<compile_context>
chip_gen: v6e
topology: v6e:2x2x1
jax: 0.10.0
libtpu: 0.0.40
codegen_flags: <defaults>
</compile_context>

<pallas_src>
import functools
import math

import jax
import jax.numpy as jnp
from jax.experimental import pallas as pl
from jax.experimental.pallas import tpu as pltpu

BN_EPS = 1e-5  # nn.BatchNorm2d default


def _basic_block_kernel(x_ref, w1_ref, w2_ref, g1_ref, b1_ref, g2_ref, b2_ref,
                        o_ref, buf_ref, *, eps):
    """Fused conv3x3 -> BN -> ReLU -> conv3x3 -> BN -> (+x) -> ReLU.

    x_ref   : (B, H, W, C)       f32   input (NHWC, C on lanes)
    w1_ref  : (3, 3C, C)         bf16  conv1 weight, (di, dj*C+ci, co)
    w2_ref  : (3, 3C, C)         bf16  conv2 weight
    g*/b*   : (1, C)             f32   BN gamma / beta
    o_ref   : (B, H, W, C)       f32   output
    buf_ref : (B, H+2, W, 3C)    bf16  shared im2col-along-W scratch (H halo only)
    """
    B, H, W, C = x_ref.shape
    K3 = 3 * C
    M = B * H * W
    bf = buf_ref.dtype

    def fill_im2col(src):
        # src: (B, H, W, C) already in buffer dtype.
        # buf[:, r, j, dj*C:(dj+1)*C] = x_pad[:, r, j+dj, :]   (x_pad = 1-pixel pad)
        buf_ref[:, 1:H + 1, 1:W, 0:C] = src[:, :, 0:W - 1, :]        # dj = 0
        buf_ref[:, 1:H + 1, :, C:2 * C] = src                        # dj = 1
        buf_ref[:, 1:H + 1, 0:W - 1, 2 * C:3 * C] = src[:, :, 1:W, :]  # dj = 2

    def conv(w_ref):
        # 3 matmuls of (M, 3C) x (3C, C); H-slices of buf are layout-free.
        w = w_ref[...]  # (3, 3C, C) bf16
        acc = jnp.dot(buf_ref[:, 0:H, :, :].reshape(M, K3), w[0],
                      preferred_element_type=jnp.float32)
        for di in (1, 2):
            acc += jnp.dot(buf_ref[:, di:di + H, :, :].reshape(M, K3), w[di],
                           preferred_element_type=jnp.float32)
        return acc

    def bn(acc, g_ref, b_ref):
        # Training-mode BN: biased batch stats, numerically-safe two-pass variance.
        mean = jnp.mean(acc, axis=0, keepdims=True)
        var = jnp.mean(jnp.square(acc - mean), axis=0, keepdims=True)
        scale = g_ref[...] * jax.lax.rsqrt(var + eps)
        bias = b_ref[...] - mean * scale
        return acc * scale + bias

    # ---- zero ONLY the conv halo (2 full rows + 2 thin column strips); the
    #      interior is overwritten by fill_im2col and the halo is reused unchanged
    #      by both convolutions. -------------------------------------------------
    buf_ref[:, 0:1, :, :] = jnp.zeros((B, 1, W, K3), bf)
    buf_ref[:, H + 1:H + 2, :, :] = jnp.zeros((B, 1, W, K3), bf)
    buf_ref[:, 1:H + 1, 0:1, 0:C] = jnp.zeros((B, H, 1, C), bf)
    buf_ref[:, 1:H + 1, W - 1:W, 2 * C:3 * C] = jnp.zeros((B, H, 1, C), bf)

    # ---- conv1 -> bn1 -> relu --------------------------------------------------
    fill_im2col(x_ref[...].astype(bf))
    h = jnp.maximum(bn(conv(w1_ref), g1_ref, b1_ref), 0.0)

    # ---- conv2 -> bn2 -> (+identity) -> relu  (same scratch reused) -------------
    fill_im2col(h.reshape(B, H, W, C).astype(bf))
    y = bn(conv(w2_ref), g2_ref, b2_ref) + x_ref[...].reshape(M, C)
    o_ref[...] = jnp.maximum(y, 0.0).reshape(B, H, W, C)


def basic_block_forward_nhwc(params, x_nhwc):
    """BasicBlock.forward (stride=1, downsample=None), NHWC activations end-to-end."""
    B, H, W, C = x_nhwc.shape
    K3 = 3 * C
    # Fold (dj, ci) into the matmul K dimension: (3, 3, C, C) -> (3, 3C, C).
    w1 = params["w1"].reshape(3, K3, C)
    w2 = params["w2"].reshape(3, K3, C)

    def vmem_spec():
        # Whole-array operand in VMEM, single-buffered (no grid => nothing to prefetch).
        return pl.BlockSpec(memory_space=pltpu.MemorySpace.VMEM)

    return pl.pallas_call(
        functools.partial(_basic_block_kernel, eps=BN_EPS),
        out_shape=jax.ShapeDtypeStruct((B, H, W, C), jnp.float32),
        in_specs=[vmem_spec() for _ in range(7)],
        out_specs=vmem_spec(),
        scratch_shapes=[
            pltpu.VMEM((B, H + 2, W, K3), jnp.bfloat16),  # shared im2col scratch
        ],
    )(
        x_nhwc.astype(jnp.float32),
        w1,
        w2,
        params["bn1_g"].reshape(1, C),
        params["bn1_b"].reshape(1, C),
        params["bn2_g"].reshape(1, C),
        params["bn2_b"].reshape(1, C),
    )


def basic_block_forward_nchw(params, x_nchw):
    """PyTorch-layout convenience wrapper (adds one NCHW<->NHWC round-trip)."""
    x_nhwc = jnp.transpose(x_nchw, (0, 2, 3, 1))
    out = basic_block_forward_nhwc(params, x_nhwc)
    return jnp.transpose(out, (0, 3, 1, 2))


def reference_forward(params, x_nhwc):
    """Pure-JAX reference (same bf16 conv inputs / f32 accumulation, train-mode BN)."""
    dn = ("NHWC", "HWIO", "NHWC")

    def conv(v, w):
        return jax.lax.conv_general_dilated(
            v.astype(jnp.bfloat16), w, window_strides=(1, 1),
            padding=((1, 1), (1, 1)), dimension_numbers=dn,
            preferred_element_type=jnp.float32)

    def bn(v, g, b):
        m = jnp.mean(v, axis=(0, 1, 2), keepdims=True)
        var = jnp.mean(jnp.square(v - m), axis=(0, 1, 2), keepdims=True)
        return (v - m) * jax.lax.rsqrt(var + BN_EPS) * g + b

    h = jnp.maximum(bn(conv(x_nhwc, params["w1"]), params["bn1_g"], params["bn1_b"]), 0.0)
    y = bn(conv(h, params["w2"]), params["bn2_g"], params["bn2_b"]) + x_nhwc
    return jnp.maximum(y, 0.0)


def make_params(key, inplanes, planes):
    # Identity residual requires inplanes == planes when downsample is None.
    assert inplanes == planes, "identity residual path requires inplanes == planes"
    k1, k2 = jax.random.split(key)

    def conv_w(k, cin, cout):
        fan_in = 3 * 3 * cin
        w = jax.random.normal(k, (3, 3, cin, cout), jnp.float32) * math.sqrt(2.0 / fan_in)
        return w.astype(jnp.bfloat16)  # bf16 weights: half the DMA, full-rate MXU

    return {
        "w1": conv_w(k1, inplanes, planes),
        "w2": conv_w(k2, planes, planes),
        "bn1_g": jnp.ones((planes,), jnp.float32),
        "bn1_b": jnp.zeros((planes,), jnp.float32),
        "bn2_g": jnp.ones((planes,), jnp.float32),
        "bn2_b": jnp.zeros((planes,), jnp.float32),
    }


if __name__ == "__main__":
    # Small but lane-dense config: C = 128 (one full lane vector), 16x16 spatial.
    B, C, H, W = 2, 128, 16, 16

    key = jax.random.PRNGKey(0)
    kx, kp = jax.random.split(key)
    # NHWC end-to-end (no NCHW<->NHWC HBM round-trip in the hot path).
    x_nhwc = jax.random.normal(kx, (B, H, W, C), jnp.float32)
    params = make_params(kp, C, C)

    fwd = jax.jit(basic_block_forward_nhwc)
    out = jax.block_until_ready(fwd(params, x_nhwc))

    assert out.shape == (B, H, W, C), out.shape
    assert bool(jnp.all(jnp.isfinite(out)))
    assert bool(jnp.all(out >= 0.0))  # final ReLU

    # Tolerance check against a pure-JAX reference with matched bf16 conv inputs
    # (remaining difference is only f32 accumulation order).
    ref = jax.block_until_ready(jax.jit(reference_forward)(params, x_nhwc))
    max_err = float(jnp.max(jnp.abs(out - ref)))
    assert max_err < 2e-2, f"max abs error vs reference: {max_err}"

    print("KERNEL_OK")
</pallas_src>

<mosaic_0001>
module attributes {stable_mosaic.version = 11 : i64} {
  func.func @_basic_block_kernel(%arg0: memref<2x16x16x128xf32, #tpu.memory_space<vmem>>, %arg1: memref<3x384x128xbf16, #tpu.memory_space<vmem>>, %arg2: memref<3x384x128xbf16, #tpu.memory_space<vmem>>, %arg3: memref<1x128xf32, #tpu.memory_space<vmem>>, %arg4: memref<1x128xf32, #tpu.memory_space<vmem>>, %arg5: memref<1x128xf32, #tpu.memory_space<vmem>>, %arg6: memref<1x128xf32, #tpu.memory_space<vmem>>, %arg7: memref<2x16x16x128xf32, #tpu.memory_space<vmem>>, %arg8: memref<2x18x16x384xbf16, #tpu.memory_space<vmem>>) attributes {dimension_semantics = [], scalar_prefetch = 0 : i64, scratch_operands = 1 : i64, tpu.core_type = #tpu.core_type<tc>} {
    %cst = arith.constant 0.000000e+00 : bf16
    %0 = vector.broadcast %cst : bf16 to vector<2x1x16x384xbf16>
    %c0 = arith.constant 0 : index
    %c0_0 = arith.constant 0 : index
    %c0_1 = arith.constant 0 : index
    %c0_2 = arith.constant 0 : index
    %1 = vector.load %arg8[%c0, %c0_0, %c0_1, %c0_2] : memref<2x18x16x384xbf16, #tpu.memory_space<vmem>>, vector<2x1x16x384xbf16>
    tpu.vector_store %arg8[%c0, %c0_0, %c0_1, %c0_2], %0 {strides = array<i32>} : memref<2x18x16x384xbf16, #tpu.memory_space<vmem>>, vector<2x1x16x384xbf16>,
    %cst_3 = arith.constant 0.000000e+00 : bf16
    %2 = vector.broadcast %cst_3 : bf16 to vector<2x1x16x384xbf16>
    %c0_4 = arith.constant 0 : index
    %c17 = arith.constant 17 : index
    %c0_5 = arith.constant 0 : index
    %c0_6 = arith.constant 0 : index
    %3 = vector.load %arg8[%c0_4, %c17, %c0_5, %c0_6] : memref<2x18x16x384xbf16, #tpu.memory_space<vmem>>, vector<2x1x16x384xbf16>
    tpu.vector_store %arg8[%c0_4, %c17, %c0_5, %c0_6], %2 {strides = array<i32>} : memref<2x18x16x384xbf16, #tpu.memory_space<vmem>>, vector<2x1x16x384xbf16>,
    %cst_7 = arith.constant 0.000000e+00 : bf16
    %4 = vector.broadcast %cst_7 : bf16 to vector<2x16x1x128xbf16>
    %c0_8 = arith.constant 0 : index
    %c1 = arith.constant 1 : index
    %c0_9 = arith.constant 0 : index
    %c0_10 = arith.constant 0 : index
    %5 = vector.load %arg8[%c0_8, %c1, %c0_9, %c0_10] : memref<2x18x16x384xbf16, #tpu.memory_space<vmem>>, vector<2x16x1x128xbf16>
    tpu.vector_store %arg8[%c0_8, %c1, %c0_9, %c0_10], %4 {strides = array<i32>} : memref<2x18x16x384xbf16, #tpu.memory_space<vmem>>, vector<2x16x1x128xbf16>,
    %cst_11 = arith.constant 0.000000e+00 : bf16
    %6 = vector.broadcast %cst_11 : bf16 to vector<2x16x1x128xbf16>
    %c0_12 = arith.constant 0 : index
    %c1_13 = arith.constant 1 : index
    %c15 = arith.constant 15 : index
    %c256 = arith.constant 256 : index
    %7 = vector.load %arg8[%c0_12, %c1_13, %c15, %c256] : memref<2x18x16x384xbf16, #tpu.memory_space<vmem>>, vector<2x16x1x128xbf16>
    tpu.vector_store %arg8[%c0_12, %c1_13, %c15, %c256], %6 {strides = array<i32>} : memref<2x18x16x384xbf16, #tpu.memory_space<vmem>>, vector<2x16x1x128xbf16>,
    %c0_14 = arith.constant 0 : index
    %c0_15 = arith.constant 0 : index
    %c0_16 = arith.constant 0 : index
    %c0_17 = arith.constant 0 : index
    %8 = vector.load %arg0[%c0_14, %c0_15, %c0_16, %c0_17] : memref<2x16x16x128xf32, #tpu.memory_space<vmem>>, vector<2x16x16x128xf32>
    %9 = arith.truncf %8 : vector<2x16x16x128xf32> to vector<2x16x16x128xbf16>
    %10 = vector.extract_strided_slice %9 {offsets = [0, 0, 0, 0], sizes = [2, 16, 15, 128], strides = [1, 1, 1, 1]} : vector<2x16x16x128xbf16> to vector<2x16x15x128xbf16>
    %c0_18 = arith.constant 0 : index
    %c1_19 = arith.constant 1 : index
    %c1_20 = arith.constant 1 : index
    %c0_21 = arith.constant 0 : index
    %11 = vector.load %arg8[%c0_18, %c1_19, %c1_20, %c0_21] : memref<2x18x16x384xbf16, #tpu.memory_space<vmem>>, vector<2x16x15x128xbf16>
    tpu.vector_store %arg8[%c0_18, %c1_19, %c1_20, %c0_21], %10 {strides = array<i32>} : memref<2x18x16x384xbf16, #tpu.memory_space<vmem>>, vector<2x16x15x128xbf16>,
    %c0_22 = arith.constant 0 : index
    %c1_23 = arith.constant 1 : index
    %c0_24 = arith.constant 0 : index
    %c128 = arith.constant 128 : index
    %12 = vector.load %arg8[%c0_22, %c1_23, %c0_24, %c128] : memref<2x18x16x384xbf16, #tpu.memory_space<vmem>>, vector<2x16x16x128xbf16>
    tpu.vector_store %arg8[%c0_22, %c1_23, %c0_24, %c128], %9 {strides = array<i32>} : memref<2x18x16x384xbf16, #tpu.memory_space<vmem>>, vector<2x16x16x128xbf16>,
    %13 = vector.extract_strided_slice %9 {offsets = [0, 0, 1, 0], sizes = [2, 16, 15, 128], strides = [1, 1, 1, 1]} : vector<2x16x16x128xbf16> to vector<2x16x15x128xbf16>
    %c0_25 = arith.constant 0 : index
    %c1_26 = arith.constant 1 : index
    %c0_27 = arith.constant 0 : index
    %c256_28 = arith.constant 256 : index
    %14 = vector.load %arg8[%c0_25, %c1_26, %c0_27, %c256_28] : memref<2x18x16x384xbf16, #tpu.memory_space<vmem>>, vector<2x16x15x128xbf16>
    tpu.vector_store %arg8[%c0_25, %c1_26, %c0_27, %c256_28], %13 {strides = array<i32>} : memref<2x18x16x384xbf16, #tpu.memory_space<vmem>>, vector<2x16x15x128xbf16>,
    %c0_29 = arith.constant 0 : index
    %c0_30 = arith.constant 0 : index
    %c0_31 = arith.constant 0 : index
    %15 = vector.load %arg1[%c0_29, %c0_30, %c0_31] : memref<3x384x128xbf16, #tpu.memory_space<vmem>>, vector<3x384x128xbf16>
    %c0_32 = arith.constant 0 : index
    %c0_33 = arith.constant 0 : index
    %c0_34 = arith.constant 0 : index
    %c0_35 = arith.constant 0 : index
    %16 = vector.load %arg8[%c0_32, %c0_33, %c0_34, %c0_35] : memref<2x18x16x384xbf16, #tpu.memory_space<vmem>>, vector<2x16x16x384xbf16>
    %17 = vector.shape_cast %16 : vector<2x16x16x384xbf16> to vector<512x384xbf16>
    %18 = vector.extract_strided_slice %15 {offsets = [0, 0, 0], sizes = [1, 384, 128], strides = [1, 1, 1]} : vector<3x384x128xbf16> to vector<1x384x128xbf16>
    %19 = vector.shape_cast %18 : vector<1x384x128xbf16> to vector<384x128xbf16>
    %cst_36 = arith.constant dense<0.000000e+00> : vector<512x128xf32>
    %20 = tpu.matmul %17, %19, %cst_36 {dimension_numbers = #tpu.dot_dimension_numbers<[1], [0], [0], [1], [0, 0, 1, 1], [], []>} : vector<512x384xbf16>, vector<384x128xbf16>, vector<512x128xf32> -> vector<512x128xf32>
    %c0_37 = arith.constant 0 : index
    %c1_38 = arith.constant 1 : index
    %c0_39 = arith.constant 0 : index
    %c0_40 = arith.constant 0 : index
    %21 = vector.load %arg8[%c0_37, %c1_38, %c0_39, %c0_40] : memref<2x18x16x384xbf16, #tpu.memory_space<vmem>>, vector<2x16x16x384xbf16>
    %22 = vector.shape_cast %21 : vector<2x16x16x384xbf16> to vector<512x384xbf16>
    %23 = vector.extract_strided_slice %15 {offsets = [1, 0, 0], sizes = [1, 384, 128], strides = [1, 1, 1]} : vector<3x384x128xbf16> to vector<1x384x128xbf16>
    %24 = vector.shape_cast %23 : vector<1x384x128xbf16> to vector<384x128xbf16>
    %cst_41 = arith.constant dense<0.000000e+00> : vector<512x128xf32>
    %25 = tpu.matmul %22, %24, %cst_41 {dimension_numbers = #tpu.dot_dimension_numbers<[1], [0], [0], [1], [0, 0, 1, 1], [], []>} : vector<512x384xbf16>, vector<384x128xbf16>, vector<512x128xf32> -> vector<512x128xf32>
    %26 = arith.addf %20, %25 : vector<512x128xf32>
    %c0_42 = arith.constant 0 : index
    %c2 = arith.constant 2 : index
    %c0_43 = arith.constant 0 : index
    %c0_44 = arith.constant 0 : index
    %27 = vector.load %arg8[%c0_42, %c2, %c0_43, %c0_44] : memref<2x18x16x384xbf16, #tpu.memory_space<vmem>>, vector<2x16x16x384xbf16>
    %28 = vector.shape_cast %27 : vector<2x16x16x384xbf16> to vector<512x384xbf16>
    %29 = vector.extract_strided_slice %15 {offsets = [2, 0, 0], sizes = [1, 384, 128], strides = [1, 1, 1]} : vector<3x384x128xbf16> to vector<1x384x128xbf16>
    %30 = vector.shape_cast %29 : vector<1x384x128xbf16> to vector<384x128xbf16>
    %cst_45 = arith.constant dense<0.000000e+00> : vector<512x128xf32>
    %31 = tpu.matmul %28, %30, %cst_45 {dimension_numbers = #tpu.dot_dimension_numbers<[1], [0], [0], [1], [0, 0, 1, 1], [], []>} : vector<512x384xbf16>, vector<384x128xbf16>, vector<512x128xf32> -> vector<512x128xf32>
    %32 = arith.addf %26, %31 : vector<512x128xf32>
    %cst_46 = arith.constant dense<0.000000e+00> : vector<128xf32>
    %33 = vector.multi_reduction <add>, %32, %cst_46 [0] : vector<512x128xf32> to vector<128xf32>
    %34 = vector.shape_cast %33 : vector<128xf32> to vector<1x128xf32>
    %cst_47 = arith.constant 5.120000e+02 : f32
    %35 = vector.broadcast %cst_47 : f32 to vector<1x128xf32>
    %36 = arith.divf %34, %35 : vector<1x128xf32>
    %37 = vector.broadcast %36 : vector<1x128xf32> to vector<512x128xf32>
    %38 = arith.subf %32, %37 : vector<512x128xf32>
    %39 = arith.mulf %38, %38 : vector<512x128xf32>
    %cst_48 = arith.constant dense<0.000000e+00> : vector<128xf32>
    %40 = vector.multi_reduction <add>, %39, %cst_48 [0] : vector<512x128xf32> to vector<128xf32>
    %41 = vector.shape_cast %40 : vector<128xf32> to vector<1x128xf32>
    %cst_49 = arith.constant 5.120000e+02 : f32
    %42 = vector.broadcast %cst_49 : f32 to vector<1x128xf32>
    %43 = arith.divf %41, %42 : vector<1x128xf32>
    %c0_50 = arith.constant 0 : index
    %c0_51 = arith.constant 0 : index
    %44 = vector.load %arg3[%c0_50, %c0_51] : memref<1x128xf32, #tpu.memory_space<vmem>>, vector<1x128xf32>
    %cst_52 = arith.constant 9.99999974E-6 : f32
    %45 = vector.broadcast %cst_52 : f32 to vector<1x128xf32>
    %46 = arith.addf %43, %45 : vector<1x128xf32>
    %47 = math.rsqrt %46 : vector<1x128xf32>
    %48 = arith.mulf %44, %47 : vector<1x128xf32>
    %c0_53 = arith.constant 0 : index
    %c0_54 = arith.constant 0 : index
    %49 = vector.load %arg4[%c0_53, %c0_54] : memref<1x128xf32, #tpu.memory_space<vmem>>, vector<1x128xf32>
    %50 = arith.mulf %36, %48 : vector<1x128xf32>
    %51 = arith.subf %49, %50 : vector<1x128xf32>
    %52 = vector.broadcast %48 : vector<1x128xf32> to vector<512x128xf32>
    %53 = arith.mulf %32, %52 : vector<512x128xf32>
    %54 = vector.broadcast %51 : vector<1x128xf32> to vector<512x128xf32>
    %55 = arith.addf %53, %54 : vector<512x128xf32>
    %cst_55 = arith.constant 0.000000e+00 : f32
    %56 = vector.broadcast %cst_55 : f32 to vector<512x128xf32>
    %57 = arith.maximumf %55, %56 : vector<512x128xf32>
    %58 = vector.shape_cast %57 : vector<512x128xf32> to vector<2x16x16x128xf32>
    %59 = arith.truncf %58 : vector<2x16x16x128xf32> to vector<2x16x16x128xbf16>
    %60 = vector.extract_strided_slice %59 {offsets = [0, 0, 0, 0], sizes = [2, 16, 15, 128], strides = [1, 1, 1, 1]} : vector<2x16x16x128xbf16> to vector<2x16x15x128xbf16>
    %c0_56 = arith.constant 0 : index
    %c1_57 = arith.constant 1 : index
    %c1_58 = arith.constant 1 : index
    %c0_59 = arith.constant 0 : index
    %61 = vector.load %arg8[%c0_56, %c1_57, %c1_58, %c0_59] : memref<2x18x16x384xbf16, #tpu.memory_space<vmem>>, vector<2x16x15x128xbf16>
    tpu.vector_store %arg8[%c0_56, %c1_57, %c1_58, %c0_59], %60 {strides = array<i32>} : memref<2x18x16x384xbf16, #tpu.memory_space<vmem>>, vector<2x16x15x128xbf16>,
    %c0_60 = arith.constant 0 : index
    %c1_61 = arith.constant 1 : index
    %c0_62 = arith.constant 0 : index
    %c128_63 = arith.constant 128 : index
    %62 = vector.load %arg8[%c0_60, %c1_61, %c0_62, %c128_63] : memref<2x18x16x384xbf16, #tpu.memory_space<vmem>>, vector<2x16x16x128xbf16>
    tpu.vector_store %arg8[%c0_60, %c1_61, %c0_62, %c128_63], %59 {strides = array<i32>} : memref<2x18x16x384xbf16, #tpu.memory_space<vmem>>, vector<2x16x16x128xbf16>,
    %63 = vector.extract_strided_slice %59 {offsets = [0, 0, 1, 0], sizes = [2, 16, 15, 128], strides = [1, 1, 1, 1]} : vector<2x16x16x128xbf16> to vector<2x16x15x128xbf16>
    %c0_64 = arith.constant 0 : index
    %c1_65 = arith.constant 1 : index
    %c0_66 = arith.constant 0 : index
    %c256_67 = arith.constant 256 : index
    %64 = vector.load %arg8[%c0_64, %c1_65, %c0_66, %c256_67] : memref<2x18x16x384xbf16, #tpu.memory_space<vmem>>, vector<2x16x15x128xbf16>
    tpu.vector_store %arg8[%c0_64, %c1_65, %c0_66, %c256_67], %63 {strides = array<i32>} : memref<2x18x16x384xbf16, #tpu.memory_space<vmem>>, vector<2x16x15x128xbf16>,
    %c0_68 = arith.constant 0 : index
    %c0_69 = arith.constant 0 : index
    %c0_70 = arith.constant 0 : index
    %65 = vector.load %arg2[%c0_68, %c0_69, %c0_70] : memref<3x384x128xbf16, #tpu.memory_space<vmem>>, vector<3x384x128xbf16>
    %c0_71 = arith.constant 0 : index
    %c0_72 = arith.constant 0 : index
    %c0_73 = arith.constant 0 : index
    %c0_74 = arith.constant 0 : index
    %66 = vector.load %arg8[%c0_71, %c0_72, %c0_73, %c0_74] : memref<2x18x16x384xbf16, #tpu.memory_space<vmem>>, vector<2x16x16x384xbf16>
    %67 = vector.shape_cast %66 : vector<2x16x16x384xbf16> to vector<512x384xbf16>
    %68 = vector.extract_strided_slice %65 {offsets = [0, 0, 0], sizes = [1, 384, 128], strides = [1, 1, 1]} : vector<3x384x128xbf16> to vector<1x384x128xbf16>
    %69 = vector.shape_cast %68 : vector<1x384x128xbf16> to vector<384x128xbf16>
    %cst_75 = arith.constant dense<0.000000e+00> : vector<512x128xf32>
    %70 = tpu.matmul %67, %69, %cst_75 {dimension_numbers = #tpu.dot_dimension_numbers<[1], [0], [0], [1], [0, 0, 1, 1], [], []>} : vector<512x384xbf16>, vector<384x128xbf16>, vector<512x128xf32> -> vector<512x128xf32>
    %c0_76 = arith.constant 0 : index
    %c1_77 = arith.constant 1 : index
    %c0_78 = arith.constant 0 : index
    %c0_79 = arith.constant 0 : index
    %71 = vector.load %arg8[%c0_76, %c1_77, %c0_78, %c0_79] : memref<2x18x16x384xbf16, #tpu.memory_space<vmem>>, vector<2x16x16x384xbf16>
    %72 = vector.shape_cast %71 : vector<2x16x16x384xbf16> to vector<512x384xbf16>
    %73 = vector.extract_strided_slice %65 {offsets = [1, 0, 0], sizes = [1, 384, 128], strides = [1, 1, 1]} : vector<3x384x128xbf16> to vector<1x384x128xbf16>
    %74 = vector.shape_cast %73 : vector<1x384x128xbf16> to vector<384x128xbf16>
    %cst_80 = arith.constant dense<0.000000e+00> : vector<512x128xf32>
    %75 = tpu.matmul %72, %74, %cst_80 {dimension_numbers = #tpu.dot_dimension_numbers<[1], [0], [0], [1], [0, 0, 1, 1], [], []>} : vector<512x384xbf16>, vector<384x128xbf16>, vector<512x128xf32> -> vector<512x128xf32>
    %76 = arith.addf %70, %75 : vector<512x128xf32>
    %c0_81 = arith.constant 0 : index
    %c2_82 = arith.constant 2 : index
    %c0_83 = arith.constant 0 : index
    %c0_84 = arith.constant 0 : index
    %77 = vector.load %arg8[%c0_81, %c2_82, %c0_83, %c0_84] : memref<2x18x16x384xbf16, #tpu.memory_space<vmem>>, vector<2x16x16x384xbf16>
    %78 = vector.shape_cast %77 : vector<2x16x16x384xbf16> to vector<512x384xbf16>
    %79 = vector.extract_strided_slice %65 {offsets = [2, 0, 0], sizes = [1, 384, 128], strides = [1, 1, 1]} : vector<3x384x128xbf16> to vector<1x384x128xbf16>
    %80 = vector.shape_cast %79 : vector<1x384x128xbf16> to vector<384x128xbf16>
    %cst_85 = arith.constant dense<0.000000e+00> : vector<512x128xf32>
    %81 = tpu.matmul %78, %80, %cst_85 {dimension_numbers = #tpu.dot_dimension_numbers<[1], [0], [0], [1], [0, 0, 1, 1], [], []>} : vector<512x384xbf16>, vector<384x128xbf16>, vector<512x128xf32> -> vector<512x128xf32>
    %82 = arith.addf %76, %81 : vector<512x128xf32>
    %cst_86 = arith.constant dense<0.000000e+00> : vector<128xf32>
    %83 = vector.multi_reduction <add>, %82, %cst_86 [0] : vector<512x128xf32> to vector<128xf32>
    %84 = vector.shape_cast %83 : vector<128xf32> to vector<1x128xf32>
    %cst_87 = arith.constant 5.120000e+02 : f32
    %85 = vector.broadcast %cst_87 : f32 to vector<1x128xf32>
    %86 = arith.divf %84, %85 : vector<1x128xf32>
    %87 = vector.broadcast %86 : vector<1x128xf32> to vector<512x128xf32>
    %88 = arith.subf %82, %87 : vector<512x128xf32>
    %89 = arith.mulf %88, %88 : vector<512x128xf32>
    %cst_88 = arith.constant dense<0.000000e+00> : vector<128xf32>
    %90 = vector.multi_reduction <add>, %89, %cst_88 [0] : vector<512x128xf32> to vector<128xf32>
    %91 = vector.shape_cast %90 : vector<128xf32> to vector<1x128xf32>
    %cst_89 = arith.constant 5.120000e+02 : f32
    %92 = vector.broadcast %cst_89 : f32 to vector<1x128xf32>
    %93 = arith.divf %91, %92 : vector<1x128xf32>
    %c0_90 = arith.constant 0 : index
    %c0_91 = arith.constant 0 : index
    %94 = vector.load %arg5[%c0_90, %c0_91] : memref<1x128xf32, #tpu.memory_space<vmem>>, vector<1x128xf32>
    %cst_92 = arith.constant 9.99999974E-6 : f32
    %95 = vector.broadcast %cst_92 : f32 to vector<1x128xf32>
    %96 = arith.addf %93, %95 : vector<1x128xf32>
    %97 = math.rsqrt %96 : vector<1x128xf32>
    %98 = arith.mulf %94, %97 : vector<1x128xf32>
    %c0_93 = arith.constant 0 : index
    %c0_94 = arith.constant 0 : index
    %99 = vector.load %arg6[%c0_93, %c0_94] : memref<1x128xf32, #tpu.memory_space<vmem>>, vector<1x128xf32>
    %100 = arith.mulf %86, %98 : vector<1x128xf32>
    %101 = arith.subf %99, %100 : vector<1x128xf32>
    %102 = vector.broadcast %98 : vector<1x128xf32> to vector<512x128xf32>
    %103 = arith.mulf %82, %102 : vector<512x128xf32>
    %104 = vector.broadcast %101 : vector<1x128xf32> to vector<512x128xf32>
    %105 = arith.addf %103, %104 : vector<512x128xf32>
    %c0_95 = arith.constant 0 : index
    %c0_96 = arith.constant 0 : index
    %c0_97 = arith.constant 0 : index
    %c0_98 = arith.constant 0 : index
    %106 = vector.load %arg0[%c0_95, %c0_96, %c0_97, %c0_98] : memref<2x16x16x128xf32, #tpu.memory_space<vmem>>, vector<2x16x16x128xf32>
    %107 = vector.shape_cast %106 : vector<2x16x16x128xf32> to vector<512x128xf32>
    %108 = arith.addf %105, %107 : vector<512x128xf32>
    %cst_99 = arith.constant 0.000000e+00 : f32
    %109 = vector.broadcast %cst_99 : f32 to vector<512x128xf32>
    %110 = arith.maximumf %108, %109 : vector<512x128xf32>
    %111 = vector.shape_cast %110 : vector<512x128xf32> to vector<2x16x16x128xf32>
    %c0_100 = arith.constant 0 : index
    %c0_101 = arith.constant 0 : index
    %c0_102 = arith.constant 0 : index
    %c0_103 = arith.constant 0 : index
    %112 = vector.load %arg7[%c0_100, %c0_101, %c0_102, %c0_103] : memref<2x16x16x128xf32, #tpu.memory_space<vmem>>, vector<2x16x16x128xf32>
    tpu.vector_store %arg7[%c0_100, %c0_101, %c0_102, %c0_103], %111 {strides = array<i32>} : memref<2x16x16x128xf32, #tpu.memory_space<vmem>>, vector<2x16x16x128xf32>,
    return
  }
}

</mosaic_0001>

<llo_original>
// kernel: basic_block_forward_nhwc.1
$region0: #{basic_block_forward_nhwc.1}
  #allocation0 [shape = 'u32[]', space=smem, size = 0x4, offset = 0x4, fixed_abs, tag = 'smem constant byte address 0x4 - core index']
  #allocation1 [shape = 'u32[144,128]{1,0:T(1,128)}', space=vmem, size = 0x12000, scoped, tag = 'internal scratch']
  #allocation2 [shape = 'bf16[2,18,16,384]{3,2,1,0:T(8,128)(2,1)}', space=vmem, size = 0x6c000, scoped, tag = 'scratch operand']
  %s0 = inlined_call_operand.hbm [shape: f32[2,16,16,128], index: 0, kind: input, shape index: {}]
  %s1 = inlined_call_operand.hbm [shape: bf16[3,384,128], index: 1, kind: input, shape index: {}]
  %s2 = inlined_call_operand.hbm [shape: bf16[3,384,128], index: 2, kind: input, shape index: {}]
  %s3 = inlined_call_operand.vmem [shape: f32[1,128], index: 3, kind: input, shape index: {}]
  %s4 = inlined_call_operand.vmem [shape: f32[1,128], index: 4, kind: input, shape index: {}]
  %s5 = inlined_call_operand.vmem [shape: f32[1,128], index: 5, kind: input, shape index: {}]
  %s6 = inlined_call_operand.vmem [shape: f32[1,128], index: 6, kind: input, shape index: {}]
  %s7 = inlined_call_operand.hbm [shape: f32[2,16,16,128], index: 7, kind: output, shape index: {}]
  %s8 = sld [smem:[#allocation0]]
  $region50: #{basic_block_forward_nhwc.1} parent=0
    _
  %s10 = ssub.s32 1, %s8
  %s11 = scalar_select 0, %s10, %s8
  $region1: #{basic_block_forward_nhwc.1} parent=0
    #allocation3 [shape = 'u8[262144]{0}', space=vmem, size = 0x40000, scoped, tag = 'input window, operand 0, single buffered']
    #allocation4 [shape = 's32[1]{0}', space=sflag, size = 0x4, scoped, tag = 'scoped memory for basic_block_forward_nhwc.1']
    #allocation5 [shape = 's32[1]{0}', space=sflag, size = 0x4, scoped, tag = 'scoped memory for basic_block_forward_nhwc.1']
    #allocation6 [shape = 'u8[294912]{0}', space=vmem, size = 0x48000, scoped, tag = 'input window, operand 1, single buffered']
    #allocation7 [shape = 's32[1]{0}', space=sflag, size = 0x4, scoped, tag = 'scoped memory for basic_block_forward_nhwc.1']
    #allocation8 [shape = 'u8[294912]{0}', space=vmem, size = 0x48000, scoped, tag = 'input window, operand 2, single buffered']
    #allocation9 [shape = 'u8[262144]{0}', space=vmem, size = 0x40000, scoped, tag = 'output window, operand 0, single buffered']
    %12 = vsyncpa [#allocation4], 0
    %13 = vsyncpa [#allocation7], 0
    %14 = vsyncpa [#allocation5], 0
    // Predicated region
    $region2: #{basic_block_forward_nhwc.1} parent=1 // pred_check
      _
    $region3: #{basic_block_forward_nhwc.1} parent=1 // pred_check_branch
      %16 = sbr.rel (0) target = $region5
    $region4: #{basic_block_forward_nhwc.1} parent=1 // pred_region
      %s18 = ssub.s32 8192, 8192
      %19 = vsyncadd [#allocation4], %s18
      %s20 = sshll.u32 [#allocation3], 4
      %s21 = int_to_ptr.vmem [resolvable:$true] %s20
      %26 = dma.hbm_to_vmem [thread:$0]  %s0, 8192, %s21, [#allocation4], 128, 128, 8
    $region5: #{basic_block_forward_nhwc.1} parent=1 // pred_fallthru
      _
    // Predicated region
    $region6: #{basic_block_forward_nhwc.1} parent=1 // pred_check
      _
    $region7: #{basic_block_forward_nhwc.1} parent=1 // pred_check_branch
      %28 = sbr.rel (0) target = $region9
    $region8: #{basic_block_forward_nhwc.1} parent=1 // pred_region
      %s30 = ssub.s32 9216, 9216
      %31 = vsyncadd [#allocation7], %s30
      %s32 = sshll.u32 [#allocation6], 4
      %s33 = int_to_ptr.vmem [resolvable:$true] %s32
      %38 = dma.hbm_to_vmem [thread:$0]  %s1, 9216, %s33, [#allocation7], 64, 64, 4
    $region9: #{basic_block_forward_nhwc.1} parent=1 // pred_fallthru
      _
    // Predicated region
    $region10: #{basic_block_forward_nhwc.1} parent=1 // pred_check
      _
    $region11: #{basic_block_forward_nhwc.1} parent=1 // pred_check_branch
      %40 = sbr.rel (0) target = $region13
    $region12: #{basic_block_forward_nhwc.1} parent=1 // pred_region
      %s42 = ssub.s32 9216, 9216
      %43 = vsyncadd [#allocation7], %s42
      %s44 = sshll.u32 [#allocation8], 4
      %s45 = int_to_ptr.vmem [resolvable:$true] %s44
      %50 = dma.hbm_to_vmem [thread:$0]  %s2, 9216, %s45, [#allocation7], 64, 64, 4
    $region13: #{basic_block_forward_nhwc.1} parent=1 // pred_fallthru
      _
    // Predicated region
    $region14: #{basic_block_forward_nhwc.1} parent=1 // pred_check
      _
    $region15: #{basic_block_forward_nhwc.1} parent=1 // pred_check_branch
      %52 = sbr.rel (0) target = $region17
    $region16: #{basic_block_forward_nhwc.1} parent=1 // pred_region
      _
    $region17: #{basic_block_forward_nhwc.1} parent=1 // pred_fallthru
      _
    // Predicated region
    $region18: #{basic_block_forward_nhwc.1} parent=1 // pred_check
      _
    $region19: #{basic_block_forward_nhwc.1} parent=1 // pred_check_branch
      %54 = sbr.rel (0) target = $region21
    $region20: #{basic_block_forward_nhwc.1} parent=1 // pred_region
      _
    $region21: #{basic_block_forward_nhwc.1} parent=1 // pred_fallthru
      _
    // Predicated region
    $region22: #{basic_block_forward_nhwc.1} parent=1 // pred_check
      _
    $region23: #{basic_block_forward_nhwc.1} parent=1 // pred_check_branch
      %56 = sbr.rel (0) target = $region25
    $region24: #{basic_block_forward_nhwc.1} parent=1 // pred_region
      _
    $region25: #{basic_block_forward_nhwc.1} parent=1 // pred_fallthru
      _
    // Predicated region
    $region26: #{basic_block_forward_nhwc.1} parent=1 // pred_check
      _
    $region27: #{basic_block_forward_nhwc.1} parent=1 // pred_check_branch
      %58 = sbr.rel (0) target = $region29
    $region28: #{basic_block_forward_nhwc.1} parent=1 // pred_region
      _
    $region29: #{basic_block_forward_nhwc.1} parent=1 // pred_fallthru
      _
    // Predicated region
    $region30: #{basic_block_forward_nhwc.1} parent=1 // pred_check
      _
    $region31: #{basic_block_forward_nhwc.1} parent=1 // pred_check_branch
      %60 = sbr.rel (0) target = $region33
    $region32: #{basic_block_forward_nhwc.1} parent=1 // pred_region
      %61 = dma.done [#allocation4], 8192
    $region33: #{basic_block_forward_nhwc.1} parent=1 // pred_fallthru
      _
    // Predicated region
    $region34: #{basic_block_forward_nhwc.1} parent=1 // pred_check
      _
    $region35: #{basic_block_forward_nhwc.1} parent=1 // pred_check_branch
      %63 = sbr.rel (0) target = $region37
    $region36: #{basic_block_forward_nhwc.1} parent=1 // pred_region
      %64 = dma.done [#allocation7], 9216
    $region37: #{basic_block_forward_nhwc.1} parent=1 // pred_fallthru
      _
    // Predicated region
    $region38: #{basic_block_forward_nhwc.1} parent=1 // pred_check
      _
    $region39: #{basic_block_forward_nhwc.1} parent=1 // pred_check_branch
      %66 = sbr.rel (0) target = $region41
    $region40: #{basic_block_forward_nhwc.1} parent=1 // pred_region
      %67 = dma.done [#allocation7], 9216
    $region41: #{basic_block_forward_nhwc.1} parent=1 // pred_fallthru
      _
    %69 = vst [vmem:[#allocation2] sm:$0xff] 0
    %70 = vst [vmem:[#allocation2 + $0x8] sm:$0xf] 0
    %71 = vst [vmem:[#allocation2 + $0xc] sm:$0xff] 0
    %72 = vst [vmem:[#allocation2 + $0x14] sm:$0xf] 0
    %73 = vst [vmem:[#allocation2 + $0x1b0] sm:$0xff] 0
    %74 = vst [vmem:[#allocation2 + $0x1b8] sm:$0xf] 0
    %75 = vst [vmem:[#allocation2 + $0x1bc] sm:$0xff] 0
    %76 = vst [vmem:[#allocation2 + $0x1c4] sm:$0xf] 0
    %s77 = scalar_lea.vmem [#allocation2], 408
    %78 = vst [vmem:[%s77] sm:$0xff] 0
    %79 = vst [vmem:[%s77 + $0x8] sm:$0xf] 0
    %80 = vst [vmem:[%s77 + $0xc] sm:$0xff] 0
    %81 = vst [vmem:[%s77 + $0x14] sm:$0xf] 0
    %82 = vst [vmem:[%s77 + $0x1b0] sm:$0xff] 0
    %83 = vst [vmem:[%s77 + $0x1b8] sm:$0xf] 0
    %84 = vst [vmem:[%s77 + $0x1bc] sm:$0xff] 0
    %85 = vst [vmem:[%s77 + $0x1c4] sm:$0xf] 0
    %s86 = scalar_lea.vmem [#allocation2], 24
    %vm87 = vcmask 1040384
    %vm88 = vsmask.f32 256
    %vm89 = vmand %vm87, %vm88
    %v90 = vld [vmem:[%s86] sm:$0x1]
    %v91 = vsel %vm89, 0, %v90
    %92 = vst [vmem:[%s86] sm:$0x1] %v91
    %v93 = vld [vmem:[%s86 + $0x18] sm:$0x1]
    %v94 = vsel %vm89, 0, %v93
    %95 = vst [vmem:[%s86 + $0x18] sm:$0x1] %v94
    %v96 = vld [vmem:[%s86 + $0x30] sm:$0x1]
    %v97 = vsel %vm89, 0, %v96
    %98 = vst [vmem:[%s86 + $0x30] sm:$0x1] %v97
    %v99 = vld [vmem:[%s86 + $0x48] sm:$0x1]
    %v100 = vsel %vm89, 0, %v99
    %101 = vst [vmem:[%s86 + $0x48] sm:$0x1] %v100
    %v102 = vld [vmem:[%s86 + $0x60] sm:$0x1]
    %v103 = vsel %vm89, 0, %v102
    %104 = vst [vmem:[%s86 + $0x60] sm:$0x1] %v103
    %v105 = vld [vmem:[%s86 + $0x78] sm:$0x1]
    %v106 = vsel %vm89, 0, %v105
    %107 = vst [vmem:[%s86 + $0x78] sm:$0x1] %v106
    %v108 = vld [vmem:[%s86 + $0x90] sm:$0x1]
    %v109 = vsel %vm89, 0, %v108
    %110 = vst [vmem:[%s86 + $0x90] sm:$0x1] %v109
    %v111 = vld [vmem:[%s86 + $0xa8] sm:$0x1]
    %v112 = vsel %vm89, 0, %v111
    %113 = vst [vmem:[%s86 + $0xa8] sm:$0x1] %v112
    %v114 = vld [vmem:[%s86 + $0xc0] sm:$0x1]
    %v115 = vsel %vm89, 0, %v114
    %116 = vst [vmem:[%s86 + $0xc0] sm:$0x1] %v115
    %v117 = vld [vmem:[%s86 + $0xd8] sm:$0x1]
    %v118 = vsel %vm89, 0, %v117
    %119 = vst [vmem:[%s86 + $0xd8] sm:$0x1] %v118
    %v120 = vld [vmem:[%s86 + $0xf0] sm:$0x1]
    %v121 = vsel %vm89, 0, %v120
    %122 = vst [vmem:[%s86 + $0xf0] sm:$0x1] %v121
    %v123 = vld [vmem:[%s86 + $0x108] sm:$0x1]
    %v124 = vsel %vm89, 0, %v123
    %125 = vst [vmem:[%s86 + $0x108] sm:$0x1] %v124
    %v126 = vld [vmem:[%s86 + $0x120] sm:$0x1]
    %v127 = vsel %vm89, 0, %v126
    %128 = vst [vmem:[%s86 + $0x120] sm:$0x1] %v127
    %v129 = vld [vmem:[%s86 + $0x138] sm:$0x1]
    %v130 = vsel %vm89, 0, %v129
    %131 = vst [vmem:[%s86 + $0x138] sm:$0x1] %v130
    %v132 = vld [vmem:[%s86 + $0x150] sm:$0x1]
    %v133 = vsel %vm89, 0, %v132
    %134 = vst [vmem:[%s86 + $0x150] sm:$0x1] %v133
    %v135 = vld [vmem:[%s86 + $0x168] sm:$0x1]
    %v136 = vsel %vm89, 0, %v135
    %137 = vst [vmem:[%s86 + $0x168] sm:$0x1] %v136
    %v138 = vld [vmem:[%s86 + $0x1b0] sm:$0x1]
    %v139 = vsel %vm89, 0, %v138
    %140 = vst [vmem:[%s86 + $0x1b0] sm:$0x1] %v139
    %v141 = vld [vmem:[%s86 + $0x1c8] sm:$0x1]
    %v142 = vsel %vm89, 0, %v141
    %143 = vst [vmem:[%s86 + $0x1c8] sm:$0x1] %v142
    %v144 = vld [vmem:[%s86 + $0x1e0] sm:$0x1]
    %v145 = vsel %vm89, 0, %v144
    %146 = vst [vmem:[%s86 + $0x1e0] sm:$0x1] %v145
    %v147 = vld [vmem:[%s86 + $0x1f8] sm:$0x1]
    %v148 = vsel %vm89, 0, %v147
    %149 = vst [vmem:[%s86 + $0x1f8] sm:$0x1] %v148
    %v150 = vld [vmem:[%s86 + $0x210] sm:$0x1]
    %v151 = vsel %vm89, 0, %v150
    %152 = vst [vmem:[%s86 + $0x210] sm:$0x1] %v151
    %v153 = vld [vmem:[%s86 + $0x228] sm:$0x1]
    %v154 = vsel %vm89, 0, %v153
    %155 = vst [vmem:[%s86 + $0x228] sm:$0x1] %v154
    %v156 = vld [vmem:[%s86 + $0x240] sm:$0x1]
    %v157 = vsel %vm89, 0, %v156
    %158 = vst [vmem:[%s86 + $0x240] sm:$0x1] %v157
    %v159 = vld [vmem:[%s86 + $0x258] sm:$0x1]
    %v160 = vsel %vm89, 0, %v159
    %161 = vst [vmem:[%s86 + $0x258] sm:$0x1] %v160
    %v162 = vld [vmem:[%s86 + $0x270] sm:$0x1]
    %v163 = vsel %vm89, 0, %v162
    %164 = vst [vmem:[%s86 + $0x270] sm:$0x1] %v163
    %v165 = vld [vmem:[%s86 + $0x288] sm:$0x1]
    %v166 = vsel %vm89, 0, %v165
    %167 = vst [vmem:[%s86 + $0x288] sm:$0x1] %v166
    %v168 = vld [vmem:[%s86 + $0x2a0] sm:$0x1]
    %v169 = vsel %vm89, 0, %v168
    %170 = vst [vmem:[%s86 + $0x2a0] sm:$0x1] %v169
    %v171 = vld [vmem:[%s86 + $0x2b8] sm:$0x1]
    %v172 = vsel %vm89, 0, %v171
    %173 = vst [vmem:[%s86 + $0x2b8] sm:$0x1] %v172
    %v174 = vld [vmem:[%s86 + $0x2d0] sm:$0x1]
    %v175 = vsel %vm89, 0, %v174
    %176 = vst [vmem:[%s86 + $0x2d0] sm:$0x1] %v175
    %v177 = vld [vmem:[%s86 + $0x2e8] sm:$0x1]
    %v178 = vsel %vm89, 0, %v177
    %179 = vst [vmem:[%s86 + $0x2e8] sm:$0x1] %v178
    %v180 = vld [vmem:[%s86 + $0x300] sm:$0x1]
    %v181 = vsel %vm89, 0, %v180
    %182 = vst [vmem:[%s86 + $0x300] sm:$0x1] %v181
    %v183 = vld [vmem:[%s86 + $0x318] sm:$0x1]
    %v184 = vsel %vm89, 0, %v183
    %185 = vst [vmem:[%s86 + $0x318] sm:$0x1] %v184
    %vm186 = vcmask 1043459
    %vm187 = vsmask.f32 7950
    %vm188 = vmand %vm186, %vm187
    %v189 = vld [vmem:[%s86 + $0x14] sm:$0x8]
    %v190 = vsel %vm188, 0, %v189
    %191 = vst [vmem:[%s86 + $0x14] sm:$0x8] %v190
    %v192 = vld [vmem:[%s86 + $0x2c] sm:$0x8]
    %v193 = vsel %vm188, 0, %v192
    %194 = vst [vmem:[%s86 + $0x2c] sm:$0x8] %v193
    %v195 = vld [vmem:[%s86 + $0x44] sm:$0x8]
    %v196 = vsel %vm188, 0, %v195
    %197 = vst [vmem:[%s86 + $0x44] sm:$0x8] %v196
    %v198 = vld [vmem:[%s86 + $0x5c] sm:$0x8]
    %v199 = vsel %vm188, 0, %v198
    %200 = vst [vmem:[%s86 + $0x5c] sm:$0x8] %v199
    %v201 = vld [vmem:[%s86 + $0x74] sm:$0x8]
    %v202 = vsel %vm188, 0, %v201
    %203 = vst [vmem:[%s86 + $0x74] sm:$0x8] %v202
    %v204 = vld [vmem:[%s86 + $0x8c] sm:$0x8]
    %v205 = vsel %vm188, 0, %v204
    %206 = vst [vmem:[%s86 + $0x8c] sm:$0x8] %v205
    %v207 = vld [vmem:[%s86 + $0xa4] sm:$0x8]
    %v208 = vsel %vm188, 0, %v207
    %209 = vst [vmem:[%s86 + $0xa4] sm:$0x8] %v208
    %v210 = vld [vmem:[%s86 + $0xbc] sm:$0x8]
    %v211 = vsel %vm188, 0, %v210
    %212 = vst [vmem:[%s86 + $0xbc] sm:$0x8] %v211
    %v213 = vld [vmem:[%s86 + $0xd4] sm:$0x8]
    %v214 = vsel %vm188, 0, %v213
    %215 = vst [vmem:[%s86 + $0xd4] sm:$0x8] %v214
    %v216 = vld [vmem:[%s86 + $0xec] sm:$0x8]
    %v217 = vsel %vm188, 0, %v216
    %218 = vst [vmem:[%s86 + $0xec] sm:$0x8] %v217
    %v219 = vld [vmem:[%s86 + $0x104] sm:$0x8]
    %v220 = vsel %vm188, 0, %v219
    %221 = vst [vmem:[%s86 + $0x104] sm:$0x8] %v220
    %v222 = vld [vmem:[%s86 + $0x11c] sm:$0x8]
    %v223 = vsel %vm188, 0, %v222
    %224 = vst [vmem:[%s86 + $0x11c] sm:$0x8] %v223
    %v225 = vld [vmem:[%s86 + $0x134] sm:$0x8]
    %v226 = vsel %vm188, 0, %v225
    %227 = vst [vmem:[%s86 + $0x134] sm:$0x8] %v226
    %v228 = vld [vmem:[%s86 + $0x14c] sm:$0x8]
    %v229 = vsel %vm188, 0, %v228
    %230 = vst [vmem:[%s86 + $0x14c] sm:$0x8] %v229
    %v231 = vld [vmem:[%s86 + $0x164] sm:$0x8]
    %v232 = vsel %vm188, 0, %v231
    %233 = vst [vmem:[%s86 + $0x164] sm:$0x8] %v232
    %v234 = vld [vmem:[%s86 + $0x17c] sm:$0x8]
    %v235 = vsel %vm188, 0, %v234
    %236 = vst [vmem:[%s86 + $0x17c] sm:$0x8] %v235
    %v237 = vld [vmem:[%s86 + $0x1c4] sm:$0x8]
    %v238 = vsel %vm188, 0, %v237
    %239 = vst [vmem:[%s86 + $0x1c4] sm:$0x8] %v238
    %v240 = vld [vmem:[%s86 + $0x1dc] sm:$0x8]
    %v241 = vsel %vm188, 0, %v240
    %242 = vst [vmem:[%s86 + $0x1dc] sm:$0x8] %v241
    %v243 = vld [vmem:[%s86 + $0x1f4] sm:$0x8]
    %v244 = vsel %vm188, 0, %v243
    %245 = vst [vmem:[%s86 + $0x1f4] sm:$0x8] %v244
    %v246 = vld [vmem:[%s86 + $0x20c] sm:$0x8]
    %v247 = vsel %vm188, 0, %v246
    %248 = vst [vmem:[%s86 + $0x20c] sm:$0x8] %v247
    %v249 = vld [vmem:[%s86 + $0x224] sm:$0x8]
    %v250 = vsel %vm188, 0, %v249
    %251 = vst [vmem:[%s86 + $0x224] sm:$0x8] %v250
    %v252 = vld [vmem:[%s86 + $0x23c] sm:$0x8]
    %v253 = vsel %vm188, 0, %v252
    %254 = vst [vmem:[%s86 + $0x23c] sm:$0x8] %v253
    %v255 = vld [vmem:[%s86 + $0x254] sm:$0x8]
    %v256 = vsel %vm188, 0, %v255
    %257 = vst [vmem:[%s86 + $0x254] sm:$0x8] %v256
    %v258 = vld [vmem:[%s86 + $0x26c] sm:$0x8]
    %v259 = vsel %vm188, 0, %v258
    %260 = vst [vmem:[%s86 + $0x26c] sm:$0x8] %v259
    %v261 = vld [vmem:[%s86 + $0x284] sm:$0x8]
    %v262 = vsel %vm188, 0, %v261
    %263 = vst [vmem:[%s86 + $0x284] sm:$0x8] %v262
    %v264 = vld [vmem:[%s86 + $0x29c] sm:$0x8]
    %v265 = vsel %vm188, 0, %v264
    %266 = vst [vmem:[%s86 + $0x29c] sm:$0x8] %v265
    %v267 = vld [vmem:[%s86 + $0x2b4] sm:$0x8]
    %v268 = vsel %vm188, 0, %v267
    %269 = vst [vmem:[%s86 + $0x2b4] sm:$0x8] %v268
    %v270 = vld [vmem:[%s86 + $0x2cc] sm:$0x8]
    %v271 = vsel %vm188, 0, %v270
    %272 = vst [vmem:[%s86 + $0x2cc] sm:$0x8] %v271
    %v273 = vld [vmem:[%s86 + $0x2e4] sm:$0x8]
    %v274 = vsel %vm188, 0, %v273
    %275 = vst [vmem:[%s86 + $0x2e4] sm:$0x8] %v274
    %v276 = vld [vmem:[%s86 + $0x2fc] sm:$0x8]
    %v277 = vsel %vm188, 0, %v276
    %278 = vst [vmem:[%s86 + $0x2fc] sm:$0x8] %v277
    %v279 = vld [vmem:[%s86 + $0x314] sm:$0x8]
    %v280 = vsel %vm188, 0, %v279
    %281 = vst [vmem:[%s86 + $0x314] sm:$0x8] %v280
    %v282 = vld [vmem:[%s86 + $0x32c] sm:$0x8]
    %v283 = vsel %vm188, 0, %v282
    %284 = vst [vmem:[%s86 + $0x32c] sm:$0x8] %v283
    %v285 = vld [vmem:[#allocation3] sm:$0xff]
    %v286 = vld [vmem:[#allocation3 + $0x8] sm:$0xff]
    %v287 = vld [vmem:[#allocation3 + $0x10] sm:$0xff]
    %v288 = vld [vmem:[#allocation3 + $0x18] sm:$0xff]
    %v289 = vld [vmem:[#allocation3 + $0x20] sm:$0xff]
    %v290 = vld [vmem:[#allocation3 + $0x28] sm:$0xff]
    %v291 = vld [vmem:[#allocation3 + $0x30] sm:$0xff]
    %v292 = vld [vmem:[#allocation3 + $0x38] sm:$0xff]
    %v293 = vld [vmem:[#allocation3 + $0x40] sm:$0xff]
    %v294 = vld [vmem:[#allocation3 + $0x48] sm:$0xff]
    %v295 = vld [vmem:[#allocation3 + $0x50] sm:$0xff]
    %v296 = vld [vmem:[#allocation3 + $0x58] sm:$0xff]
    %v297 = vld [vmem:[#allocation3 + $0x60] sm:$0xff]
    %v298 = vld [vmem:[#allocation3 + $0x68] sm:$0xff]
    %v299 = vld [vmem:[#allocation3 + $0x70] sm:$0xff]
    %v300 = vld [vmem:[#allocation3 + $0x78] sm:$0xff]
    %v301 = vld [vmem:[#allocation3 + $0x80] sm:$0xff]
    %v302 = vld [vmem:[#allocation3 + $0x88] sm:$0xff]
    %v303 = vld [vmem:[#allocation3 + $0x90] sm:$0xff]
    %v304 = vld [vmem:[#allocation3 + $0x98] sm:$0xff]
    %v305 = vld [vmem:[#allocation3 + $0xa0] sm:$0xff]
    %v306 = vld [vmem:[#allocation3 + $0xa8] sm:$0xff]
    %v307 = vld [vmem:[#allocation3 + $0xb0] sm:$0xff]
    %v308 = vld [vmem:[#allocation3 + $0xb8] sm:$0xff]
    %v309 = vld [vmem:[#allocation3 + $0xc0] sm:$0xff]
    %v310 = vld [vmem:[#allocation3 + $0xc8] sm:$0xff]
    %v311 = vld [vmem:[#allocation3 + $0xd0] sm:$0xff]
    %v312 = vld [vmem:[#allocation3 + $0xd8] sm:$0xff]
    %v313 = vld [vmem:[#allocation3 + $0xe0] sm:$0xff]
    %v314 = vld [vmem:[#allocation3 + $0xe8] sm:$0xff]
    %v315 = vld [vmem:[#allocation3 + $0xf0] sm:$0xff]
    %v316 = vld [vmem:[#allocation3 + $0xf8] sm:$0xff]
    %v317 = vld [vmem:[#allocation3 + $0x100] sm:$0xff]
    %v318 = vld [vmem:[#allocation3 + $0x108] sm:$0xff]
    %v319 = vld [vmem:[#allocation3 + $0x110] sm:$0xff]
    %v320 = vld [vmem:[#allocation3 + $0x118] sm:$0xff]
    %v321 = vld [vmem:[#allocation3 + $0x120] sm:$0xff]
    %v322 = vld [vmem:[#allocation3 + $0x128] sm:$0xff]
    %v323 = vld [vmem:[#allocation3 + $0x130] sm:$0xff]
    %v324 = vld [vmem:[#allocation3 + $0x138] sm:$0xff]
    %v325 = vld [vmem:[#allocation3 + $0x140] sm:$0xff]
    %v326 = vld [vmem:[#allocation3 + $0x148] sm:$0xff]
    %v327 = vld [vmem:[#allocation3 + $0x150] sm:$0xff]
    %v328 = vld [vmem:[#allocation3 + $0x158] sm:$0xff]
    %v329 = vld [vmem:[#allocation3 + $0x160] sm:$0xff]
    %v330 = vld [vmem:[#allocation3 + $0x168] sm:$0xff]
    %v331 = vld [vmem:[#allocation3 + $0x170] sm:$0xff]
    %v332 = vld [vmem:[#allocation3 + $0x178] sm:$0xff]
    %v333 = vld [vmem:[#allocation3 + $0x180] sm:$0xff]
    %v334 = vld [vmem:[#allocation3 + $0x188] sm:$0xff]
    %v335 = vld [vmem:[#allocation3 + $0x190] sm:$0xff]
    %v336 = vld [vmem:[#allocation3 + $0x198] sm:$0xff]
    %v337 = vld [vmem:[#allocation3 + $0x1a0] sm:$0xff]
    %v338 = vld [vmem:[#allocation3 + $0x1a8] sm:$0xff]
    %v339 = vld [vmem:[#allocation3 + $0x1b0] sm:$0xff]
    %v340 = vld [vmem:[#allocation3 + $0x1b8] sm:$0xff]
    %v341 = vld [vmem:[#allocation3 + $0x1c0] sm:$0xff]
    %v342 = vld [vmem:[#allocation3 + $0x1c8] sm:$0xff]
    %v343 = vld [vmem:[#allocation3 + $0x1d0] sm:$0xff]
    %v344 = vld [vmem:[#allocation3 + $0x1d8] sm:$0xff]
    %v345 = vld [vmem:[#allocation3 + $0x1e0] sm:$0xff]
    %v346 = vld [vmem:[#allocation3 + $0x1e8] sm:$0xff]
    %v347 = vld [vmem:[#allocation3 + $0x1f0] sm:$0xff]
    %v348 = vld [vmem:[#allocation3 + $0x1f8] sm:$0xff]
    %v349 = vpack.c.bf16 %v286, %v285
    %v350 = vpack.c.bf16 %v288, %v287
    %v351 = vpack.c.bf16 %v290, %v289
    %v352 = vpack.c.bf16 %v292, %v291
    %v353 = vpack.c.bf16 %v294, %v293
    %v354 = vpack.c.bf16 %v296, %v295
    %v355 = vpack.c.bf16 %v298, %v297
    %v356 = vpack.c.bf16 %v300, %v299
    %v357 = vpack.c.bf16 %v302, %v301
    %v358 = vpack.c.bf16 %v304, %v303
    %v359 = vpack.c.bf16 %v306, %v305
    %v360 = vpack.c.bf16 %v308, %v307
    %v361 = vpack.c.bf16 %v310, %v309
    %v362 = vpack.c.bf16 %v312, %v311
    %v363 = vpack.c.bf16 %v314, %v313
    %v364 = vpack.c.bf16 %v316, %v315
    %v365 = vpack.c.bf16 %v318, %v317
    %v366 = vpack.c.bf16 %v320, %v319
    %v367 = vpack.c.bf16 %v322, %v321
    %v368 = vpack.c.bf16 %v324, %v323
    %v369 = vpack.c.bf16 %v326, %v325
    %v370 = vpack.c.bf16 %v328, %v327
    %v371 = vpack.c.bf16 %v330, %v329
    %v372 = vpack.c.bf16 %v332, %v331
    %v373 = vpack.c.bf16 %v334, %v333
    %v374 = vpack.c.bf16 %v336, %v335
    %v375 = vpack.c.bf16 %v338, %v337
    %v376 = vpack.c.bf16 %v340, %v339
    %v377 = vpack.c.bf16 %v342, %v341
    %v378 = vpack.c.bf16 %v344, %v343
    %v379 = vpack.c.bf16 %v346, %v345
    %v380 = vpack.c.bf16 %v348, %v347
    %v413 = vunpack.c.l.b16 %v349
    %v414 = vunpack.c.h.b16 %v349
    %v415 = vunpack.c.l.b16 %v350
    %v416 = vunpack.c.h.b16 %v350
    %v417 = vunpack.c.l.b16 %v351
    %v418 = vunpack.c.h.b16 %v351
    %v419 = vunpack.c.l.b16 %v352
    %v420 = vunpack.c.h.b16 %v352
    %v421 = vunpack.c.l.b16 %v353
    %v422 = vunpack.c.h.b16 %v353
    %v423 = vunpack.c.l.b16 %v354
    %v424 = vunpack.c.h.b16 %v354
    %v425 = vunpack.c.l.b16 %v355
    %v426 = vunpack.c.h.b16 %v355
    %v427 = vunpack.c.l.b16 %v356
    %v428 = vunpack.c.h.b16 %v356
    %v429 = vunpack.c.l.b16 %v357
    %v430 = vunpack.c.h.b16 %v357
    %v431 = vunpack.c.l.b16 %v358
    %v432 = vunpack.c.h.b16 %v358
    %v433 = vunpack.c.l.b16 %v359
    %v434 = vunpack.c.h.b16 %v359
    %v435 = vunpack.c.l.b16 %v360
    %v436 = vunpack.c.h.b16 %v360
    %v437 = vunpack.c.l.b16 %v361
    %v438 = vunpack.c.h.b16 %v361
    %v439 = vunpack.c.l.b16 %v362
    %v440 = vunpack.c.h.b16 %v362
    %v441 = vunpack.c.l.b16 %v363
    %v442 = vunpack.c.h.b16 %v363
    %v443 = vunpack.c.l.b16 %v364
    %v444 = vunpack.c.h.b16 %v364
    %v445 = vunpack.c.l.b16 %v365
    %v446 = vunpack.c.h.b16 %v365
    %v447 = vunpack.c.l.b16 %v366
    %v448 = vunpack.c.h.b16 %v366
    %v449 = vunpack.c.l.b16 %v367
    %v450 = vunpack.c.h.b16 %v367
    %v451 = vunpack.c.l.b16 %v368
    %v452 = vunpack.c.h.b16 %v368
    %v453 = vunpack.c.l.b16 %v369
    %v454 = vunpack.c.h.b16 %v369
    %v455 = vunpack.c.l.b16 %v370
    %v456 = vunpack.c.h.b16 %v370
    %v457 = vunpack.c.l.b16 %v371
    %v458 = vunpack.c.h.b16 %v371
    %v459 = vunpack.c.l.b16 %v372
    %v460 = vunpack.c.h.b16 %v372
    %v461 = vunpack.c.l.b16 %v373
    %v462 = vunpack.c.h.b16 %v373
    %v463 = vunpack.c.l.b16 %v374
    %v464 = vunpack.c.h.b16 %v374
    %v465 = vunpack.c.l.b16 %v375
    %v466 = vunpack.c.h.b16 %v375
    %v467 = vunpack.c.l.b16 %v376
    %v468 = vunpack.c.h.b16 %v376
    %v469 = vunpack.c.l.b16 %v377
    %v470 = vunpack.c.h.b16 %v377
    %v471 = vunpack.c.l.b16 %v378
    %v472 = vunpack.c.h.b16 %v378
    %v473 = vunpack.c.l.b16 %v379
    %v474 = vunpack.c.h.b16 %v379
    %v475 = vunpack.c.l.b16 %v380
    %v476 = vunpack.c.h.b16 %v380
    %v477 = vpack.c.b16 %v413, %v413
    %v478 = vpack.c.b16 %v414, %v414
    %v479 = vpack.c.b16 %v415, %v415
    %v480 = vpack.c.b16 %v416, %v416
    %v481 = vpack.c.b16 %v417, %v417
    %v482 = vpack.c.b16 %v418, %v418
    %v483 = vpack.c.b16 %v419, %v419
    %v484 = vpack.c.b16 %v420, %v420
    %v485 = vpack.c.b16 %v421, %v421
    %v486 = vpack.c.b16 %v422, %v422
    %v487 = vpack.c.b16 %v423, %v423
    %v488 = vpack.c.b16 %v424, %v424
    %v489 = vpack.c.b16 %v425, %v425
    %v490 = vpack.c.b16 %v426, %v426
    %v491 = vpack.c.b16 %v427, %v427
    %v492 = vpack.c.b16 %v428, %v428
    %v493 = vpack.c.b16 %v429, %v429
    %v494 = vpack.c.b16 %v430, %v430
    %v495 = vpack.c.b16 %v431, %v431
    %v496 = vpack.c.b16 %v432, %v432
    %v497 = vpack.c.b16 %v433, %v433
    %v498 = vpack.c.b16 %v434, %v434
    %v499 = vpack.c.b16 %v435, %v435
    %v500 = vpack.c.b16 %v436, %v436
    %v501 = vpack.c.b16 %v437, %v437
    %v502 = vpack.c.b16 %v438, %v438
    %v503 = vpack.c.b16 %v439, %v439
    %v504 = vpack.c.b16 %v440, %v440
    %v505 = vpack.c.b16 %v441, %v441
    %v506 = vpack.c.b16 %v442, %v442
    %v507 = vpack.c.b16 %v443, %v443
    %v508 = vpack.c.b16 %v444, %v444
    %v509 = vpack.c.b16 %v445, %v445
    %v510 = vpack.c.b16 %v446, %v446
    %v511 = vpack.c.b16 %v447, %v447
    %v512 = vpack.c.b16 %v448, %v448
    %v513 = vpack.c.b16 %v449, %v449
    %v514 = vpack.c.b16 %v450, %v450
    %v515 = vpack.c.b16 %v451, %v451
    %v516 = vpack.c.b16 %v452, %v452
    %v517 = vpack.c.b16 %v453, %v453
    %v518 = vpack.c.b16 %v454, %v454
    %v519 = vpack.c.b16 %v455, %v455
    %v520 = vpack.c.b16 %v456, %v456
    %v521 = vpack.c.b16 %v457, %v457
    %v522 = vpack.c.b16 %v458, %v458
    %v523 = vpack.c.b16 %v459, %v459
    %v524 = vpack.c.b16 %v460, %v460
    %v525 = vpack.c.b16 %v461, %v461
    %v526 = vpack.c.b16 %v462, %v462
    %v527 = vpack.c.b16 %v463, %v463
    %v528 = vpack.c.b16 %v464, %v464
    %v529 = vpack.c.b16 %v465, %v465
    %v530 = vpack.c.b16 %v466, %v466
    %v531 = vpack.c.b16 %v467, %v467
    %v532 = vpack.c.b16 %v468, %v468
    %v533 = vpack.c.b16 %v469, %v469
    %v534 = vpack.c.b16 %v470, %v470
    %v535 = vpack.c.b16 %v471, %v471
    %v536 = vpack.c.b16 %v472, %v472
    %v537 = vpack.c.b16 %v473, %v473
    %v538 = vpack.c.b16 %v474, %v474
    %v539 = vpack.c.b16 %v475, %v475
    %v540 = vpack.c.b16 %v476, %v476
    %vm541 = vsmask.f32 4368
    %vm542 = vmor %vm88, %vm541
    %v544 = vshrl.u32 %v477, 16
    %v546 = vrot.slane %v544, 7
    %v547 = vshll.u32 %v477, 16
    %v549 = vor.u32 %v546, %v547
    %v550 = vrot.slane %v546, 4
    %v552 = vshrl.u32 %v478, 16
    %v554 = vrot.slane %v552, 7
    %v555 = vshll.u32 %v478, 16
    %v557 = vor.u32 %v554, %v555
    %v558 = vsel %vm542, %v550, %v557
    %v560 = vshrl.u32 %v479, 16
    %v562 = vrot.slane %v560, 7
    %v563 = vshll.u32 %v479, 16
    %v565 = vor.u32 %v562, %v563
    %v566 = vrot.slane %v562, 4
    %v568 = vshrl.u32 %v480, 16
    %v570 = vrot.slane %v568, 7
    %v571 = vshll.u32 %v480, 16
    %v573 = vor.u32 %v570, %v571
    %v574 = vsel %vm542, %v566, %v573
    %v576 = vshrl.u32 %v481, 16
    %v578 = vrot.slane %v576, 7
    %v579 = vshll.u32 %v481, 16
    %v581 = vor.u32 %v578, %v579
    %v582 = vrot.slane %v578, 4
    %v584 = vshrl.u32 %v482, 16
    %v586 = vrot.slane %v584, 7
    %v587 = vshll.u32 %v482, 16
    %v589 = vor.u32 %v586, %v587
    %v590 = vsel %vm542, %v582, %v589
    %v592 = vshrl.u32 %v483, 16
    %v594 = vrot.slane %v592, 7
    %v595 = vshll.u32 %v483, 16
    %v597 = vor.u32 %v594, %v595
    %v598 = vrot.slane %v594, 4
    %v600 = vshrl.u32 %v484, 16
    %v602 = vrot.slane %v600, 7
    %v603 = vshll.u32 %v484, 16
    %v605 = vor.u32 %v602, %v603
    %v606 = vsel %vm542, %v598, %v605
    %v608 = vshrl.u32 %v485, 16
    %v610 = vrot.slane %v608, 7
    %v611 = vshll.u32 %v485, 16
    %v613 = vor.u32 %v610, %v611
    %v614 = vrot.slane %v610, 4
    %v616 = vshrl.u32 %v486, 16
    %v618 = vrot.slane %v616, 7
    %v619 = vshll.u32 %v486, 16
    %v621 = vor.u32 %v618, %v619
    %v622 = vsel %vm542, %v614, %v621
    %v624 = vshrl.u32 %v487, 16
    %v626 = vrot.slane %v624, 7
    %v627 = vshll.u32 %v487, 16
    %v629 = vor.u32 %v626, %v627
    %v630 = vrot.slane %v626, 4
    %v632 = vshrl.u32 %v488, 16
    %v634 = vrot.slane %v632, 7
    %v635 = vshll.u32 %v488, 16
    %v637 = vor.u32 %v634, %v635
    %v638 = vsel %vm542, %v630, %v637
    %v640 = vshrl.u32 %v489, 16
    %v642 = vrot.slane %v640, 7
    %v643 = vshll.u32 %v489, 16
    %v645 = vor.u32 %v642, %v643
    %v646 = vrot.slane %v642, 4
    %v648 = vshrl.u32 %v490, 16
    %v650 = vrot.slane %v648, 7
    %v651 = vshll.u32 %v490, 16
    %v653 = vor.u32 %v650, %v651
    %v654 = vsel %vm542, %v646, %v653
    %v656 = vshrl.u32 %v491, 16
    %v658 = vrot.slane %v656, 7
    %v659 = vshll.u32 %v491, 16
    %v661 = vor.u32 %v658, %v659
    %v662 = vrot.slane %v658, 4
    %v664 = vshrl.u32 %v492, 16
    %v666 = vrot.slane %v664, 7
    %v667 = vshll.u32 %v492, 16
    %v669 = vor.u32 %v666, %v667
    %v670 = vsel %vm542, %v662, %v669
    %v672 = vshrl.u32 %v493, 16
    %v674 = vrot.slane %v672, 7
    %v675 = vshll.u32 %v493, 16
    %v677 = vor.u32 %v674, %v675
    %v678 = vrot.slane %v674, 4
    %v680 = vshrl.u32 %v494, 16
    %v682 = vrot.slane %v680, 7
    %v683 = vshll.u32 %v494, 16
    %v685 = vor.u32 %v682, %v683
    %v686 = vsel %vm542, %v678, %v685
    %v688 = vshrl.u32 %v495, 16
    %v690 = vrot.slane %v688, 7
    %v691 = vshll.u32 %v495, 16
    %v693 = vor.u32 %v690, %v691
    %v694 = vrot.slane %v690, 4
    %v696 = vshrl.u32 %v496, 16
    %v698 = vrot.slane %v696, 7
    %v699 = vshll.u32 %v496, 16
    %v701 = vor.u32 %v698, %v699
    %v702 = vsel %vm542, %v694, %v701
    %v704 = vshrl.u32 %v497, 16
    %v706 = vrot.slane %v704, 7
    %v707 = vshll.u32 %v497, 16
    %v709 = vor.u32 %v706, %v707
    %v710 = vrot.slane %v706, 4
    %v712 = vshrl.u32 %v498, 16
    %v714 = vrot.slane %v712, 7
    %v715 = vshll.u32 %v498, 16
    %v717 = vor.u32 %v714, %v715
    %v718 = vsel %vm542, %v710, %v717
    %v720 = vshrl.u32 %v499, 16
    %v722 = vrot.slane %v720, 7
    %v723 = vshll.u32 %v499, 16
    %v725 = vor.u32 %v722, %v723
    %v726 = vrot.slane %v722, 4
    %v728 = vshrl.u32 %v500, 16
    %v730 = vrot.slane %v728, 7
    %v731 = vshll.u32 %v500, 16
    %v733 = vor.u32 %v730, %v731
    %v734 = vsel %vm542, %v726, %v733
    %v736 = vshrl.u32 %v501, 16
    %v738 = vrot.slane %v736, 7
    %v739 = vshll.u32 %v501, 16
    %v741 = vor.u32 %v738, %v739
    %v742 = vrot.slane %v738, 4
    %v744 = vshrl.u32 %v502, 16
    %v746 = vrot.slane %v744, 7
    %v747 = vshll.u32 %v502, 16
    %v749 = vor.u32 %v746, %v747
    %v750 = vsel %vm542, %v742, %v749
    %v752 = vshrl.u32 %v503, 16
    %v754 = vrot.slane %v752, 7
    %v755 = vshll.u32 %v503, 16
    %v757 = vor.u32 %v754, %v755
    %v758 = vrot.slane %v754, 4
    %v760 = vshrl.u32 %v504, 16
    %v762 = vrot.slane %v760, 7
    %v763 = vshll.u32 %v504, 16
    %v765 = vor.u32 %v762, %v763
    %v766 = vsel %vm542, %v758, %v765
    %v768 = vshrl.u32 %v505, 16
    %v770 = vrot.slane %v768, 7
    %v771 = vshll.u32 %v505, 16
    %v773 = vor.u32 %v770, %v771
    %v774 = vrot.slane %v770, 4
    %v776 = vshrl.u32 %v506, 16
    %v778 = vrot.slane %v776, 7
    %v779 = vshll.u32 %v506, 16
    %v781 = vor.u32 %v778, %v779
    %v782 = vsel %vm542, %v774, %v781
    %v784 = vshrl.u32 %v507, 16
    %v786 = vrot.slane %v784, 7
    %v787 = vshll.u32 %v507, 16
    %v789 = vor.u32 %v786, %v787
    %v790 = vrot.slane %v786, 4
    %v792 = vshrl.u32 %v508, 16
    %v794 = vrot.slane %v792, 7
    %v795 = vshll.u32 %v508, 16
    %v797 = vor.u32 %v794, %v795
    %v798 = vsel %vm542, %v790, %v797
    %v800 = vshrl.u32 %v509, 16
    %v802 = vrot.slane %v800, 7
    %v803 = vshll.u32 %v509, 16
    %v805 = vor.u32 %v802, %v803
    %v806 = vrot.slane %v802, 4
    %v808 = vshrl.u32 %v510, 16
    %v810 = vrot.slane %v808, 7
    %v811 = vshll.u32 %v510, 16
    %v813 = vor.u32 %v810, %v811
    %v814 = vsel %vm542, %v806, %v813
    %v816 = vshrl.u32 %v511, 16
    %v818 = vrot.slane %v816, 7
    %v819 = vshll.u32 %v511, 16
    %v821 = vor.u32 %v818, %v819
    %v822 = vrot.slane %v818, 4
    %v824 = vshrl.u32 %v512, 16
    %v826 = vrot.slane %v824, 7
    %v827 = vshll.u32 %v512, 16
    %v829 = vor.u32 %v826, %v827
    %v830 = vsel %vm542, %v822, %v829
    %v832 = vshrl.u32 %v513, 16
    %v834 = vrot.slane %v832, 7
    %v835 = vshll.u32 %v513, 16
    %v837 = vor.u32 %v834, %v835
    %v838 = vrot.slane %v834, 4
    %v840 = vshrl.u32 %v514, 16
    %v842 = vrot.slane %v840, 7
    %v843 = vshll.u32 %v514, 16
    %v845 = vor.u32 %v842, %v843
    %v846 = vsel %vm542, %v838, %v845
    %v848 = vshrl.u32 %v515, 16
    %v850 = vrot.slane %v848, 7
    %v851 = vshll.u32 %v515, 16
    %v853 = vor.u32 %v850, %v851
    %v854 = vrot.slane %v850, 4
    %v856 = vshrl.u32 %v516, 16
    %v858 = vrot.slane %v856, 7
    %v859 = vshll.u32 %v516, 16
    %v861 = vor.u32 %v858, %v859
    %v862 = vsel %vm542, %v854, %v861
    %v864 = vshrl.u32 %v517, 16
    %v866 = vrot.slane %v864, 7
    %v867 = vshll.u32 %v517, 16
    %v869 = vor.u32 %v866, %v867
    %v870 = vrot.slane %v866, 4
    %v872 = vshrl.u32 %v518, 16
    %v874 = vrot.slane %v872, 7
    %v875 = vshll.u32 %v518, 16
    %v877 = vor.u32 %v874, %v875
    %v878 = vsel %vm542, %v870, %v877
    %v880 = vshrl.u32 %v519, 16
    %v882 = vrot.slane %v880, 7
    %v883 = vshll.u32 %v519, 16
    %v885 = vor.u32 %v882, %v883
    %v886 = vrot.slane %v882, 4
    %v888 = vshrl.u32 %v520, 16
    %v890 = vrot.slane %v888, 7
    %v891 = vshll.u32 %v520, 16
    %v893 = vor.u32 %v890, %v891
    %v894 = vsel %vm542, %v886, %v893
    %v896 = vshrl.u32 %v521, 16
    %v898 = vrot.slane %v896, 7
    %v899 = vshll.u32 %v521, 16
    %v901 = vor.u32 %v898, %v899
    %v902 = vrot.slane %v898, 4
    %v904 = vshrl.u32 %v522, 16
    %v906 = vrot.slane %v904, 7
    %v907 = vshll.u32 %v522, 16
    %v909 = vor.u32 %v906, %v907
    %v910 = vsel %vm542, %v902, %v909
    %v912 = vshrl.u32 %v523, 16
    %v914 = vrot.slane %v912, 7
    %v915 = vshll.u32 %v523, 16
    %v917 = vor.u32 %v914, %v915
    %v918 = vrot.slane %v914, 4
    %v920 = vshrl.u32 %v524, 16
    %v922 = vrot.slane %v920, 7
    %v923 = vshll.u32 %v524, 16
    %v925 = vor.u32 %v922, %v923
    %v926 = vsel %vm542, %v918, %v925
    %v928 = vshrl.u32 %v525, 16
    %v930 = vrot.slane %v928, 7
    %v931 = vshll.u32 %v525, 16
    %v933 = vor.u32 %v930, %v931
    %v934 = vrot.slane %v930, 4
    %v936 = vshrl.u32 %v526, 16
    %v938 = vrot.slane %v936, 7
    %v939 = vshll.u32 %v526, 16
    %v941 = vor.u32 %v938, %v939
    %v942 = vsel %vm542, %v934, %v941
    %v944 = vshrl.u32 %v527, 16
    %v946 = vrot.slane %v944, 7
    %v947 = vshll.u32 %v527, 16
    %v949 = vor.u32 %v946, %v947
    %v950 = vrot.slane %v946, 4
    %v952 = vshrl.u32 %v528, 16
    %v954 = vrot.slane %v952, 7
    %v955 = vshll.u32 %v528, 16
    %v957 = vor.u32 %v954, %v955
    %v958 = vsel %vm542, %v950, %v957
    %v960 = vshrl.u32 %v529, 16
    %v962 = vrot.slane %v960, 7
    %v963 = vshll.u32 %v529, 16
    %v965 = vor.u32 %v962, %v963
    %v966 = vrot.slane %v962, 4
    %v968 = vshrl.u32 %v530, 16
    %v970 = vrot.slane %v968, 7
    %v971 = vshll.u32 %v530, 16
    %v973 = vor.u32 %v970, %v971
    %v974 = vsel %vm542, %v966, %v973
    %v976 = vshrl.u32 %v531, 16
    %v978 = vrot.slane %v976, 7
    %v979 = vshll.u32 %v531, 16
    %v981 = vor.u32 %v978, %v979
    %v982 = vrot.slane %v978, 4
    %v984 = vshrl.u32 %v532, 16
    %v986 = vrot.slane %v984, 7
    %v987 = vshll.u32 %v532, 16
    %v989 = vor.u32 %v986, %v987
    %v990 = vsel %vm542, %v982, %v989
    %v992 = vshrl.u32 %v533, 16
    %v994 = vrot.slane %v992, 7
    %v995 = vshll.u32 %v533, 16
    %v997 = vor.u32 %v994, %v995
    %v998 = vrot.slane %v994, 4
    %v1000 = vshrl.u32 %v534, 16
    %v1002 = vrot.slane %v1000, 7
    %v1003 = vshll.u32 %v534, 16
    %v1005 = vor.u32 %v1002, %v1003
    %v1006 = vsel %vm542, %v998, %v1005
    %v1008 = vshrl.u32 %v535, 16
    %v1010 = vrot.slane %v1008, 7
    %v1011 = vshll.u32 %v535, 16
    %v1013 = vor.u32 %v1010, %v1011
    %v1014 = vrot.slane %v1010, 4
    %v1016 = vshrl.u32 %v536, 16
    %v1018 = vrot.slane %v1016, 7
    %v1019 = vshll.u32 %v536, 16
    %v1021 = vor.u32 %v1018, %v1019
    %v1022 = vsel %vm542, %v1014, %v1021
    %v1024 = vshrl.u32 %v537, 16
    %v1026 = vrot.slane %v1024, 7
    %v1027 = vshll.u32 %v537, 16
    %v1029 = vor.u32 %v1026, %v1027
    %v1030 = vrot.slane %v1026, 4
    %v1032 = vshrl.u32 %v538, 16
    %v1034 = vrot.slane %v1032, 7
    %v1035 = vshll.u32 %v538, 16
    %v1037 = vor.u32 %v1034, %v1035
    %v1038 = vsel %vm542, %v1030, %v1037
    %v1040 = vshrl.u32 %v539, 16
    %v1042 = vrot.slane %v1040, 7
    %v1043 = vshll.u32 %v539, 16
    %v1045 = vor.u32 %v1042, %v1043
    %v1046 = vrot.slane %v1042, 4
    %v1048 = vshrl.u32 %v540, 16
    %v1050 = vrot.slane %v1048, 7
    %v1051 = vshll.u32 %v540, 16
    %v1053 = vor.u32 %v1050, %v1051
    %v1054 = vsel %vm542, %v1046, %v1053
    %vm1119 = vcmask 1043456
    %vm1120 = vsmask.f32 7938
    %vm1121 = vmand %vm1119, %vm1120
    %v1122 = vld [vmem:[%s86] sm:$0xf]
    %v1123 = vsel %vm1121, %v549, %v1122
    %1124 = vst [vmem:[%s86] sm:$0xf] %v1123
    %1125 = vst [vmem:[%s86 + $0xc] sm:$0xf] %v558
    %v1126 = vld [vmem:[%s86 + $0x18] sm:$0xf]
    %v1127 = vsel %vm1121, %v565, %v1126
    %1128 = vst [vmem:[%s86 + $0x18] sm:$0xf] %v1127
    %1129 = vst [vmem:[%s86 + $0x24] sm:$0xf] %v574
    %v1130 = vld [vmem:[%s86 + $0x30] sm:$0xf]
    %v1131 = vsel %vm1121, %v581, %v1130
    %1132 = vst [vmem:[%s86 + $0x30] sm:$0xf] %v1131
    %1133 = vst [vmem:[%s86 + $0x3c] sm:$0xf] %v590
    %v1134 = vld [vmem:[%s86 + $0x48] sm:$0xf]
    %v1135 = vsel %vm1121, %v597, %v1134
    %1136 = vst [vmem:[%s86 + $0x48] sm:$0xf] %v1135
    %1137 = vst [vmem:[%s86 + $0x54] sm:$0xf] %v606
    %v1138 = vld [vmem:[%s86 + $0x60] sm:$0xf]
    %v1139 = vsel %vm1121, %v613, %v1138
    %1140 = vst [vmem:[%s86 + $0x60] sm:$0xf] %v1139
    %1141 = vst [vmem:[%s86 + $0x6c] sm:$0xf] %v622
    %v1142 = vld [vmem:[%s86 + $0x78] sm:$0xf]
    %v1143 = vsel %vm1121, %v629, %v1142
    %1144 = vst [vmem:[%s86 + $0x78] sm:$0xf] %v1143
    %1145 = vst [vmem:[%s86 + $0x84] sm:$0xf] %v638
    %v1146 = vld [vmem:[%s86 + $0x90] sm:$0xf]
    %v1147 = vsel %vm1121, %v645, %v1146
    %1148 = vst [vmem:[%s86 + $0x90] sm:$0xf] %v1147
    %1149 = vst [vmem:[%s86 + $0x9c] sm:$0xf] %v654
    %v1150 = vld [vmem:[%s86 + $0xa8] sm:$0xf]
    %v1151 = vsel %vm1121, %v661, %v1150
    %1152 = vst [vmem:[%s86 + $0xa8] sm:$0xf] %v1151
    %1153 = vst [vmem:[%s86 + $0xb4] sm:$0xf] %v670
    %v1154 = vld [vmem:[%s86 + $0xc0] sm:$0xf]
    %v1155 = vsel %vm1121, %v677, %v1154
    %1156 = vst [vmem:[%s86 + $0xc0] sm:$0xf] %v1155
    %1157 = vst [vmem:[%s86 + $0xcc] sm:$0xf] %v686
    %v1158 = vld [vmem:[%s86 + $0xd8] sm:$0xf]
    %v1159 = vsel %vm1121, %v693, %v1158
    %1160 = vst [vmem:[%s86 + $0xd8] sm:$0xf] %v1159
    %1161 = vst [vmem:[%s86 + $0xe4] sm:$0xf] %v702
    %v1162 = vld [vmem:[%s86 + $0xf0] sm:$0xf]
    %v1163 = vsel %vm1121, %v709, %v1162
    %1164 = vst [vmem:[%s86 + $0xf0] sm:$0xf] %v1163
    %1165 = vst [vmem:[%s86 + $0xfc] sm:$0xf] %v718
    %v1166 = vld [vmem:[%s86 + $0x108] sm:$0xf]
    %v1167 = vsel %vm1121, %v725, %v1166
    %1168 = vst [vmem:[%s86 + $0x108] sm:$0xf] %v1167
    %1169 = vst [vmem:[%s86 + $0x114] sm:$0xf] %v734
    %v1170 = vld [vmem:[%s86 + $0x120] sm:$0xf]
    %v1171 = vsel %vm1121, %v741, %v1170
    %1172 = vst [vmem:[%s86 + $0x120] sm:$0xf] %v1171
    %1173 = vst [vmem:[%s86 + $0x12c] sm:$0xf] %v750
    %v1174 = vld [vmem:[%s86 + $0x138] sm:$0xf]
    %v1175 = vsel %vm1121, %v757, %v1174
    %1176 = vst [vmem:[%s86 + $0x138] sm:$0xf] %v1175
    %1177 = vst [vmem:[%s86 + $0x144] sm:$0xf] %v766
    %v1178 = vld [vmem:[%s86 + $0x150] sm:$0xf]
    %v1179 = vsel %vm1121, %v773, %v1178
    %1180 = vst [vmem:[%s86 + $0x150] sm:$0xf] %v1179
    %1181 = vst [vmem:[%s86 + $0x15c] sm:$0xf] %v782
    %v1182 = vld [vmem:[%s86 + $0x168] sm:$0xf]
    %v1183 = vsel %vm1121, %v789, %v1182
    %1184 = vst [vmem:[%s86 + $0x168] sm:$0xf] %v1183
    %1185 = vst [vmem:[%s86 + $0x174] sm:$0xf] %v798
    %v1186 = vld [vmem:[%s86 + $0x1b0] sm:$0xf]
    %v1187 = vsel %vm1121, %v805, %v1186
    %1188 = vst [vmem:[%s86 + $0x1b0] sm:$0xf] %v1187
    %1189 = vst [vmem:[%s86 + $0x1bc] sm:$0xf] %v814
    %v1190 = vld [vmem:[%s86 + $0x1c8] sm:$0xf]
    %v1191 = vsel %vm1121, %v821, %v1190
    %1192 = vst [vmem:[%s86 + $0x1c8] sm:$0xf] %v1191
    %1193 = vst [vmem:[%s86 + $0x1d4] sm:$0xf] %v830
    %v1194 = vld [vmem:[%s86 + $0x1e0] sm:$0xf]
    %v1195 = vsel %vm1121, %v837, %v1194
    %1196 = vst [vmem:[%s86 + $0x1e0] sm:$0xf] %v1195
    %1197 = vst [vmem:[%s86 + $0x1ec] sm:$0xf] %v846
    %v1198 = vld [vmem:[%s86 + $0x1f8] sm:$0xf]
    %v1199 = vsel %vm1121, %v853, %v1198
    %1200 = vst [vmem:[%s86 + $0x1f8] sm:$0xf] %v1199
    %1201 = vst [vmem:[%s86 + $0x204] sm:$0xf] %v862
    %v1202 = vld [vmem:[%s86 + $0x210] sm:$0xf]
    %v1203 = vsel %vm1121, %v869, %v1202
    %1204 = vst [vmem:[%s86 + $0x210] sm:$0xf] %v1203
    %1205 = vst [vmem:[%s86 + $0x21c] sm:$0xf] %v878
    %v1206 = vld [vmem:[%s86 + $0x228] sm:$0xf]
    %v1207 = vsel %vm1121, %v885, %v1206
    %1208 = vst [vmem:[%s86 + $0x228] sm:$0xf] %v1207
    %1209 = vst [vmem:[%s86 + $0x234] sm:$0xf] %v894
    %v1210 = vld [vmem:[%s86 + $0x240] sm:$0xf]
    %v1211 = vsel %vm1121, %v901, %v1210
    %1212 = vst [vmem:[%s86 + $0x240] sm:$0xf] %v1211
    %1213 = vst [vmem:[%s86 + $0x24c] sm:$0xf] %v910
    %v1214 = vld [vmem:[%s86 + $0x258] sm:$0xf]
    %v1215 = vsel %vm1121, %v917, %v1214
    %1216 = vst [vmem:[%s86 + $0x258] sm:$0xf] %v1215
    %1217 = vst [vmem:[%s86 + $0x264] sm:$0xf] %v926
    %v1218 = vld [vmem:[%s86 + $0x270] sm:$0xf]
    %v1219 = vsel %vm1121, %v933, %v1218
    %1220 = vst [vmem:[%s86 + $0x270] sm:$0xf] %v1219
    %1221 = vst [vmem:[%s86 + $0x27c] sm:$0xf] %v942
    %v1222 = vld [vmem:[%s86 + $0x288] sm:$0xf]
    %v1223 = vsel %vm1121, %v949, %v1222
    %1224 = vst [vmem:[%s86 + $0x288] sm:$0xf] %v1223
    %1225 = vst [vmem:[%s86 + $0x294] sm:$0xf] %v958
    %v1226 = vld [vmem:[%s86 + $0x2a0] sm:$0xf]
    %v1227 = vsel %vm1121, %v965, %v1226
    %1228 = vst [vmem:[%s86 + $0x2a0] sm:$0xf] %v1227
    %1229 = vst [vmem:[%s86 + $0x2ac] sm:$0xf] %v974
    %v1230 = vld [vmem:[%s86 + $0x2b8] sm:$0xf]
    %v1231 = vsel %vm1121, %v981, %v1230
    %1232 = vst [vmem:[%s86 + $0x2b8] sm:$0xf] %v1231
    %1233 = vst [vmem:[%s86 + $0x2c4] sm:$0xf] %v990
    %v1234 = vld [vmem:[%s86 + $0x2d0] sm:$0xf]
    %v1235 = vsel %vm1121, %v997, %v1234
    %1236 = vst [vmem:[%s86 + $0x2d0] sm:$0xf] %v1235
    %1237 = vst [vmem:[%s86 + $0x2dc] sm:$0xf] %v1006
    %v1238 = vld [vmem:[%s86 + $0x2e8] sm:$0xf]
    %v1239 = vsel %vm1121, %v1013, %v1238
    %1240 = vst [vmem:[%s86 + $0x2e8] sm:$0xf] %v1239
    %1241 = vst [vmem:[%s86 + $0x2f4] sm:$0xf] %v1022
    %v1242 = vld [vmem:[%s86 + $0x300] sm:$0xf]
    %v1243 = vsel %vm1121, %v1029, %v1242
    %1244 = vst [vmem:[%s86 + $0x300] sm:$0xf] %v1243
    %1245 = vst [vmem:[%s86 + $0x30c] sm:$0xf] %v1038
    %v1246 = vld [vmem:[%s86 + $0x318] sm:$0xf]
    %v1247 = vsel %vm1121, %v1045, %v1246
    %1248 = vst [vmem:[%s86 + $0x318] sm:$0xf] %v1247
    %1249 = vst [vmem:[%s86 + $0x324] sm:$0xf] %v1054
    %1314 = vst [vmem:[%s86 + $0x4] sm:$0xf] %v477
    %1315 = vst [vmem:[%s86 + $0x10] sm:$0xf] %v478
    %1316 = vst [vmem:[%s86 + $0x1c] sm:$0xf] %v479
    %1317 = vst [vmem:[%s86 + $0x28] sm:$0xf] %v480
    %1318 = vst [vmem:[%s86 + $0x34] sm:$0xf] %v481
    %1319 = vst [vmem:[%s86 + $0x40] sm:$0xf] %v482
    %1320 = vst [vmem:[%s86 + $0x4c] sm:$0xf] %v483
    %1321 = vst [vmem:[%s86 + $0x58] sm:$0xf] %v484
    %1322 = vst [vmem:[%s86 + $0x64] sm:$0xf] %v485
    %1323 = vst [vmem:[%s86 + $0x70] sm:$0xf] %v486
    %1324 = vst [vmem:[%s86 + $0x7c] sm:$0xf] %v487
    %1325 = vst [vmem:[%s86 + $0x88] sm:$0xf] %v488
    %1326 = vst [vmem:[%s86 + $0x94] sm:$0xf] %v489
    %1327 = vst [vmem:[%s86 + $0xa0] sm:$0xf] %v490
    %1328 = vst [vmem:[%s86 + $0xac] sm:$0xf] %v491
    %1329 = vst [vmem:[%s86 + $0xb8] sm:$0xf] %v492
    %1330 = vst [vmem:[%s86 + $0xc4] sm:$0xf] %v493
    %1331 = vst [vmem:[%s86 + $0xd0] sm:$0xf] %v494
    %1332 = vst [vmem:[%s86 + $0xdc] sm:$0xf] %v495
    %1333 = vst [vmem:[%s86 + $0xe8] sm:$0xf] %v496
    %1334 = vst [vmem:[%s86 + $0xf4] sm:$0xf] %v497
    %1335 = vst [vmem:[%s86 + $0x100] sm:$0xf] %v498
    %1336 = vst [vmem:[%s86 + $0x10c] sm:$0xf] %v499
    %1337 = vst [vmem:[%s86 + $0x118] sm:$0xf] %v500
    %1338 = vst [vmem:[%s86 + $0x124] sm:$0xf] %v501
    %1339 = vst [vmem:[%s86 + $0x130] sm:$0xf] %v502
    %1340 = vst [vmem:[%s86 + $0x13c] sm:$0xf] %v503
    %1341 = vst [vmem:[%s86 + $0x148] sm:$0xf] %v504
    %1342 = vst [vmem:[%s86 + $0x154] sm:$0xf] %v505
    %1343 = vst [vmem:[%s86 + $0x160] sm:$0xf] %v506
    %1344 = vst [vmem:[%s86 + $0x16c] sm:$0xf] %v507
    %1345 = vst [vmem:[%s86 + $0x178] sm:$0xf] %v508
    %1346 = vst [vmem:[%s86 + $0x1b4] sm:$0xf] %v509
    %1347 = vst [vmem:[%s86 + $0x1c0] sm:$0xf] %v510
    %1348 = vst [vmem:[%s86 + $0x1cc] sm:$0xf] %v511
    %1349 = vst [vmem:[%s86 + $0x1d8] sm:$0xf] %v512
    %1350 = vst [vmem:[%s86 + $0x1e4] sm:$0xf] %v513
    %1351 = vst [vmem:[%s86 + $0x1f0] sm:$0xf] %v514
    %1352 = vst [vmem:[%s86 + $0x1fc] sm:$0xf] %v515
    %1353 = vst [vmem:[%s86 + $0x208] sm:$0xf] %v516
    %1354 = vst [vmem:[%s86 + $0x214] sm:$0xf] %v517
    %1355 = vst [vmem:[%s86 + $0x220] sm:$0xf] %v518
    %1356 = vst [vmem:[%s86 + $0x22c] sm:$0xf] %v519
    %1357 = vst [vmem:[%s86 + $0x238] sm:$0xf] %v520
    %1358 = vst [vmem:[%s86 + $0x244] sm:$0xf] %v521
    %1359 = vst [vmem:[%s86 + $0x250] sm:$0xf] %v522
    %1360 = vst [vmem:[%s86 + $0x25c] sm:$0xf] %v523
    %1361 = vst [vmem:[%s86 + $0x268] sm:$0xf] %v524
    %1362 = vst [vmem:[%s86 + $0x274] sm:$0xf] %v525
    %1363 = vst [vmem:[%s86 + $0x280] sm:$0xf] %v526
    %1364 = vst [vmem:[%s86 + $0x28c] sm:$0xf] %v527
    %1365 = vst [vmem:[%s86 + $0x298] sm:$0xf] %v528
    %1366 = vst [vmem:[%s86 + $0x2a4] sm:$0xf] %v529
    %1367 = vst [vmem:[%s86 + $0x2b0] sm:$0xf] %v530
    %1368 = vst [vmem:[%s86 + $0x2bc] sm:$0xf] %v531
    %1369 = vst [vmem:[%s86 + $0x2c8] sm:$0xf] %v532
    %1370 = vst [vmem:[%s86 + $0x2d4] sm:$0xf] %v533
    %1371 = vst [vmem:[%s86 + $0x2e0] sm:$0xf] %v534
    %1372 = vst [vmem:[%s86 + $0x2ec] sm:$0xf] %v535
    %1373 = vst [vmem:[%s86 + $0x2f8] sm:$0xf] %v536
    %1374 = vst [vmem:[%s86 + $0x304] sm:$0xf] %v537
    %1375 = vst [vmem:[%s86 + $0x310] sm:$0xf] %v538
    %1376 = vst [vmem:[%s86 + $0x31c] sm:$0xf] %v539
    %1377 = vst [vmem:[%s86 + $0x328] sm:$0xf] %v540
    %vm1378 = vsmask.f32 3328
    %vm1379 = vsmask.f32 7440
    %vm1380 = vmor %vm1378, %vm1379
    %v1381 = vrot.slane %v544, 4
    %v1382 = vrot.slane %v547, 5
    %v1383 = vor.u32 %v1381, %v1382
    %v1384 = vrot.slane %v1383, 4
    %v1385 = vrot.slane %v555, 5
    %v1386 = vsel %vm1380, %v1384, %v1385
    %v1387 = vrot.slane %v552, 4
    %v1388 = vor.u32 %v1387, %v1385
    %v1389 = vrot.slane %v1388, 4
    %v1390 = vrot.slane %v560, 4
    %v1391 = vrot.slane %v563, 5
    %v1392 = vor.u32 %v1390, %v1391
    %v1393 = vrot.slane %v1392, 4
    %v1394 = vrot.slane %v571, 5
    %v1395 = vsel %vm1380, %v1393, %v1394
    %v1396 = vrot.slane %v568, 4
    %v1397 = vor.u32 %v1396, %v1394
    %v1398 = vrot.slane %v1397, 4
    %v1399 = vrot.slane %v576, 4
    %v1400 = vrot.slane %v579, 5
    %v1401 = vor.u32 %v1399, %v1400
    %v1402 = vrot.slane %v1401, 4
    %v1403 = vrot.slane %v587, 5
    %v1404 = vsel %vm1380, %v1402, %v1403
    %v1405 = vrot.slane %v584, 4
    %v1406 = vor.u32 %v1405, %v1403
    %v1407 = vrot.slane %v1406, 4
    %v1408 = vrot.slane %v592, 4
    %v1409 = vrot.slane %v595, 5
    %v1410 = vor.u32 %v1408, %v1409
    %v1411 = vrot.slane %v1410, 4
    %v1412 = vrot.slane %v603, 5
    %v1413 = vsel %vm1380, %v1411, %v1412
    %v1414 = vrot.slane %v600, 4
    %v1415 = vor.u32 %v1414, %v1412
    %v1416 = vrot.slane %v1415, 4
    %v1417 = vrot.slane %v608, 4
    %v1418 = vrot.slane %v611, 5
    %v1419 = vor.u32 %v1417, %v1418
    %v1420 = vrot.slane %v1419, 4
    %v1421 = vrot.slane %v619, 5
    %v1422 = vsel %vm1380, %v1420, %v1421
    %v1423 = vrot.slane %v616, 4
    %v1424 = vor.u32 %v1423, %v1421
    %v1425 = vrot.slane %v1424, 4
    %v1426 = vrot.slane %v624, 4
    %v1427 = vrot.slane %v627, 5
    %v1428 = vor.u32 %v1426, %v1427
    %v1429 = vrot.slane %v1428, 4
    %v1430 = vrot.slane %v635, 5
    %v1431 = vsel %vm1380, %v1429, %v1430
    %v1432 = vrot.slane %v632, 4
    %v1433 = vor.u32 %v1432, %v1430
    %v1434 = vrot.slane %v1433, 4
    %v1435 = vrot.slane %v640, 4
    %v1436 = vrot.slane %v643, 5
    %v1437 = vor.u32 %v1435, %v1436
    %v1438 = vrot.slane %v1437, 4
    %v1439 = vrot.slane %v651, 5
    %v1440 = vsel %vm1380, %v1438, %v1439
    %v1441 = vrot.slane %v648, 4
    %v1442 = vor.u32 %v1441, %v1439
    %v1443 = vrot.slane %v1442, 4
    %v1444 = vrot.slane %v656, 4
    %v1445 = vrot.slane %v659, 5
    %v1446 = vor.u32 %v1444, %v1445
    %v1447 = vrot.slane %v1446, 4
    %v1448 = vrot.slane %v667, 5
    %v1449 = vsel %vm1380, %v1447, %v1448
    %v1450 = vrot.slane %v664, 4
    %v1451 = vor.u32 %v1450, %v1448
    %v1452 = vrot.slane %v1451, 4
    %v1453 = vrot.slane %v672, 4
    %v1454 = vrot.slane %v675, 5
    %v1455 = vor.u32 %v1453, %v1454
    %v1456 = vrot.slane %v1455, 4
    %v1457 = vrot.slane %v683, 5
    %v1458 = vsel %vm1380, %v1456, %v1457
    %v1459 = vrot.slane %v680, 4
    %v1460 = vor.u32 %v1459, %v1457
    %v1461 = vrot.slane %v1460, 4
    %v1462 = vrot.slane %v688, 4
    %v1463 = vrot.slane %v691, 5
    %v1464 = vor.u32 %v1462, %v1463
    %v1465 = vrot.slane %v1464, 4
    %v1466 = vrot.slane %v699, 5
    %v1467 = vsel %vm1380, %v1465, %v1466
    %v1468 = vrot.slane %v696, 4
    %v1469 = vor.u32 %v1468, %v1466
    %v1470 = vrot.slane %v1469, 4
    %v1471 = vrot.slane %v704, 4
    %v1472 = vrot.slane %v707, 5
    %v1473 = vor.u32 %v1471, %v1472
    %v1474 = vrot.slane %v1473, 4
    %v1475 = vrot.slane %v715, 5
    %v1476 = vsel %vm1380, %v1474, %v1475
    %v1477 = vrot.slane %v712, 4
    %v1478 = vor.u32 %v1477, %v1475
    %v1479 = vrot.slane %v1478, 4
    %v1480 = vrot.slane %v720, 4
    %v1481 = vrot.slane %v723, 5
    %v1482 = vor.u32 %v1480, %v1481
    %v1483 = vrot.slane %v1482, 4
    %v1484 = vrot.slane %v731, 5
    %v1485 = vsel %vm1380, %v1483, %v1484
    %v1486 = vrot.slane %v728, 4
    %v1487 = vor.u32 %v1486, %v1484
    %v1488 = vrot.slane %v1487, 4
    %v1489 = vrot.slane %v736, 4
    %v1490 = vrot.slane %v739, 5
    %v1491 = vor.u32 %v1489, %v1490
    %v1492 = vrot.slane %v1491, 4
    %v1493 = vrot.slane %v747, 5
    %v1494 = vsel %vm1380, %v1492, %v1493
    %v1495 = vrot.slane %v744, 4
    %v1496 = vor.u32 %v1495, %v1493
    %v1497 = vrot.slane %v1496, 4
    %v1498 = vrot.slane %v752, 4
    %v1499 = vrot.slane %v755, 5
    %v1500 = vor.u32 %v1498, %v1499
    %v1501 = vrot.slane %v1500, 4
    %v1502 = vrot.slane %v763, 5
    %v1503 = vsel %vm1380, %v1501, %v1502
    %v1504 = vrot.slane %v760, 4
    %v1505 = vor.u32 %v1504, %v1502
    %v1506 = vrot.slane %v1505, 4
    %v1507 = vrot.slane %v768, 4
    %v1508 = vrot.slane %v771, 5
    %v1509 = vor.u32 %v1507, %v1508
    %v1510 = vrot.slane %v1509, 4
    %v1511 = vrot.slane %v779, 5
    %v1512 = vsel %vm1380, %v1510, %v1511
    %v1513 = vrot.slane %v776, 4
    %v1514 = vor.u32 %v1513, %v1511
    %v1515 = vrot.slane %v1514, 4
    %v1516 = vrot.slane %v784, 4
    %v1517 = vrot.slane %v787, 5
    %v1518 = vor.u32 %v1516, %v1517
    %v1519 = vrot.slane %v1518, 4
    %v1520 = vrot.slane %v795, 5
    %v1521 = vsel %vm1380, %v1519, %v1520
    %v1522 = vrot.slane %v792, 4
    %v1523 = vor.u32 %v1522, %v1520
    %v1524 = vrot.slane %v1523, 4
    %v1525 = vrot.slane %v800, 4
    %v1526 = vrot.slane %v803, 5
    %v1527 = vor.u32 %v1525, %v1526
    %v1528 = vrot.slane %v1527, 4
    %v1529 = vrot.slane %v811, 5
    %v1530 = vsel %vm1380, %v1528, %v1529
    %v1531 = vrot.slane %v808, 4
    %v1532 = vor.u32 %v1531, %v1529
    %v1533 = vrot.slane %v1532, 4
    %v1534 = vrot.slane %v816, 4
    %v1535 = vrot.slane %v819, 5
    %v1536 = vor.u32 %v1534, %v1535
    %v1537 = vrot.slane %v1536, 4
    %v1538 = vrot.slane %v827, 5
    %v1539 = vsel %vm1380, %v1537, %v1538
    %v1540 = vrot.slane %v824, 4
    %v1541 = vor.u32 %v1540, %v1538
    %v1542 = vrot.slane %v1541, 4
    %v1543 = vrot.slane %v832, 4
    %v1544 = vrot.slane %v835, 5
    %v1545 = vor.u32 %v1543, %v1544
    %v1546 = vrot.slane %v1545, 4
    %v1547 = vrot.slane %v843, 5
    %v1548 = vsel %vm1380, %v1546, %v1547
    %v1549 = vrot.slane %v840, 4
    %v1550 = vor.u32 %v1549, %v1547
    %v1551 = vrot.slane %v1550, 4
    %v1552 = vrot.slane %v848, 4
    %v1553 = vrot.slane %v851, 5
    %v1554 = vor.u32 %v1552, %v1553
    %v1555 = vrot.slane %v1554, 4
    %v1556 = vrot.slane %v859, 5
    %v1557 = vsel %vm1380, %v1555, %v1556
    %v1558 = vrot.slane %v856, 4
    %v1559 = vor.u32 %v1558, %v1556
    %v1560 = vrot.slane %v1559, 4
    %v1561 = vrot.slane %v864, 4
    %v1562 = vrot.slane %v867, 5
    %v1563 = vor.u32 %v1561, %v1562
    %v1564 = vrot.slane %v1563, 4
    %v1565 = vrot.slane %v875, 5
    %v1566 = vsel %vm1380, %v1564, %v1565
    %v1567 = vrot.slane %v872, 4
    %v1568 = vor.u32 %v1567, %v1565
    %v1569 = vrot.slane %v1568, 4
    %v1570 = vrot.slane %v880, 4
    %v1571 = vrot.slane %v883, 5
    %v1572 = vor.u32 %v1570, %v1571
    %v1573 = vrot.slane %v1572, 4
    %v1574 = vrot.slane %v891, 5
    %v1575 = vsel %vm1380, %v1573, %v1574
    %v1576 = vrot.slane %v888, 4
    %v1577 = vor.u32 %v1576, %v1574
    %v1578 = vrot.slane %v1577, 4
    %v1579 = vrot.slane %v896, 4
    %v1580 = vrot.slane %v899, 5
    %v1581 = vor.u32 %v1579, %v1580
    %v1582 = vrot.slane %v1581, 4
    %v1583 = vrot.slane %v907, 5
    %v1584 = vsel %vm1380, %v1582, %v1583
    %v1585 = vrot.slane %v904, 4
    %v1586 = vor.u32 %v1585, %v1583
    %v1587 = vrot.slane %v1586, 4
    %v1588 = vrot.slane %v912, 4
    %v1589 = vrot.slane %v915, 5
    %v1590 = vor.u32 %v1588, %v1589
    %v1591 = vrot.slane %v1590, 4
    %v1592 = vrot.slane %v923, 5
    %v1593 = vsel %vm1380, %v1591, %v1592
    %v1594 = vrot.slane %v920, 4
    %v1595 = vor.u32 %v1594, %v1592
    %v1596 = vrot.slane %v1595, 4
    %v1597 = vrot.slane %v928, 4
    %v1598 = vrot.slane %v931, 5
    %v1599 = vor.u32 %v1597, %v1598
    %v1600 = vrot.slane %v1599, 4
    %v1601 = vrot.slane %v939, 5
    %v1602 = vsel %vm1380, %v1600, %v1601
    %v1603 = vrot.slane %v936, 4
    %v1604 = vor.u32 %v1603, %v1601
    %v1605 = vrot.slane %v1604, 4
    %v1606 = vrot.slane %v944, 4
    %v1607 = vrot.slane %v947, 5
    %v1608 = vor.u32 %v1606, %v1607
    %v1609 = vrot.slane %v1608, 4
    %v1610 = vrot.slane %v955, 5
    %v1611 = vsel %vm1380, %v1609, %v1610
    %v1612 = vrot.slane %v952, 4
    %v1613 = vor.u32 %v1612, %v1610
    %v1614 = vrot.slane %v1613, 4
    %v1615 = vrot.slane %v960, 4
    %v1616 = vrot.slane %v963, 5
    %v1617 = vor.u32 %v1615, %v1616
    %v1618 = vrot.slane %v1617, 4
    %v1619 = vrot.slane %v971, 5
    %v1620 = vsel %vm1380, %v1618, %v1619
    %v1621 = vrot.slane %v968, 4
    %v1622 = vor.u32 %v1621, %v1619
    %v1623 = vrot.slane %v1622, 4
    %v1624 = vrot.slane %v976, 4
    %v1625 = vrot.slane %v979, 5
    %v1626 = vor.u32 %v1624, %v1625
    %v1627 = vrot.slane %v1626, 4
    %v1628 = vrot.slane %v987, 5
    %v1629 = vsel %vm1380, %v1627, %v1628
    %v1630 = vrot.slane %v984, 4
    %v1631 = vor.u32 %v1630, %v1628
    %v1632 = vrot.slane %v1631, 4
    %v1633 = vrot.slane %v992, 4
    %v1634 = vrot.slane %v995, 5
    %v1635 = vor.u32 %v1633, %v1634
    %v1636 = vrot.slane %v1635, 4
    %v1637 = vrot.slane %v1003, 5
    %v1638 = vsel %vm1380, %v1636, %v1637
    %v1639 = vrot.slane %v1000, 4
    %v1640 = vor.u32 %v1639, %v1637
    %v1641 = vrot.slane %v1640, 4
    %v1642 = vrot.slane %v1008, 4
    %v1643 = vrot.slane %v1011, 5
    %v1644 = vor.u32 %v1642, %v1643
    %v1645 = vrot.slane %v1644, 4
    %v1646 = vrot.slane %v1019, 5
    %v1647 = vsel %vm1380, %v1645, %v1646
    %v1648 = vrot.slane %v1016, 4
    %v1649 = vor.u32 %v1648, %v1646
    %v1650 = vrot.slane %v1649, 4
    %v1651 = vrot.slane %v1024, 4
    %v1652 = vrot.slane %v1027, 5
    %v1653 = vor.u32 %v1651, %v1652
    %v1654 = vrot.slane %v1653, 4
    %v1655 = vrot.slane %v1035, 5
    %v1656 = vsel %vm1380, %v1654, %v1655
    %v1657 = vrot.slane %v1032, 4
    %v1658 = vor.u32 %v1657, %v1655
    %v1659 = vrot.slane %v1658, 4
    %v1660 = vrot.slane %v1040, 4
    %v1661 = vrot.slane %v1043, 5
    %v1662 = vor.u32 %v1660, %v1661
    %v1663 = vrot.slane %v1662, 4
    %v1664 = vrot.slane %v1051, 5
    %v1665 = vsel %vm1380, %v1663, %v1664
    %v1666 = vrot.slane %v1048, 4
    %v1667 = vor.u32 %v1666, %v1664
    %v1668 = vrot.slane %v1667, 4
    %1733 = vst [vmem:[%s86 + $0x8] sm:$0xf] %v1386
    %vm1734 = vmand %vm1119, %vm1378
    %v1735 = vld [vmem:[%s86 + $0x14] sm:$0xf]
    %v1736 = vsel %vm1734, %v1389, %v1735
    %1737 = vst [vmem:[%s86 + $0x14] sm:$0xf] %v1736
    %1738 = vst [vmem:[%s86 + $0x20] sm:$0xf] %v1395
    %v1739 = vld [vmem:[%s86 + $0x2c] sm:$0xf]
    %v1740 = vsel %vm1734, %v1398, %v1739
    %1741 = vst [vmem:[%s86 + $0x2c] sm:$0xf] %v1740
    %1742 = vst [vmem:[%s86 + $0x38] sm:$0xf] %v1404
    %v1743 = vld [vmem:[%s86 + $0x44] sm:$0xf]
    %v1744 = vsel %vm1734, %v1407, %v1743
    %1745 = vst [vmem:[%s86 + $0x44] sm:$0xf] %v1744
    %1746 = vst [vmem:[%s86 + $0x50] sm:$0xf] %v1413
    %v1747 = vld [vmem:[%s86 + $0x5c] sm:$0xf]
    %v1748 = vsel %vm1734, %v1416, %v1747
    %1749 = vst [vmem:[%s86 + $0x5c] sm:$0xf] %v1748
    %1750 = vst [vmem:[%s86 + $0x68] sm:$0xf] %v1422
    %v1751 = vld [vmem:[%s86 + $0x74] sm:$0xf]
    %v1752 = vsel %vm1734, %v1425, %v1751
    %1753 = vst [vmem:[%s86 + $0x74] sm:$0xf] %v1752
    %1754 = vst [vmem:[%s86 + $0x80] sm:$0xf] %v1431
    %v1755 = vld [vmem:[%s86 + $0x8c] sm:$0xf]
    %v1756 = vsel %vm1734, %v1434, %v1755
    %1757 = vst [vmem:[%s86 + $0x8c] sm:$0xf] %v1756
    %1758 = vst [vmem:[%s86 + $0x98] sm:$0xf] %v1440
    %v1759 = vld [vmem:[%s86 + $0xa4] sm:$0xf]
    %v1760 = vsel %vm1734, %v1443, %v1759
    %1761 = vst [vmem:[%s86 + $0xa4] sm:$0xf] %v1760
    %1762 = vst [vmem:[%s86 + $0xb0] sm:$0xf] %v1449
    %v1763 = vld [vmem:[%s86 + $0xbc] sm:$0xf]
    %v1764 = vsel %vm1734, %v1452, %v1763
    %1765 = vst [vmem:[%s86 + $0xbc] sm:$0xf] %v1764
    %1766 = vst [vmem:[%s86 + $0xc8] sm:$0xf] %v1458
    %v1767 = vld [vmem:[%s86 + $0xd4] sm:$0xf]
    %v1768 = vsel %vm1734, %v1461, %v1767
    %1769 = vst [vmem:[%s86 + $0xd4] sm:$0xf] %v1768
    %1770 = vst [vmem:[%s86 + $0xe0] sm:$0xf] %v1467
    %v1771 = vld [vmem:[%s86 + $0xec] sm:$0xf]
    %v1772 = vsel %vm1734, %v1470, %v1771
    %1773 = vst [vmem:[%s86 + $0xec] sm:$0xf] %v1772
    %1774 = vst [vmem:[%s86 + $0xf8] sm:$0xf] %v1476
    %v1775 = vld [vmem:[%s86 + $0x104] sm:$0xf]
    %v1776 = vsel %vm1734, %v1479, %v1775
    %1777 = vst [vmem:[%s86 + $0x104] sm:$0xf] %v1776
    %1778 = vst [vmem:[%s86 + $0x110] sm:$0xf] %v1485
    %v1779 = vld [vmem:[%s86 + $0x11c] sm:$0xf]
    %v1780 = vsel %vm1734, %v1488, %v1779
    %1781 = vst [vmem:[%s86 + $0x11c] sm:$0xf] %v1780
    %1782 = vst [vmem:[%s86 + $0x128] sm:$0xf] %v1494
    %v1783 = vld [vmem:[%s86 + $0x134] sm:$0xf]
    %v1784 = vsel %vm1734, %v1497, %v1783
    %1785 = vst [vmem:[%s86 + $0x134] sm:$0xf] %v1784
    %1786 = vst [vmem:[%s86 + $0x140] sm:$0xf] %v1503
    %v1787 = vld [vmem:[%s86 + $0x14c] sm:$0xf]
    %v1788 = vsel %vm1734, %v1506, %v1787
    %1789 = vst [vmem:[%s86 + $0x14c] sm:$0xf] %v1788
    %1790 = vst [vmem:[%s86 + $0x158] sm:$0xf] %v1512
    %v1791 = vld [vmem:[%s86 + $0x164] sm:$0xf]
    %v1792 = vsel %vm1734, %v1515, %v1791
    %1793 = vst [vmem:[%s86 + $0x164] sm:$0xf] %v1792
    %1794 = vst [vmem:[%s86 + $0x170] sm:$0xf] %v1521
    %v1795 = vld [vmem:[%s86 + $0x17c] sm:$0xf]
    %v1796 = vsel %vm1734, %v1524, %v1795
    %1797 = vst [vmem:[%s86 + $0x17c] sm:$0xf] %v1796
    %1798 = vst [vmem:[%s86 + $0x1b8] sm:$0xf] %v1530
    %v1799 = vld [vmem:[%s86 + $0x1c4] sm:$0xf]
    %v1800 = vsel %vm1734, %v1533, %v1799
    %1801 = vst [vmem:[%s86 + $0x1c4] sm:$0xf] %v1800
    %1802 = vst [vmem:[%s86 + $0x1d0] sm:$0xf] %v1539
    %v1803 = vld [vmem:[%s86 + $0x1dc] sm:$0xf]
    %v1804 = vsel %vm1734, %v1542, %v1803
    %1805 = vst [vmem:[%s86 + $0x1dc] sm:$0xf] %v1804
    %1806 = vst [vmem:[%s86 + $0x1e8] sm:$0xf] %v1548
    %v1807 = vld [vmem:[%s86 + $0x1f4] sm:$0xf]
    %v1808 = vsel %vm1734, %v1551, %v1807
    %1809 = vst [vmem:[%s86 + $0x1f4] sm:$0xf] %v1808
    %1810 = vst [vmem:[%s86 + $0x200] sm:$0xf] %v1557
    %v1811 = vld [vmem:[%s86 + $0x20c] sm:$0xf]
    %v1812 = vsel %vm1734, %v1560, %v1811
    %1813 = vst [vmem:[%s86 + $0x20c] sm:$0xf] %v1812
    %1814 = vst [vmem:[%s86 + $0x218] sm:$0xf] %v1566
    %v1815 = vld [vmem:[%s86 + $0x224] sm:$0xf]
    %v1816 = vsel %vm1734, %v1569, %v1815
    %1817 = vst [vmem:[%s86 + $0x224] sm:$0xf] %v1816
    %1818 = vst [vmem:[%s86 + $0x230] sm:$0xf] %v1575
    %v1819 = vld [vmem:[%s86 + $0x23c] sm:$0xf]
    %v1820 = vsel %vm1734, %v1578, %v1819
    %1821 = vst [vmem:[%s86 + $0x23c] sm:$0xf] %v1820
    %1822 = vst [vmem:[%s86 + $0x248] sm:$0xf] %v1584
    %v1823 = vld [vmem:[%s86 + $0x254] sm:$0xf]
    %v1824 = vsel %vm1734, %v1587, %v1823
    %1825 = vst [vmem:[%s86 + $0x254] sm:$0xf] %v1824
    %1826 = vst [vmem:[%s86 + $0x260] sm:$0xf] %v1593
    %v1827 = vld [vmem:[%s86 + $0x26c] sm:$0xf]
    %v1828 = vsel %vm1734, %v1596, %v1827
    %1829 = vst [vmem:[%s86 + $0x26c] sm:$0xf] %v1828
    %1830 = vst [vmem:[%s86 + $0x278] sm:$0xf] %v1602
    %v1831 = vld [vmem:[%s86 + $0x284] sm:$0xf]
    %v1832 = vsel %vm1734, %v1605, %v1831
    %1833 = vst [vmem:[%s86 + $0x284] sm:$0xf] %v1832
    %1834 = vst [vmem:[%s86 + $0x290] sm:$0xf] %v1611
    %v1835 = vld [vmem:[%s86 + $0x29c] sm:$0xf]
    %v1836 = vsel %vm1734, %v1614, %v1835
    %1837 = vst [vmem:[%s86 + $0x29c] sm:$0xf] %v1836
    %1838 = vst [vmem:[%s86 + $0x2a8] sm:$0xf] %v1620
    %v1839 = vld [vmem:[%s86 + $0x2b4] sm:$0xf]
    %v1840 = vsel %vm1734, %v1623, %v1839
    %1841 = vst [vmem:[%s86 + $0x2b4] sm:$0xf] %v1840
    %1842 = vst [vmem:[%s86 + $0x2c0] sm:$0xf] %v1629
    %v1843 = vld [vmem:[%s86 + $0x2cc] sm:$0xf]
    %v1844 = vsel %vm1734, %v1632, %v1843
    %1845 = vst [vmem:[%s86 + $0x2cc] sm:$0xf] %v1844
    %1846 = vst [vmem:[%s86 + $0x2d8] sm:$0xf] %v1638
    %v1847 = vld [vmem:[%s86 + $0x2e4] sm:$0xf]
    %v1848 = vsel %vm1734, %v1641, %v1847
    %1849 = vst [vmem:[%s86 + $0x2e4] sm:$0xf] %v1848
    %1850 = vst [vmem:[%s86 + $0x2f0] sm:$0xf] %v1647
    %v1851 = vld [vmem:[%s86 + $0x2fc] sm:$0xf]
    %v1852 = vsel %vm1734, %v1650, %v1851
    %1853 = vst [vmem:[%s86 + $0x2fc] sm:$0xf] %v1852
    %1854 = vst [vmem:[%s86 + $0x308] sm:$0xf] %v1656
    %v1855 = vld [vmem:[%s86 + $0x314] sm:$0xf]
    %v1856 = vsel %vm1734, %v1659, %v1855
    %1857 = vst [vmem:[%s86 + $0x314] sm:$0xf] %v1856
    %1858 = vst [vmem:[%s86 + $0x320] sm:$0xf] %v1665
    %v1859 = vld [vmem:[%s86 + $0x32c] sm:$0xf]
    %v1860 = vsel %vm1734, %v1668, %v1859
    %1861 = vst [vmem:[%s86 + $0x32c] sm:$0xf] %v1860
    %v1862 = vld [vmem:[#allocation6] sm:$0xf]
    %v1863 = vld [vmem:[#allocation6 + $0x4] sm:$0xf]
    %v1864 = vld [vmem:[#allocation6 + $0x8] sm:$0xf]
    %v1865 = vld [vmem:[#allocation6 + $0xc] sm:$0xf]
    %v1866 = vld [vmem:[#allocation6 + $0x10] sm:$0xf]
    %v1867 = vld [vmem:[#allocation6 + $0x14] sm:$0xf]
    %v1868 = vld [vmem:[#allocation6 + $0x18] sm:$0xf]
    %v1869 = vld [vmem:[#allocation6 + $0x1c] sm:$0xf]
    %v1870 = vld [vmem:[#allocation6 + $0x20] sm:$0xf]
    %v1871 = vld [vmem:[#allocation6 + $0x24] sm:$0xf]
    %v1872 = vld [vmem:[#allocation6 + $0x28] sm:$0xf]
    %v1873 = vld [vmem:[#allocation6 + $0x2c] sm:$0xf]
    %v1874 = vld [vmem:[#allocation6 + $0x30] sm:$0xf]
    %v1875 = vld [vmem:[#allocation6 + $0x34] sm:$0xf]
    %v1876 = vld [vmem:[#allocation6 + $0x38] sm:$0xf]
    %v1877 = vld [vmem:[#allocation6 + $0x3c] sm:$0xf]
    %v1878 = vld [vmem:[#allocation6 + $0x40] sm:$0xf]
    %v1879 = vld [vmem:[#allocation6 + $0x44] sm:$0xf]
    %v1880 = vld [vmem:[#allocation6 + $0x48] sm:$0xf]
    %v1881 = vld [vmem:[#allocation6 + $0x4c] sm:$0xf]
    %v1882 = vld [vmem:[#allocation6 + $0x50] sm:$0xf]
    %v1883 = vld [vmem:[#allocation6 + $0x54] sm:$0xf]
    %v1884 = vld [vmem:[#allocation6 + $0x58] sm:$0xf]
    %v1885 = vld [vmem:[#allocation6 + $0x5c] sm:$0xf]
    %v1886 = vld [vmem:[#allocation6 + $0x60] sm:$0xf]
    %v1887 = vld [vmem:[#allocation6 + $0x64] sm:$0xf]
    %v1888 = vld [vmem:[#allocation6 + $0x68] sm:$0xf]
    %v1889 = vld [vmem:[#allocation6 + $0x6c] sm:$0xf]
    %v1890 = vld [vmem:[#allocation6 + $0x70] sm:$0xf]
    %v1891 = vld [vmem:[#allocation6 + $0x74] sm:$0xf]
    %v1892 = vld [vmem:[#allocation6 + $0x78] sm:$0xf]
    %v1893 = vld [vmem:[#allocation6 + $0x7c] sm:$0xf]
    %v1894 = vld [vmem:[#allocation6 + $0x80] sm:$0xf]
    %v1895 = vld [vmem:[#allocation6 + $0x84] sm:$0xf]
    %v1896 = vld [vmem:[#allocation6 + $0x88] sm:$0xf]
    %v1897 = vld [vmem:[#allocation6 + $0x8c] sm:$0xf]
    %v1898 = vld [vmem:[#allocation6 + $0x90] sm:$0xf]
    %v1899 = vld [vmem:[#allocation6 + $0x94] sm:$0xf]
    %v1900 = vld [vmem:[#allocation6 + $0x98] sm:$0xf]
    %v1901 = vld [vmem:[#allocation6 + $0x9c] sm:$0xf]
    %v1902 = vld [vmem:[#allocation6 + $0xa0] sm:$0xf]
    %v1903 = vld [vmem:[#allocation6 + $0xa4] sm:$0xf]
    %v1904 = vld [vmem:[#allocation6 + $0xa8] sm:$0xf]
    %v1905 = vld [vmem:[#allocation6 + $0xac] sm:$0xf]
    %v1906 = vld [vmem:[#allocation6 + $0xb0] sm:$0xf]
    %v1907 = vld [vmem:[#allocation6 + $0xb4] sm:$0xf]
    %v1908 = vld [vmem:[#allocation6 + $0xb8] sm:$0xf]
    %v1909 = vld [vmem:[#allocation6 + $0xbc] sm:$0xf]
    %v1910 = vld [vmem:[#allocation6 + $0xc0] sm:$0xf]
    %v1911 = vld [vmem:[#allocation6 + $0xc4] sm:$0xf]
    %v1912 = vld [vmem:[#allocation6 + $0xc8] sm:$0xf]
    %v1913 = vld [vmem:[#allocation6 + $0xcc] sm:$0xf]
    %v1914 = vld [vmem:[#allocation6 + $0xd0] sm:$0xf]
    %v1915 = vld [vmem:[#allocation6 + $0xd4] sm:$0xf]
    %v1916 = vld [vmem:[#allocation6 + $0xd8] sm:$0xf]
    %v1917 = vld [vmem:[#allocation6 + $0xdc] sm:$0xf]
    %v1918 = vld [vmem:[#allocation6 + $0xe0] sm:$0xf]
    %v1919 = vld [vmem:[#allocation6 + $0xe4] sm:$0xf]
    %v1920 = vld [vmem:[#allocation6 + $0xe8] sm:$0xf]
    %v1921 = vld [vmem:[#allocation6 + $0xec] sm:$0xf]
    %v1922 = vld [vmem:[#allocation6 + $0xf0] sm:$0xf]
    %v1923 = vld [vmem:[#allocation6 + $0xf4] sm:$0xf]
    %v1924 = vld [vmem:[#allocation6 + $0xf8] sm:$0xf]
    %v1925 = vld [vmem:[#allocation6 + $0xfc] sm:$0xf]
    %v1926 = vld [vmem:[#allocation6 + $0x100] sm:$0xf]
    %v1927 = vld [vmem:[#allocation6 + $0x104] sm:$0xf]
    %v1928 = vld [vmem:[#allocation6 + $0x108] sm:$0xf]
    %v1929 = vld [vmem:[#allocation6 + $0x10c] sm:$0xf]
    %v1930 = vld [vmem:[#allocation6 + $0x110] sm:$0xf]
    %v1931 = vld [vmem:[#allocation6 + $0x114] sm:$0xf]
    %v1932 = vld [vmem:[#allocation6 + $0x118] sm:$0xf]
    %v1933 = vld [vmem:[#allocation6 + $0x11c] sm:$0xf]
    %v1934 = vld [vmem:[#allocation6 + $0x120] sm:$0xf]
    %v1935 = vld [vmem:[#allocation6 + $0x124] sm:$0xf]
    %v1936 = vld [vmem:[#allocation6 + $0x128] sm:$0xf]
    %v1937 = vld [vmem:[#allocation6 + $0x12c] sm:$0xf]
    %v1938 = vld [vmem:[#allocation6 + $0x130] sm:$0xf]
    %v1939 = vld [vmem:[#allocation6 + $0x134] sm:$0xf]
    %v1940 = vld [vmem:[#allocation6 + $0x138] sm:$0xf]
    %v1941 = vld [vmem:[#allocation6 + $0x13c] sm:$0xf]
    %v1942 = vld [vmem:[#allocation6 + $0x140] sm:$0xf]
    %v1943 = vld [vmem:[#allocation6 + $0x144] sm:$0xf]
    %v1944 = vld [vmem:[#allocation6 + $0x148] sm:$0xf]
    %v1945 = vld [vmem:[#allocation6 + $0x14c] sm:$0xf]
    %v1946 = vld [vmem:[#allocation6 + $0x150] sm:$0xf]
    %v1947 = vld [vmem:[#allocation6 + $0x154] sm:$0xf]
    %v1948 = vld [vmem:[#allocation6 + $0x158] sm:$0xf]
    %v1949 = vld [vmem:[#allocation6 + $0x15c] sm:$0xf]
    %v1950 = vld [vmem:[#allocation6 + $0x160] sm:$0xf]
    %v1951 = vld [vmem:[#allocation6 + $0x164] sm:$0xf]
    %v1952 = vld [vmem:[#allocation6 + $0x168] sm:$0xf]
    %v1953 = vld [vmem:[#allocation6 + $0x16c] sm:$0xf]
    %v1954 = vld [vmem:[#allocation6 + $0x170] sm:$0xf]
    %v1955 = vld [vmem:[#allocation6 + $0x174] sm:$0xf]
    %v1956 = vld [vmem:[#allocation6 + $0x178] sm:$0xf]
    %v1957 = vld [vmem:[#allocation6 + $0x17c] sm:$0xf]
    %v1958 = vld [vmem:[#allocation6 + $0x180] sm:$0xf]
    %v1959 = vld [vmem:[#allocation6 + $0x184] sm:$0xf]
    %v1960 = vld [vmem:[#allocation6 + $0x188] sm:$0xf]
    %v1961 = vld [vmem:[#allocation6 + $0x18c] sm:$0xf]
    %v1962 = vld [vmem:[#allocation6 + $0x190] sm:$0xf]
    %v1963 = vld [vmem:[#allocation6 + $0x194] sm:$0xf]
    %v1964 = vld [vmem:[#allocation6 + $0x198] sm:$0xf]
    %v1965 = vld [vmem:[#allocation6 + $0x19c] sm:$0xf]
    %v1966 = vld [vmem:[#allocation6 + $0x1a0] sm:$0xf]
    %v1967 = vld [vmem:[#allocation6 + $0x1a4] sm:$0xf]
    %v1968 = vld [vmem:[#allocation6 + $0x1a8] sm:$0xf]
    %v1969 = vld [vmem:[#allocation6 + $0x1ac] sm:$0xf]
    %v1970 = vld [vmem:[#allocation6 + $0x1b0] sm:$0xf]
    %v1971 = vld [vmem:[#allocation6 + $0x1b4] sm:$0xf]
    %v1972 = vld [vmem:[#allocation6 + $0x1b8] sm:$0xf]
    %v1973 = vld [vmem:[#allocation6 + $0x1bc] sm:$0xf]
    %v1974 = vld [vmem:[#allocation6 + $0x1c0] sm:$0xf]
    %v1975 = vld [vmem:[#allocation6 + $0x1c4] sm:$0xf]
    %v1976 = vld [vmem:[#allocation6 + $0x1c8] sm:$0xf]
    %v1977 = vld [vmem:[#allocation6 + $0x1cc] sm:$0xf]
    %v1978 = vld [vmem:[#allocation6 + $0x1d0] sm:$0xf]
    %v1979 = vld [vmem:[#allocation6 + $0x1d4] sm:$0xf]
    %v1980 = vld [vmem:[#allocation6 + $0x1d8] sm:$0xf]
    %v1981 = vld [vmem:[#allocation6 + $0x1dc] sm:$0xf]
    %v1982 = vld [vmem:[#allocation6 + $0x1e0] sm:$0xf]
    %v1983 = vld [vmem:[#allocation6 + $0x1e4] sm:$0xf]
    %v1984 = vld [vmem:[#allocation6 + $0x1e8] sm:$0xf]
    %v1985 = vld [vmem:[#allocation6 + $0x1ec] sm:$0xf]
    %v1986 = vld [vmem:[#allocation6 + $0x1f0] sm:$0xf]
    %v1987 = vld [vmem:[#allocation6 + $0x1f4] sm:$0xf]
    %v1988 = vld [vmem:[#allocation6 + $0x1f8] sm:$0xf]
    %v1989 = vld [vmem:[#allocation6 + $0x1fc] sm:$0xf]
    %v1990 = vld [vmem:[#allocation6 + $0x200] sm:$0xf]
    %v1991 = vld [vmem:[#allocation6 + $0x204] sm:$0xf]
    %v1992 = vld [vmem:[#allocation6 + $0x208] sm:$0xf]
    %v1993 = vld [vmem:[#allocation6 + $0x20c] sm:$0xf]
    %v1994 = vld [vmem:[#allocation6 + $0x210] sm:$0xf]
    %v1995 = vld [vmem:[#allocation6 + $0x214] sm:$0xf]
    %v1996 = vld [vmem:[#allocation6 + $0x218] sm:$0xf]
    %v1997 = vld [vmem:[#allocation6 + $0x21c] sm:$0xf]
    %v1998 = vld [vmem:[#allocation6 + $0x220] sm:$0xf]
    %v1999 = vld [vmem:[#allocation6 + $0x224] sm:$0xf]
    %v2000 = vld [vmem:[#allocation6 + $0x228] sm:$0xf]
    %v2001 = vld [vmem:[#allocation6 + $0x22c] sm:$0xf]
    %v2002 = vld [vmem:[#allocation6 + $0x230] sm:$0xf]
    %v2003 = vld [vmem:[#allocation6 + $0x234] sm:$0xf]
    %v2004 = vld [vmem:[#allocation6 + $0x238] sm:$0xf]
    %v2005 = vld [vmem:[#allocation6 + $0x23c] sm:$0xf]
    %v2006 = vld [vmem:[#allocation2] sm:$0xff]
    %v2007 = vld [vmem:[#allocation2 + $0x8] sm:$0xf]
    %v2008 = vld [vmem:[#allocation2 + $0xc] sm:$0xff]
    %v2009 = vld [vmem:[#allocation2 + $0x14] sm:$0xf]
    %v2010 = vld [vmem:[#allocation2 + $0x18] sm:$0xff]
    %v2011 = vld [vmem:[#allocation2 + $0x20] sm:$0xf]
    %v2012 = vld [vmem:[#allocation2 + $0x24] sm:$0xff]
    %v2013 = vld [vmem:[#allocation2 + $0x2c] sm:$0xf]
    %v2014 = vld [vmem:[#allocation2 + $0x30] sm:$0xff]
    %v2015 = vld [vmem:[#allocation2 + $0x38] sm:$0xf]
    %v2016 = vld [vmem:[#allocation2 + $0x3c] sm:$0xff]
    %v2017 = vld [vmem:[#allocation2 + $0x44] sm:$0xf]
    %v2018 = vld [vmem:[#allocation2 + $0x48] sm:$0xff]
    %v2019 = vld [vmem:[#allocation2 + $0x50] sm:$0xf]
    %v2020 = vld [vmem:[#allocation2 + $0x54] sm:$0xff]
    %v2021 = vld [vmem:[#allocation2 + $0x5c] sm:$0xf]
    %v2022 = vld [vmem:[#allocation2 + $0x60] sm:$0xff]
    %v2023 = vld [vmem:[#allocation2 + $0x68] sm:$0xf]
    %v2024 = vld [vmem:[#allocation2 + $0x6c] sm:$0xff]
    %v2025 = vld [vmem:[#allocation2 + $0x74] sm:$0xf]
    %v2026 = vld [vmem:[#allocation2 + $0x78] sm:$0xff]
    %v2027 = vld [vmem:[#allocation2 + $0x80] sm:$0xf]
    %v2028 = vld [vmem:[#allocation2 + $0x84] sm:$0xff]
    %v2029 = vld [vmem:[#allocation2 + $0x8c] sm:$0xf]
    %v2030 = vld [vmem:[#allocation2 + $0x90] sm:$0xff]
    %v2031 = vld [vmem:[#allocation2 + $0x98] sm:$0xf]
    %v2032 = vld [vmem:[#allocation2 + $0x9c] sm:$0xff]
    %v2033 = vld [vmem:[#allocation2 + $0xa4] sm:$0xf]
    %v2034 = vld [vmem:[#allocation2 + $0xa8] sm:$0xff]
    %v2035 = vld [vmem:[#allocation2 + $0xb0] sm:$0xf]
    %v2036 = vld [vmem:[#allocation2 + $0xb4] sm:$0xff]
    %v2037 = vld [vmem:[#allocation2 + $0xbc] sm:$0xf]
    %v2038 = vld [vmem:[#allocation2 + $0xc0] sm:$0xff]
    %v2039 = vld [vmem:[#allocation2 + $0xc8] sm:$0xf]
    %v2040 = vld [vmem:[#allocation2 + $0xcc] sm:$0xff]
    %v2041 = vld [vmem:[#allocation2 + $0xd4] sm:$0xf]
    %v2042 = vld [vmem:[#allocation2 + $0xd8] sm:$0xff]
    %v2043 = vld [vmem:[#allocation2 + $0xe0] sm:$0xf]
    %v2044 = vld [vmem:[#allocation2 + $0xe4] sm:$0xff]
    %v2045 = vld [vmem:[#allocation2 + $0xec] sm:$0xf]
    %v2046 = vld [vmem:[#allocation2 + $0xf0] sm:$0xff]
    %v2047 = vld [vmem:[#allocation2 + $0xf8] sm:$0xf]
    %v2048 = vld [vmem:[#allocation2 + $0xfc] sm:$0xff]
    %v2049 = vld [vmem:[#allocation2 + $0x104] sm:$0xf]
    %v2050 = vld [vmem:[#allocation2 + $0x108] sm:$0xff]
    %v2051 = vld [vmem:[#allocation2 + $0x110] sm:$0xf]
    %v2052 = vld [vmem:[#allocation2 + $0x114] sm:$0xff]
    %v2053 = vld [vmem:[#allocation2 + $0x11c] sm:$0xf]
    %v2054 = vld [vmem:[#allocation2 + $0x120] sm:$0xff]
    %v2055 = vld [vmem:[#allocation2 + $0x128] sm:$0xf]
    %v2056 = vld [vmem:[#allocation2 + $0x12c] sm:$0xff]
    %v2057 = vld [vmem:[#allocation2 + $0x134] sm:$0xf]
    %v2058 = vld [vmem:[#allocation2 + $0x138] sm:$0xff]
    %v2059 = vld [vmem:[#allocation2 + $0x140] sm:$0xf]
    %v2060 = vld [vmem:[#allocation2 + $0x144] sm:$0xff]
    %v2061 = vld [vmem:[#allocation2 + $0x14c] sm:$0xf]
    %v2062 = vld [vmem:[#allocation2 + $0x150] sm:$0xff]
    %v2063 = vld [vmem:[#allocation2 + $0x158] sm:$0xf]
    %v2064 = vld [vmem:[#allocation2 + $0x15c] sm:$0xff]
    %v2065 = vld [vmem:[#allocation2 + $0x164] sm:$0xf]
    %v2066 = vld [vmem:[#allocation2 + $0x168] sm:$0xff]
    %v2067 = vld [vmem:[#allocation2 + $0x170] sm:$0xf]
    %v2068 = vld [vmem:[#allocation2 + $0x174] sm:$0xff]
    %v2069 = vld [vmem:[#allocation2 + $0x17c] sm:$0xf]
    %v2070 = vld [vmem:[#allocation2 + $0x1b0] sm:$0xff]
    %v2071 = vld [vmem:[#allocation2 + $0x1b8] sm:$0xf]
    %v2072 = vld [vmem:[#allocation2 + $0x1bc] sm:$0xff]
    %v2073 = vld [vmem:[#allocation2 + $0x1c4] sm:$0xf]
    %v2074 = vld [vmem:[#allocation2 + $0x1c8] sm:$0xff]
    %v2075 = vld [vmem:[#allocation2 + $0x1d0] sm:$0xf]
    %v2076 = vld [vmem:[#allocation2 + $0x1d4] sm:$0xff]
    %v2077 = vld [vmem:[#allocation2 + $0x1dc] sm:$0xf]
    %v2078 = vld [vmem:[#allocation2 + $0x1e0] sm:$0xff]
    %v2079 = vld [vmem:[#allocation2 + $0x1e8] sm:$0xf]
    %v2080 = vld [vmem:[#allocation2 + $0x1ec] sm:$0xff]
    %v2081 = vld [vmem:[#allocation2 + $0x1f4] sm:$0xf]
    %v2082 = vld [vmem:[#allocation2 + $0x1f8] sm:$0xff]
    %v2083 = vld [vmem:[#allocation2 + $0x200] sm:$0xf]
    %v2084 = vld [vmem:[#allocation2 + $0x204] sm:$0xff]
    %v2085 = vld [vmem:[#allocation2 + $0x20c] sm:$0xf]
    %v2086 = vld [vmem:[#allocation2 + $0x210] sm:$0xff]
    %v2087 = vld [vmem:[#allocation2 + $0x218] sm:$0xf]
    %v2088 = vld [vmem:[#allocation2 + $0x21c] sm:$0xff]
    %v2089 = vld [vmem:[#allocation2 + $0x224] sm:$0xf]
    %v2090 = vld [vmem:[#allocation2 + $0x228] sm:$0xff]
    %v2091 = vld [vmem:[#allocation2 + $0x230] sm:$0xf]
    %v2092 = vld [vmem:[#allocation2 + $0x234] sm:$0xff]
    %v2093 = vld [vmem:[#allocation2 + $0x23c] sm:$0xf]
    %v2094 = vld [vmem:[#allocation2 + $0x240] sm:$0xff]
    %v2095 = vld [vmem:[#allocation2 + $0x248] sm:$0xf]
    %v2096 = vld [vmem:[#allocation2 + $0x24c] sm:$0xff]
    %v2097 = vld [vmem:[#allocation2 + $0x254] sm:$0xf]
    %v2098 = vld [vmem:[#allocation2 + $0x258] sm:$0xff]
    %v2099 = vld [vmem:[#allocation2 + $0x260] sm:$0xf]
    %v2100 = vld [vmem:[#allocation2 + $0x264] sm:$0xff]
    %v2101 = vld [vmem:[#allocation2 + $0x26c] sm:$0xf]
    %v2102 = vld [vmem:[#allocation2 + $0x270] sm:$0xff]
    %v2103 = vld [vmem:[#allocation2 + $0x278] sm:$0xf]
    %v2104 = vld [vmem:[#allocation2 + $0x27c] sm:$0xff]
    %v2105 = vld [vmem:[#allocation2 + $0x284] sm:$0xf]
    %v2106 = vld [vmem:[#allocation2 + $0x288] sm:$0xff]
    %v2107 = vld [vmem:[#allocation2 + $0x290] sm:$0xf]
    %v2108 = vld [vmem:[#allocation2 + $0x294] sm:$0xff]
    %v2109 = vld [vmem:[#allocation2 + $0x29c] sm:$0xf]
    %v2110 = vld [vmem:[#allocation2 + $0x2a0] sm:$0xff]
    %v2111 = vld [vmem:[#allocation2 + $0x2a8] sm:$0xf]
    %v2112 = vld [vmem:[#allocation2 + $0x2ac] sm:$0xff]
    %v2113 = vld [vmem:[#allocation2 + $0x2b4] sm:$0xf]
    %v2114 = vld [vmem:[#allocation2 + $0x2b8] sm:$0xff]
    %v2115 = vld [vmem:[#allocation2 + $0x2c0] sm:$0xf]
    %v2116 = vld [vmem:[#allocation2 + $0x2c4] sm:$0xff]
    %v2117 = vld [vmem:[#allocation2 + $0x2cc] sm:$0xf]
    %v2118 = vld [vmem:[#allocation2 + $0x2d0] sm:$0xff]
    %v2119 = vld [vmem:[#allocation2 + $0x2d8] sm:$0xf]
    %v2120 = vld [vmem:[#allocation2 + $0x2dc] sm:$0xff]
    %v2121 = vld [vmem:[#allocation2 + $0x2e4] sm:$0xf]
    %v2122 = vld [vmem:[#allocation2 + $0x2e8] sm:$0xff]
    %v2123 = vld [vmem:[#allocation2 + $0x2f0] sm:$0xf]
    %v2124 = vld [vmem:[#allocation2 + $0x2f4] sm:$0xff]
    %v2125 = vld [vmem:[#allocation2 + $0x2fc] sm:$0xf]
    %v2126 = vld [vmem:[#allocation2 + $0x300] sm:$0xff]
    %v2127 = vld [vmem:[#allocation2 + $0x308] sm:$0xf]
    %v2128 = vld [vmem:[#allocation2 + $0x30c] sm:$0xff]
    %v2129 = vld [vmem:[#allocation2 + $0x314] sm:$0xf]
    %v2130 = vld [vmem:[#allocation2 + $0x318] sm:$0xff]
    %v2131 = vld [vmem:[#allocation2 + $0x320] sm:$0xf]
    %v2132 = vld [vmem:[#allocation2 + $0x324] sm:$0xff]
    %v2133 = vld [vmem:[#allocation2 + $0x32c] sm:$0xf]
    %v2134 = vld [vmem:[%s86] sm:$0xff]
    %v2135 = vld [vmem:[%s86 + $0x8] sm:$0xf]
    %v2136 = vld [vmem:[%s86 + $0xc] sm:$0xff]
    %v2137 = vld [vmem:[%s86 + $0x14] sm:$0xf]
    %v2138 = vld [vmem:[%s86 + $0x18] sm:$0xff]
    %v2139 = vld [vmem:[%s86 + $0x20] sm:$0xf]
    %v2140 = vld [vmem:[%s86 + $0x24] sm:$0xff]
    %v2141 = vld [vmem:[%s86 + $0x2c] sm:$0xf]
    %v2142 = vld [vmem:[%s86 + $0x30] sm:$0xff]
    %v2143 = vld [vmem:[%s86 + $0x38] sm:$0xf]
    %v2144 = vld [vmem:[%s86 + $0x3c] sm:$0xff]
    %v2145 = vld [vmem:[%s86 + $0x44] sm:$0xf]
    %v2146 = vld [vmem:[%s86 + $0x48] sm:$0xff]
    %v2147 = vld [vmem:[%s86 + $0x50] sm:$0xf]
    %v2148 = vld [vmem:[%s86 + $0x54] sm:$0xff]
    %v2149 = vld [vmem:[%s86 + $0x5c] sm:$0xf]
    %v2150 = vld [vmem:[%s86 + $0x60] sm:$0xff]
    %v2151 = vld [vmem:[%s86 + $0x68] sm:$0xf]
    %v2152 = vld [vmem:[%s86 + $0x6c] sm:$0xff]
    %v2153 = vld [vmem:[%s86 + $0x74] sm:$0xf]
    %v2154 = vld [vmem:[%s86 + $0x78] sm:$0xff]
    %v2155 = vld [vmem:[%s86 + $0x80] sm:$0xf]
    %v2156 = vld [vmem:[%s86 + $0x84] sm:$0xff]
    %v2157 = vld [vmem:[%s86 + $0x8c] sm:$0xf]
    %v2158 = vld [vmem:[%s86 + $0x90] sm:$0xff]
    %v2159 = vld [vmem:[%s86 + $0x98] sm:$0xf]
    %v2160 = vld [vmem:[%s86 + $0x9c] sm:$0xff]
    %v2161 = vld [vmem:[%s86 + $0xa4] sm:$0xf]
    %v2162 = vld [vmem:[%s86 + $0xa8] sm:$0xff]
    %v2163 = vld [vmem:[%s86 + $0xb0] sm:$0xf]
    %v2164 = vld [vmem:[%s86 + $0xb4] sm:$0xff]
    %v2165 = vld [vmem:[%s86 + $0xbc] sm:$0xf]
    %v2166 = vld [vmem:[%s86 + $0xc0] sm:$0xff]
    %v2167 = vld [vmem:[%s86 + $0xc8] sm:$0xf]
    %v2168 = vld [vmem:[%s86 + $0xcc] sm:$0xff]
    %v2169 = vld [vmem:[%s86 + $0xd4] sm:$0xf]
    %v2170 = vld [vmem:[%s86 + $0xd8] sm:$0xff]
    %v2171 = vld [vmem:[%s86 + $0xe0] sm:$0xf]
    %v2172 = vld [vmem:[%s86 + $0xe4] sm:$0xff]
    %v2173 = vld [vmem:[%s86 + $0xec] sm:$0xf]
    %v2174 = vld [vmem:[%s86 + $0xf0] sm:$0xff]
    %v2175 = vld [vmem:[%s86 + $0xf8] sm:$0xf]
    %v2176 = vld [vmem:[%s86 + $0xfc] sm:$0xff]
    %v2177 = vld [vmem:[%s86 + $0x104] sm:$0xf]
    %v2178 = vld [vmem:[%s86 + $0x108] sm:$0xff]
    %v2179 = vld [vmem:[%s86 + $0x110] sm:$0xf]
    %v2180 = vld [vmem:[%s86 + $0x114] sm:$0xff]
    %v2181 = vld [vmem:[%s86 + $0x11c] sm:$0xf]
    %v2182 = vld [vmem:[%s86 + $0x120] sm:$0xff]
    %v2183 = vld [vmem:[%s86 + $0x128] sm:$0xf]
    %v2184 = vld [vmem:[%s86 + $0x12c] sm:$0xff]
    %v2185 = vld [vmem:[%s86 + $0x134] sm:$0xf]
    %v2186 = vld [vmem:[%s86 + $0x138] sm:$0xff]
    %v2187 = vld [vmem:[%s86 + $0x140] sm:$0xf]
    %v2188 = vld [vmem:[%s86 + $0x144] sm:$0xff]
    %v2189 = vld [vmem:[%s86 + $0x14c] sm:$0xf]
    %v2190 = vld [vmem:[%s86 + $0x150] sm:$0xff]
    %v2191 = vld [vmem:[%s86 + $0x158] sm:$0xf]
    %v2192 = vld [vmem:[%s86 + $0x15c] sm:$0xff]
    %v2193 = vld [vmem:[%s86 + $0x164] sm:$0xf]
    %v2194 = vld [vmem:[%s86 + $0x168] sm:$0xff]
    %v2195 = vld [vmem:[%s86 + $0x170] sm:$0xf]
    %v2196 = vld [vmem:[%s86 + $0x174] sm:$0xff]
    %v2197 = vld [vmem:[%s86 + $0x17c] sm:$0xf]
    %v2198 = vld [vmem:[%s86 + $0x1b0] sm:$0xff]
    %v2199 = vld [vmem:[%s86 + $0x1b8] sm:$0xf]
    %v2200 = vld [vmem:[%s86 + $0x1bc] sm:$0xff]
    %v2201 = vld [vmem:[%s86 + $0x1c4] sm:$0xf]
    %v2202 = vld [vmem:[%s86 + $0x1c8] sm:$0xff]
    %v2203 = vld [vmem:[%s86 + $0x1d0] sm:$0xf]
    %v2204 = vld [vmem:[%s86 + $0x1d4] sm:$0xff]
    %v2205 = vld [vmem:[%s86 + $0x1dc] sm:$0xf]
    %v2206 = vld [vmem:[%s86 + $0x1e0] sm:$0xff]
    %v2207 = vld [vmem:[%s86 + $0x1e8] sm:$0xf]
    %v2208 = vld [vmem:[%s86 + $0x1ec] sm:$0xff]
    %v2209 = vld [vmem:[%s86 + $0x1f4] sm:$0xf]
    %v2210 = vld [vmem:[%s86 + $0x1f8] sm:$0xff]
    %v2211 = vld [vmem:[%s86 + $0x200] sm:$0xf]
    %v2212 = vld [vmem:[%s86 + $0x204] sm:$0xff]
    %v2213 = vld [vmem:[%s86 + $0x20c] sm:$0xf]
    %v2214 = vld [vmem:[%s86 + $0x210] sm:$0xff]
    %v2215 = vld [vmem:[%s86 + $0x218] sm:$0xf]
    %v2216 = vld [vmem:[%s86 + $0x21c] sm:$0xff]
    %v2217 = vld [vmem:[%s86 + $0x224] sm:$0xf]
    %v2218 = vld [vmem:[%s86 + $0x228] sm:$0xff]
    %v2219 = vld [vmem:[%s86 + $0x230] sm:$0xf]
    %v2220 = vld [vmem:[%s86 + $0x234] sm:$0xff]
    %v2221 = vld [vmem:[%s86 + $0x23c] sm:$0xf]
    %v2222 = vld [vmem:[%s86 + $0x240] sm:$0xff]
    %v2223 = vld [vmem:[%s86 + $0x248] sm:$0xf]
    %v2224 = vld [vmem:[%s86 + $0x24c] sm:$0xff]
    %v2225 = vld [vmem:[%s86 + $0x254] sm:$0xf]
    %v2226 = vld [vmem:[%s86 + $0x258] sm:$0xff]
    %v2227 = vld [vmem:[%s86 + $0x260] sm:$0xf]
    %v2228 = vld [vmem:[%s86 + $0x264] sm:$0xff]
    %v2229 = vld [vmem:[%s86 + $0x26c] sm:$0xf]
    %v2230 = vld [vmem:[%s86 + $0x270] sm:$0xff]
    %v2231 = vld [vmem:[%s86 + $0x278] sm:$0xf]
    %v2232 = vld [vmem:[%s86 + $0x27c] sm:$0xff]
    %v2233 = vld [vmem:[%s86 + $0x284] sm:$0xf]
    %v2234 = vld [vmem:[%s86 + $0x288] sm:$0xff]
    %v2235 = vld [vmem:[%s86 + $0x290] sm:$0xf]
    %v2236 = vld [vmem:[%s86 + $0x294] sm:$0xff]
    %v2237 = vld [vmem:[%s86 + $0x29c] sm:$0xf]
    %v2238 = vld [vmem:[%s86 + $0x2a0] sm:$0xff]
    %v2239 = vld [vmem:[%s86 + $0x2a8] sm:$0xf]
    %v2240 = vld [vmem:[%s86 + $0x2ac] sm:$0xff]
    %v2241 = vld [vmem:[%s86 + $0x2b4] sm:$0xf]
    %v2242 = vld [vmem:[%s86 + $0x2b8] sm:$0xff]
    %v2243 = vld [vmem:[%s86 + $0x2c0] sm:$0xf]
    %v2244 = vld [vmem:[%s86 + $0x2c4] sm:$0xff]
    %v2245 = vld [vmem:[%s86 + $0x2cc] sm:$0xf]
    %v2246 = vld [vmem:[%s86 + $0x2d0] sm:$0xff]
    %v2247 = vld [vmem:[%s86 + $0x2d8] sm:$0xf]
    %v2248 = vld [vmem:[%s86 + $0x2dc] sm:$0xff]
    %v2249 = vld [vmem:[%s86 + $0x2e4] sm:$0xf]
    %v2250 = vld [vmem:[%s86 + $0x2e8] sm:$0xff]
    %v2251 = vld [vmem:[%s86 + $0x2f0] sm:$0xf]
    %v2252 = vld [vmem:[%s86 + $0x2f4] sm:$0xff]
    %v2253 = vld [vmem:[%s86 + $0x2fc] sm:$0xf]
    %v2254 = vld [vmem:[%s86 + $0x300] sm:$0xff]
    %v2255 = vld [vmem:[%s86 + $0x308] sm:$0xf]
    %v2256 = vld [vmem:[%s86 + $0x30c] sm:$0xff]
    %v2257 = vld [vmem:[%s86 + $0x314] sm:$0xf]
    %v2258 = vld [vmem:[%s86 + $0x318] sm:$0xff]
    %v2259 = vld [vmem:[%s86 + $0x320] sm:$0xf]
    %v2260 = vld [vmem:[%s86 + $0x324] sm:$0xff]
    %v2261 = vld [vmem:[%s86 + $0x32c] sm:$0xf]
    %v2390 = vunpack.c.l.b16 %v2134
    %v2391 = vunpack.c.h.b16 %v2134
    %v2392 = vunpack.c.l.b16 %v2135
    %v2393 = vunpack.c.l.b16 %v2136
    %v2394 = vunpack.c.h.b16 %v2136
    %v2395 = vunpack.c.l.b16 %v2137
    %v2396 = vunpack.c.l.b16 %v2138
    %v2397 = vunpack.c.h.b16 %v2138
    %v2398 = vunpack.c.l.b16 %v2139
    %v2399 = vunpack.c.l.b16 %v2140
    %v2400 = vunpack.c.h.b16 %v2140
    %v2401 = vunpack.c.l.b16 %v2141
    %v2402 = vunpack.c.l.b16 %v2142
    %v2403 = vunpack.c.h.b16 %v2142
    %v2404 = vunpack.c.l.b16 %v2143
    %v2405 = vunpack.c.l.b16 %v2144
    %v2406 = vunpack.c.h.b16 %v2144
    %v2407 = vunpack.c.l.b16 %v2145
    %v2408 = vunpack.c.l.b16 %v2146
    %v2409 = vunpack.c.h.b16 %v2146
    %v2410 = vunpack.c.l.b16 %v2147
    %v2411 = vunpack.c.l.b16 %v2148
    %v2412 = vunpack.c.h.b16 %v2148
    %v2413 = vunpack.c.l.b16 %v2149
    %v2414 = vunpack.c.l.b16 %v2150
    %v2415 = vunpack.c.h.b16 %v2150
    %v2416 = vunpack.c.l.b16 %v2151
    %v2417 = vunpack.c.l.b16 %v2152
    %v2418 = vunpack.c.h.b16 %v2152
    %v2419 = vunpack.c.l.b16 %v2153
    %v2420 = vunpack.c.l.b16 %v2154
    %v2421 = vunpack.c.h.b16 %v2154
    %v2422 = vunpack.c.l.b16 %v2155
    %v2423 = vunpack.c.l.b16 %v2156
    %v2424 = vunpack.c.h.b16 %v2156
    %v2425 = vunpack.c.l.b16 %v2157
    %v2426 = vunpack.c.l.b16 %v2158
    %v2427 = vunpack.c.h.b16 %v2158
    %v2428 = vunpack.c.l.b16 %v2159
    %v2429 = vunpack.c.l.b16 %v2160
    %v2430 = vunpack.c.h.b16 %v2160
    %v2431 = vunpack.c.l.b16 %v2161
    %v2432 = vunpack.c.l.b16 %v2162
    %v2433 = vunpack.c.h.b16 %v2162
    %v2434 = vunpack.c.l.b16 %v2163
    %v2435 = vunpack.c.l.b16 %v2164
    %v2436 = vunpack.c.h.b16 %v2164
    %v2437 = vunpack.c.l.b16 %v2165
    %v2438 = vunpack.c.l.b16 %v2166
    %v2439 = vunpack.c.h.b16 %v2166
    %v2440 = vunpack.c.l.b16 %v2167
    %v2441 = vunpack.c.l.b16 %v2168
    %v2442 = vunpack.c.h.b16 %v2168
    %v2443 = vunpack.c.l.b16 %v2169
    %v2444 = vunpack.c.l.b16 %v2170
    %v2445 = vunpack.c.h.b16 %v2170
    %v2446 = vunpack.c.l.b16 %v2171
    %v2447 = vunpack.c.l.b16 %v2172
    %v2448 = vunpack.c.h.b16 %v2172
    %v2449 = vunpack.c.l.b16 %v2173
    %v2450 = vunpack.c.l.b16 %v2174
    %v2451 = vunpack.c.h.b16 %v2174
    %v2452 = vunpack.c.l.b16 %v2175
    %v2453 = vunpack.c.l.b16 %v2176
    %v2454 = vunpack.c.h.b16 %v2176
    %v2455 = vunpack.c.l.b16 %v2177
    %v2456 = vunpack.c.l.b16 %v2178
    %v2457 = vunpack.c.h.b16 %v2178
    %v2458 = vunpack.c.l.b16 %v2179
    %v2459 = vunpack.c.l.b16 %v2180
    %v2460 = vunpack.c.h.b16 %v2180
    %v2461 = vunpack.c.l.b16 %v2181
    %v2462 = vunpack.c.l.b16 %v2182
    %v2463 = vunpack.c.h.b16 %v2182
    %v2464 = vunpack.c.l.b16 %v2183
    %v2465 = vunpack.c.l.b16 %v2184
    %v2466 = vunpack.c.h.b16 %v2184
    %v2467 = vunpack.c.l.b16 %v2185
    %v2468 = vunpack.c.l.b16 %v2186
    %v2469 = vunpack.c.h.b16 %v2186
    %v2470 = vunpack.c.l.b16 %v2187
    %v2471 = vunpack.c.l.b16 %v2188
    %v2472 = vunpack.c.h.b16 %v2188
    %v2473 = vunpack.c.l.b16 %v2189
    %v2474 = vunpack.c.l.b16 %v2190
    %v2475 = vunpack.c.h.b16 %v2190
    %v2476 = vunpack.c.l.b16 %v2191
    %v2477 = vunpack.c.l.b16 %v2192
    %v2478 = vunpack.c.h.b16 %v2192
    %v2479 = vunpack.c.l.b16 %v2193
    %v2480 = vunpack.c.l.b16 %v2194
    %v2481 = vunpack.c.h.b16 %v2194
    %v2482 = vunpack.c.l.b16 %v2195
    %v2483 = vunpack.c.l.b16 %v2196
    %v2484 = vunpack.c.h.b16 %v2196
    %v2485 = vunpack.c.l.b16 %v2197
    %v2486 = vunpack.c.l.b16 %v2198
    %v2487 = vunpack.c.h.b16 %v2198
    %v2488 = vunpack.c.l.b16 %v2199
    %v2489 = vunpack.c.l.b16 %v2200
    %v2490 = vunpack.c.h.b16 %v2200
    %v2491 = vunpack.c.l.b16 %v2201
    %v2492 = vunpack.c.l.b16 %v2202
    %v2493 = vunpack.c.h.b16 %v2202
    %v2494 = vunpack.c.l.b16 %v2203
    %v2495 = vunpack.c.l.b16 %v2204
    %v2496 = vunpack.c.h.b16 %v2204
    %v2497 = vunpack.c.l.b16 %v2205
    %v2498 = vunpack.c.l.b16 %v2206
    %v2499 = vunpack.c.h.b16 %v2206
    %v2500 = vunpack.c.l.b16 %v2207
    %v2501 = vunpack.c.l.b16 %v2208
    %v2502 = vunpack.c.h.b16 %v2208
    %v2503 = vunpack.c.l.b16 %v2209
    %v2504 = vunpack.c.l.b16 %v2210
    %v2505 = vunpack.c.h.b16 %v2210
    %v2506 = vunpack.c.l.b16 %v2211
    %v2507 = vunpack.c.l.b16 %v2212
    %v2508 = vunpack.c.h.b16 %v2212
    %v2509 = vunpack.c.l.b16 %v2213
    %v2510 = vunpack.c.l.b16 %v2214
    %v2511 = vunpack.c.h.b16 %v2214
    %v2512 = vunpack.c.l.b16 %v2215
    %v2513 = vunpack.c.l.b16 %v2216
    %v2514 = vunpack.c.h.b16 %v2216
    %v2515 = vunpack.c.l.b16 %v2217
    %v2516 = vunpack.c.l.b16 %v2218
    %v2517 = vunpack.c.h.b16 %v2218
    %v2518 = vunpack.c.l.b16 %v2219
    %v2519 = vunpack.c.l.b16 %v2220
    %v2520 = vunpack.c.h.b16 %v2220
    %v2521 = vunpack.c.l.b16 %v2221
    %v2522 = vunpack.c.l.b16 %v2222
    %v2523 = vunpack.c.h.b16 %v2222
    %v2524 = vunpack.c.l.b16 %v2223
    %v2525 = vunpack.c.l.b16 %v2224
    %v2526 = vunpack.c.h.b16 %v2224
    %v2527 = vunpack.c.l.b16 %v2225
    %v2528 = vunpack.c.l.b16 %v2226
    %v2529 = vunpack.c.h.b16 %v2226
    %v2530 = vunpack.c.l.b16 %v2227
    %v2531 = vunpack.c.l.b16 %v2228
    %v2532 = vunpack.c.h.b16 %v2228
    %v2533 = vunpack.c.l.b16 %v2229
    %v2534 = vunpack.c.l.b16 %v2230
    %v2535 = vunpack.c.h.b16 %v2230
    %v2536 = vunpack.c.l.b16 %v2231
    %v2537 = vunpack.c.l.b16 %v2232
    %v2538 = vunpack.c.h.b16 %v2232
    %v2539 = vunpack.c.l.b16 %v2233
    %v2540 = vunpack.c.l.b16 %v2234
    %v2541 = vunpack.c.h.b16 %v2234
    %v2542 = vunpack.c.l.b16 %v2235
    %v2543 = vunpack.c.l.b16 %v2236
    %v2544 = vunpack.c.h.b16 %v2236
    %v2545 = vunpack.c.l.b16 %v2237
    %v2546 = vunpack.c.l.b16 %v2238
    %v2547 = vunpack.c.h.b16 %v2238
    %v2548 = vunpack.c.l.b16 %v2239
    %v2549 = vunpack.c.l.b16 %v2240
    %v2550 = vunpack.c.h.b16 %v2240
    %v2551 = vunpack.c.l.b16 %v2241
    %v2552 = vunpack.c.l.b16 %v2242
    %v2553 = vunpack.c.h.b16 %v2242
    %v2554 = vunpack.c.l.b16 %v2243
    %v2555 = vunpack.c.l.b16 %v2244
    %v2556 = vunpack.c.h.b16 %v2244
    %v2557 = vunpack.c.l.b16 %v2245
    %v2558 = vunpack.c.l.b16 %v2246
    %v2559 = vunpack.c.h.b16 %v2246
    %v2560 = vunpack.c.l.b16 %v2247
    %v2561 = vunpack.c.l.b16 %v2248
    %v2562 = vunpack.c.h.b16 %v2248
    %v2563 = vunpack.c.l.b16 %v2249
    %v2564 = vunpack.c.l.b16 %v2250
    %v2565 = vunpack.c.h.b16 %v2250
    %v2566 = vunpack.c.l.b16 %v2251
    %v2567 = vunpack.c.l.b16 %v2252
    %v2568 = vunpack.c.h.b16 %v2252
    %v2569 = vunpack.c.l.b16 %v2253
    %v2570 = vunpack.c.l.b16 %v2254
    %v2571 = vunpack.c.h.b16 %v2254
    %v2572 = vunpack.c.l.b16 %v2255
    %v2573 = vunpack.c.l.b16 %v2256
    %v2574 = vunpack.c.h.b16 %v2256
    %v2575 = vunpack.c.l.b16 %v2257
    %v2576 = vunpack.c.l.b16 %v2258
    %v2577 = vunpack.c.h.b16 %v2258
    %v2578 = vunpack.c.l.b16 %v2259
    %v2579 = vunpack.c.l.b16 %v2260
    %v2580 = vunpack.c.h.b16 %v2260
    %v2581 = vunpack.c.l.b16 %v2261
    %v2582 = vpack.c.b16 %v2393, %v2390
    %v2583 = vpack.c.b16 %v2394, %v2391
    %v2584 = vpack.c.b16 %v2395, %v2392
    %v2585 = vpack.c.b16 %v2399, %v2396
    %v2586 = vpack.c.b16 %v2400, %v2397
    %v2587 = vpack.c.b16 %v2401, %v2398
    %v2588 = vpack.c.b16 %v2405, %v2402
    %v2589 = vpack.c.b16 %v2406, %v2403
    %v2590 = vpack.c.b16 %v2407, %v2404
    %v2591 = vpack.c.b16 %v2411, %v2408
    %v2592 = vpack.c.b16 %v2412, %v2409
    %v2593 = vpack.c.b16 %v2413, %v2410
    %v2594 = vpack.c.b16 %v2417, %v2414
    %v2595 = vpack.c.b16 %v2418, %v2415
    %v2596 = vpack.c.b16 %v2419, %v2416
    %v2597 = vpack.c.b16 %v2423, %v2420
    %v2598 = vpack.c.b16 %v2424, %v2421
    %v2599 = vpack.c.b16 %v2425, %v2422
    %v2600 = vpack.c.b16 %v2429, %v2426
    %v2601 = vpack.c.b16 %v2430, %v2427
    %v2602 = vpack.c.b16 %v2431, %v2428
    %v2603 = vpack.c.b16 %v2435, %v2432
    %v2604 = vpack.c.b16 %v2436, %v2433
    %v2605 = vpack.c.b16 %v2437, %v2434
    %v2606 = vpack.c.b16 %v2441, %v2438
    %v2607 = vpack.c.b16 %v2442, %v2439
    %v2608 = vpack.c.b16 %v2443, %v2440
    %v2609 = vpack.c.b16 %v2447, %v2444
    %v2610 = vpack.c.b16 %v2448, %v2445
    %v2611 = vpack.c.b16 %v2449, %v2446
    %v2612 = vpack.c.b16 %v2453, %v2450
    %v2613 = vpack.c.b16 %v2454, %v2451
    %v2614 = vpack.c.b16 %v2455, %v2452
    %v2615 = vpack.c.b16 %v2459, %v2456
    %v2616 = vpack.c.b16 %v2460, %v2457
    %v2617 = vpack.c.b16 %v2461, %v2458
    %v2618 = vpack.c.b16 %v2465, %v2462
    %v2619 = vpack.c.b16 %v2466, %v2463
    %v2620 = vpack.c.b16 %v2467, %v2464
    %v2621 = vpack.c.b16 %v2471, %v2468
    %v2622 = vpack.c.b16 %v2472, %v2469
    %v2623 = vpack.c.b16 %v2473, %v2470
    %v2624 = vpack.c.b16 %v2477, %v2474
    %v2625 = vpack.c.b16 %v2478, %v2475
    %v2626 = vpack.c.b16 %v2479, %v2476
    %v2627 = vpack.c.b16 %v2483, %v2480
    %v2628 = vpack.c.b16 %v2484, %v2481
    %v2629 = vpack.c.b16 %v2485, %v2482
    %v2630 = vpack.c.b16 %v2489, %v2486
    %v2631 = vpack.c.b16 %v2490, %v2487
    %v2632 = vpack.c.b16 %v2491, %v2488
    %v2633 = vpack.c.b16 %v2495, %v2492
    %v2634 = vpack.c.b16 %v2496, %v2493
    %v2635 = vpack.c.b16 %v2497, %v2494
    %v2636 = vpack.c.b16 %v2501, %v2498
    %v2637 = vpack.c.b16 %v2502, %v2499
    %v2638 = vpack.c.b16 %v2503, %v2500
    %v2639 = vpack.c.b16 %v2507, %v2504
    %v2640 = vpack.c.b16 %v2508, %v2505
    %v2641 = vpack.c.b16 %v2509, %v2506
    %v2642 = vpack.c.b16 %v2513, %v2510
    %v2643 = vpack.c.b16 %v2514, %v2511
    %v2644 = vpack.c.b16 %v2515, %v2512
    %v2645 = vpack.c.b16 %v2519, %v2516
    %v2646 = vpack.c.b16 %v2520, %v2517
    %v2647 = vpack.c.b16 %v2521, %v2518
    %v2648 = vpack.c.b16 %v2525, %v2522
    %v2649 = vpack.c.b16 %v2526, %v2523
    %v2650 = vpack.c.b16 %v2527, %v2524
    %v2651 = vpack.c.b16 %v2531, %v2528
    %v2652 = vpack.c.b16 %v2532, %v2529
    %v2653 = vpack.c.b16 %v2533, %v2530
    %v2654 = vpack.c.b16 %v2537, %v2534
    %v2655 = vpack.c.b16 %v2538, %v2535
    %v2656 = vpack.c.b16 %v2539, %v2536
    %v2657 = vpack.c.b16 %v2543, %v2540
    %v2658 = vpack.c.b16 %v2544, %v2541
    %v2659 = vpack.c.b16 %v2545, %v2542
    %v2660 = vpack.c.b16 %v2549, %v2546
    %v2661 = vpack.c.b16 %v2550, %v2547
    %v2662 = vpack.c.b16 %v2551, %v2548
    %v2663 = vpack.c.b16 %v2555, %v2552
    %v2664 = vpack.c.b16 %v2556, %v2553
    %v2665 = vpack.c.b16 %v2557, %v2554
    %v2666 = vpack.c.b16 %v2561, %v2558
    %v2667 = vpack.c.b16 %v2562, %v2559
    %v2668 = vpack.c.b16 %v2563, %v2560
    %v2669 = vpack.c.b16 %v2567, %v2564
    %v2670 = vpack.c.b16 %v2568, %v2565
    %v2671 = vpack.c.b16 %v2569, %v2566
    %v2672 = vpack.c.b16 %v2573, %v2570
    %v2673 = vpack.c.b16 %v2574, %v2571
    %v2674 = vpack.c.b16 %v2575, %v2572
    %v2675 = vpack.c.b16 %v2579, %v2576
    %v2676 = vpack.c.b16 %v2580, %v2577
    %v2677 = vpack.c.b16 %v2581, %v2578
    %v2822 = vunpack.c.l.b16 %v1910
    %v2823 = vunpack.c.l.b16 %v1911
    %v2824 = vunpack.c.l.b16 %v1912
    %v2825 = vunpack.c.l.b16 %v1913
    %v2826 = vunpack.c.l.b16 %v1914
    %v2827 = vunpack.c.l.b16 %v1915
    %v2828 = vunpack.c.l.b16 %v1916
    %v2829 = vunpack.c.l.b16 %v1917
    %v2830 = vunpack.c.l.b16 %v1918
    %v2831 = vunpack.c.l.b16 %v1919
    %v2832 = vunpack.c.l.b16 %v1920
    %v2833 = vunpack.c.l.b16 %v1921
    %v2834 = vunpack.c.l.b16 %v1922
    %v2835 = vunpack.c.l.b16 %v1923
    %v2836 = vunpack.c.l.b16 %v1924
    %v2837 = vunpack.c.l.b16 %v1925
    %v2838 = vunpack.c.l.b16 %v1926
    %v2839 = vunpack.c.l.b16 %v1927
    %v2840 = vunpack.c.l.b16 %v1928
    %v2841 = vunpack.c.l.b16 %v1929
    %v2842 = vunpack.c.l.b16 %v1930
    %v2843 = vunpack.c.l.b16 %v1931
    %v2844 = vunpack.c.l.b16 %v1932
    %v2845 = vunpack.c.l.b16 %v1933
    %v2846 = vunpack.c.l.b16 %v1934
    %v2847 = vunpack.c.l.b16 %v1935
    %v2848 = vunpack.c.l.b16 %v1936
    %v2849 = vunpack.c.l.b16 %v1937
    %v2850 = vunpack.c.l.b16 %v1938
    %v2851 = vunpack.c.l.b16 %v1939
    %v2852 = vunpack.c.l.b16 %v1940
    %v2853 = vunpack.c.l.b16 %v1941
    %v2854 = vunpack.c.l.b16 %v1942
    %v2855 = vunpack.c.l.b16 %v1943
    %v2856 = vunpack.c.l.b16 %v1944
    %v2857 = vunpack.c.l.b16 %v1945
    %v2858 = vunpack.c.l.b16 %v1946
    %v2859 = vunpack.c.l.b16 %v1947
    %v2860 = vunpack.c.l.b16 %v1948
    %v2861 = vunpack.c.l.b16 %v1949
    %v2862 = vunpack.c.l.b16 %v1950
    %v2863 = vunpack.c.l.b16 %v1951
    %v2864 = vunpack.c.l.b16 %v1952
    %v2865 = vunpack.c.l.b16 %v1953
    %v2866 = vunpack.c.l.b16 %v1954
    %v2867 = vunpack.c.l.b16 %v1955
    %v2868 = vunpack.c.l.b16 %v1956
    %v2869 = vunpack.c.l.b16 %v1957
    %v2870 = vpack.c.b16 %v2823, %v2822
    %v2871 = vpack.c.b16 %v2825, %v2824
    %v2872 = vpack.c.b16 %v2827, %v2826
    %v2873 = vpack.c.b16 %v2829, %v2828
    %v2874 = vpack.c.b16 %v2831, %v2830
    %v2875 = vpack.c.b16 %v2833, %v2832
    %v2876 = vpack.c.b16 %v2835, %v2834
    %v2877 = vpack.c.b16 %v2837, %v2836
    %v2878 = vpack.c.b16 %v2839, %v2838
    %v2879 = vpack.c.b16 %v2841, %v2840
    %v2880 = vpack.c.b16 %v2843, %v2842
    %v2881 = vpack.c.b16 %v2845, %v2844
    %v2882 = vpack.c.b16 %v2847, %v2846
    %v2883 = vpack.c.b16 %v2849, %v2848
    %v2884 = vpack.c.b16 %v2851, %v2850
    %v2885 = vpack.c.b16 %v2853, %v2852
    %v2886 = vpack.c.b16 %v2855, %v2854
    %v2887 = vpack.c.b16 %v2857, %v2856
    %v2888 = vpack.c.b16 %v2859, %v2858
    %v2889 = vpack.c.b16 %v2861, %v2860
    %v2890 = vpack.c.b16 %v2863, %v2862
    %v2891 = vpack.c.b16 %v2865, %v2864
    %v2892 = vpack.c.b16 %v2867, %v2866
    %v2893 = vpack.c.b16 %v2869, %v2868
    %2918 = vmatprep.subr.bf16.mxu0 0
    %2919 = vmatpush1.bf16.msra.mxu0 %v2877
    %2920 = vmatprep.subr.bf16.mxu0 0
    %2921 = vmatpush1.bf16.msra.mxu0 %v2876
    %2922 = vmatprep.subr.bf16.mxu0 0
    %2923 = vmatpush1.bf16.msra.mxu0 %v2875
    %2924 = vmatprep.subr.bf16.mxu0 0
    %2925 = vmatpush1.bf16.msra.mxu0 %v2874
    %2926 = vmatprep.subr.bf16.mxu0 0
    %2927 = vmatpush1.bf16.msra.mxu0 %v2873
    %2928 = vmatprep.subr.bf16.mxu0 0
    %2929 = vmatpush1.bf16.msra.mxu0 %v2872
    %2930 = vmatprep.subr.bf16.mxu0 0
    %2931 = vmatpush1.bf16.msra.mxu0 %v2871
    %2932 = vmatprep.subr.bf16.mxu0 0
    %2933 = vmatpush1.bf16.msra.mxu0 %v2870
    %2934 = vmatprep.subr.bf16.mxu0 0
    %2935 = vmatpush2.bf16.msra.mxu0 %v2885
    %2936 = vmatprep.subr.bf16.mxu0 0
    %2937 = vmatpush2.bf16.msra.mxu0 %v2884
    %2938 = vmatprep.subr.bf16.mxu0 0
    %2939 = vmatpush2.bf16.msra.mxu0 %v2883
    %2940 = vmatprep.subr.bf16.mxu0 0
    %2941 = vmatpush2.bf16.msra.mxu0 %v2882
    %2942 = vmatprep.subr.bf16.mxu0 0
    %2943 = vmatpush2.bf16.msra.mxu0 %v2881
    %2944 = vmatprep.subr.bf16.mxu0 0
    %2945 = vmatpush2.bf16.msra.mxu0 %v2880
    %2946 = vmatprep.subr.bf16.mxu0 0
    %2947 = vmatpush2.bf16.msra.mxu0 %v2879
    %2948 = vmatprep.subr.bf16.mxu0 0
    %2949 = vmatpush2.bf16.msra.mxu0 %v2878
    %2950 = vmatprep.mubr.bf16.mxu0 %v2583
    %2951 = vmatmul.mubr.bf16.gmra.mxu0 %v2582
    %v2952 = vpop.f32.mrf.mxu0
    %v2953 = vadd.f32 0.0, %v2952
    %v2954 = vpop.f32.mrf.mxu0
    %v2955 = vpop.f32.mrf.mxu0
    %v2956 = vadd.f32 0.0, %v2955
    %v2957 = vpop.f32.mrf.mxu0
    %2958 = vmatprep.mubr.bf16.mxu0 %v2586
    %2959 = vmatmul.mubr.bf16.gmra.mxu0 %v2585
    %v2960 = vpop.f32.mrf.mxu0
    %v2961 = vadd.f32 0.0, %v2960
    %v2962 = vpop.f32.mrf.mxu0
    %v2963 = vpop.f32.mrf.mxu0
    %v2964 = vadd.f32 0.0, %v2963
    %v2965 = vpop.f32.mrf.mxu0
    %2966 = vmatprep.mubr.bf16.mxu0 %v2589
    %2967 = vmatmul.mubr.bf16.gmra.mxu0 %v2588
    %v2968 = vpop.f32.mrf.mxu0
    %v2969 = vadd.f32 0.0, %v2968
    %v2970 = vpop.f32.mrf.mxu0
    %v2971 = vpop.f32.mrf.mxu0
    %v2972 = vadd.f32 0.0, %v2971
    %v2973 = vpop.f32.mrf.mxu0
    %2974 = vmatprep.mubr.bf16.mxu0 %v2592
    %2975 = vmatmul.mubr.bf16.gmra.mxu0 %v2591
    %v2976 = vpop.f32.mrf.mxu0
    %v2977 = vadd.f32 0.0, %v2976
    %v2978 = vpop.f32.mrf.mxu0
    %v2979 = vpop.f32.mrf.mxu0
    %v2980 = vadd.f32 0.0, %v2979
    %v2981 = vpop.f32.mrf.mxu0
    %2982 = vmatprep.mubr.bf16.mxu0 %v2595
    %2983 = vmatmul.mubr.bf16.gmra.mxu0 %v2594
    %v2984 = vpop.f32.mrf.mxu0
    %v2985 = vadd.f32 0.0, %v2984
    %v2986 = vpop.f32.mrf.mxu0
    %v2987 = vpop.f32.mrf.mxu0
    %v2988 = vadd.f32 0.0, %v2987
    %v2989 = vpop.f32.mrf.mxu0
    %2990 = vmatprep.mubr.bf16.mxu0 %v2598
    %2991 = vmatmul.mubr.bf16.gmra.mxu0 %v2597
    %v2992 = vpop.f32.mrf.mxu0
    %v2993 = vadd.f32 0.0, %v2992
    %v2994 = vpop.f32.mrf.mxu0
    %v2995 = vpop.f32.mrf.mxu0
    %v2996 = vadd.f32 0.0, %v2995
    %v2997 = vpop.f32.mrf.mxu0
    %2998 = vmatprep.mubr.bf16.mxu0 %v2601
    %2999 = vmatmul.mubr.bf16.gmra.mxu0 %v2600
    %v3000 = vpop.f32.mrf.mxu0
    %v3001 = vadd.f32 0.0, %v3000
    %v3002 = vpop.f32.mrf.mxu0
    %v3003 = vpop.f32.mrf.mxu0
    %v3004 = vadd.f32 0.0, %v3003
    %v3005 = vpop.f32.mrf.mxu0
    %3006 = vmatprep.mubr.bf16.mxu0 %v2604
    %3007 = vmatmul.mubr.bf16.gmra.mxu0 %v2603
    %v3008 = vpop.f32.mrf.mxu0
    %v3009 = vadd.f32 0.0, %v3008
    %v3010 = vpop.f32.mrf.mxu0
    %v3011 = vpop.f32.mrf.mxu0
    %v3012 = vadd.f32 0.0, %v3011
    %v3013 = vpop.f32.mrf.mxu0
    %3014 = vmatprep.mubr.bf16.mxu0 %v2607
    %3015 = vmatmul.mubr.bf16.gmra.mxu0 %v2606
    %v3016 = vpop.f32.mrf.mxu0
    %v3017 = vadd.f32 0.0, %v3016
    %v3018 = vpop.f32.mrf.mxu0
    %v3019 = vpop.f32.mrf.mxu0
    %v3020 = vadd.f32 0.0, %v3019
    %v3021 = vpop.f32.mrf.mxu0
    %3022 = vmatprep.mubr.bf16.mxu0 %v2610
    %3023 = vmatmul.mubr.bf16.gmra.mxu0 %v2609
    %v3024 = vpop.f32.mrf.mxu0
    %v3025 = vadd.f32 0.0, %v3024
    %v3026 = vpop.f32.mrf.mxu0
    %v3027 = vpop.f32.mrf.mxu0
    %v3028 = vadd.f32 0.0, %v3027
    %v3029 = vpop.f32.mrf.mxu0
    %3030 = vmatprep.mubr.bf16.mxu0 %v2613
    %3031 = vmatmul.mubr.bf16.gmra.mxu0 %v2612
    %v3032 = vpop.f32.mrf.mxu0
    %v3033 = vadd.f32 0.0, %v3032
    %v3034 = vpop.f32.mrf.mxu0
    %v3035 = vpop.f32.mrf.mxu0
    %v3036 = vadd.f32 0.0, %v3035
    %v3037 = vpop.f32.mrf.mxu0
    %3038 = vmatprep.mubr.bf16.mxu0 %v2616
    %3039 = vmatmul.mubr.bf16.gmra.mxu0 %v2615
    %v3040 = vpop.f32.mrf.mxu0
    %v3041 = vadd.f32 0.0, %v3040
    %v3042 = vpop.f32.mrf.mxu0
    %v3043 = vpop.f32.mrf.mxu0
    %v3044 = vadd.f32 0.0, %v3043
    %v3045 = vpop.f32.mrf.mxu0
    %3046 = vmatprep.mubr.bf16.mxu0 %v2619
    %3047 = vmatmul.mubr.bf16.gmra.mxu0 %v2618
    %v3048 = vpop.f32.mrf.mxu0
    %v3049 = vadd.f32 0.0, %v3048
    %v3050 = vpop.f32.mrf.mxu0
    %v3051 = vpop.f32.mrf.mxu0
    %v3052 = vadd.f32 0.0, %v3051
    %v3053 = vpop.f32.mrf.mxu0
    %3054 = vmatprep.mubr.bf16.mxu0 %v2622
    %3055 = vmatmul.mubr.bf16.gmra.mxu0 %v2621
    %v3056 = vpop.f32.mrf.mxu0
    %v3057 = vadd.f32 0.0, %v3056
    %v3058 = vpop.f32.mrf.mxu0
    %v3059 = vpop.f32.mrf.mxu0
    %v3060 = vadd.f32 0.0, %v3059
    %v3061 = vpop.f32.mrf.mxu0
    %3062 = vmatprep.mubr.bf16.mxu0 %v2625
    %3063 = vmatmul.mubr.bf16.gmra.mxu0 %v2624
    %v3064 = vpop.f32.mrf.mxu0
    %v3065 = vadd.f32 0.0, %v3064
    %v3066 = vpop.f32.mrf.mxu0
    %v3067 = vpop.f32.mrf.mxu0
    %v3068 = vadd.f32 0.0, %v3067
    %v3069 = vpop.f32.mrf.mxu0
    %3070 = vmatprep.mubr.bf16.mxu0 %v2628
    %3071 = vmatmul.mubr.bf16.gmra.mxu0 %v2627
    %v3072 = vpop.f32.mrf.mxu0
    %v3073 = vadd.f32 0.0, %v3072
    %v3074 = vpop.f32.mrf.mxu0
    %v3075 = vpop.f32.mrf.mxu0
    %v3076 = vadd.f32 0.0, %v3075
    %v3077 = vpop.f32.mrf.mxu0
    %3078 = vmatprep.mubr.bf16.mxu0 %v2631
    %3079 = vmatmul.mubr.bf16.gmra.mxu0 %v2630
    %v3080 = vpop.f32.mrf.mxu0
    %v3081 = vadd.f32 0.0, %v3080
    %v3082 = vpop.f32.mrf.mxu0
    %v3083 = vpop.f32.mrf.mxu0
    %v3084 = vadd.f32 0.0, %v3083
    %v3085 = vpop.f32.mrf.mxu0
    %3086 = vmatprep.mubr.bf16.mxu0 %v2634
    %3087 = vmatmul.mubr.bf16.gmra.mxu0 %v2633
    %v3088 = vpop.f32.mrf.mxu0
    %v3089 = vadd.f32 0.0, %v3088
    %v3090 = vpop.f32.mrf.mxu0
    %v3091 = vpop.f32.mrf.mxu0
    %v3092 = vadd.f32 0.0, %v3091
    %v3093 = vpop.f32.mrf.mxu0
    %3094 = vmatprep.mubr.bf16.mxu0 %v2637
    %3095 = vmatmul.mubr.bf16.gmra.mxu0 %v2636
    %v3096 = vpop.f32.mrf.mxu0
    %v3097 = vadd.f32 0.0, %v3096
    %v3098 = vpop.f32.mrf.mxu0
    %v3099 = vpop.f32.mrf.mxu0
    %v3100 = vadd.f32 0.0, %v3099
    %v3101 = vpop.f32.mrf.mxu0
    %3102 = vmatprep.mubr.bf16.mxu0 %v2640
    %3103 = vmatmul.mubr.bf16.gmra.mxu0 %v2639
    %v3104 = vpop.f32.mrf.mxu0
    %v3105 = vadd.f32 0.0, %v3104
    %v3106 = vpop.f32.mrf.mxu0
    %v3107 = vpop.f32.mrf.mxu0
    %v3108 = vadd.f32 0.0, %v3107
    %v3109 = vpop.f32.mrf.mxu0
    %3110 = vmatprep.mubr.bf16.mxu0 %v2643
    %3111 = vmatmul.mubr.bf16.gmra.mxu0 %v2642
    %v3112 = vpop.f32.mrf.mxu0
    %v3113 = vadd.f32 0.0, %v3112
    %v3114 = vpop.f32.mrf.mxu0
    %v3115 = vpop.f32.mrf.mxu0
    %v3116 = vadd.f32 0.0, %v3115
    %v3117 = vpop.f32.mrf.mxu0
    %3118 = vmatprep.mubr.bf16.mxu0 %v2646
    %3119 = vmatmul.mubr.bf16.gmra.mxu0 %v2645
    %v3120 = vpop.f32.mrf.mxu0
    %v3121 = vadd.f32 0.0, %v3120
    %v3122 = vpop.f32.mrf.mxu0
    %v3123 = vpop.f32.mrf.mxu0
    %v3124 = vadd.f32 0.0, %v3123
    %v3125 = vpop.f32.mrf.mxu0
    %3126 = vmatprep.mubr.bf16.mxu0 %v2649
    %3127 = vmatmul.mubr.bf16.gmra.mxu0 %v2648
    %v3128 = vpop.f32.mrf.mxu0
    %v3129 = vadd.f32 0.0, %v3128
    %v3130 = vpop.f32.mrf.mxu0
    %v3131 = vpop.f32.mrf.mxu0
    %v3132 = vadd.f32 0.0, %v3131
    %v3133 = vpop.f32.mrf.mxu0
    %3134 = vmatprep.mubr.bf16.mxu0 %v2652
    %3135 = vmatmul.mubr.bf16.gmra.mxu0 %v2651
    %v3136 = vpop.f32.mrf.mxu0
    %v3137 = vadd.f32 0.0, %v3136
    %v3138 = vpop.f32.mrf.mxu0
    %v3139 = vpop.f32.mrf.mxu0
    %v3140 = vadd.f32 0.0, %v3139
    %v3141 = vpop.f32.mrf.mxu0
    %3142 = vmatprep.mubr.bf16.mxu0 %v2655
    %3143 = vmatmul.mubr.bf16.gmra.mxu0 %v2654
    %v3144 = vpop.f32.mrf.mxu0
    %v3145 = vadd.f32 0.0, %v3144
    %v3146 = vpop.f32.mrf.mxu0
    %v3147 = vpop.f32.mrf.mxu0
    %v3148 = vadd.f32 0.0, %v3147
    %v3149 = vpop.f32.mrf.mxu0
    %3150 = vmatprep.mubr.bf16.mxu0 %v2658
    %3151 = vmatmul.mubr.bf16.gmra.mxu0 %v2657
    %v3152 = vpop.f32.mrf.mxu0
    %v3153 = vadd.f32 0.0, %v3152
    %v3154 = vpop.f32.mrf.mxu0
    %v3155 = vpop.f32.mrf.mxu0
    %v3156 = vadd.f32 0.0, %v3155
    %v3157 = vpop.f32.mrf.mxu0
    %3158 = vmatprep.mubr.bf16.mxu0 %v2661
    %3159 = vmatmul.mubr.bf16.gmra.mxu0 %v2660
    %v3160 = vpop.f32.mrf.mxu0
    %v3161 = vadd.f32 0.0, %v3160
    %v3162 = vpop.f32.mrf.mxu0
    %v3163 = vpop.f32.mrf.mxu0
    %v3164 = vadd.f32 0.0, %v3163
    %v3165 = vpop.f32.mrf.mxu0
    %3166 = vmatprep.mubr.bf16.mxu0 %v2664
    %3167 = vmatmul.mubr.bf16.gmra.mxu0 %v2663
    %v3168 = vpop.f32.mrf.mxu0
    %v3169 = vadd.f32 0.0, %v3168
    %v3170 = vpop.f32.mrf.mxu0
    %v3171 = vpop.f32.mrf.mxu0
    %v3172 = vadd.f32 0.0, %v3171
    %v3173 = vpop.f32.mrf.mxu0
    %3174 = vmatprep.mubr.bf16.mxu0 %v2667
    %3175 = vmatmul.mubr.bf16.gmra.mxu0 %v2666
    %v3176 = vpop.f32.mrf.mxu0
    %v3177 = vadd.f32 0.0, %v3176
    %v3178 = vpop.f32.mrf.mxu0
    %v3179 = vpop.f32.mrf.mxu0
    %v3180 = vadd.f32 0.0, %v3179
    %v3181 = vpop.f32.mrf.mxu0
    %3182 = vmatprep.mubr.bf16.mxu0 %v2670
    %3183 = vmatmul.mubr.bf16.gmra.mxu0 %v2669
    %v3184 = vpop.f32.mrf.mxu0
    %v3185 = vadd.f32 0.0, %v3184
    %v3186 = vpop.f32.mrf.mxu0
    %v3187 = vpop.f32.mrf.mxu0
    %v3188 = vadd.f32 0.0, %v3187
    %v3189 = vpop.f32.mrf.mxu0
    %3190 = vmatprep.mubr.bf16.mxu0 %v2673
    %3191 = vmatmul.mubr.bf16.gmra.mxu0 %v2672
    %v3192 = vpop.f32.mrf.mxu0
    %v3193 = vadd.f32 0.0, %v3192
    %v3194 = vpop.f32.mrf.mxu0
    %v3195 = vpop.f32.mrf.mxu0
    %v3196 = vadd.f32 0.0, %v3195
    %v3197 = vpop.f32.mrf.mxu0
    %3198 = vmatprep.mubr.bf16.mxu0 %v2676
    %3199 = vmatmul.mubr.bf16.gmra.mxu0 %v2675
    %v3200 = vpop.f32.mrf.mxu0
    %v3201 = vadd.f32 0.0, %v3200
    %v3202 = vpop.f32.mrf.mxu0
    %v3203 = vpop.f32.mrf.mxu0
    %v3204 = vadd.f32 0.0, %v3203
    %v3205 = vpop.f32.mrf.mxu0
    %3206 = vdwg.mxu0
    %3207 = vmatprep.subr.bf16.mxu0 0
    %3208 = vmatpush1.bf16.msra.mxu0 %v2893
    %3209 = vmatprep.subr.bf16.mxu0 0
    %3210 = vmatpush1.bf16.msra.mxu0 %v2892
    %3211 = vmatprep.subr.bf16.mxu0 0
    %3212 = vmatpush1.bf16.msra.mxu0 %v2891
    %3213 = vmatprep.subr.bf16.mxu0 0
    %3214 = vmatpush1.bf16.msra.mxu0 %v2890
    %3215 = vmatprep.subr.bf16.mxu0 0
    %3216 = vmatpush1.bf16.msra.mxu0 %v2889
    %3217 = vmatprep.subr.bf16.mxu0 0
    %3218 = vmatpush1.bf16.msra.mxu0 %v2888
    %3219 = vmatprep.subr.bf16.mxu0 0
    %3220 = vmatpush1.bf16.msra.mxu0 %v2887
    %3221 = vmatprep.subr.bf16.mxu0 0
    %3222 = vmatpush1.bf16.msra.mxu0 %v2886
    %3223 = vmatprep.subr.bf16.mxu0 0
    %3224 = vmatpush2.bf16.msra.mxu0 0
    %3225 = vmatprep.subr.bf16.mxu0 0
    %3226 = vmatpush2.bf16.msra.mxu0 0
    %3227 = vmatprep.subr.bf16.mxu0 0
    %3228 = vmatpush2.bf16.msra.mxu0 0
    %3229 = vmatprep.subr.bf16.mxu0 0
    %3230 = vmatpush2.bf16.msra.mxu0 0
    %3231 = vmatprep.subr.bf16.mxu0 0
    %3232 = vmatpush2.bf16.msra.mxu0 0
    %3233 = vmatprep.subr.bf16.mxu0 0
    %3234 = vmatpush2.bf16.msra.mxu0 0
    %3235 = vmatprep.subr.bf16.mxu0 0
    %3236 = vmatpush2.bf16.msra.mxu0 0
    %3237 = vmatprep.subr.bf16.mxu0 0
    %3238 = vmatpush2.bf16.msra.mxu0 0
    %3239 = vmatprep.mubr.bf16.mxu0 0
    %3240 = vmatmul.mubr.bf16.gmra.mxu0 %v2584
    %v3241 = vpop.f32.mrf.mxu0
    %v3242 = vadd.f32 %v2953, %v3241
    %v3243 = vpop.f32.mrf.mxu0
    %v3244 = vpop.f32.mrf.mxu0
    %v3245 = vadd.f32 %v2956, %v3244
    %v3246 = vpop.f32.mrf.mxu0
    %3247 = vmatprep.mubr.bf16.mxu0 0
    %3248 = vmatmul.mubr.bf16.gmra.mxu0 %v2587
    %v3249 = vpop.f32.mrf.mxu0
    %v3250 = vadd.f32 %v2961, %v3249
    %v3251 = vpop.f32.mrf.mxu0
    %v3252 = vpop.f32.mrf.mxu0
    %v3253 = vadd.f32 %v2964, %v3252
    %v3254 = vpop.f32.mrf.mxu0
    %3255 = vmatprep.mubr.bf16.mxu0 0
    %3256 = vmatmul.mubr.bf16.gmra.mxu0 %v2590
    %v3257 = vpop.f32.mrf.mxu0
    %v3258 = vadd.f32 %v2969, %v3257
    %v3259 = vpop.f32.mrf.mxu0
    %v3260 = vpop.f32.mrf.mxu0
    %v3261 = vadd.f32 %v2972, %v3260
    %v3262 = vpop.f32.mrf.mxu0
    %3263 = vmatprep.mubr.bf16.mxu0 0
    %3264 = vmatmul.mubr.bf16.gmra.mxu0 %v2593
    %v3265 = vpop.f32.mrf.mxu0
    %v3266 = vadd.f32 %v2977, %v3265
    %v3267 = vpop.f32.mrf.mxu0
    %v3268 = vpop.f32.mrf.mxu0
    %v3269 = vadd.f32 %v2980, %v3268
    %v3270 = vpop.f32.mrf.mxu0
    %3271 = vmatprep.mubr.bf16.mxu0 0
    %3272 = vmatmul.mubr.bf16.gmra.mxu0 %v2596
    %v3273 = vpop.f32.mrf.mxu0
    %v3274 = vadd.f32 %v2985, %v3273
    %v3275 = vpop.f32.mrf.mxu0
    %v3276 = vpop.f32.mrf.mxu0
    %v3277 = vadd.f32 %v2988, %v3276
    %v3278 = vpop.f32.mrf.mxu0
    %3279 = vmatprep.mubr.bf16.mxu0 0
    %3280 = vmatmul.mubr.bf16.gmra.mxu0 %v2599
    %v3281 = vpop.f32.mrf.mxu0
    %v3282 = vadd.f32 %v2993, %v3281
    %v3283 = vpop.f32.mrf.mxu0
    %v3284 = vpop.f32.mrf.mxu0
    %v3285 = vadd.f32 %v2996, %v3284
    %v3286 = vpop.f32.mrf.mxu0
    %3287 = vmatprep.mubr.bf16.mxu0 0
    %3288 = vmatmul.mubr.bf16.gmra.mxu0 %v2602
    %v3289 = vpop.f32.mrf.mxu0
    %v3290 = vadd.f32 %v3001, %v3289
    %v3291 = vpop.f32.mrf.mxu0
    %v3292 = vpop.f32.mrf.mxu0
    %v3293 = vadd.f32 %v3004, %v3292
    %v3294 = vpop.f32.mrf.mxu0
    %3295 = vmatprep.mubr.bf16.mxu0 0
    %3296 = vmatmul.mubr.bf16.gmra.mxu0 %v2605
    %v3297 = vpop.f32.mrf.mxu0
    %v3298 = vadd.f32 %v3009, %v3297
    %v3299 = vpop.f32.mrf.mxu0
    %v3300 = vpop.f32.mrf.mxu0
    %v3301 = vadd.f32 %v3012, %v3300
    %v3302 = vpop.f32.mrf.mxu0
    %3303 = vmatprep.mubr.bf16.mxu0 0
    %3304 = vmatmul.mubr.bf16.gmra.mxu0 %v2608
    %v3305 = vpop.f32.mrf.mxu0
    %v3306 = vadd.f32 %v3017, %v3305
    %v3307 = vpop.f32.mrf.mxu0
    %v3308 = vpop.f32.mrf.mxu0
    %v3309 = vadd.f32 %v3020, %v3308
    %v3310 = vpop.f32.mrf.mxu0
    %3311 = vmatprep.mubr.bf16.mxu0 0
    %3312 = vmatmul.mubr.bf16.gmra.mxu0 %v2611
    %v3313 = vpop.f32.mrf.mxu0
    %v3314 = vadd.f32 %v3025, %v3313
    %v3315 = vpop.f32.mrf.mxu0
    %v3316 = vpop.f32.mrf.mxu0
    %v3317 = vadd.f32 %v3028, %v3316
    %v3318 = vpop.f32.mrf.mxu0
    %3319 = vmatprep.mubr.bf16.mxu0 0
    %3320 = vmatmul.mubr.bf16.gmra.mxu0 %v2614
    %v3321 = vpop.f32.mrf.mxu0
    %v3322 = vadd.f32 %v3033, %v3321
    %v3323 = vpop.f32.mrf.mxu0
    %v3324 = vpop.f32.mrf.mxu0
    %v3325 = vadd.f32 %v3036, %v3324
    %v3326 = vpop.f32.mrf.mxu0
    %3327 = vmatprep.mubr.bf16.mxu0 0
    %3328 = vmatmul.mubr.bf16.gmra.mxu0 %v2617
    %v3329 = vpop.f32.mrf.mxu0
    %v3330 = vadd.f32 %v3041, %v3329
    %v3331 = vpop.f32.mrf.mxu0
    %v3332 = vpop.f32.mrf.mxu0
    %v3333 = vadd.f32 %v3044, %v3332
    %v3334 = vpop.f32.mrf.mxu0
    %3335 = vmatprep.mubr.bf16.mxu0 0
    %3336 = vmatmul.mubr.bf16.gmra.mxu0 %v2620
    %v3337 = vpop.f32.mrf.mxu0
    %v3338 = vadd.f32 %v3049, %v3337
    %v3339 = vpop.f32.mrf.mxu0
    %v3340 = vpop.f32.mrf.mxu0
    %v3341 = vadd.f32 %v3052, %v3340
    %v3342 = vpop.f32.mrf.mxu0
    %3343 = vmatprep.mubr.bf16.mxu0 0
    %3344 = vmatmul.mubr.bf16.gmra.mxu0 %v2623
    %v3345 = vpop.f32.mrf.mxu0
    %v3346 = vadd.f32 %v3057, %v3345
    %v3347 = vpop.f32.mrf.mxu0
    %v3348 = vpop.f32.mrf.mxu0
    %v3349 = vadd.f32 %v3060, %v3348
    %v3350 = vpop.f32.mrf.mxu0
    %3351 = vmatprep.mubr.bf16.mxu0 0
    %3352 = vmatmul.mubr.bf16.gmra.mxu0 %v2626
    %v3353 = vpop.f32.mrf.mxu0
    %v3354 = vadd.f32 %v3065, %v3353
    %v3355 = vpop.f32.mrf.mxu0
    %v3356 = vpop.f32.mrf.mxu0
    %v3357 = vadd.f32 %v3068, %v3356
    %v3358 = vpop.f32.mrf.mxu0
    %3359 = vmatprep.mubr.bf16.mxu0 0
    %3360 = vmatmul.mubr.bf16.gmra.mxu0 %v2629
    %v3361 = vpop.f32.mrf.mxu0
    %v3362 = vadd.f32 %v3073, %v3361
    %v3363 = vpop.f32.mrf.mxu0
    %v3364 = vpop.f32.mrf.mxu0
    %v3365 = vadd.f32 %v3076, %v3364
    %v3366 = vpop.f32.mrf.mxu0
    %3367 = vmatprep.mubr.bf16.mxu0 0
    %3368 = vmatmul.mubr.bf16.gmra.mxu0 %v2632
    %v3369 = vpop.f32.mrf.mxu0
    %v3370 = vadd.f32 %v3081, %v3369
    %v3371 = vpop.f32.mrf.mxu0
    %v3372 = vpop.f32.mrf.mxu0
    %v3373 = vadd.f32 %v3084, %v3372
    %v3374 = vpop.f32.mrf.mxu0
    %3375 = vmatprep.mubr.bf16.mxu0 0
    %3376 = vmatmul.mubr.bf16.gmra.mxu0 %v2635
    %v3377 = vpop.f32.mrf.mxu0
    %v3378 = vadd.f32 %v3089, %v3377
    %v3379 = vpop.f32.mrf.mxu0
    %v3380 = vpop.f32.mrf.mxu0
    %v3381 = vadd.f32 %v3092, %v3380
    %v3382 = vpop.f32.mrf.mxu0
    %3383 = vmatprep.mubr.bf16.mxu0 0
    %3384 = vmatmul.mubr.bf16.gmra.mxu0 %v2638
    %v3385 = vpop.f32.mrf.mxu0
    %v3386 = vadd.f32 %v3097, %v3385
    %v3387 = vpop.f32.mrf.mxu0
    %v3388 = vpop.f32.mrf.mxu0
    %v3389 = vadd.f32 %v3100, %v3388
    %v3390 = vpop.f32.mrf.mxu0
    %3391 = vmatprep.mubr.bf16.mxu0 0
    %3392 = vmatmul.mubr.bf16.gmra.mxu0 %v2641
    %v3393 = vpop.f32.mrf.mxu0
    %v3394 = vadd.f32 %v3105, %v3393
    %v3395 = vpop.f32.mrf.mxu0
    %v3396 = vpop.f32.mrf.mxu0
    %v3397 = vadd.f32 %v3108, %v3396
    %v3398 = vpop.f32.mrf.mxu0
    %3399 = vmatprep.mubr.bf16.mxu0 0
    %3400 = vmatmul.mubr.bf16.gmra.mxu0 %v2644
    %v3401 = vpop.f32.mrf.mxu0
    %v3402 = vadd.f32 %v3113, %v3401
    %v3403 = vpop.f32.mrf.mxu0
    %v3404 = vpop.f32.mrf.mxu0
    %v3405 = vadd.f32 %v3116, %v3404
    %v3406 = vpop.f32.mrf.mxu0
    %3407 = vmatprep.mubr.bf16.mxu0 0
    %3408 = vmatmul.mubr.bf16.gmra.mxu0 %v2647
    %v3409 = vpop.f32.mrf.mxu0
    %v3410 = vadd.f32 %v3121, %v3409
    %v3411 = vpop.f32.mrf.mxu0
    %v3412 = vpop.f32.mrf.mxu0
    %v3413 = vadd.f32 %v3124, %v3412
    %v3414 = vpop.f32.mrf.mxu0
    %3415 = vmatprep.mubr.bf16.mxu0 0
    %3416 = vmatmul.mubr.bf16.gmra.mxu0 %v2650
    %v3417 = vpop.f32.mrf.mxu0
    %v3418 = vadd.f32 %v3129, %v3417
    %v3419 = vpop.f32.mrf.mxu0
    %v3420 = vpop.f32.mrf.mxu0
    %v3421 = vadd.f32 %v3132, %v3420
    %v3422 = vpop.f32.mrf.mxu0
    %3423 = vmatprep.mubr.bf16.mxu0 0
    %3424 = vmatmul.mubr.bf16.gmra.mxu0 %v2653
    %v3425 = vpop.f32.mrf.mxu0
    %v3426 = vadd.f32 %v3137, %v3425
    %v3427 = vpop.f32.mrf.mxu0
    %v3428 = vpop.f32.mrf.mxu0
    %v3429 = vadd.f32 %v3140, %v3428
    %v3430 = vpop.f32.mrf.mxu0
    %3431 = vmatprep.mubr.bf16.mxu0 0
    %3432 = vmatmul.mubr.bf16.gmra.mxu0 %v2656
    %v3433 = vpop.f32.mrf.mxu0
    %v3434 = vadd.f32 %v3145, %v3433
    %v3435 = vpop.f32.mrf.mxu0
    %v3436 = vpop.f32.mrf.mxu0
    %v3437 = vadd.f32 %v3148, %v3436
    %v3438 = vpop.f32.mrf.mxu0
    %3439 = vmatprep.mubr.bf16.mxu0 0
    %3440 = vmatmul.mubr.bf16.gmra.mxu0 %v2659
    %v3441 = vpop.f32.mrf.mxu0
    %v3442 = vadd.f32 %v3153, %v3441
    %v3443 = vpop.f32.mrf.mxu0
    %v3444 = vpop.f32.mrf.mxu0
    %v3445 = vadd.f32 %v3156, %v3444
    %v3446 = vpop.f32.mrf.mxu0
    %3447 = vmatprep.mubr.bf16.mxu0 0
    %3448 = vmatmul.mubr.bf16.gmra.mxu0 %v2662
    %v3449 = vpop.f32.mrf.mxu0
    %v3450 = vadd.f32 %v3161, %v3449
    %v3451 = vpop.f32.mrf.mxu0
    %v3452 = vpop.f32.mrf.mxu0
    %v3453 = vadd.f32 %v3164, %v3452
    %v3454 = vpop.f32.mrf.mxu0
    %3455 = vmatprep.mubr.bf16.mxu0 0
    %3456 = vmatmul.mubr.bf16.gmra.mxu0 %v2665
    %v3457 = vpop.f32.mrf.mxu0
    %v3458 = vadd.f32 %v3169, %v3457
    %v3459 = vpop.f32.mrf.mxu0
    %v3460 = vpop.f32.mrf.mxu0
    %v3461 = vadd.f32 %v3172, %v3460
    %v3462 = vpop.f32.mrf.mxu0
    %3463 = vmatprep.mubr.bf16.mxu0 0
    %3464 = vmatmul.mubr.bf16.gmra.mxu0 %v2668
    %v3465 = vpop.f32.mrf.mxu0
    %v3466 = vadd.f32 %v3177, %v3465
    %v3467 = vpop.f32.mrf.mxu0
    %v3468 = vpop.f32.mrf.mxu0
    %v3469 = vadd.f32 %v3180, %v3468
    %v3470 = vpop.f32.mrf.mxu0
    %3471 = vmatprep.mubr.bf16.mxu0 0
    %3472 = vmatmul.mubr.bf16.gmra.mxu0 %v2671
    %v3473 = vpop.f32.mrf.mxu0
    %v3474 = vadd.f32 %v3185, %v3473
    %v3475 = vpop.f32.mrf.mxu0
    %v3476 = vpop.f32.mrf.mxu0
    %v3477 = vadd.f32 %v3188, %v3476
    %v3478 = vpop.f32.mrf.mxu0
    %3479 = vmatprep.mubr.bf16.mxu0 0
    %3480 = vmatmul.mubr.bf16.gmra.mxu0 %v2674
    %v3481 = vpop.f32.mrf.mxu0
    %v3482 = vadd.f32 %v3193, %v3481
    %v3483 = vpop.f32.mrf.mxu0
    %v3484 = vpop.f32.mrf.mxu0
    %v3485 = vadd.f32 %v3196, %v3484
    %v3486 = vpop.f32.mrf.mxu0
    %3487 = vmatprep.mubr.bf16.mxu0 0
    %3488 = vmatmul.mubr.bf16.gmra.mxu0 %v2677
    %v3489 = vpop.f32.mrf.mxu0
    %v3490 = vadd.f32 %v3201, %v3489
    %v3491 = vpop.f32.mrf.mxu0
    %v3492 = vpop.f32.mrf.mxu0
    %v3493 = vadd.f32 %v3204, %v3492
    %v3494 = vpop.f32.mrf.mxu0
    %3495 = vdwg.mxu0
    %v3624 = vunpack.c.l.b16 %v2006
    %v3625 = vunpack.c.h.b16 %v2006
    %v3626 = vunpack.c.l.b16 %v2007
    %v3627 = vunpack.c.l.b16 %v2008
    %v3628 = vunpack.c.h.b16 %v2008
    %v3629 = vunpack.c.l.b16 %v2009
    %v3630 = vunpack.c.l.b16 %v2010
    %v3631 = vunpack.c.h.b16 %v2010
    %v3632 = vunpack.c.l.b16 %v2011
    %v3633 = vunpack.c.l.b16 %v2012
    %v3634 = vunpack.c.h.b16 %v2012
    %v3635 = vunpack.c.l.b16 %v2013
    %v3636 = vunpack.c.l.b16 %v2014
    %v3637 = vunpack.c.h.b16 %v2014
    %v3638 = vunpack.c.l.b16 %v2015
    %v3639 = vunpack.c.l.b16 %v2016
    %v3640 = vunpack.c.h.b16 %v2016
    %v3641 = vunpack.c.l.b16 %v2017
    %v3642 = vunpack.c.l.b16 %v2018
    %v3643 = vunpack.c.h.b16 %v2018
    %v3644 = vunpack.c.l.b16 %v2019
    %v3645 = vunpack.c.l.b16 %v2020
    %v3646 = vunpack.c.h.b16 %v2020
    %v3647 = vunpack.c.l.b16 %v2021
    %v3648 = vunpack.c.l.b16 %v2022
    %v3649 = vunpack.c.h.b16 %v2022
    %v3650 = vunpack.c.l.b16 %v2023
    %v3651 = vunpack.c.l.b16 %v2024
    %v3652 = vunpack.c.h.b16 %v2024
    %v3653 = vunpack.c.l.b16 %v2025
    %v3654 = vunpack.c.l.b16 %v2026
    %v3655 = vunpack.c.h.b16 %v2026
    %v3656 = vunpack.c.l.b16 %v2027
    %v3657 = vunpack.c.l.b16 %v2028
    %v3658 = vunpack.c.h.b16 %v2028
    %v3659 = vunpack.c.l.b16 %v2029
    %v3660 = vunpack.c.l.b16 %v2030
    %v3661 = vunpack.c.h.b16 %v2030
    %v3662 = vunpack.c.l.b16 %v2031
    %v3663 = vunpack.c.l.b16 %v2032
    %v3664 = vunpack.c.h.b16 %v2032
    %v3665 = vunpack.c.l.b16 %v2033
    %v3666 = vunpack.c.l.b16 %v2034
    %v3667 = vunpack.c.h.b16 %v2034
    %v3668 = vunpack.c.l.b16 %v2035
    %v3669 = vunpack.c.l.b16 %v2036
    %v3670 = vunpack.c.h.b16 %v2036
    %v3671 = vunpack.c.l.b16 %v2037
    %v3672 = vunpack.c.l.b16 %v2038
    %v3673 = vunpack.c.h.b16 %v2038
    %v3674 = vunpack.c.l.b16 %v2039
    %v3675 = vunpack.c.l.b16 %v2040
    %v3676 = vunpack.c.h.b16 %v2040
    %v3677 = vunpack.c.l.b16 %v2041
    %v3678 = vunpack.c.l.b16 %v2042
    %v3679 = vunpack.c.h.b16 %v2042
    %v3680 = vunpack.c.l.b16 %v2043
    %v3681 = vunpack.c.l.b16 %v2044
    %v3682 = vunpack.c.h.b16 %v2044
    %v3683 = vunpack.c.l.b16 %v2045
    %v3684 = vunpack.c.l.b16 %v2046
    %v3685 = vunpack.c.h.b16 %v2046
    %v3686 = vunpack.c.l.b16 %v2047
    %v3687 = vunpack.c.l.b16 %v2048
    %v3688 = vunpack.c.h.b16 %v2048
    %v3689 = vunpack.c.l.b16 %v2049
    %v3690 = vunpack.c.l.b16 %v2050
    %v3691 = vunpack.c.h.b16 %v2050
    %v3692 = vunpack.c.l.b16 %v2051
    %v3693 = vunpack.c.l.b16 %v2052
    %v3694 = vunpack.c.h.b16 %v2052
    %v3695 = vunpack.c.l.b16 %v2053
    %v3696 = vunpack.c.l.b16 %v2054
    %v3697 = vunpack.c.h.b16 %v2054
    %v3698 = vunpack.c.l.b16 %v2055
    %v3699 = vunpack.c.l.b16 %v2056
    %v3700 = vunpack.c.h.b16 %v2056
    %v3701 = vunpack.c.l.b16 %v2057
    %v3702 = vunpack.c.l.b16 %v2058
    %v3703 = vunpack.c.h.b16 %v2058
    %v3704 = vunpack.c.l.b16 %v2059
    %v3705 = vunpack.c.l.b16 %v2060
    %v3706 = vunpack.c.h.b16 %v2060
    %v3707 = vunpack.c.l.b16 %v2061
    %v3708 = vunpack.c.l.b16 %v2062
    %v3709 = vunpack.c.h.b16 %v2062
    %v3710 = vunpack.c.l.b16 %v2063
    %v3711 = vunpack.c.l.b16 %v2064
    %v3712 = vunpack.c.h.b16 %v2064
    %v3713 = vunpack.c.l.b16 %v2065
    %v3714 = vunpack.c.l.b16 %v2066
    %v3715 = vunpack.c.h.b16 %v2066
    %v3716 = vunpack.c.l.b16 %v2067
    %v3717 = vunpack.c.l.b16 %v2068
    %v3718 = vunpack.c.h.b16 %v2068
    %v3719 = vunpack.c.l.b16 %v2069
    %v3720 = vunpack.c.l.b16 %v2070
    %v3721 = vunpack.c.h.b16 %v2070
    %v3722 = vunpack.c.l.b16 %v2071
    %v3723 = vunpack.c.l.b16 %v2072
    %v3724 = vunpack.c.h.b16 %v2072
    %v3725 = vunpack.c.l.b16 %v2073
    %v3726 = vunpack.c.l.b16 %v2074
    %v3727 = vunpack.c.h.b16 %v2074
    %v3728 = vunpack.c.l.b16 %v2075
    %v3729 = vunpack.c.l.b16 %v2076
    %v3730 = vunpack.c.h.b16 %v2076
    %v3731 = vunpack.c.l.b16 %v2077
    %v3732 = vunpack.c.l.b16 %v2078
    %v3733 = vunpack.c.h.b16 %v2078
    %v3734 = vunpack.c.l.b16 %v2079
    %v3735 = vunpack.c.l.b16 %v2080
    %v3736 = vunpack.c.h.b16 %v2080
    %v3737 = vunpack.c.l.b16 %v2081
    %v3738 = vunpack.c.l.b16 %v2082
    %v3739 = vunpack.c.h.b16 %v2082
    %v3740 = vunpack.c.l.b16 %v2083
    %v3741 = vunpack.c.l.b16 %v2084
    %v3742 = vunpack.c.h.b16 %v2084
    %v3743 = vunpack.c.l.b16 %v2085
    %v3744 = vunpack.c.l.b16 %v2086
    %v3745 = vunpack.c.h.b16 %v2086
    %v3746 = vunpack.c.l.b16 %v2087
    %v3747 = vunpack.c.l.b16 %v2088
    %v3748 = vunpack.c.h.b16 %v2088
    %v3749 = vunpack.c.l.b16 %v2089
    %v3750 = vunpack.c.l.b16 %v2090
    %v3751 = vunpack.c.h.b16 %v2090
    %v3752 = vunpack.c.l.b16 %v2091
    %v3753 = vunpack.c.l.b16 %v2092
    %v3754 = vunpack.c.h.b16 %v2092
    %v3755 = vunpack.c.l.b16 %v2093
    %v3756 = vunpack.c.l.b16 %v2094
    %v3757 = vunpack.c.h.b16 %v2094
    %v3758 = vunpack.c.l.b16 %v2095
    %v3759 = vunpack.c.l.b16 %v2096
    %v3760 = vunpack.c.h.b16 %v2096
    %v3761 = vunpack.c.l.b16 %v2097
    %v3762 = vunpack.c.l.b16 %v2098
    %v3763 = vunpack.c.h.b16 %v2098
    %v3764 = vunpack.c.l.b16 %v2099
    %v3765 = vunpack.c.l.b16 %v2100
    %v3766 = vunpack.c.h.b16 %v2100
    %v3767 = vunpack.c.l.b16 %v2101
    %v3768 = vunpack.c.l.b16 %v2102
    %v3769 = vunpack.c.h.b16 %v2102
    %v3770 = vunpack.c.l.b16 %v2103
    %v3771 = vunpack.c.l.b16 %v2104
    %v3772 = vunpack.c.h.b16 %v2104
    %v3773 = vunpack.c.l.b16 %v2105
    %v3774 = vunpack.c.l.b16 %v2106
    %v3775 = vunpack.c.h.b16 %v2106
    %v3776 = vunpack.c.l.b16 %v2107
    %v3777 = vunpack.c.l.b16 %v2108
    %v3778 = vunpack.c.h.b16 %v2108
    %v3779 = vunpack.c.l.b16 %v2109
    %v3780 = vunpack.c.l.b16 %v2110
    %v3781 = vunpack.c.h.b16 %v2110
    %v3782 = vunpack.c.l.b16 %v2111
    %v3783 = vunpack.c.l.b16 %v2112
    %v3784 = vunpack.c.h.b16 %v2112
    %v3785 = vunpack.c.l.b16 %v2113
    %v3786 = vunpack.c.l.b16 %v2114
    %v3787 = vunpack.c.h.b16 %v2114
    %v3788 = vunpack.c.l.b16 %v2115
    %v3789 = vunpack.c.l.b16 %v2116
    %v3790 = vunpack.c.h.b16 %v2116
    %v3791 = vunpack.c.l.b16 %v2117
    %v3792 = vunpack.c.l.b16 %v2118
    %v3793 = vunpack.c.h.b16 %v2118
    %v3794 = vunpack.c.l.b16 %v2119
    %v3795 = vunpack.c.l.b16 %v2120
    %v3796 = vunpack.c.h.b16 %v2120
    %v3797 = vunpack.c.l.b16 %v2121
    %v3798 = vunpack.c.l.b16 %v2122
    %v3799 = vunpack.c.h.b16 %v2122
    %v3800 = vunpack.c.l.b16 %v2123
    %v3801 = vunpack.c.l.b16 %v2124
    %v3802 = vunpack.c.h.b16 %v2124
    %v3803 = vunpack.c.l.b16 %v2125
    %v3804 = vunpack.c.l.b16 %v2126
    %v3805 = vunpack.c.h.b16 %v2126
    %v3806 = vunpack.c.l.b16 %v2127
    %v3807 = vunpack.c.l.b16 %v2128
    %v3808 = vunpack.c.h.b16 %v2128
    %v3809 = vunpack.c.l.b16 %v2129
    %v3810 = vunpack.c.l.b16 %v2130
    %v3811 = vunpack.c.h.b16 %v2130
    %v3812 = vunpack.c.l.b16 %v2131
    %v3813 = vunpack.c.l.b16 %v2132
    %v3814 = vunpack.c.h.b16 %v2132
    %v3815 = vunpack.c.l.b16 %v2133
    %v3816 = vpack.c.b16 %v3627, %v3624
    %v3817 = vpack.c.b16 %v3628, %v3625
    %v3818 = vpack.c.b16 %v3629, %v3626
    %v3819 = vpack.c.b16 %v3633, %v3630
    %v3820 = vpack.c.b16 %v3634, %v3631
    %v3821 = vpack.c.b16 %v3635, %v3632
    %v3822 = vpack.c.b16 %v3639, %v3636
    %v3823 = vpack.c.b16 %v3640, %v3637
    %v3824 = vpack.c.b16 %v3641, %v3638
    %v3825 = vpack.c.b16 %v3645, %v3642
    %v3826 = vpack.c.b16 %v3646, %v3643
    %v3827 = vpack.c.b16 %v3647, %v3644
    %v3828 = vpack.c.b16 %v3651, %v3648
    %v3829 = vpack.c.b16 %v3652, %v3649
    %v3830 = vpack.c.b16 %v3653, %v3650
    %v3831 = vpack.c.b16 %v3657, %v3654
    %v3832 = vpack.c.b16 %v3658, %v3655
    %v3833 = vpack.c.b16 %v3659, %v3656
    %v3834 = vpack.c.b16 %v3663, %v3660
    %v3835 = vpack.c.b16 %v3664, %v3661
    %v3836 = vpack.c.b16 %v3665, %v3662
    %v3837 = vpack.c.b16 %v3669, %v3666
    %v3838 = vpack.c.b16 %v3670, %v3667
    %v3839 = vpack.c.b16 %v3671, %v3668
    %v3840 = vpack.c.b16 %v3675, %v3672
    %v3841 = vpack.c.b16 %v3676, %v3673
    %v3842 = vpack.c.b16 %v3677, %v3674
    %v3843 = vpack.c.b16 %v3681, %v3678
    %v3844 = vpack.c.b16 %v3682, %v3679
    %v3845 = vpack.c.b16 %v3683, %v3680
    %v3846 = vpack.c.b16 %v3687, %v3684
    %v3847 = vpack.c.b16 %v3688, %v3685
    %v3848 = vpack.c.b16 %v3689, %v3686
    %v3849 = vpack.c.b16 %v3693, %v3690
    %v3850 = vpack.c.b16 %v3694, %v3691
    %v3851 = vpack.c.b16 %v3695, %v3692
    %v3852 = vpack.c.b16 %v3699, %v3696
    %v3853 = vpack.c.b16 %v3700, %v3697
    %v3854 = vpack.c.b16 %v3701, %v3698
    %v3855 = vpack.c.b16 %v3705, %v3702
    %v3856 = vpack.c.b16 %v3706, %v3703
    %v3857 = vpack.c.b16 %v3707, %v3704
    %v3858 = vpack.c.b16 %v3711, %v3708
    %v3859 = vpack.c.b16 %v3712, %v3709
    %v3860 = vpack.c.b16 %v3713, %v3710
    %v3861 = vpack.c.b16 %v3717, %v3714
    %v3862 = vpack.c.b16 %v3718, %v3715
    %v3863 = vpack.c.b16 %v3719, %v3716
    %v3864 = vpack.c.b16 %v3723, %v3720
    %v3865 = vpack.c.b16 %v3724, %v3721
    %v3866 = vpack.c.b16 %v3725, %v3722
    %v3867 = vpack.c.b16 %v3729, %v3726
    %v3868 = vpack.c.b16 %v3730, %v3727
    %v3869 = vpack.c.b16 %v3731, %v3728
    %v3870 = vpack.c.b16 %v3735, %v3732
    %v3871 = vpack.c.b16 %v3736, %v3733
    %v3872 = vpack.c.b16 %v3737, %v3734
    %v3873 = vpack.c.b16 %v3741, %v3738
    %v3874 = vpack.c.b16 %v3742, %v3739
    %v3875 = vpack.c.b16 %v3743, %v3740
    %v3876 = vpack.c.b16 %v3747, %v3744
    %v3877 = vpack.c.b16 %v3748, %v3745
    %v3878 = vpack.c.b16 %v3749, %v3746
    %v3879 = vpack.c.b16 %v3753, %v3750
    %v3880 = vpack.c.b16 %v3754, %v3751
    %v3881 = vpack.c.b16 %v3755, %v3752
    %v3882 = vpack.c.b16 %v3759, %v3756
    %v3883 = vpack.c.b16 %v3760, %v3757
    %v3884 = vpack.c.b16 %v3761, %v3758
    %v3885 = vpack.c.b16 %v3765, %v3762
    %v3886 = vpack.c.b16 %v3766, %v3763
    %v3887 = vpack.c.b16 %v3767, %v3764
    %v3888 = vpack.c.b16 %v3771, %v3768
    %v3889 = vpack.c.b16 %v3772, %v3769
    %v3890 = vpack.c.b16 %v3773, %v3770
    %v3891 = vpack.c.b16 %v3777, %v3774
    %v3892 = vpack.c.b16 %v3778, %v3775
    %v3893 = vpack.c.b16 %v3779, %v3776
    %v3894 = vpack.c.b16 %v3783, %v3780
    %v3895 = vpack.c.b16 %v3784, %v3781
    %v3896 = vpack.c.b16 %v3785, %v3782
    %v3897 = vpack.c.b16 %v3789, %v3786
    %v3898 = vpack.c.b16 %v3790, %v3787
    %v3899 = vpack.c.b16 %v3791, %v3788
    %v3900 = vpack.c.b16 %v3795, %v3792
    %v3901 = vpack.c.b16 %v3796, %v3793
    %v3902 = vpack.c.b16 %v3797, %v3794
    %v3903 = vpack.c.b16 %v3801, %v3798
    %v3904 = vpack.c.b16 %v3802, %v3799
    %v3905 = vpack.c.b16 %v3803, %v3800
    %v3906 = vpack.c.b16 %v3807, %v3804
    %v3907 = vpack.c.b16 %v3808, %v3805
    %v3908 = vpack.c.b16 %v3809, %v3806
    %v3909 = vpack.c.b16 %v3813, %v3810
    %v3910 = vpack.c.b16 %v3814, %v3811
    %v3911 = vpack.c.b16 %v3815, %v3812
    %v4056 = vunpack.c.l.b16 %v1862
    %v4057 = vunpack.c.l.b16 %v1863
    %v4058 = vunpack.c.l.b16 %v1864
    %v4059 = vunpack.c.l.b16 %v1865
    %v4060 = vunpack.c.l.b16 %v1866
    %v4061 = vunpack.c.l.b16 %v1867
    %v4062 = vunpack.c.l.b16 %v1868
    %v4063 = vunpack.c.l.b16 %v1869
    %v4064 = vunpack.c.l.b16 %v1870
    %v4065 = vunpack.c.l.b16 %v1871
    %v4066 = vunpack.c.l.b16 %v1872
    %v4067 = vunpack.c.l.b16 %v1873
    %v4068 = vunpack.c.l.b16 %v1874
    %v4069 = vunpack.c.l.b16 %v1875
    %v4070 = vunpack.c.l.b16 %v1876
    %v4071 = vunpack.c.l.b16 %v1877
    %v4072 = vunpack.c.l.b16 %v1878
    %v4073 = vunpack.c.l.b16 %v1879
    %v4074 = vunpack.c.l.b16 %v1880
    %v4075 = vunpack.c.l.b16 %v1881
    %v4076 = vunpack.c.l.b16 %v1882
    %v4077 = vunpack.c.l.b16 %v1883
    %v4078 = vunpack.c.l.b16 %v1884
    %v4079 = vunpack.c.l.b16 %v1885
    %v4080 = vunpack.c.l.b16 %v1886
    %v4081 = vunpack.c.l.b16 %v1887
    %v4082 = vunpack.c.l.b16 %v1888
    %v4083 = vunpack.c.l.b16 %v1889
    %v4084 = vunpack.c.l.b16 %v1890
    %v4085 = vunpack.c.l.b16 %v1891
    %v4086 = vunpack.c.l.b16 %v1892
    %v4087 = vunpack.c.l.b16 %v1893
    %v4088 = vunpack.c.l.b16 %v1894
    %v4089 = vunpack.c.l.b16 %v1895
    %v4090 = vunpack.c.l.b16 %v1896
    %v4091 = vunpack.c.l.b16 %v1897
    %v4092 = vunpack.c.l.b16 %v1898
    %v4093 = vunpack.c.l.b16 %v1899
    %v4094 = vunpack.c.l.b16 %v1900
    %v4095 = vunpack.c.l.b16 %v1901
    %v4096 = vunpack.c.l.b16 %v1902
    %v4097 = vunpack.c.l.b16 %v1903
    %v4098 = vunpack.c.l.b16 %v1904
    %v4099 = vunpack.c.l.b16 %v1905
    %v4100 = vunpack.c.l.b16 %v1906
    %v4101 = vunpack.c.l.b16 %v1907
    %v4102 = vunpack.c.l.b16 %v1908
    %v4103 = vunpack.c.l.b16 %v1909
    %v4104 = vpack.c.b16 %v4057, %v4056
    %v4105 = vpack.c.b16 %v4059, %v4058
    %v4106 = vpack.c.b16 %v4061, %v4060
    %v4107 = vpack.c.b16 %v4063, %v4062
    %v4108 = vpack.c.b16 %v4065, %v4064
    %v4109 = vpack.c.b16 %v4067, %v4066
    %v4110 = vpack.c.b16 %v4069, %v4068
    %v4111 = vpack.c.b16 %v4071, %v4070
    %v4112 = vpack.c.b16 %v4073, %v4072
    %v4113 = vpack.c.b16 %v4075, %v4074
    %v4114 = vpack.c.b16 %v4077, %v4076
    %v4115 = vpack.c.b16 %v4079, %v4078
    %v4116 = vpack.c.b16 %v4081, %v4080
    %v4117 = vpack.c.b16 %v4083, %v4082
    %v4118 = vpack.c.b16 %v4085, %v4084
    %v4119 = vpack.c.b16 %v4087, %v4086
    %v4120 = vpack.c.b16 %v4089, %v4088
    %v4121 = vpack.c.b16 %v4091, %v4090
    %v4122 = vpack.c.b16 %v4093, %v4092
    %v4123 = vpack.c.b16 %v4095, %v4094
    %v4124 = vpack.c.b16 %v4097, %v4096
    %v4125 = vpack.c.b16 %v4099, %v4098
    %v4126 = vpack.c.b16 %v4101, %v4100
    %v4127 = vpack.c.b16 %v4103, %v4102
    %4152 = vmatprep.subr.bf16.mxu0 0
    %4153 = vmatpush1.bf16.msra.mxu0 %v4111
    %4154 = vmatprep.subr.bf16.mxu0 0
    %4155 = vmatpush1.bf16.msra.mxu0 %v4110
    %4156 = vmatprep.subr.bf16.mxu0 0
    %4157 = vmatpush1.bf16.msra.mxu0 %v4109
    %4158 = vmatprep.subr.bf16.mxu0 0
    %4159 = vmatpush1.bf16.msra.mxu0 %v4108
    %4160 = vmatprep.subr.bf16.mxu0 0
    %4161 = vmatpush1.bf16.msra.mxu0 %v4107
    %4162 = vmatprep.subr.bf16.mxu0 0
    %4163 = vmatpush1.bf16.msra.mxu0 %v4106
    %4164 = vmatprep.subr.bf16.mxu0 0
    %4165 = vmatpush1.bf16.msra.mxu0 %v4105
    %4166 = vmatprep.subr.bf16.mxu0 0
    %4167 = vmatpush1.bf16.msra.mxu0 %v4104
    %4168 = vmatprep.subr.bf16.mxu0 0
    %4169 = vmatpush2.bf16.msra.mxu0 %v4119
    %4170 = vmatprep.subr.bf16.mxu0 0
    %4171 = vmatpush2.bf16.msra.mxu0 %v4118
    %4172 = vmatprep.subr.bf16.mxu0 0
    %4173 = vmatpush2.bf16.msra.mxu0 %v4117
    %4174 = vmatprep.subr.bf16.mxu0 0
    %4175 = vmatpush2.bf16.msra.mxu0 %v4116
    %4176 = vmatprep.subr.bf16.mxu0 0
    %4177 = vmatpush2.bf16.msra.mxu0 %v4115
    %4178 = vmatprep.subr.bf16.mxu0 0
    %4179 = vmatpush2.bf16.msra.mxu0 %v4114
    %4180 = vmatprep.subr.bf16.mxu0 0
    %4181 = vmatpush2.bf16.msra.mxu0 %v4113
    %4182 = vmatprep.subr.bf16.mxu0 0
    %4183 = vmatpush2.bf16.msra.mxu0 %v4112
    %4184 = vmatprep.mubr.bf16.mxu0 %v3817
    %4185 = vmatmul.mubr.bf16.gmra.mxu0 %v3816
    %v4186 = vpop.f32.mrf.mxu0
    %v4187 = vadd.f32 %v3242, %v4186
    %v4188 = vpop.f32.mrf.mxu0
    %v4189 = vpop.f32.mrf.mxu0
    %v4190 = vadd.f32 %v3245, %v4189
    %v4191 = vpop.f32.mrf.mxu0
    %4192 = vmatprep.mubr.bf16.mxu0 %v3820
    %4193 = vmatmul.mubr.bf16.gmra.mxu0 %v3819
    %v4194 = vpop.f32.mrf.mxu0
    %v4195 = vadd.f32 %v3250, %v4194
    %v4196 = vpop.f32.mrf.mxu0
    %v4197 = vpop.f32.mrf.mxu0
    %v4198 = vadd.f32 %v3253, %v4197
    %v4199 = vpop.f32.mrf.mxu0
    %4200 = vmatprep.mubr.bf16.mxu0 %v3823
    %4201 = vmatmul.mubr.bf16.gmra.mxu0 %v3822
    %v4202 = vpop.f32.mrf.mxu0
    %v4203 = vadd.f32 %v3258, %v4202
    %v4204 = vpop.f32.mrf.mxu0
    %v4205 = vpop.f32.mrf.mxu0
    %v4206 = vadd.f32 %v3261, %v4205
    %v4207 = vpop.f32.mrf.mxu0
    %4208 = vmatprep.mubr.bf16.mxu0 %v3826
    %4209 = vmatmul.mubr.bf16.gmra.mxu0 %v3825
    %v4210 = vpop.f32.mrf.mxu0
    %v4211 = vadd.f32 %v3266, %v4210
    %v4212 = vpop.f32.mrf.mxu0
    %v4213 = vpop.f32.mrf.mxu0
    %v4214 = vadd.f32 %v3269, %v4213
    %v4215 = vpop.f32.mrf.mxu0
    %4216 = vmatprep.mubr.bf16.mxu0 %v3829
    %4217 = vmatmul.mubr.bf16.gmra.mxu0 %v3828
    %v4218 = vpop.f32.mrf.mxu0
    %v4219 = vadd.f32 %v3274, %v4218
    %v4220 = vpop.f32.mrf.mxu0
    %v4221 = vpop.f32.mrf.mxu0
    %v4222 = vadd.f32 %v3277, %v4221
    %v4223 = vpop.f32.mrf.mxu0
    %4224 = vmatprep.mubr.bf16.mxu0 %v3832
    %4225 = vmatmul.mubr.bf16.gmra.mxu0 %v3831
    %v4226 = vpop.f32.mrf.mxu0
    %v4227 = vadd.f32 %v3282, %v4226
    %v4228 = vpop.f32.mrf.mxu0
    %v4229 = vpop.f32.mrf.mxu0
    %v4230 = vadd.f32 %v3285, %v4229
    %v4231 = vpop.f32.mrf.mxu0
    %4232 = vmatprep.mubr.bf16.mxu0 %v3835
    %4233 = vmatmul.mubr.bf16.gmra.mxu0 %v3834
    %v4234 = vpop.f32.mrf.mxu0
    %v4235 = vadd.f32 %v3290, %v4234
    %v4236 = vpop.f32.mrf.mxu0
    %v4237 = vpop.f32.mrf.mxu0
    %v4238 = vadd.f32 %v3293, %v4237
    %v4239 = vpop.f32.mrf.mxu0
    %4240 = vmatprep.mubr.bf16.mxu0 %v3838
    %4241 = vmatmul.mubr.bf16.gmra.mxu0 %v3837
    %v4242 = vpop.f32.mrf.mxu0
    %v4243 = vadd.f32 %v3298, %v4242
    %v4244 = vpop.f32.mrf.mxu0
    %v4245 = vpop.f32.mrf.mxu0
    %v4246 = vadd.f32 %v3301, %v4245
    %v4247 = vpop.f32.mrf.mxu0
    %4248 = vmatprep.mubr.bf16.mxu0 %v3841
    %4249 = vmatmul.mubr.bf16.gmra.mxu0 %v3840
    %v4250 = vpop.f32.mrf.mxu0
    %v4251 = vadd.f32 %v3306, %v4250
    %v4252 = vpop.f32.mrf.mxu0
    %v4253 = vpop.f32.mrf.mxu0
    %v4254 = vadd.f32 %v3309, %v4253
    %v4255 = vpop.f32.mrf.mxu0
    %4256 = vmatprep.mubr.bf16.mxu0 %v3844
    %4257 = vmatmul.mubr.bf16.gmra.mxu0 %v3843
    %v4258 = vpop.f32.mrf.mxu0
    %v4259 = vadd.f32 %v3314, %v4258
    %v4260 = vpop.f32.mrf.mxu0
    %v4261 = vpop.f32.mrf.mxu0
    %v4262 = vadd.f32 %v3317, %v4261
    %v4263 = vpop.f32.mrf.mxu0
    %4264 = vmatprep.mubr.bf16.mxu0 %v3847
    %4265 = vmatmul.mubr.bf16.gmra.mxu0 %v3846
    %v4266 = vpop.f32.mrf.mxu0
    %v4267 = vadd.f32 %v3322, %v4266
    %v4268 = vpop.f32.mrf.mxu0
    %v4269 = vpop.f32.mrf.mxu0
    %v4270 = vadd.f32 %v3325, %v4269
    %v4271 = vpop.f32.mrf.mxu0
    %4272 = vmatprep.mubr.bf16.mxu0 %v3850
    %4273 = vmatmul.mubr.bf16.gmra.mxu0 %v3849
    %v4274 = vpop.f32.mrf.mxu0
    %v4275 = vadd.f32 %v3330, %v4274
    %v4276 = vpop.f32.mrf.mxu0
    %v4277 = vpop.f32.mrf.mxu0
    %v4278 = vadd.f32 %v3333, %v4277
    %v4279 = vpop.f32.mrf.mxu0
    %4280 = vmatprep.mubr.bf16.mxu0 %v3853
    %4281 = vmatmul.mubr.bf16.gmra.mxu0 %v3852
    %v4282 = vpop.f32.mrf.mxu0
    %v4283 = vadd.f32 %v3338, %v4282
    %v4284 = vpop.f32.mrf.mxu0
    %v4285 = vpop.f32.mrf.mxu0
    %v4286 = vadd.f32 %v3341, %v4285
    %v4287 = vpop.f32.mrf.mxu0
    %4288 = vmatprep.mubr.bf16.mxu0 %v3856
    %4289 = vmatmul.mubr.bf16.gmra.mxu0 %v3855
    %v4290 = vpop.f32.mrf.mxu0
    %v4291 = vadd.f32 %v3346, %v4290
    %v4292 = vpop.f32.mrf.mxu0
    %v4293 = vpop.f32.mrf.mxu0
    %v4294 = vadd.f32 %v3349, %v4293
    %v4295 = vpop.f32.mrf.mxu0
    %4296 = vmatprep.mubr.bf16.mxu0 %v3859
    %4297 = vmatmul.mubr.bf16.gmra.mxu0 %v3858
    %v4298 = vpop.f32.mrf.mxu0
    %v4299 = vadd.f32 %v3354, %v4298
    %v4300 = vpop.f32.mrf.mxu0
    %v4301 = vpop.f32.mrf.mxu0
    %v4302 = vadd.f32 %v3357, %v4301
    %v4303 = vpop.f32.mrf.mxu0
    %4304 = vmatprep.mubr.bf16.mxu0 %v3862
    %4305 = vmatmul.mubr.bf16.gmra.mxu0 %v3861
    %v4306 = vpop.f32.mrf.mxu0
    %v4307 = vadd.f32 %v3362, %v4306
    %v4308 = vpop.f32.mrf.mxu0
    %v4309 = vpop.f32.mrf.mxu0
    %v4310 = vadd.f32 %v3365, %v4309
    %v4311 = vpop.f32.mrf.mxu0
    %4312 = vmatprep.mubr.bf16.mxu0 %v3865
    %4313 = vmatmul.mubr.bf16.gmra.mxu0 %v3864
    %v4314 = vpop.f32.mrf.mxu0
    %v4315 = vadd.f32 %v3370, %v4314
    %v4316 = vpop.f32.mrf.mxu0
    %v4317 = vpop.f32.mrf.mxu0
    %v4318 = vadd.f32 %v3373, %v4317
    %v4319 = vpop.f32.mrf.mxu0
    %4320 = vmatprep.mubr.bf16.mxu0 %v3868
    %4321 = vmatmul.mubr.bf16.gmra.mxu0 %v3867
    %v4322 = vpop.f32.mrf.mxu0
    %v4323 = vadd.f32 %v3378, %v4322
    %v4324 = vpop.f32.mrf.mxu0
    %v4325 = vpop.f32.mrf.mxu0
    %v4326 = vadd.f32 %v3381, %v4325
    %v4327 = vpop.f32.mrf.mxu0
    %4328 = vmatprep.mubr.bf16.mxu0 %v3871
    %4329 = vmatmul.mubr.bf16.gmra.mxu0 %v3870
    %v4330 = vpop.f32.mrf.mxu0
    %v4331 = vadd.f32 %v3386, %v4330
    %v4332 = vpop.f32.mrf.mxu0
    %v4333 = vpop.f32.mrf.mxu0
    %v4334 = vadd.f32 %v3389, %v4333
    %v4335 = vpop.f32.mrf.mxu0
    %4336 = vmatprep.mubr.bf16.mxu0 %v3874
    %4337 = vmatmul.mubr.bf16.gmra.mxu0 %v3873
    %v4338 = vpop.f32.mrf.mxu0
    %v4339 = vadd.f32 %v3394, %v4338
    %v4340 = vpop.f32.mrf.mxu0
    %v4341 = vpop.f32.mrf.mxu0
    %v4342 = vadd.f32 %v3397, %v4341
    %v4343 = vpop.f32.mrf.mxu0
    %4344 = vmatprep.mubr.bf16.mxu0 %v3877
    %4345 = vmatmul.mubr.bf16.gmra.mxu0 %v3876
    %v4346 = vpop.f32.mrf.mxu0
    %v4347 = vadd.f32 %v3402, %v4346
    %v4348 = vpop.f32.mrf.mxu0
    %v4349 = vpop.f32.mrf.mxu0
    %v4350 = vadd.f32 %v3405, %v4349
    %v4351 = vpop.f32.mrf.mxu0
    %4352 = vmatprep.mubr.bf16.mxu0 %v3880
    %4353 = vmatmul.mubr.bf16.gmra.mxu0 %v3879
    %v4354 = vpop.f32.mrf.mxu0
    %v4355 = vadd.f32 %v3410, %v4354
    %v4356 = vpop.f32.mrf.mxu0
    %v4357 = vpop.f32.mrf.mxu0
    %v4358 = vadd.f32 %v3413, %v4357
    %v4359 = vpop.f32.mrf.mxu0
    %4360 = vmatprep.mubr.bf16.mxu0 %v3883
    %4361 = vmatmul.mubr.bf16.gmra.mxu0 %v3882
    %v4362 = vpop.f32.mrf.mxu0
    %v4363 = vadd.f32 %v3418, %v4362
    %v4364 = vpop.f32.mrf.mxu0
    %v4365 = vpop.f32.mrf.mxu0
    %v4366 = vadd.f32 %v3421, %v4365
    %v4367 = vpop.f32.mrf.mxu0
    %4368 = vmatprep.mubr.bf16.mxu0 %v3886
    %4369 = vmatmul.mubr.bf16.gmra.mxu0 %v3885
    %v4370 = vpop.f32.mrf.mxu0
    %v4371 = vadd.f32 %v3426, %v4370
    %v4372 = vpop.f32.mrf.mxu0
    %v4373 = vpop.f32.mrf.mxu0
    %v4374 = vadd.f32 %v3429, %v4373
    %v4375 = vpop.f32.mrf.mxu0
    %4376 = vmatprep.mubr.bf16.mxu0 %v3889
    %4377 = vmatmul.mubr.bf16.gmra.mxu0 %v3888
    %v4378 = vpop.f32.mrf.mxu0
    %v4379 = vadd.f32 %v3434, %v4378
    %v4380 = vpop.f32.mrf.mxu0
    %v4381 = vpop.f32.mrf.mxu0
    %v4382 = vadd.f32 %v3437, %v4381
    %v4383 = vpop.f32.mrf.mxu0
    %4384 = vmatprep.mubr.bf16.mxu0 %v3892
    %4385 = vmatmul.mubr.bf16.gmra.mxu0 %v3891
    %v4386 = vpop.f32.mrf.mxu0
    %v4387 = vadd.f32 %v3442, %v4386
    %v4388 = vpop.f32.mrf.mxu0
    %v4389 = vpop.f32.mrf.mxu0
    %v4390 = vadd.f32 %v3445, %v4389
    %v4391 = vpop.f32.mrf.mxu0
    %4392 = vmatprep.mubr.bf16.mxu0 %v3895
    %4393 = vmatmul.mubr.bf16.gmra.mxu0 %v3894
    %v4394 = vpop.f32.mrf.mxu0
    %v4395 = vadd.f32 %v3450, %v4394
    %v4396 = vpop.f32.mrf.mxu0
    %v4397 = vpop.f32.mrf.mxu0
    %v4398 = vadd.f32 %v3453, %v4397
    %v4399 = vpop.f32.mrf.mxu0
    %4400 = vmatprep.mubr.bf16.mxu0 %v3898
    %4401 = vmatmul.mubr.bf16.gmra.mxu0 %v3897
    %v4402 = vpop.f32.mrf.mxu0
    %v4403 = vadd.f32 %v3458, %v4402
    %v4404 = vpop.f32.mrf.mxu0
    %v4405 = vpop.f32.mrf.mxu0
    %v4406 = vadd.f32 %v3461, %v4405
    %v4407 = vpop.f32.mrf.mxu0
    %4408 = vmatprep.mubr.bf16.mxu0 %v3901
    %4409 = vmatmul.mubr.bf16.gmra.mxu0 %v3900
    %v4410 = vpop.f32.mrf.mxu0
    %v4411 = vadd.f32 %v3466, %v4410
    %v4412 = vpop.f32.mrf.mxu0
    %v4413 = vpop.f32.mrf.mxu0
    %v4414 = vadd.f32 %v3469, %v4413
    %v4415 = vpop.f32.mrf.mxu0
    %4416 = vmatprep.mubr.bf16.mxu0 %v3904
    %4417 = vmatmul.mubr.bf16.gmra.mxu0 %v3903
    %v4418 = vpop.f32.mrf.mxu0
    %v4419 = vadd.f32 %v3474, %v4418
    %v4420 = vpop.f32.mrf.mxu0
    %v4421 = vpop.f32.mrf.mxu0
    %v4422 = vadd.f32 %v3477, %v4421
    %v4423 = vpop.f32.mrf.mxu0
    %4424 = vmatprep.mubr.bf16.mxu0 %v3907
    %4425 = vmatmul.mubr.bf16.gmra.mxu0 %v3906
    %v4426 = vpop.f32.mrf.mxu0
    %v4427 = vadd.f32 %v3482, %v4426
    %v4428 = vpop.f32.mrf.mxu0
    %v4429 = vpop.f32.mrf.mxu0
    %v4430 = vadd.f32 %v3485, %v4429
    %v4431 = vpop.f32.mrf.mxu0
    %4432 = vmatprep.mubr.bf16.mxu0 %v3910
    %4433 = vmatmul.mubr.bf16.gmra.mxu0 %v3909
    %v4434 = vpop.f32.mrf.mxu0
    %v4435 = vadd.f32 %v3490, %v4434
    %v4436 = vpop.f32.mrf.mxu0
    %v4437 = vpop.f32.mrf.mxu0
    %v4438 = vadd.f32 %v3493, %v4437
    %v4439 = vpop.f32.mrf.mxu0
    %4440 = vdwg.mxu0
    %4441 = vmatprep.subr.bf16.mxu0 0
    %4442 = vmatpush1.bf16.msra.mxu0 %v4127
    %4443 = vmatprep.subr.bf16.mxu0 0
    %4444 = vmatpush1.bf16.msra.mxu0 %v4126
    %4445 = vmatprep.subr.bf16.mxu0 0
    %4446 = vmatpush1.bf16.msra.mxu0 %v4125
    %4447 = vmatprep.subr.bf16.mxu0 0
    %4448 = vmatpush1.bf16.msra.mxu0 %v4124
    %4449 = vmatprep.subr.bf16.mxu0 0
    %4450 = vmatpush1.bf16.msra.mxu0 %v4123
    %4451 = vmatprep.subr.bf16.mxu0 0
    %4452 = vmatpush1.bf16.msra.mxu0 %v4122
    %4453 = vmatprep.subr.bf16.mxu0 0
    %4454 = vmatpush1.bf16.msra.mxu0 %v4121
    %4455 = vmatprep.subr.bf16.mxu0 0
    %4456 = vmatpush1.bf16.msra.mxu0 %v4120
    %4457 = vmatprep.subr.bf16.mxu0 0
    %4458 = vmatpush2.bf16.msra.mxu0 0
    %4459 = vmatprep.subr.bf16.mxu0 0
    %4460 = vmatpush2.bf16.msra.mxu0 0
    %4461 = vmatprep.subr.bf16.mxu0 0
    %4462 = vmatpush2.bf16.msra.mxu0 0
    %4463 = vmatprep.subr.bf16.mxu0 0
    %4464 = vmatpush2.bf16.msra.mxu0 0
    %4465 = vmatprep.subr.bf16.mxu0 0
    %4466 = vmatpush2.bf16.msra.mxu0 0
    %4467 = vmatprep.subr.bf16.mxu0 0
    %4468 = vmatpush2.bf16.msra.mxu0 0
    %4469 = vmatprep.subr.bf16.mxu0 0
    %4470 = vmatpush2.bf16.msra.mxu0 0
    %4471 = vmatprep.subr.bf16.mxu0 0
    %4472 = vmatpush2.bf16.msra.mxu0 0
    %4473 = vmatprep.mubr.bf16.mxu0 0
    %4474 = vmatmul.mubr.bf16.gmra.mxu0 %v3818
    %v4475 = vpop.f32.mrf.mxu0
    %v4476 = vadd.f32 %v4187, %v4475
    %v4477 = vpop.f32.mrf.mxu0
    %v4478 = vpop.f32.mrf.mxu0
    %v4479 = vadd.f32 %v4190, %v4478
    %v4480 = vpop.f32.mrf.mxu0
    %4481 = vmatprep.mubr.bf16.mxu0 0
    %4482 = vmatmul.mubr.bf16.gmra.mxu0 %v3821
    %v4483 = vpop.f32.mrf.mxu0
    %v4484 = vadd.f32 %v4195, %v4483
    %v4485 = vpop.f32.mrf.mxu0
    %v4486 = vpop.f32.mrf.mxu0
    %v4487 = vadd.f32 %v4198, %v4486
    %v4488 = vpop.f32.mrf.mxu0
    %4489 = vmatprep.mubr.bf16.mxu0 0
    %4490 = vmatmul.mubr.bf16.gmra.mxu0 %v3824
    %v4491 = vpop.f32.mrf.mxu0
    %v4492 = vadd.f32 %v4203, %v4491
    %v4493 = vpop.f32.mrf.mxu0
    %v4494 = vpop.f32.mrf.mxu0
    %v4495 = vadd.f32 %v4206, %v4494
    %v4496 = vpop.f32.mrf.mxu0
    %4497 = vmatprep.mubr.bf16.mxu0 0
    %4498 = vmatmul.mubr.bf16.gmra.mxu0 %v3827
    %v4499 = vpop.f32.mrf.mxu0
    %v4500 = vadd.f32 %v4211, %v4499
    %v4501 = vpop.f32.mrf.mxu0
    %v4502 = vpop.f32.mrf.mxu0
    %v4503 = vadd.f32 %v4214, %v4502
    %v4504 = vpop.f32.mrf.mxu0
    %4505 = vmatprep.mubr.bf16.mxu0 0
    %4506 = vmatmul.mubr.bf16.gmra.mxu0 %v3830
    %v4507 = vpop.f32.mrf.mxu0
    %v4508 = vadd.f32 %v4219, %v4507
    %v4509 = vpop.f32.mrf.mxu0
    %v4510 = vpop.f32.mrf.mxu0
    %v4511 = vadd.f32 %v4222, %v4510
    %v4512 = vpop.f32.mrf.mxu0
    %4513 = vmatprep.mubr.bf16.mxu0 0
    %4514 = vmatmul.mubr.bf16.gmra.mxu0 %v3833
    %v4515 = vpop.f32.mrf.mxu0
    %v4516 = vadd.f32 %v4227, %v4515
    %v4517 = vpop.f32.mrf.mxu0
    %v4518 = vpop.f32.mrf.mxu0
    %v4519 = vadd.f32 %v4230, %v4518
    %v4520 = vpop.f32.mrf.mxu0
    %4521 = vmatprep.mubr.bf16.mxu0 0
    %4522 = vmatmul.mubr.bf16.gmra.mxu0 %v3836
    %v4523 = vpop.f32.mrf.mxu0
    %v4524 = vadd.f32 %v4235, %v4523
    %v4525 = vpop.f32.mrf.mxu0
    %v4526 = vpop.f32.mrf.mxu0
    %v4527 = vadd.f32 %v4238, %v4526
    %v4528 = vpop.f32.mrf.mxu0
    %4529 = vmatprep.mubr.bf16.mxu0 0
    %4530 = vmatmul.mubr.bf16.gmra.mxu0 %v3839
    %v4531 = vpop.f32.mrf.mxu0
    %v4532 = vadd.f32 %v4243, %v4531
    %v4533 = vpop.f32.mrf.mxu0
    %v4534 = vpop.f32.mrf.mxu0
    %v4535 = vadd.f32 %v4246, %v4534
    %v4536 = vpop.f32.mrf.mxu0
    %4537 = vmatprep.mubr.bf16.mxu0 0
    %4538 = vmatmul.mubr.bf16.gmra.mxu0 %v3842
    %v4539 = vpop.f32.mrf.mxu0
    %v4540 = vadd.f32 %v4251, %v4539
    %v4541 = vpop.f32.mrf.mxu0
    %v4542 = vpop.f32.mrf.mxu0
    %v4543 = vadd.f32 %v4254, %v4542
    %v4544 = vpop.f32.mrf.mxu0
    %4545 = vmatprep.mubr.bf16.mxu0 0
    %4546 = vmatmul.mubr.bf16.gmra.mxu0 %v3845
    %v4547 = vpop.f32.mrf.mxu0
    %v4548 = vadd.f32 %v4259, %v4547
    %v4549 = vpop.f32.mrf.mxu0
    %v4550 = vpop.f32.mrf.mxu0
    %v4551 = vadd.f32 %v4262, %v4550
    %v4552 = vpop.f32.mrf.mxu0
    %4553 = vmatprep.mubr.bf16.mxu0 0
    %4554 = vmatmul.mubr.bf16.gmra.mxu0 %v3848
    %v4555 = vpop.f32.mrf.mxu0
    %v4556 = vadd.f32 %v4267, %v4555
    %v4557 = vpop.f32.mrf.mxu0
    %v4558 = vpop.f32.mrf.mxu0
    %v4559 = vadd.f32 %v4270, %v4558
    %v4560 = vpop.f32.mrf.mxu0
    %4561 = vmatprep.mubr.bf16.mxu0 0
    %4562 = vmatmul.mubr.bf16.gmra.mxu0 %v3851
    %v4563 = vpop.f32.mrf.mxu0
    %v4564 = vadd.f32 %v4275, %v4563
    %v4565 = vpop.f32.mrf.mxu0
    %v4566 = vpop.f32.mrf.mxu0
    %v4567 = vadd.f32 %v4278, %v4566
    %v4568 = vpop.f32.mrf.mxu0
    %4569 = vmatprep.mubr.bf16.mxu0 0
    %4570 = vmatmul.mubr.bf16.gmra.mxu0 %v3854
    %v4571 = vpop.f32.mrf.mxu0
    %v4572 = vadd.f32 %v4283, %v4571
    %v4573 = vpop.f32.mrf.mxu0
    %v4574 = vpop.f32.mrf.mxu0
    %v4575 = vadd.f32 %v4286, %v4574
    %v4576 = vpop.f32.mrf.mxu0
    %4577 = vmatprep.mubr.bf16.mxu0 0
    %4578 = vmatmul.mubr.bf16.gmra.mxu0 %v3857
    %v4579 = vpop.f32.mrf.mxu0
    %v4580 = vadd.f32 %v4291, %v4579
    %v4581 = vpop.f32.mrf.mxu0
    %v4582 = vpop.f32.mrf.mxu0
    %v4583 = vadd.f32 %v4294, %v4582
    %v4584 = vpop.f32.mrf.mxu0
    %4585 = vmatprep.mubr.bf16.mxu0 0
    %4586 = vmatmul.mubr.bf16.gmra.mxu0 %v3860
    %v4587 = vpop.f32.mrf.mxu0
    %v4588 = vadd.f32 %v4299, %v4587
    %v4589 = vpop.f32.mrf.mxu0
    %v4590 = vpop.f32.mrf.mxu0
    %v4591 = vadd.f32 %v4302, %v4590
    %v4592 = vpop.f32.mrf.mxu0
    %4593 = vmatprep.mubr.bf16.mxu0 0
    %4594 = vmatmul.mubr.bf16.gmra.mxu0 %v3863
    %v4595 = vpop.f32.mrf.mxu0
    %v4596 = vadd.f32 %v4307, %v4595
    %v4597 = vpop.f32.mrf.mxu0
    %v4598 = vpop.f32.mrf.mxu0
    %v4599 = vadd.f32 %v4310, %v4598
    %v4600 = vpop.f32.mrf.mxu0
    %4601 = vmatprep.mubr.bf16.mxu0 0
    %4602 = vmatmul.mubr.bf16.gmra.mxu0 %v3866
    %v4603 = vpop.f32.mrf.mxu0
    %v4604 = vadd.f32 %v4315, %v4603
    %v4605 = vpop.f32.mrf.mxu0
    %v4606 = vpop.f32.mrf.mxu0
    %v4607 = vadd.f32 %v4318, %v4606
    %v4608 = vpop.f32.mrf.mxu0
    %4609 = vmatprep.mubr.bf16.mxu0 0
    %4610 = vmatmul.mubr.bf16.gmra.mxu0 %v3869
    %v4611 = vpop.f32.mrf.mxu0
    %v4612 = vadd.f32 %v4323, %v4611
    %v4613 = vpop.f32.mrf.mxu0
    %v4614 = vpop.f32.mrf.mxu0
    %v4615 = vadd.f32 %v4326, %v4614
    %v4616 = vpop.f32.mrf.mxu0
    %4617 = vmatprep.mubr.bf16.mxu0 0
    %4618 = vmatmul.mubr.bf16.gmra.mxu0 %v3872
    %v4619 = vpop.f32.mrf.mxu0
    %v4620 = vadd.f32 %v4331, %v4619
    %v4621 = vpop.f32.mrf.mxu0
    %v4622 = vpop.f32.mrf.mxu0
    %v4623 = vadd.f32 %v4334, %v4622
    %v4624 = vpop.f32.mrf.mxu0
    %4625 = vmatprep.mubr.bf16.mxu0 0
    %4626 = vmatmul.mubr.bf16.gmra.mxu0 %v3875
    %v4627 = vpop.f32.mrf.mxu0
    %v4628 = vadd.f32 %v4339, %v4627
    %v4629 = vpop.f32.mrf.mxu0
    %v4630 = vpop.f32.mrf.mxu0
    %v4631 = vadd.f32 %v4342, %v4630
    %v4632 = vpop.f32.mrf.mxu0
    %4633 = vmatprep.mubr.bf16.mxu0 0
    %4634 = vmatmul.mubr.bf16.gmra.mxu0 %v3878
    %v4635 = vpop.f32.mrf.mxu0
    %v4636 = vadd.f32 %v4347, %v4635
    %v4637 = vpop.f32.mrf.mxu0
    %v4638 = vpop.f32.mrf.mxu0
    %v4639 = vadd.f32 %v4350, %v4638
    %v4640 = vpop.f32.mrf.mxu0
    %4641 = vmatprep.mubr.bf16.mxu0 0
    %4642 = vmatmul.mubr.bf16.gmra.mxu0 %v3881
    %v4643 = vpop.f32.mrf.mxu0
    %v4644 = vadd.f32 %v4355, %v4643
    %v4645 = vpop.f32.mrf.mxu0
    %v4646 = vpop.f32.mrf.mxu0
    %v4647 = vadd.f32 %v4358, %v4646
    %v4648 = vpop.f32.mrf.mxu0
    %4649 = vmatprep.mubr.bf16.mxu0 0
    %4650 = vmatmul.mubr.bf16.gmra.mxu0 %v3884
    %v4651 = vpop.f32.mrf.mxu0
    %v4652 = vadd.f32 %v4363, %v4651
    %v4653 = vpop.f32.mrf.mxu0
    %v4654 = vpop.f32.mrf.mxu0
    %v4655 = vadd.f32 %v4366, %v4654
    %v4656 = vpop.f32.mrf.mxu0
    %4657 = vmatprep.mubr.bf16.mxu0 0
    %4658 = vmatmul.mubr.bf16.gmra.mxu0 %v3887
    %v4659 = vpop.f32.mrf.mxu0
    %v4660 = vadd.f32 %v4371, %v4659
    %v4661 = vpop.f32.mrf.mxu0
    %v4662 = vpop.f32.mrf.mxu0
    %v4663 = vadd.f32 %v4374, %v4662
    %v4664 = vpop.f32.mrf.mxu0
    %4665 = vmatprep.mubr.bf16.mxu0 0
    %4666 = vmatmul.mubr.bf16.gmra.mxu0 %v3890
    %v4667 = vpop.f32.mrf.mxu0
    %v4668 = vadd.f32 %v4379, %v4667
    %v4669 = vpop.f32.mrf.mxu0
    %v4670 = vpop.f32.mrf.mxu0
    %v4671 = vadd.f32 %v4382, %v4670
    %v4672 = vpop.f32.mrf.mxu0
    %4673 = vmatprep.mubr.bf16.mxu0 0
    %4674 = vmatmul.mubr.bf16.gmra.mxu0 %v3893
    %v4675 = vpop.f32.mrf.mxu0
    %v4676 = vadd.f32 %v4387, %v4675
    %v4677 = vpop.f32.mrf.mxu0
    %v4678 = vpop.f32.mrf.mxu0
    %v4679 = vadd.f32 %v4390, %v4678
    %v4680 = vpop.f32.mrf.mxu0
    %4681 = vmatprep.mubr.bf16.mxu0 0
    %4682 = vmatmul.mubr.bf16.gmra.mxu0 %v3896
    %v4683 = vpop.f32.mrf.mxu0
    %v4684 = vadd.f32 %v4395, %v4683
    %v4685 = vpop.f32.mrf.mxu0
    %v4686 = vpop.f32.mrf.mxu0
    %v4687 = vadd.f32 %v4398, %v4686
    %v4688 = vpop.f32.mrf.mxu0
    %4689 = vmatprep.mubr.bf16.mxu0 0
    %4690 = vmatmul.mubr.bf16.gmra.mxu0 %v3899
    %v4691 = vpop.f32.mrf.mxu0
    %v4692 = vadd.f32 %v4403, %v4691
    %v4693 = vpop.f32.mrf.mxu0
    %v4694 = vpop.f32.mrf.mxu0
    %v4695 = vadd.f32 %v4406, %v4694
    %v4696 = vpop.f32.mrf.mxu0
    %4697 = vmatprep.mubr.bf16.mxu0 0
    %4698 = vmatmul.mubr.bf16.gmra.mxu0 %v3902
    %v4699 = vpop.f32.mrf.mxu0
    %v4700 = vadd.f32 %v4411, %v4699
    %v4701 = vpop.f32.mrf.mxu0
    %v4702 = vpop.f32.mrf.mxu0
    %v4703 = vadd.f32 %v4414, %v4702
    %v4704 = vpop.f32.mrf.mxu0
    %4705 = vmatprep.mubr.bf16.mxu0 0
    %4706 = vmatmul.mubr.bf16.gmra.mxu0 %v3905
    %v4707 = vpop.f32.mrf.mxu0
    %v4708 = vadd.f32 %v4419, %v4707
    %v4709 = vpop.f32.mrf.mxu0
    %v4710 = vpop.f32.mrf.mxu0
    %v4711 = vadd.f32 %v4422, %v4710
    %v4712 = vpop.f32.mrf.mxu0
    %4713 = vmatprep.mubr.bf16.mxu0 0
    %4714 = vmatmul.mubr.bf16.gmra.mxu0 %v3908
    %v4715 = vpop.f32.mrf.mxu0
    %v4716 = vadd.f32 %v4427, %v4715
    %v4717 = vpop.f32.mrf.mxu0
    %v4718 = vpop.f32.mrf.mxu0
    %v4719 = vadd.f32 %v4430, %v4718
    %v4720 = vpop.f32.mrf.mxu0
    %4721 = vmatprep.mubr.bf16.mxu0 0
    %4722 = vmatmul.mubr.bf16.gmra.mxu0 %v3911
    %v4723 = vpop.f32.mrf.mxu0
    %v4724 = vadd.f32 %v4435, %v4723
    %v4725 = vpop.f32.mrf.mxu0
    %v4726 = vpop.f32.mrf.mxu0
    %v4727 = vadd.f32 %v4438, %v4726
    %v4728 = vpop.f32.mrf.mxu0
    %4729 = vdwg.mxu0
    %s4730 = scalar_lea.vmem [#allocation2], 48
    %v4731 = vld [vmem:[%s4730] sm:$0xff]
    %v4732 = vld [vmem:[%s4730 + $0x8] sm:$0xf]
    %v4733 = vld [vmem:[%s4730 + $0xc] sm:$0xff]
    %v4734 = vld [vmem:[%s4730 + $0x14] sm:$0xf]
    %v4735 = vld [vmem:[%s4730 + $0x18] sm:$0xff]
    %v4736 = vld [vmem:[%s4730 + $0x20] sm:$0xf]
    %v4737 = vld [vmem:[%s4730 + $0x24] sm:$0xff]
    %v4738 = vld [vmem:[%s4730 + $0x2c] sm:$0xf]
    %v4739 = vld [vmem:[%s4730 + $0x30] sm:$0xff]
    %v4740 = vld [vmem:[%s4730 + $0x38] sm:$0xf]
    %v4741 = vld [vmem:[%s4730 + $0x3c] sm:$0xff]
    %v4742 = vld [vmem:[%s4730 + $0x44] sm:$0xf]
    %v4743 = vld [vmem:[%s4730 + $0x48] sm:$0xff]
    %v4744 = vld [vmem:[%s4730 + $0x50] sm:$0xf]
    %v4745 = vld [vmem:[%s4730 + $0x54] sm:$0xff]
    %v4746 = vld [vmem:[%s4730 + $0x5c] sm:$0xf]
    %v4747 = vld [vmem:[%s4730 + $0x60] sm:$0xff]
    %v4748 = vld [vmem:[%s4730 + $0x68] sm:$0xf]
    %v4749 = vld [vmem:[%s4730 + $0x6c] sm:$0xff]
    %v4750 = vld [vmem:[%s4730 + $0x74] sm:$0xf]
    %v4751 = vld [vmem:[%s4730 + $0x78] sm:$0xff]
    %v4752 = vld [vmem:[%s4730 + $0x80] sm:$0xf]
    %v4753 = vld [vmem:[%s4730 + $0x84] sm:$0xff]
    %v4754 = vld [vmem:[%s4730 + $0x8c] sm:$0xf]
    %v4755 = vld [vmem:[%s4730 + $0x90] sm:$0xff]
    %v4756 = vld [vmem:[%s4730 + $0x98] sm:$0xf]
    %v4757 = vld [vmem:[%s4730 + $0x9c] sm:$0xff]
    %v4758 = vld [vmem:[%s4730 + $0xa4] sm:$0xf]
    %v4759 = vld [vmem:[%s4730 + $0xa8] sm:$0xff]
    %v4760 = vld [vmem:[%s4730 + $0xb0] sm:$0xf]
    %v4761 = vld [vmem:[%s4730 + $0xb4] sm:$0xff]
    %v4762 = vld [vmem:[%s4730 + $0xbc] sm:$0xf]
    %v4763 = vld [vmem:[%s4730 + $0xc0] sm:$0xff]
    %v4764 = vld [vmem:[%s4730 + $0xc8] sm:$0xf]
    %v4765 = vld [vmem:[%s4730 + $0xcc] sm:$0xff]
    %v4766 = vld [vmem:[%s4730 + $0xd4] sm:$0xf]
    %v4767 = vld [vmem:[%s4730 + $0xd8] sm:$0xff]
    %v4768 = vld [vmem:[%s4730 + $0xe0] sm:$0xf]
    %v4769 = vld [vmem:[%s4730 + $0xe4] sm:$0xff]
    %v4770 = vld [vmem:[%s4730 + $0xec] sm:$0xf]
    %v4771 = vld [vmem:[%s4730 + $0xf0] sm:$0xff]
    %v4772 = vld [vmem:[%s4730 + $0xf8] sm:$0xf]
    %v4773 = vld [vmem:[%s4730 + $0xfc] sm:$0xff]
    %v4774 = vld [vmem:[%s4730 + $0x104] sm:$0xf]
    %v4775 = vld [vmem:[%s4730 + $0x108] sm:$0xff]
    %v4776 = vld [vmem:[%s4730 + $0x110] sm:$0xf]
    %v4777 = vld [vmem:[%s4730 + $0x114] sm:$0xff]
    %v4778 = vld [vmem:[%s4730 + $0x11c] sm:$0xf]
    %v4779 = vld [vmem:[%s4730 + $0x120] sm:$0xff]
    %v4780 = vld [vmem:[%s4730 + $0x128] sm:$0xf]
    %v4781 = vld [vmem:[%s4730 + $0x12c] sm:$0xff]
    %v4782 = vld [vmem:[%s4730 + $0x134] sm:$0xf]
    %v4783 = vld [vmem:[%s4730 + $0x138] sm:$0xff]
    %v4784 = vld [vmem:[%s4730 + $0x140] sm:$0xf]
    %v4785 = vld [vmem:[%s4730 + $0x144] sm:$0xff]
    %v4786 = vld [vmem:[%s4730 + $0x14c] sm:$0xf]
    %v4787 = vld [vmem:[%s4730 + $0x150] sm:$0xff]
    %v4788 = vld [vmem:[%s4730 + $0x158] sm:$0xf]
    %v4789 = vld [vmem:[%s4730 + $0x15c] sm:$0xff]
    %v4790 = vld [vmem:[%s4730 + $0x164] sm:$0xf]
    %v4791 = vld [vmem:[%s4730 + $0x168] sm:$0xff]
    %v4792 = vld [vmem:[%s4730 + $0x170] sm:$0xf]
    %v4793 = vld [vmem:[%s4730 + $0x174] sm:$0xff]
    %v4794 = vld [vmem:[%s4730 + $0x17c] sm:$0xf]
    %v4795 = vld [vmem:[%s4730 + $0x1b0] sm:$0xff]
    %v4796 = vld [vmem:[%s4730 + $0x1b8] sm:$0xf]
    %v4797 = vld [vmem:[%s4730 + $0x1bc] sm:$0xff]
    %v4798 = vld [vmem:[%s4730 + $0x1c4] sm:$0xf]
    %v4799 = vld [vmem:[%s4730 + $0x1c8] sm:$0xff]
    %v4800 = vld [vmem:[%s4730 + $0x1d0] sm:$0xf]
    %v4801 = vld [vmem:[%s4730 + $0x1d4] sm:$0xff]
    %v4802 = vld [vmem:[%s4730 + $0x1dc] sm:$0xf]
    %v4803 = vld [vmem:[%s4730 + $0x1e0] sm:$0xff]
    %v4804 = vld [vmem:[%s4730 + $0x1e8] sm:$0xf]
    %v4805 = vld [vmem:[%s4730 + $0x1ec] sm:$0xff]
    %v4806 = vld [vmem:[%s4730 + $0x1f4] sm:$0xf]
    %v4807 = vld [vmem:[%s4730 + $0x1f8] sm:$0xff]
    %v4808 = vld [vmem:[%s4730 + $0x200] sm:$0xf]
    %v4809 = vld [vmem:[%s4730 + $0x204] sm:$0xff]
    %v4810 = vld [vmem:[%s4730 + $0x20c] sm:$0xf]
    %v4811 = vld [vmem:[%s4730 + $0x210] sm:$0xff]
    %v4812 = vld [vmem:[%s4730 + $0x218] sm:$0xf]
    %v4813 = vld [vmem:[%s4730 + $0x21c] sm:$0xff]
    %v4814 = vld [vmem:[%s4730 + $0x224] sm:$0xf]
    %v4815 = vld [vmem:[%s4730 + $0x228] sm:$0xff]
    %v4816 = vld [vmem:[%s4730 + $0x230] sm:$0xf]
    %v4817 = vld [vmem:[%s4730 + $0x234] sm:$0xff]
    %v4818 = vld [vmem:[%s4730 + $0x23c] sm:$0xf]
    %v4819 = vld [vmem:[%s4730 + $0x240] sm:$0xff]
    %v4820 = vld [vmem:[%s4730 + $0x248] sm:$0xf]
    %v4821 = vld [vmem:[%s4730 + $0x24c] sm:$0xff]
    %v4822 = vld [vmem:[%s4730 + $0x254] sm:$0xf]
    %v4823 = vld [vmem:[%s4730 + $0x258] sm:$0xff]
    %v4824 = vld [vmem:[%s4730 + $0x260] sm:$0xf]
    %v4825 = vld [vmem:[%s4730 + $0x264] sm:$0xff]
    %v4826 = vld [vmem:[%s4730 + $0x26c] sm:$0xf]
    %v4827 = vld [vmem:[%s4730 + $0x270] sm:$0xff]
    %v4828 = vld [vmem:[%s4730 + $0x278] sm:$0xf]
    %v4829 = vld [vmem:[%s4730 + $0x27c] sm:$0xff]
    %v4830 = vld [vmem:[%s4730 + $0x284] sm:$0xf]
    %v4831 = vld [vmem:[%s4730 + $0x288] sm:$0xff]
    %v4832 = vld [vmem:[%s4730 + $0x290] sm:$0xf]
    %v4833 = vld [vmem:[%s4730 + $0x294] sm:$0xff]
    %v4834 = vld [vmem:[%s4730 + $0x29c] sm:$0xf]
    %v4835 = vld [vmem:[%s4730 + $0x2a0] sm:$0xff]
    %v4836 = vld [vmem:[%s4730 + $0x2a8] sm:$0xf]
    %v4837 = vld [vmem:[%s4730 + $0x2ac] sm:$0xff]
    %v4838 = vld [vmem:[%s4730 + $0x2b4] sm:$0xf]
    %v4839 = vld [vmem:[%s4730 + $0x2b8] sm:$0xff]
    %v4840 = vld [vmem:[%s4730 + $0x2c0] sm:$0xf]
    %v4841 = vld [vmem:[%s4730 + $0x2c4] sm:$0xff]
    %v4842 = vld [vmem:[%s4730 + $0x2cc] sm:$0xf]
    %v4843 = vld [vmem:[%s4730 + $0x2d0] sm:$0xff]
    %v4844 = vld [vmem:[%s4730 + $0x2d8] sm:$0xf]
    %v4845 = vld [vmem:[%s4730 + $0x2dc] sm:$0xff]
    %v4846 = vld [vmem:[%s4730 + $0x2e4] sm:$0xf]
    %v4847 = vld [vmem:[%s4730 + $0x2e8] sm:$0xff]
    %v4848 = vld [vmem:[%s4730 + $0x2f0] sm:$0xf]
    %v4849 = vld [vmem:[%s4730 + $0x2f4] sm:$0xff]
    %v4850 = vld [vmem:[%s4730 + $0x2fc] sm:$0xf]
    %v4851 = vld [vmem:[%s4730 + $0x300] sm:$0xff]
    %v4852 = vld [vmem:[%s4730 + $0x308] sm:$0xf]
    %v4853 = vld [vmem:[%s4730 + $0x30c] sm:$0xff]
    %v4854 = vld [vmem:[%s4730 + $0x314] sm:$0xf]
    %v4855 = vld [vmem:[%s4730 + $0x318] sm:$0xff]
    %v4856 = vld [vmem:[%s4730 + $0x320] sm:$0xf]
    %v4857 = vld [vmem:[%s4730 + $0x324] sm:$0xff]
    %v4858 = vld [vmem:[%s4730 + $0x32c] sm:$0xf]
    %v4987 = vunpack.c.l.b16 %v4731
    %v4988 = vunpack.c.h.b16 %v4731
    %v4989 = vunpack.c.l.b16 %v4732
    %v4990 = vunpack.c.l.b16 %v4733
    %v4991 = vunpack.c.h.b16 %v4733
    %v4992 = vunpack.c.l.b16 %v4734
    %v4993 = vunpack.c.l.b16 %v4735
    %v4994 = vunpack.c.h.b16 %v4735
    %v4995 = vunpack.c.l.b16 %v4736
    %v4996 = vunpack.c.l.b16 %v4737
    %v4997 = vunpack.c.h.b16 %v4737
    %v4998 = vunpack.c.l.b16 %v4738
    %v4999 = vunpack.c.l.b16 %v4739
    %v5000 = vunpack.c.h.b16 %v4739
    %v5001 = vunpack.c.l.b16 %v4740
    %v5002 = vunpack.c.l.b16 %v4741
    %v5003 = vunpack.c.h.b16 %v4741
    %v5004 = vunpack.c.l.b16 %v4742
    %v5005 = vunpack.c.l.b16 %v4743
    %v5006 = vunpack.c.h.b16 %v4743
    %v5007 = vunpack.c.l.b16 %v4744
    %v5008 = vunpack.c.l.b16 %v4745
    %v5009 = vunpack.c.h.b16 %v4745
    %v5010 = vunpack.c.l.b16 %v4746
    %v5011 = vunpack.c.l.b16 %v4747
    %v5012 = vunpack.c.h.b16 %v4747
    %v5013 = vunpack.c.l.b16 %v4748
    %v5014 = vunpack.c.l.b16 %v4749
    %v5015 = vunpack.c.h.b16 %v4749
    %v5016 = vunpack.c.l.b16 %v4750
    %v5017 = vunpack.c.l.b16 %v4751
    %v5018 = vunpack.c.h.b16 %v4751
    %v5019 = vunpack.c.l.b16 %v4752
    %v5020 = vunpack.c.l.b16 %v4753
    %v5021 = vunpack.c.h.b16 %v4753
    %v5022 = vunpack.c.l.b16 %v4754
    %v5023 = vunpack.c.l.b16 %v4755
    %v5024 = vunpack.c.h.b16 %v4755
    %v5025 = vunpack.c.l.b16 %v4756
    %v5026 = vunpack.c.l.b16 %v4757
    %v5027 = vunpack.c.h.b16 %v4757
    %v5028 = vunpack.c.l.b16 %v4758
    %v5029 = vunpack.c.l.b16 %v4759
    %v5030 = vunpack.c.h.b16 %v4759
    %v5031 = vunpack.c.l.b16 %v4760
    %v5032 = vunpack.c.l.b16 %v4761
    %v5033 = vunpack.c.h.b16 %v4761
    %v5034 = vunpack.c.l.b16 %v4762
    %v5035 = vunpack.c.l.b16 %v4763
    %v5036 = vunpack.c.h.b16 %v4763
    %v5037 = vunpack.c.l.b16 %v4764
    %v5038 = vunpack.c.l.b16 %v4765
    %v5039 = vunpack.c.h.b16 %v4765
    %v5040 = vunpack.c.l.b16 %v4766
    %v5041 = vunpack.c.l.b16 %v4767
    %v5042 = vunpack.c.h.b16 %v4767
    %v5043 = vunpack.c.l.b16 %v4768
    %v5044 = vunpack.c.l.b16 %v4769
    %v5045 = vunpack.c.h.b16 %v4769
    %v5046 = vunpack.c.l.b16 %v4770
    %v5047 = vunpack.c.l.b16 %v4771
    %v5048 = vunpack.c.h.b16 %v4771
    %v5049 = vunpack.c.l.b16 %v4772
    %v5050 = vunpack.c.l.b16 %v4773
    %v5051 = vunpack.c.h.b16 %v4773
    %v5052 = vunpack.c.l.b16 %v4774
    %v5053 = vunpack.c.l.b16 %v4775
    %v5054 = vunpack.c.h.b16 %v4775
    %v5055 = vunpack.c.l.b16 %v4776
    %v5056 = vunpack.c.l.b16 %v4777
    %v5057 = vunpack.c.h.b16 %v4777
    %v5058 = vunpack.c.l.b16 %v4778
    %v5059 = vunpack.c.l.b16 %v4779
    %v5060 = vunpack.c.h.b16 %v4779
    %v5061 = vunpack.c.l.b16 %v4780
    %v5062 = vunpack.c.l.b16 %v4781
    %v5063 = vunpack.c.h.b16 %v4781
    %v5064 = vunpack.c.l.b16 %v4782
    %v5065 = vunpack.c.l.b16 %v4783
    %v5066 = vunpack.c.h.b16 %v4783
    %v5067 = vunpack.c.l.b16 %v4784
    %v5068 = vunpack.c.l.b16 %v4785
    %v5069 = vunpack.c.h.b16 %v4785
    %v5070 = vunpack.c.l.b16 %v4786
    %v5071 = vunpack.c.l.b16 %v4787
    %v5072 = vunpack.c.h.b16 %v4787
    %v5073 = vunpack.c.l.b16 %v4788
    %v5074 = vunpack.c.l.b16 %v4789
    %v5075 = vunpack.c.h.b16 %v4789
    %v5076 = vunpack.c.l.b16 %v4790
    %v5077 = vunpack.c.l.b16 %v4791
    %v5078 = vunpack.c.h.b16 %v4791
    %v5079 = vunpack.c.l.b16 %v4792
    %v5080 = vunpack.c.l.b16 %v4793
    %v5081 = vunpack.c.h.b16 %v4793
    %v5082 = vunpack.c.l.b16 %v4794
    %v5083 = vunpack.c.l.b16 %v4795
    %v5084 = vunpack.c.h.b16 %v4795
    %v5085 = vunpack.c.l.b16 %v4796
    %v5086 = vunpack.c.l.b16 %v4797
    %v5087 = vunpack.c.h.b16 %v4797
    %v5088 = vunpack.c.l.b16 %v4798
    %v5089 = vunpack.c.l.b16 %v4799
    %v5090 = vunpack.c.h.b16 %v4799
    %v5091 = vunpack.c.l.b16 %v4800
    %v5092 = vunpack.c.l.b16 %v4801
    %v5093 = vunpack.c.h.b16 %v4801
    %v5094 = vunpack.c.l.b16 %v4802
    %v5095 = vunpack.c.l.b16 %v4803
    %v5096 = vunpack.c.h.b16 %v4803
    %v5097 = vunpack.c.l.b16 %v4804
    %v5098 = vunpack.c.l.b16 %v4805
    %v5099 = vunpack.c.h.b16 %v4805
    %v5100 = vunpack.c.l.b16 %v4806
    %v5101 = vunpack.c.l.b16 %v4807
    %v5102 = vunpack.c.h.b16 %v4807
    %v5103 = vunpack.c.l.b16 %v4808
    %v5104 = vunpack.c.l.b16 %v4809
    %v5105 = vunpack.c.h.b16 %v4809
    %v5106 = vunpack.c.l.b16 %v4810
    %v5107 = vunpack.c.l.b16 %v4811
    %v5108 = vunpack.c.h.b16 %v4811
    %v5109 = vunpack.c.l.b16 %v4812
    %v5110 = vunpack.c.l.b16 %v4813
    %v5111 = vunpack.c.h.b16 %v4813
    %v5112 = vunpack.c.l.b16 %v4814
    %v5113 = vunpack.c.l.b16 %v4815
    %v5114 = vunpack.c.h.b16 %v4815
    %v5115 = vunpack.c.l.b16 %v4816
    %v5116 = vunpack.c.l.b16 %v4817
    %v5117 = vunpack.c.h.b16 %v4817
    %v5118 = vunpack.c.l.b16 %v4818
    %v5119 = vunpack.c.l.b16 %v4819
    %v5120 = vunpack.c.h.b16 %v4819
    %v5121 = vunpack.c.l.b16 %v4820
    %v5122 = vunpack.c.l.b16 %v4821
    %v5123 = vunpack.c.h.b16 %v4821
    %v5124 = vunpack.c.l.b16 %v4822
    %v5125 = vunpack.c.l.b16 %v4823
    %v5126 = vunpack.c.h.b16 %v4823
    %v5127 = vunpack.c.l.b16 %v4824
    %v5128 = vunpack.c.l.b16 %v4825
    %v5129 = vunpack.c.h.b16 %v4825
    %v5130 = vunpack.c.l.b16 %v4826
    %v5131 = vunpack.c.l.b16 %v4827
    %v5132 = vunpack.c.h.b16 %v4827
    %v5133 = vunpack.c.l.b16 %v4828
    %v5134 = vunpack.c.l.b16 %v4829
    %v5135 = vunpack.c.h.b16 %v4829
    %v5136 = vunpack.c.l.b16 %v4830
    %v5137 = vunpack.c.l.b16 %v4831
    %v5138 = vunpack.c.h.b16 %v4831
    %v5139 = vunpack.c.l.b16 %v4832
    %v5140 = vunpack.c.l.b16 %v4833
    %v5141 = vunpack.c.h.b16 %v4833
    %v5142 = vunpack.c.l.b16 %v4834
    %v5143 = vunpack.c.l.b16 %v4835
    %v5144 = vunpack.c.h.b16 %v4835
    %v5145 = vunpack.c.l.b16 %v4836
    %v5146 = vunpack.c.l.b16 %v4837
    %v5147 = vunpack.c.h.b16 %v4837
    %v5148 = vunpack.c.l.b16 %v4838
    %v5149 = vunpack.c.l.b16 %v4839
    %v5150 = vunpack.c.h.b16 %v4839
    %v5151 = vunpack.c.l.b16 %v4840
    %v5152 = vunpack.c.l.b16 %v4841
    %v5153 = vunpack.c.h.b16 %v4841
    %v5154 = vunpack.c.l.b16 %v4842
    %v5155 = vunpack.c.l.b16 %v4843
    %v5156 = vunpack.c.h.b16 %v4843
    %v5157 = vunpack.c.l.b16 %v4844
    %v5158 = vunpack.c.l.b16 %v4845
    %v5159 = vunpack.c.h.b16 %v4845
    %v5160 = vunpack.c.l.b16 %v4846
    %v5161 = vunpack.c.l.b16 %v4847
    %v5162 = vunpack.c.h.b16 %v4847
    %v5163 = vunpack.c.l.b16 %v4848
    %v5164 = vunpack.c.l.b16 %v4849
    %v5165 = vunpack.c.h.b16 %v4849
    %v5166 = vunpack.c.l.b16 %v4850
    %v5167 = vunpack.c.l.b16 %v4851
    %v5168 = vunpack.c.h.b16 %v4851
    %v5169 = vunpack.c.l.b16 %v4852
    %v5170 = vunpack.c.l.b16 %v4853
    %v5171 = vunpack.c.h.b16 %v4853
    %v5172 = vunpack.c.l.b16 %v4854
    %v5173 = vunpack.c.l.b16 %v4855
    %v5174 = vunpack.c.h.b16 %v4855
    %v5175 = vunpack.c.l.b16 %v4856
    %v5176 = vunpack.c.l.b16 %v4857
    %v5177 = vunpack.c.h.b16 %v4857
    %v5178 = vunpack.c.l.b16 %v4858
    %v5179 = vpack.c.b16 %v4990, %v4987
    %v5180 = vpack.c.b16 %v4991, %v4988
    %v5181 = vpack.c.b16 %v4992, %v4989
    %v5182 = vpack.c.b16 %v4996, %v4993
    %v5183 = vpack.c.b16 %v4997, %v4994
    %v5184 = vpack.c.b16 %v4998, %v4995
    %v5185 = vpack.c.b16 %v5002, %v4999
    %v5186 = vpack.c.b16 %v5003, %v5000
    %v5187 = vpack.c.b16 %v5004, %v5001
    %v5188 = vpack.c.b16 %v5008, %v5005
    %v5189 = vpack.c.b16 %v5009, %v5006
    %v5190 = vpack.c.b16 %v5010, %v5007
    %v5191 = vpack.c.b16 %v5014, %v5011
    %v5192 = vpack.c.b16 %v5015, %v5012
    %v5193 = vpack.c.b16 %v5016, %v5013
    %v5194 = vpack.c.b16 %v5020, %v5017
    %v5195 = vpack.c.b16 %v5021, %v5018
    %v5196 = vpack.c.b16 %v5022, %v5019
    %v5197 = vpack.c.b16 %v5026, %v5023
    %v5198 = vpack.c.b16 %v5027, %v5024
    %v5199 = vpack.c.b16 %v5028, %v5025
    %v5200 = vpack.c.b16 %v5032, %v5029
    %v5201 = vpack.c.b16 %v5033, %v5030
    %v5202 = vpack.c.b16 %v5034, %v5031
    %v5203 = vpack.c.b16 %v5038, %v5035
    %v5204 = vpack.c.b16 %v5039, %v5036
    %v5205 = vpack.c.b16 %v5040, %v5037
    %v5206 = vpack.c.b16 %v5044, %v5041
    %v5207 = vpack.c.b16 %v5045, %v5042
    %v5208 = vpack.c.b16 %v5046, %v5043
    %v5209 = vpack.c.b16 %v5050, %v5047
    %v5210 = vpack.c.b16 %v5051, %v5048
    %v5211 = vpack.c.b16 %v5052, %v5049
    %v5212 = vpack.c.b16 %v5056, %v5053
    %v5213 = vpack.c.b16 %v5057, %v5054
    %v5214 = vpack.c.b16 %v5058, %v5055
    %v5215 = vpack.c.b16 %v5062, %v5059
    %v5216 = vpack.c.b16 %v5063, %v5060
    %v5217 = vpack.c.b16 %v5064, %v5061
    %v5218 = vpack.c.b16 %v5068, %v5065
    %v5219 = vpack.c.b16 %v5069, %v5066
    %v5220 = vpack.c.b16 %v5070, %v5067
    %v5221 = vpack.c.b16 %v5074, %v5071
    %v5222 = vpack.c.b16 %v5075, %v5072
    %v5223 = vpack.c.b16 %v5076, %v5073
    %v5224 = vpack.c.b16 %v5080, %v5077
    %v5225 = vpack.c.b16 %v5081, %v5078
    %v5226 = vpack.c.b16 %v5082, %v5079
    %v5227 = vpack.c.b16 %v5086, %v5083
    %v5228 = vpack.c.b16 %v5087, %v5084
    %v5229 = vpack.c.b16 %v5088, %v5085
    %v5230 = vpack.c.b16 %v5092, %v5089
    %v5231 = vpack.c.b16 %v5093, %v5090
    %v5232 = vpack.c.b16 %v5094, %v5091
    %v5233 = vpack.c.b16 %v5098, %v5095
    %v5234 = vpack.c.b16 %v5099, %v5096
    %v5235 = vpack.c.b16 %v5100, %v5097
    %v5236 = vpack.c.b16 %v5104, %v5101
    %v5237 = vpack.c.b16 %v5105, %v5102
    %v5238 = vpack.c.b16 %v5106, %v5103
    %v5239 = vpack.c.b16 %v5110, %v5107
    %v5240 = vpack.c.b16 %v5111, %v5108
    %v5241 = vpack.c.b16 %v5112, %v5109
    %v5242 = vpack.c.b16 %v5116, %v5113
    %v5243 = vpack.c.b16 %v5117, %v5114
    %v5244 = vpack.c.b16 %v5118, %v5115
    %v5245 = vpack.c.b16 %v5122, %v5119
    %v5246 = vpack.c.b16 %v5123, %v5120
    %v5247 = vpack.c.b16 %v5124, %v5121
    %v5248 = vpack.c.b16 %v5128, %v5125
    %v5249 = vpack.c.b16 %v5129, %v5126
    %v5250 = vpack.c.b16 %v5130, %v5127
    %v5251 = vpack.c.b16 %v5134, %v5131
    %v5252 = vpack.c.b16 %v5135, %v5132
    %v5253 = vpack.c.b16 %v5136, %v5133
    %v5254 = vpack.c.b16 %v5140, %v5137
    %v5255 = vpack.c.b16 %v5141, %v5138
    %v5256 = vpack.c.b16 %v5142, %v5139
    %v5257 = vpack.c.b16 %v5146, %v5143
    %v5258 = vpack.c.b16 %v5147, %v5144
    %v5259 = vpack.c.b16 %v5148, %v5145
    %v5260 = vpack.c.b16 %v5152, %v5149
    %v5261 = vpack.c.b16 %v5153, %v5150
    %v5262 = vpack.c.b16 %v5154, %v5151
    %v5263 = vpack.c.b16 %v5158, %v5155
    %v5264 = vpack.c.b16 %v5159, %v5156
    %v5265 = vpack.c.b16 %v5160, %v5157
    %v5266 = vpack.c.b16 %v5164, %v5161
    %v5267 = vpack.c.b16 %v5165, %v5162
    %v5268 = vpack.c.b16 %v5166, %v5163
    %v5269 = vpack.c.b16 %v5170, %v5167
    %v5270 = vpack.c.b16 %v5171, %v5168
    %v5271 = vpack.c.b16 %v5172, %v5169
    %v5272 = vpack.c.b16 %v5176, %v5173
    %v5273 = vpack.c.b16 %v5177, %v5174
    %v5274 = vpack.c.b16 %v5178, %v5175
    %v5419 = vunpack.c.l.b16 %v1958
    %v5420 = vunpack.c.l.b16 %v1959
    %v5421 = vunpack.c.l.b16 %v1960
    %v5422 = vunpack.c.l.b16 %v1961
    %v5423 = vunpack.c.l.b16 %v1962
    %v5424 = vunpack.c.l.b16 %v1963
    %v5425 = vunpack.c.l.b16 %v1964
    %v5426 = vunpack.c.l.b16 %v1965
    %v5427 = vunpack.c.l.b16 %v1966
    %v5428 = vunpack.c.l.b16 %v1967
    %v5429 = vunpack.c.l.b16 %v1968
    %v5430 = vunpack.c.l.b16 %v1969
    %v5431 = vunpack.c.l.b16 %v1970
    %v5432 = vunpack.c.l.b16 %v1971
    %v5433 = vunpack.c.l.b16 %v1972
    %v5434 = vunpack.c.l.b16 %v1973
    %v5435 = vunpack.c.l.b16 %v1974
    %v5436 = vunpack.c.l.b16 %v1975
    %v5437 = vunpack.c.l.b16 %v1976
    %v5438 = vunpack.c.l.b16 %v1977
    %v5439 = vunpack.c.l.b16 %v1978
    %v5440 = vunpack.c.l.b16 %v1979
    %v5441 = vunpack.c.l.b16 %v1980
    %v5442 = vunpack.c.l.b16 %v1981
    %v5443 = vunpack.c.l.b16 %v1982
    %v5444 = vunpack.c.l.b16 %v1983
    %v5445 = vunpack.c.l.b16 %v1984
    %v5446 = vunpack.c.l.b16 %v1985
    %v5447 = vunpack.c.l.b16 %v1986
    %v5448 = vunpack.c.l.b16 %v1987
    %v5449 = vunpack.c.l.b16 %v1988
    %v5450 = vunpack.c.l.b16 %v1989
    %v5451 = vunpack.c.l.b16 %v1990
    %v5452 = vunpack.c.l.b16 %v1991
    %v5453 = vunpack.c.l.b16 %v1992
    %v5454 = vunpack.c.l.b16 %v1993
    %v5455 = vunpack.c.l.b16 %v1994
    %v5456 = vunpack.c.l.b16 %v1995
    %v5457 = vunpack.c.l.b16 %v1996
    %v5458 = vunpack.c.l.b16 %v1997
    %v5459 = vunpack.c.l.b16 %v1998
    %v5460 = vunpack.c.l.b16 %v1999
    %v5461 = vunpack.c.l.b16 %v2000
    %v5462 = vunpack.c.l.b16 %v2001
    %v5463 = vunpack.c.l.b16 %v2002
    %v5464 = vunpack.c.l.b16 %v2003
    %v5465 = vunpack.c.l.b16 %v2004
    %v5466 = vunpack.c.l.b16 %v2005
    %v5467 = vpack.c.b16 %v5420, %v5419
    %v5468 = vpack.c.b16 %v5422, %v5421
    %v5469 = vpack.c.b16 %v5424, %v5423
    %v5470 = vpack.c.b16 %v5426, %v5425
    %v5471 = vpack.c.b16 %v5428, %v5427
    %v5472 = vpack.c.b16 %v5430, %v5429
    %v5473 = vpack.c.b16 %v5432, %v5431
    %v5474 = vpack.c.b16 %v5434, %v5433
    %v5475 = vpack.c.b16 %v5436, %v5435
    %v5476 = vpack.c.b16 %v5438, %v5437
    %v5477 = vpack.c.b16 %v5440, %v5439
    %v5478 = vpack.c.b16 %v5442, %v5441
    %v5479 = vpack.c.b16 %v5444, %v5443
    %v5480 = vpack.c.b16 %v5446, %v5445
    %v5481 = vpack.c.b16 %v5448, %v5447
    %v5482 = vpack.c.b16 %v5450, %v5449
    %v5483 = vpack.c.b16 %v5452, %v5451
    %v5484 = vpack.c.b16 %v5454, %v5453
    %v5485 = vpack.c.b16 %v5456, %v5455
    %v5486 = vpack.c.b16 %v5458, %v5457
    %v5487 = vpack.c.b16 %v5460, %v5459
    %v5488 = vpack.c.b16 %v5462, %v5461
    %v5489 = vpack.c.b16 %v5464, %v5463
    %v5490 = vpack.c.b16 %v5466, %v5465
    %5515 = vmatprep.subr.bf16.mxu0 0
    %5516 = vmatpush1.bf16.msra.mxu0 %v5474
    %5517 = vmatprep.subr.bf16.mxu0 0
    %5518 = vmatpush1.bf16.msra.mxu0 %v5473
    %5519 = vmatprep.subr.bf16.mxu0 0
    %5520 = vmatpush1.bf16.msra.mxu0 %v5472
    %5521 = vmatprep.subr.bf16.mxu0 0
    %5522 = vmatpush1.bf16.msra.mxu0 %v5471
    %5523 = vmatprep.subr.bf16.mxu0 0
    %5524 = vmatpush1.bf16.msra.mxu0 %v5470
    %5525 = vmatprep.subr.bf16.mxu0 0
    %5526 = vmatpush1.bf16.msra.mxu0 %v5469
    %5527 = vmatprep.subr.bf16.mxu0 0
    %5528 = vmatpush1.bf16.msra.mxu0 %v5468
    %5529 = vmatprep.subr.bf16.mxu0 0
    %5530 = vmatpush1.bf16.msra.mxu0 %v5467
    %5531 = vmatprep.subr.bf16.mxu0 0
    %5532 = vmatpush2.bf16.msra.mxu0 %v5482
    %5533 = vmatprep.subr.bf16.mxu0 0
    %5534 = vmatpush2.bf16.msra.mxu0 %v5481
    %5535 = vmatprep.subr.bf16.mxu0 0
    %5536 = vmatpush2.bf16.msra.mxu0 %v5480
    %5537 = vmatprep.subr.bf16.mxu0 0
    %5538 = vmatpush2.bf16.msra.mxu0 %v5479
    %5539 = vmatprep.subr.bf16.mxu0 0
    %5540 = vmatpush2.bf16.msra.mxu0 %v5478
    %5541 = vmatprep.subr.bf16.mxu0 0
    %5542 = vmatpush2.bf16.msra.mxu0 %v5477
    %5543 = vmatprep.subr.bf16.mxu0 0
    %5544 = vmatpush2.bf16.msra.mxu0 %v5476
    %5545 = vmatprep.subr.bf16.mxu0 0
    %5546 = vmatpush2.bf16.msra.mxu0 %v5475
    %5547 = vmatprep.mubr.bf16.mxu0 %v5180
    %5548 = vmatmul.mubr.bf16.gmra.mxu0 %v5179
    %v5549 = vpop.f32.mrf.mxu0
    %v5550 = vadd.f32 0.0, %v5549
    %v5551 = vpop.f32.mrf.mxu0
    %v5552 = vpop.f32.mrf.mxu0
    %v5553 = vadd.f32 0.0, %v5552
    %v5554 = vpop.f32.mrf.mxu0
    %5555 = vmatprep.mubr.bf16.mxu0 %v5183
    %5556 = vmatmul.mubr.bf16.gmra.mxu0 %v5182
    %v5557 = vpop.f32.mrf.mxu0
    %v5558 = vadd.f32 0.0, %v5557
    %v5559 = vpop.f32.mrf.mxu0
    %v5560 = vpop.f32.mrf.mxu0
    %v5561 = vadd.f32 0.0, %v5560
    %v5562 = vpop.f32.mrf.mxu0
    %5563 = vmatprep.mubr.bf16.mxu0 %v5186
    %5564 = vmatmul.mubr.bf16.gmra.mxu0 %v5185
    %v5565 = vpop.f32.mrf.mxu0
    %v5566 = vadd.f32 0.0, %v5565
    %v5567 = vpop.f32.mrf.mxu0
    %v5568 = vpop.f32.mrf.mxu0
    %v5569 = vadd.f32 0.0, %v5568
    %v5570 = vpop.f32.mrf.mxu0
    %5571 = vmatprep.mubr.bf16.mxu0 %v5189
    %5572 = vmatmul.mubr.bf16.gmra.mxu0 %v5188
    %v5573 = vpop.f32.mrf.mxu0
    %v5574 = vadd.f32 0.0, %v5573
    %v5575 = vpop.f32.mrf.mxu0
    %v5576 = vpop.f32.mrf.mxu0
    %v5577 = vadd.f32 0.0, %v5576
    %v5578 = vpop.f32.mrf.mxu0
    %5579 = vmatprep.mubr.bf16.mxu0 %v5192
    %5580 = vmatmul.mubr.bf16.gmra.mxu0 %v5191
    %v5581 = vpop.f32.mrf.mxu0
    %v5582 = vadd.f32 0.0, %v5581
    %v5583 = vpop.f32.mrf.mxu0
    %v5584 = vpop.f32.mrf.mxu0
    %v5585 = vadd.f32 0.0, %v5584
    %v5586 = vpop.f32.mrf.mxu0
    %5587 = vmatprep.mubr.bf16.mxu0 %v5195
    %5588 = vmatmul.mubr.bf16.gmra.mxu0 %v5194
    %v5589 = vpop.f32.mrf.mxu0
    %v5590 = vadd.f32 0.0, %v5589
    %v5591 = vpop.f32.mrf.mxu0
    %v5592 = vpop.f32.mrf.mxu0
    %v5593 = vadd.f32 0.0, %v5592
    %v5594 = vpop.f32.mrf.mxu0
    %5595 = vmatprep.mubr.bf16.mxu0 %v5198
    %5596 = vmatmul.mubr.bf16.gmra.mxu0 %v5197
    %v5597 = vpop.f32.mrf.mxu0
    %v5598 = vadd.f32 0.0, %v5597
    %v5599 = vpop.f32.mrf.mxu0
    %v5600 = vpop.f32.mrf.mxu0
    %v5601 = vadd.f32 0.0, %v5600
    %v5602 = vpop.f32.mrf.mxu0
    %5603 = vmatprep.mubr.bf16.mxu0 %v5201
    %5604 = vmatmul.mubr.bf16.gmra.mxu0 %v5200
    %v5605 = vpop.f32.mrf.mxu0
    %v5606 = vadd.f32 0.0, %v5605
    %v5607 = vpop.f32.mrf.mxu0
    %v5608 = vpop.f32.mrf.mxu0
    %v5609 = vadd.f32 0.0, %v5608
    %v5610 = vpop.f32.mrf.mxu0
    %5611 = vmatprep.mubr.bf16.mxu0 %v5204
    %5612 = vmatmul.mubr.bf16.gmra.mxu0 %v5203
    %v5613 = vpop.f32.mrf.mxu0
    %v5614 = vadd.f32 0.0, %v5613
    %v5615 = vpop.f32.mrf.mxu0
    %v5616 = vpop.f32.mrf.mxu0
    %v5617 = vadd.f32 0.0, %v5616
    %v5618 = vpop.f32.mrf.mxu0
    %5619 = vmatprep.mubr.bf16.mxu0 %v5207
    %5620 = vmatmul.mubr.bf16.gmra.mxu0 %v5206
    %v5621 = vpop.f32.mrf.mxu0
    %v5622 = vadd.f32 0.0, %v5621
    %v5623 = vpop.f32.mrf.mxu0
    %v5624 = vpop.f32.mrf.mxu0
    %v5625 = vadd.f32 0.0, %v5624
    %v5626 = vpop.f32.mrf.mxu0
    %5627 = vmatprep.mubr.bf16.mxu0 %v5210
    %5628 = vmatmul.mubr.bf16.gmra.mxu0 %v5209
    %v5629 = vpop.f32.mrf.mxu0
    %v5630 = vadd.f32 0.0, %v5629
    %v5631 = vpop.f32.mrf.mxu0
    %v5632 = vpop.f32.mrf.mxu0
    %v5633 = vadd.f32 0.0, %v5632
    %v5634 = vpop.f32.mrf.mxu0
    %5635 = vmatprep.mubr.bf16.mxu0 %v5213
    %5636 = vmatmul.mubr.bf16.gmra.mxu0 %v5212
    %v5637 = vpop.f32.mrf.mxu0
    %v5638 = vadd.f32 0.0, %v5637
    %v5639 = vpop.f32.mrf.mxu0
    %v5640 = vpop.f32.mrf.mxu0
    %v5641 = vadd.f32 0.0, %v5640
    %v5642 = vpop.f32.mrf.mxu0
    %5643 = vmatprep.mubr.bf16.mxu0 %v5216
    %5644 = vmatmul.mubr.bf16.gmra.mxu0 %v5215
    %v5645 = vpop.f32.mrf.mxu0
    %v5646 = vadd.f32 0.0, %v5645
    %v5647 = vpop.f32.mrf.mxu0
    %v5648 = vpop.f32.mrf.mxu0
    %v5649 = vadd.f32 0.0, %v5648
    %v5650 = vpop.f32.mrf.mxu0
    %5651 = vmatprep.mubr.bf16.mxu0 %v5219
    %5652 = vmatmul.mubr.bf16.gmra.mxu0 %v5218
    %v5653 = vpop.f32.mrf.mxu0
    %v5654 = vadd.f32 0.0, %v5653
    %v5655 = vpop.f32.mrf.mxu0
    %v5656 = vpop.f32.mrf.mxu0
    %v5657 = vadd.f32 0.0, %v5656
    %v5658 = vpop.f32.mrf.mxu0
    %5659 = vmatprep.mubr.bf16.mxu0 %v5222
    %5660 = vmatmul.mubr.bf16.gmra.mxu0 %v5221
    %v5661 = vpop.f32.mrf.mxu0
    %v5662 = vadd.f32 0.0, %v5661
    %v5663 = vpop.f32.mrf.mxu0
    %v5664 = vpop.f32.mrf.mxu0
    %v5665 = vadd.f32 0.0, %v5664
    %v5666 = vpop.f32.mrf.mxu0
    %5667 = vmatprep.mubr.bf16.mxu0 %v5225
    %5668 = vmatmul.mubr.bf16.gmra.mxu0 %v5224
    %v5669 = vpop.f32.mrf.mxu0
    %v5670 = vadd.f32 0.0, %v5669
    %v5671 = vpop.f32.mrf.mxu0
    %v5672 = vpop.f32.mrf.mxu0
    %v5673 = vadd.f32 0.0, %v5672
    %v5674 = vpop.f32.mrf.mxu0
    %5675 = vmatprep.mubr.bf16.mxu0 %v5228
    %5676 = vmatmul.mubr.bf16.gmra.mxu0 %v5227
    %v5677 = vpop.f32.mrf.mxu0
    %v5678 = vadd.f32 0.0, %v5677
    %v5679 = vpop.f32.mrf.mxu0
    %v5680 = vpop.f32.mrf.mxu0
    %v5681 = vadd.f32 0.0, %v5680
    %v5682 = vpop.f32.mrf.mxu0
    %5683 = vmatprep.mubr.bf16.mxu0 %v5231
    %5684 = vmatmul.mubr.bf16.gmra.mxu0 %v5230
    %v5685 = vpop.f32.mrf.mxu0
    %v5686 = vadd.f32 0.0, %v5685
    %v5687 = vpop.f32.mrf.mxu0
    %v5688 = vpop.f32.mrf.mxu0
    %v5689 = vadd.f32 0.0, %v5688
    %v5690 = vpop.f32.mrf.mxu0
    %5691 = vmatprep.mubr.bf16.mxu0 %v5234
    %5692 = vmatmul.mubr.bf16.gmra.mxu0 %v5233
    %v5693 = vpop.f32.mrf.mxu0
    %v5694 = vadd.f32 0.0, %v5693
    %v5695 = vpop.f32.mrf.mxu0
    %v5696 = vpop.f32.mrf.mxu0
    %v5697 = vadd.f32 0.0, %v5696
    %v5698 = vpop.f32.mrf.mxu0
    %5699 = vmatprep.mubr.bf16.mxu0 %v5237
    %5700 = vmatmul.mubr.bf16.gmra.mxu0 %v5236
    %v5701 = vpop.f32.mrf.mxu0
    %v5702 = vadd.f32 0.0, %v5701
    %v5703 = vpop.f32.mrf.mxu0
    %v5704 = vpop.f32.mrf.mxu0
    %v5705 = vadd.f32 0.0, %v5704
    %v5706 = vpop.f32.mrf.mxu0
    %5707 = vmatprep.mubr.bf16.mxu0 %v5240
    %5708 = vmatmul.mubr.bf16.gmra.mxu0 %v5239
    %v5709 = vpop.f32.mrf.mxu0
    %v5710 = vadd.f32 0.0, %v5709
    %v5711 = vpop.f32.mrf.mxu0
    %v5712 = vpop.f32.mrf.mxu0
    %v5713 = vadd.f32 0.0, %v5712
    %v5714 = vpop.f32.mrf.mxu0
    %5715 = vmatprep.mubr.bf16.mxu0 %v5243
    %5716 = vmatmul.mubr.bf16.gmra.mxu0 %v5242
    %v5717 = vpop.f32.mrf.mxu0
    %v5718 = vadd.f32 0.0, %v5717
    %v5719 = vpop.f32.mrf.mxu0
    %v5720 = vpop.f32.mrf.mxu0
    %v5721 = vadd.f32 0.0, %v5720
    %v5722 = vpop.f32.mrf.mxu0
    %5723 = vmatprep.mubr.bf16.mxu0 %v5246
    %5724 = vmatmul.mubr.bf16.gmra.mxu0 %v5245
    %v5725 = vpop.f32.mrf.mxu0
    %v5726 = vadd.f32 0.0, %v5725
    %v5727 = vpop.f32.mrf.mxu0
    %v5728 = vpop.f32.mrf.mxu0
    %v5729 = vadd.f32 0.0, %v5728
    %v5730 = vpop.f32.mrf.mxu0
    %5731 = vmatprep.mubr.bf16.mxu0 %v5249
    %5732 = vmatmul.mubr.bf16.gmra.mxu0 %v5248
    %v5733 = vpop.f32.mrf.mxu0
    %v5734 = vadd.f32 0.0, %v5733
    %v5735 = vpop.f32.mrf.mxu0
    %v5736 = vpop.f32.mrf.mxu0
    %v5737 = vadd.f32 0.0, %v5736
    %v5738 = vpop.f32.mrf.mxu0
    %5739 = vmatprep.mubr.bf16.mxu0 %v5252
    %5740 = vmatmul.mubr.bf16.gmra.mxu0 %v5251
    %v5741 = vpop.f32.mrf.mxu0
    %v5742 = vadd.f32 0.0, %v5741
    %v5743 = vpop.f32.mrf.mxu0
    %v5744 = vpop.f32.mrf.mxu0
    %v5745 = vadd.f32 0.0, %v5744
    %v5746 = vpop.f32.mrf.mxu0
    %5747 = vmatprep.mubr.bf16.mxu0 %v5255
    %5748 = vmatmul.mubr.bf16.gmra.mxu0 %v5254
    %v5749 = vpop.f32.mrf.mxu0
    %v5750 = vadd.f32 0.0, %v5749
    %v5751 = vpop.f32.mrf.mxu0
    %v5752 = vpop.f32.mrf.mxu0
    %v5753 = vadd.f32 0.0, %v5752
    %v5754 = vpop.f32.mrf.mxu0
    %5755 = vmatprep.mubr.bf16.mxu0 %v5258
    %5756 = vmatmul.mubr.bf16.gmra.mxu0 %v5257
    %v5757 = vpop.f32.mrf.mxu0
    %v5758 = vadd.f32 0.0, %v5757
    %v5759 = vpop.f32.mrf.mxu0
    %v5760 = vpop.f32.mrf.mxu0
    %v5761 = vadd.f32 0.0, %v5760
    %v5762 = vpop.f32.mrf.mxu0
    %5763 = vmatprep.mubr.bf16.mxu0 %v5261
    %5764 = vmatmul.mubr.bf16.gmra.mxu0 %v5260
    %v5765 = vpop.f32.mrf.mxu0
    %v5766 = vadd.f32 0.0, %v5765
    %v5767 = vpop.f32.mrf.mxu0
    %v5768 = vpop.f32.mrf.mxu0
    %v5769 = vadd.f32 0.0, %v5768
    %v5770 = vpop.f32.mrf.mxu0
    %5771 = vmatprep.mubr.bf16.mxu0 %v5264
    %5772 = vmatmul.mubr.bf16.gmra.mxu0 %v5263
    %v5773 = vpop.f32.mrf.mxu0
    %v5774 = vadd.f32 0.0, %v5773
    %v5775 = vpop.f32.mrf.mxu0
    %v5776 = vpop.f32.mrf.mxu0
    %v5777 = vadd.f32 0.0, %v5776
    %v5778 = vpop.f32.mrf.mxu0
    %5779 = vmatprep.mubr.bf16.mxu0 %v5267
    %5780 = vmatmul.mubr.bf16.gmra.mxu0 %v5266
    %v5781 = vpop.f32.mrf.mxu0
    %v5782 = vadd.f32 0.0, %v5781
    %v5783 = vpop.f32.mrf.mxu0
    %v5784 = vpop.f32.mrf.mxu0
    %v5785 = vadd.f32 0.0, %v5784
    %v5786 = vpop.f32.mrf.mxu0
    %5787 = vmatprep.mubr.bf16.mxu0 %v5270
    %5788 = vmatmul.mubr.bf16.gmra.mxu0 %v5269
    %v5789 = vpop.f32.mrf.mxu0
    %v5790 = vadd.f32 0.0, %v5789
    %v5791 = vpop.f32.mrf.mxu0
    %v5792 = vpop.f32.mrf.mxu0
    %v5793 = vadd.f32 0.0, %v5792
    %v5794 = vpop.f32.mrf.mxu0
    %5795 = vmatprep.mubr.bf16.mxu0 %v5273
    %5796 = vmatmul.mubr.bf16.gmra.mxu0 %v5272
    %v5797 = vpop.f32.mrf.mxu0
    %v5798 = vadd.f32 0.0, %v5797
    %v5799 = vpop.f32.mrf.mxu0
    %v5800 = vpop.f32.mrf.mxu0
    %v5801 = vadd.f32 0.0, %v5800
    %v5802 = vpop.f32.mrf.mxu0
    %5803 = vdwg.mxu0
    %5804 = vmatprep.subr.bf16.mxu0 0
    %5805 = vmatpush1.bf16.msra.mxu0 %v5490
    %5806 = vmatprep.subr.bf16.mxu0 0
    %5807 = vmatpush1.bf16.msra.mxu0 %v5489
    %5808 = vmatprep.subr.bf16.mxu0 0
    %5809 = vmatpush1.bf16.msra.mxu0 %v5488
    %5810 = vmatprep.subr.bf16.mxu0 0
    %5811 = vmatpush1.bf16.msra.mxu0 %v5487
    %5812 = vmatprep.subr.bf16.mxu0 0
    %5813 = vmatpush1.bf16.msra.mxu0 %v5486
    %5814 = vmatprep.subr.bf16.mxu0 0
    %5815 = vmatpush1.bf16.msra.mxu0 %v5485
    %5816 = vmatprep.subr.bf16.mxu0 0
    %5817 = vmatpush1.bf16.msra.mxu0 %v5484
    %5818 = vmatprep.subr.bf16.mxu0 0
    %5819 = vmatpush1.bf16.msra.mxu0 %v5483
    %5820 = vmatprep.subr.bf16.mxu0 0
    %5821 = vmatpush2.bf16.msra.mxu0 0
    %5822 = vmatprep.subr.bf16.mxu0 0
    %5823 = vmatpush2.bf16.msra.mxu0 0
    %5824 = vmatprep.subr.bf16.mxu0 0
    %5825 = vmatpush2.bf16.msra.mxu0 0
    %5826 = vmatprep.subr.bf16.mxu0 0
    %5827 = vmatpush2.bf16.msra.mxu0 0
    %5828 = vmatprep.subr.bf16.mxu0 0
    %5829 = vmatpush2.bf16.msra.mxu0 0
    %5830 = vmatprep.subr.bf16.mxu0 0
    %5831 = vmatpush2.bf16.msra.mxu0 0
    %5832 = vmatprep.subr.bf16.mxu0 0
    %5833 = vmatpush2.bf16.msra.mxu0 0
    %5834 = vmatprep.subr.bf16.mxu0 0
    %5835 = vmatpush2.bf16.msra.mxu0 0
    %5836 = vmatprep.mubr.bf16.mxu0 0
    %5837 = vmatmul.mubr.bf16.gmra.mxu0 %v5181
    %v5838 = vpop.f32.mrf.mxu0
    %v5839 = vadd.f32 %v5550, %v5838
    %v5840 = vpop.f32.mrf.mxu0
    %v5841 = vpop.f32.mrf.mxu0
    %v5842 = vadd.f32 %v5553, %v5841
    %v5843 = vpop.f32.mrf.mxu0
    %5844 = vmatprep.mubr.bf16.mxu0 0
    %5845 = vmatmul.mubr.bf16.gmra.mxu0 %v5184
    %v5846 = vpop.f32.mrf.mxu0
    %v5847 = vadd.f32 %v5558, %v5846
    %v5848 = vpop.f32.mrf.mxu0
    %v5849 = vpop.f32.mrf.mxu0
    %v5850 = vadd.f32 %v5561, %v5849
    %v5851 = vpop.f32.mrf.mxu0
    %5852 = vmatprep.mubr.bf16.mxu0 0
    %5853 = vmatmul.mubr.bf16.gmra.mxu0 %v5187
    %v5854 = vpop.f32.mrf.mxu0
    %v5855 = vadd.f32 %v5566, %v5854
    %v5856 = vpop.f32.mrf.mxu0
    %v5857 = vpop.f32.mrf.mxu0
    %v5858 = vadd.f32 %v5569, %v5857
    %v5859 = vpop.f32.mrf.mxu0
    %5860 = vmatprep.mubr.bf16.mxu0 0
    %5861 = vmatmul.mubr.bf16.gmra.mxu0 %v5190
    %v5862 = vpop.f32.mrf.mxu0
    %v5863 = vadd.f32 %v5574, %v5862
    %v5864 = vpop.f32.mrf.mxu0
    %v5865 = vpop.f32.mrf.mxu0
    %v5866 = vadd.f32 %v5577, %v5865
    %v5867 = vpop.f32.mrf.mxu0
    %5868 = vmatprep.mubr.bf16.mxu0 0
    %5869 = vmatmul.mubr.bf16.gmra.mxu0 %v5193
    %v5870 = vpop.f32.mrf.mxu0
    %v5871 = vadd.f32 %v5582, %v5870
    %v5872 = vpop.f32.mrf.mxu0
    %v5873 = vpop.f32.mrf.mxu0
    %v5874 = vadd.f32 %v5585, %v5873
    %v5875 = vpop.f32.mrf.mxu0
    %5876 = vmatprep.mubr.bf16.mxu0 0
    %5877 = vmatmul.mubr.bf16.gmra.mxu0 %v5196
    %v5878 = vpop.f32.mrf.mxu0
    %v5879 = vadd.f32 %v5590, %v5878
    %v5880 = vpop.f32.mrf.mxu0
    %v5881 = vpop.f32.mrf.mxu0
    %v5882 = vadd.f32 %v5593, %v5881
    %v5883 = vpop.f32.mrf.mxu0
    %5884 = vmatprep.mubr.bf16.mxu0 0
    %5885 = vmatmul.mubr.bf16.gmra.mxu0 %v5199
    %v5886 = vpop.f32.mrf.mxu0
    %v5887 = vadd.f32 %v5598, %v5886
    %v5888 = vpop.f32.mrf.mxu0
    %v5889 = vpop.f32.mrf.mxu0
    %v5890 = vadd.f32 %v5601, %v5889
    %v5891 = vpop.f32.mrf.mxu0
    %5892 = vmatprep.mubr.bf16.mxu0 0
    %5893 = vmatmul.mubr.bf16.gmra.mxu0 %v5202
    %v5894 = vpop.f32.mrf.mxu0
    %v5895 = vadd.f32 %v5606, %v5894
    %v5896 = vpop.f32.mrf.mxu0
    %v5897 = vpop.f32.mrf.mxu0
    %v5898 = vadd.f32 %v5609, %v5897
    %v5899 = vpop.f32.mrf.mxu0
    %5900 = vmatprep.mubr.bf16.mxu0 0
    %5901 = vmatmul.mubr.bf16.gmra.mxu0 %v5205
    %v5902 = vpop.f32.mrf.mxu0
    %v5903 = vadd.f32 %v5614, %v5902
    %v5904 = vpop.f32.mrf.mxu0
    %v5905 = vpop.f32.mrf.mxu0
    %v5906 = vadd.f32 %v5617, %v5905
    %v5907 = vpop.f32.mrf.mxu0
    %5908 = vmatprep.mubr.bf16.mxu0 0
    %5909 = vmatmul.mubr.bf16.gmra.mxu0 %v5208
    %v5910 = vpop.f32.mrf.mxu0
    %v5911 = vadd.f32 %v5622, %v5910
    %v5912 = vpop.f32.mrf.mxu0
    %v5913 = vpop.f32.mrf.mxu0
    %v5914 = vadd.f32 %v5625, %v5913
    %v5915 = vpop.f32.mrf.mxu0
    %5916 = vmatprep.mubr.bf16.mxu0 0
    %5917 = vmatmul.mubr.bf16.gmra.mxu0 %v5211
    %v5918 = vpop.f32.mrf.mxu0
    %v5919 = vadd.f32 %v5630, %v5918
    %v5920 = vpop.f32.mrf.mxu0
    %v5921 = vpop.f32.mrf.mxu0
    %v5922 = vadd.f32 %v5633, %v5921
    %v5923 = vpop.f32.mrf.mxu0
    %5924 = vmatprep.mubr.bf16.mxu0 0
    %5925 = vmatmul.mubr.bf16.gmra.mxu0 %v5214
    %v5926 = vpop.f32.mrf.mxu0
    %v5927 = vadd.f32 %v5638, %v5926
    %v5928 = vpop.f32.mrf.mxu0
    %v5929 = vpop.f32.mrf.mxu0
    %v5930 = vadd.f32 %v5641, %v5929
    %v5931 = vpop.f32.mrf.mxu0
    %5932 = vmatprep.mubr.bf16.mxu0 0
    %5933 = vmatmul.mubr.bf16.gmra.mxu0 %v5217
    %v5934 = vpop.f32.mrf.mxu0
    %v5935 = vadd.f32 %v5646, %v5934
    %v5936 = vpop.f32.mrf.mxu0
    %v5937 = vpop.f32.mrf.mxu0
    %v5938 = vadd.f32 %v5649, %v5937
    %v5939 = vpop.f32.mrf.mxu0
    %5940 = vmatprep.mubr.bf16.mxu0 0
    %5941 = vmatmul.mubr.bf16.gmra.mxu0 %v5220
    %v5942 = vpop.f32.mrf.mxu0
    %v5943 = vadd.f32 %v5654, %v5942
    %v5944 = vpop.f32.mrf.mxu0
    %v5945 = vpop.f32.mrf.mxu0
    %v5946 = vadd.f32 %v5657, %v5945
    %v5947 = vpop.f32.mrf.mxu0
    %5948 = vmatprep.mubr.bf16.mxu0 0
    %5949 = vmatmul.mubr.bf16.gmra.mxu0 %v5223
    %v5950 = vpop.f32.mrf.mxu0
    %v5951 = vadd.f32 %v5662, %v5950
    %v5952 = vpop.f32.mrf.mxu0
    %v5953 = vpop.f32.mrf.mxu0
    %v5954 = vadd.f32 %v5665, %v5953
    %v5955 = vpop.f32.mrf.mxu0
    %5956 = vmatprep.mubr.bf16.mxu0 0
    %5957 = vmatmul.mubr.bf16.gmra.mxu0 %v5226
    %v5958 = vpop.f32.mrf.mxu0
    %v5959 = vadd.f32 %v5670, %v5958
    %v5960 = vpop.f32.mrf.mxu0
    %v5961 = vpop.f32.mrf.mxu0
    %v5962 = vadd.f32 %v5673, %v5961
    %v5963 = vpop.f32.mrf.mxu0
    %5964 = vmatprep.mubr.bf16.mxu0 0
    %5965 = vmatmul.mubr.bf16.gmra.mxu0 %v5229
    %v5966 = vpop.f32.mrf.mxu0
    %v5967 = vadd.f32 %v5678, %v5966
    %v5968 = vpop.f32.mrf.mxu0
    %v5969 = vpop.f32.mrf.mxu0
    %v5970 = vadd.f32 %v5681, %v5969
    %v5971 = vpop.f32.mrf.mxu0
    %5972 = vmatprep.mubr.bf16.mxu0 0
    %5973 = vmatmul.mubr.bf16.gmra.mxu0 %v5232
    %v5974 = vpop.f32.mrf.mxu0
    %v5975 = vadd.f32 %v5686, %v5974
    %v5976 = vpop.f32.mrf.mxu0
    %v5977 = vpop.f32.mrf.mxu0
    %v5978 = vadd.f32 %v5689, %v5977
    %v5979 = vpop.f32.mrf.mxu0
    %5980 = vmatprep.mubr.bf16.mxu0 0
    %5981 = vmatmul.mubr.bf16.gmra.mxu0 %v5235
    %v5982 = vpop.f32.mrf.mxu0
    %v5983 = vadd.f32 %v5694, %v5982
    %v5984 = vpop.f32.mrf.mxu0
    %v5985 = vpop.f32.mrf.mxu0
    %v5986 = vadd.f32 %v5697, %v5985
    %v5987 = vpop.f32.mrf.mxu0
    %5988 = vmatprep.mubr.bf16.mxu0 0
    %5989 = vmatmul.mubr.bf16.gmra.mxu0 %v5238
    %v5990 = vpop.f32.mrf.mxu0
    %v5991 = vadd.f32 %v5702, %v5990
    %v5992 = vpop.f32.mrf.mxu0
    %v5993 = vpop.f32.mrf.mxu0
    %v5994 = vadd.f32 %v5705, %v5993
    %v5995 = vpop.f32.mrf.mxu0
    %5996 = vmatprep.mubr.bf16.mxu0 0
    %5997 = vmatmul.mubr.bf16.gmra.mxu0 %v5241
    %v5998 = vpop.f32.mrf.mxu0
    %v5999 = vadd.f32 %v5710, %v5998
    %v6000 = vpop.f32.mrf.mxu0
    %v6001 = vpop.f32.mrf.mxu0
    %v6002 = vadd.f32 %v5713, %v6001
    %v6003 = vpop.f32.mrf.mxu0
    %6004 = vmatprep.mubr.bf16.mxu0 0
    %6005 = vmatmul.mubr.bf16.gmra.mxu0 %v5244
    %v6006 = vpop.f32.mrf.mxu0
    %v6007 = vadd.f32 %v5718, %v6006
    %v6008 = vpop.f32.mrf.mxu0
    %v6009 = vpop.f32.mrf.mxu0
    %v6010 = vadd.f32 %v5721, %v6009
    %v6011 = vpop.f32.mrf.mxu0
    %6012 = vmatprep.mubr.bf16.mxu0 0
    %6013 = vmatmul.mubr.bf16.gmra.mxu0 %v5247
    %v6014 = vpop.f32.mrf.mxu0
    %v6015 = vadd.f32 %v5726, %v6014
    %v6016 = vpop.f32.mrf.mxu0
    %v6017 = vpop.f32.mrf.mxu0
    %v6018 = vadd.f32 %v5729, %v6017
    %v6019 = vpop.f32.mrf.mxu0
    %6020 = vmatprep.mubr.bf16.mxu0 0
    %6021 = vmatmul.mubr.bf16.gmra.mxu0 %v5250
    %v6022 = vpop.f32.mrf.mxu0
    %v6023 = vadd.f32 %v5734, %v6022
    %v6024 = vpop.f32.mrf.mxu0
    %v6025 = vpop.f32.mrf.mxu0
    %v6026 = vadd.f32 %v5737, %v6025
    %v6027 = vpop.f32.mrf.mxu0
    %6028 = vmatprep.mubr.bf16.mxu0 0
    %6029 = vmatmul.mubr.bf16.gmra.mxu0 %v5253
    %v6030 = vpop.f32.mrf.mxu0
    %v6031 = vadd.f32 %v5742, %v6030
    %v6032 = vpop.f32.mrf.mxu0
    %v6033 = vpop.f32.mrf.mxu0
    %v6034 = vadd.f32 %v5745, %v6033
    %v6035 = vpop.f32.mrf.mxu0
    %6036 = vmatprep.mubr.bf16.mxu0 0
    %6037 = vmatmul.mubr.bf16.gmra.mxu0 %v5256
    %v6038 = vpop.f32.mrf.mxu0
    %v6039 = vadd.f32 %v5750, %v6038
    %v6040 = vpop.f32.mrf.mxu0
    %v6041 = vpop.f32.mrf.mxu0
    %v6042 = vadd.f32 %v5753, %v6041
    %v6043 = vpop.f32.mrf.mxu0
    %6044 = vmatprep.mubr.bf16.mxu0 0
    %6045 = vmatmul.mubr.bf16.gmra.mxu0 %v5259
    %v6046 = vpop.f32.mrf.mxu0
    %v6047 = vadd.f32 %v5758, %v6046
    %v6048 = vpop.f32.mrf.mxu0
    %v6049 = vpop.f32.mrf.mxu0
    %v6050 = vadd.f32 %v5761, %v6049
    %v6051 = vpop.f32.mrf.mxu0
    %6052 = vmatprep.mubr.bf16.mxu0 0
    %6053 = vmatmul.mubr.bf16.gmra.mxu0 %v5262
    %v6054 = vpop.f32.mrf.mxu0
    %v6055 = vadd.f32 %v5766, %v6054
    %v6056 = vpop.f32.mrf.mxu0
    %v6057 = vpop.f32.mrf.mxu0
    %v6058 = vadd.f32 %v5769, %v6057
    %v6059 = vpop.f32.mrf.mxu0
    %6060 = vmatprep.mubr.bf16.mxu0 0
    %6061 = vmatmul.mubr.bf16.gmra.mxu0 %v5265
    %v6062 = vpop.f32.mrf.mxu0
    %v6063 = vadd.f32 %v5774, %v6062
    %v6064 = vpop.f32.mrf.mxu0
    %v6065 = vpop.f32.mrf.mxu0
    %v6066 = vadd.f32 %v5777, %v6065
    %v6067 = vpop.f32.mrf.mxu0
    %6068 = vmatprep.mubr.bf16.mxu0 0
    %6069 = vmatmul.mubr.bf16.gmra.mxu0 %v5268
    %v6070 = vpop.f32.mrf.mxu0
    %v6071 = vadd.f32 %v5782, %v6070
    %v6072 = vpop.f32.mrf.mxu0
    %v6073 = vpop.f32.mrf.mxu0
    %v6074 = vadd.f32 %v5785, %v6073
    %v6075 = vpop.f32.mrf.mxu0
    %6076 = vmatprep.mubr.bf16.mxu0 0
    %6077 = vmatmul.mubr.bf16.gmra.mxu0 %v5271
    %v6078 = vpop.f32.mrf.mxu0
    %v6079 = vadd.f32 %v5790, %v6078
    %v6080 = vpop.f32.mrf.mxu0
    %v6081 = vpop.f32.mrf.mxu0
    %v6082 = vadd.f32 %v5793, %v6081
    %v6083 = vpop.f32.mrf.mxu0
    %6084 = vmatprep.mubr.bf16.mxu0 0
    %6085 = vmatmul.mubr.bf16.gmra.mxu0 %v5274
    %v6086 = vpop.f32.mrf.mxu0
    %v6087 = vadd.f32 %v5798, %v6086
    %v6088 = vpop.f32.mrf.mxu0
    %v6089 = vpop.f32.mrf.mxu0
    %v6090 = vadd.f32 %v5801, %v6089
    %v6091 = vpop.f32.mrf.mxu0
    %6092 = vdwg.mxu0
    %v6093 = vadd.f32 %v4476, %v5839
    %v6094 = vadd.f32 %v4479, %v5842
    %v6095 = vadd.f32 %v4484, %v5847
    %v6096 = vadd.f32 %v4487, %v5850
    %v6097 = vadd.f32 %v4492, %v5855
    %v6098 = vadd.f32 %v4495, %v5858
    %v6099 = vadd.f32 %v4500, %v5863
    %v6100 = vadd.f32 %v4503, %v5866
    %v6101 = vadd.f32 %v4508, %v5871
    %v6102 = vadd.f32 %v4511, %v5874
    %v6103 = vadd.f32 %v4516, %v5879
    %v6104 = vadd.f32 %v4519, %v5882
    %v6105 = vadd.f32 %v4524, %v5887
    %v6106 = vadd.f32 %v4527, %v5890
    %v6107 = vadd.f32 %v4532, %v5895
    %v6108 = vadd.f32 %v4535, %v5898
    %v6109 = vadd.f32 %v4540, %v5903
    %v6110 = vadd.f32 %v4543, %v5906
    %v6111 = vadd.f32 %v4548, %v5911
    %v6112 = vadd.f32 %v4551, %v5914
    %v6113 = vadd.f32 %v4556, %v5919
    %v6114 = vadd.f32 %v4559, %v5922
    %v6115 = vadd.f32 %v4564, %v5927
    %v6116 = vadd.f32 %v4567, %v5930
    %v6117 = vadd.f32 %v4572, %v5935
    %v6118 = vadd.f32 %v4575, %v5938
    %v6119 = vadd.f32 %v4580, %v5943
    %v6120 = vadd.f32 %v4583, %v5946
    %v6121 = vadd.f32 %v4588, %v5951
    %v6122 = vadd.f32 %v4591, %v5954
    %v6123 = vadd.f32 %v4596, %v5959
    %v6124 = vadd.f32 %v4599, %v5962
    %v6125 = vadd.f32 %v4604, %v5967
    %v6126 = vadd.f32 %v4607, %v5970
    %v6127 = vadd.f32 %v4612, %v5975
    %v6128 = vadd.f32 %v4615, %v5978
    %v6129 = vadd.f32 %v4620, %v5983
    %v6130 = vadd.f32 %v4623, %v5986
    %v6131 = vadd.f32 %v4628, %v5991
    %v6132 = vadd.f32 %v4631, %v5994
    %v6133 = vadd.f32 %v4636, %v5999
    %v6134 = vadd.f32 %v4639, %v6002
    %v6135 = vadd.f32 %v4644, %v6007
    %v6136 = vadd.f32 %v4647, %v6010
    %v6137 = vadd.f32 %v4652, %v6015
    %v6138 = vadd.f32 %v4655, %v6018
    %v6139 = vadd.f32 %v4660, %v6023
    %v6140 = vadd.f32 %v4663, %v6026
    %v6141 = vadd.f32 %v4668, %v6031
    %v6142 = vadd.f32 %v4671, %v6034
    %v6143 = vadd.f32 %v4676, %v6039
    %v6144 = vadd.f32 %v4679, %v6042
    %v6145 = vadd.f32 %v4684, %v6047
    %v6146 = vadd.f32 %v4687, %v6050
    %v6147 = vadd.f32 %v4692, %v6055
    %v6148 = vadd.f32 %v4695, %v6058
    %v6149 = vadd.f32 %v4700, %v6063
    %v6150 = vadd.f32 %v4703, %v6066
    %v6151 = vadd.f32 %v4708, %v6071
    %v6152 = vadd.f32 %v4711, %v6074
    %v6153 = vadd.f32 %v4716, %v6079
    %v6154 = vadd.f32 %v4719, %v6082
    %v6155 = vadd.f32 %v4724, %v6087
    %v6156 = vadd.f32 %v4727, %v6090
    %v6157 = vadd.f32 %v6093, %v6094
    %v6158 = vadd.f32 %v6157, %v6095
    %v6159 = vadd.f32 %v6158, %v6096
    %v6160 = vadd.f32 %v6159, %v6097
    %v6161 = vadd.f32 %v6160, %v6098
    %v6162 = vadd.f32 %v6161, %v6099
    %v6163 = vadd.f32 %v6162, %v6100
    %v6164 = vadd.f32 %v6163, %v6101
    %v6165 = vadd.f32 %v6164, %v6102
    %v6166 = vadd.f32 %v6165, %v6103
    %v6167 = vadd.f32 %v6166, %v6104
    %v6168 = vadd.f32 %v6167, %v6105
    %v6169 = vadd.f32 %v6168, %v6106
    %v6170 = vadd.f32 %v6169, %v6107
    %v6171 = vadd.f32 %v6170, %v6108
    %v6172 = vadd.f32 %v6171, %v6109
    %v6173 = vadd.f32 %v6172, %v6110
    %v6174 = vadd.f32 %v6173, %v6111
    %v6175 = vadd.f32 %v6174, %v6112
    %v6176 = vadd.f32 %v6175, %v6113
    %v6177 = vadd.f32 %v6176, %v6114
    %v6178 = vadd.f32 %v6177, %v6115
    %v6179 = vadd.f32 %v6178, %v6116
    %v6180 = vadd.f32 %v6179, %v6117
    %v6181 = vadd.f32 %v6180, %v6118
    %v6182 = vadd.f32 %v6181, %v6119
    %v6183 = vadd.f32 %v6182, %v6120
    %v6184 = vadd.f32 %v6183, %v6121
    %v6185 = vadd.f32 %v6184, %v6122
    %v6186 = vadd.f32 %v6185, %v6123
    %v6187 = vadd.f32 %v6186, %v6124
    %v6188 = vadd.f32 %v6187, %v6125
    %v6189 = vadd.f32 %v6188, %v6126
    %v6190 = vadd.f32 %v6189, %v6127
    %v6191 = vadd.f32 %v6190, %v6128
    %v6192 = vadd.f32 %v6191, %v6129
    %v6193 = vadd.f32 %v6192, %v6130
    %v6194 = vadd.f32 %v6193, %v6131
    %v6195 = vadd.f32 %v6194, %v6132
    %v6196 = vadd.f32 %v6195, %v6133
    %v6197 = vadd.f32 %v6196, %v6134
    %v6198 = vadd.f32 %v6197, %v6135
    %v6199 = vadd.f32 %v6198, %v6136
    %v6200 = vadd.f32 %v6199, %v6137
    %v6201 = vadd.f32 %v6200, %v6138
    %v6202 = vadd.f32 %v6201, %v6139
    %v6203 = vadd.f32 %v6202, %v6140
    %v6204 = vadd.f32 %v6203, %v6141
    %v6205 = vadd.f32 %v6204, %v6142
    %v6206 = vadd.f32 %v6205, %v6143
    %v6207 = vadd.f32 %v6206, %v6144
    %v6208 = vadd.f32 %v6207, %v6145
    %v6209 = vadd.f32 %v6208, %v6146
    %v6210 = vadd.f32 %v6209, %v6147
    %v6211 = vadd.f32 %v6210, %v6148
    %v6212 = vadd.f32 %v6211, %v6149
    %v6213 = vadd.f32 %v6212, %v6150
    %v6214 = vadd.f32 %v6213, %v6151
    %v6215 = vadd.f32 %v6214, %v6152
    %v6216 = vadd.f32 %v6215, %v6153
    %v6217 = vadd.f32 %v6216, %v6154
    %v6218 = vadd.f32 %v6217, %v6155
    %v6219 = vadd.f32 %v6218, %v6156
    %v6220 = vrot.slane %v6219, 4
    %v6221 = vadd.f32 %v6219, %v6220
    %v6222 = vrot.slane %v6221, 2
    %v6223 = vadd.f32 %v6221, %v6222
    %v6224 = vrot.slane %v6223, 1
    %v6225 = vadd.f32 %v6223, %v6224
    %v6226 = vrcp.pop 512.0
    %v6227 = vmul.f32 %v6225, %v6226
    %v6228 = vsub.f32 %v6093, %v6227
    %v6229 = vsub.f32 %v6094, %v6227
    %v6230 = vsub.f32 %v6095, %v6227
    %v6231 = vsub.f32 %v6096, %v6227
    %v6232 = vsub.f32 %v6097, %v6227
    %v6233 = vsub.f32 %v6098, %v6227
    %v6234 = vsub.f32 %v6099, %v6227
    %v6235 = vsub.f32 %v6100, %v6227
    %v6236 = vsub.f32 %v6101, %v6227
    %v6237 = vsub.f32 %v6102, %v6227
    %v6238 = vsub.f32 %v6103, %v6227
    %v6239 = vsub.f32 %v6104, %v6227
    %v6240 = vsub.f32 %v6105, %v6227
    %v6241 = vsub.f32 %v6106, %v6227
    %v6242 = vsub.f32 %v6107, %v6227
    %v6243 = vsub.f32 %v6108, %v6227
    %v6244 = vsub.f32 %v6109, %v6227
    %v6245 = vsub.f32 %v6110, %v6227
    %v6246 = vsub.f32 %v6111, %v6227
    %v6247 = vsub.f32 %v6112, %v6227
    %v6248 = vsub.f32 %v6113, %v6227
    %v6249 = vsub.f32 %v6114, %v6227
    %v6250 = vsub.f32 %v6115, %v6227
    %v6251 = vsub.f32 %v6116, %v6227
    %v6252 = vsub.f32 %v6117, %v6227
    %v6253 = vsub.f32 %v6118, %v6227
    %v6254 = vsub.f32 %v6119, %v6227
    %v6255 = vsub.f32 %v6120, %v6227
    %v6256 = vsub.f32 %v6121, %v6227
    %v6257 = vsub.f32 %v6122, %v6227
    %v6258 = vsub.f32 %v6123, %v6227
    %v6259 = vsub.f32 %v6124, %v6227
    %v6260 = vsub.f32 %v6125, %v6227
    %v6261 = vsub.f32 %v6126, %v6227
    %v6262 = vsub.f32 %v6127, %v6227
    %v6263 = vsub.f32 %v6128, %v6227
    %v6264 = vsub.f32 %v6129, %v6227
    %v6265 = vsub.f32 %v6130, %v6227
    %v6266 = vsub.f32 %v6131, %v6227
    %v6267 = vsub.f32 %v6132, %v6227
    %v6268 = vsub.f32 %v6133, %v6227
    %v6269 = vsub.f32 %v6134, %v6227
    %v6270 = vsub.f32 %v6135, %v6227
    %v6271 = vsub.f32 %v6136, %v6227
    %v6272 = vsub.f32 %v6137, %v6227
    %v6273 = vsub.f32 %v6138, %v6227
    %v6274 = vsub.f32 %v6139, %v6227
    %v6275 = vsub.f32 %v6140, %v6227
    %v6276 = vsub.f32 %v6141, %v6227
    %v6277 = vsub.f32 %v6142, %v6227
    %v6278 = vsub.f32 %v6143, %v6227
    %v6279 = vsub.f32 %v6144, %v6227
    %v6280 = vsub.f32 %v6145, %v6227
    %v6281 = vsub.f32 %v6146, %v6227
    %v6282 = vsub.f32 %v6147, %v6227
    %v6283 = vsub.f32 %v6148, %v6227
    %v6284 = vsub.f32 %v6149, %v6227
    %v6285 = vsub.f32 %v6150, %v6227
    %v6286 = vsub.f32 %v6151, %v6227
    %v6287 = vsub.f32 %v6152, %v6227
    %v6288 = vsub.f32 %v6153, %v6227
    %v6289 = vsub.f32 %v6154, %v6227
    %v6290 = vsub.f32 %v6155, %v6227
    %v6291 = vsub.f32 %v6156, %v6227
    %v6292 = vmul.f32 %v6228, %v6228
    %v6293 = vmul.f32 %v6229, %v6229
    %v6294 = vmul.f32 %v6230, %v6230
    %v6295 = vmul.f32 %v6231, %v6231
    %v6296 = vmul.f32 %v6232, %v6232
    %v6297 = vmul.f32 %v6233, %v6233
    %v6298 = vmul.f32 %v6234, %v6234
    %v6299 = vmul.f32 %v6235, %v6235
    %v6300 = vmul.f32 %v6236, %v6236
    %v6301 = vmul.f32 %v6237, %v6237
    %v6302 = vmul.f32 %v6238, %v6238
    %v6303 = vmul.f32 %v6239, %v6239
    %v6304 = vmul.f32 %v6240, %v6240
    %v6305 = vmul.f32 %v6241, %v6241
    %v6306 = vmul.f32 %v6242, %v6242
    %v6307 = vmul.f32 %v6243, %v6243
    %v6308 = vmul.f32 %v6244, %v6244
    %v6309 = vmul.f32 %v6245, %v6245
    %v6310 = vmul.f32 %v6246, %v6246
    %v6311 = vmul.f32 %v6247, %v6247
    %v6312 = vmul.f32 %v6248, %v6248
    %v6313 = vmul.f32 %v6249, %v6249
    %v6314 = vmul.f32 %v6250, %v6250
    %v6315 = vmul.f32 %v6251, %v6251
    %v6316 = vmul.f32 %v6252, %v6252
    %v6317 = vmul.f32 %v6253, %v6253
    %v6318 = vmul.f32 %v6254, %v6254
    %v6319 = vmul.f32 %v6255, %v6255
    %v6320 = vmul.f32 %v6256, %v6256
    %v6321 = vmul.f32 %v6257, %v6257
    %v6322 = vmul.f32 %v6258, %v6258
    %v6323 = vmul.f32 %v6259, %v6259
    %v6324 = vmul.f32 %v6260, %v6260
    %v6325 = vmul.f32 %v6261, %v6261
    %v6326 = vmul.f32 %v6262, %v6262
    %v6327 = vmul.f32 %v6263, %v6263
    %v6328 = vmul.f32 %v6264, %v6264
    %v6329 = vmul.f32 %v6265, %v6265
    %v6330 = vmul.f32 %v6266, %v6266
    %v6331 = vmul.f32 %v6267, %v6267
    %v6332 = vmul.f32 %v6268, %v6268
    %v6333 = vmul.f32 %v6269, %v6269
    %v6334 = vmul.f32 %v6270, %v6270
    %v6335 = vmul.f32 %v6271, %v6271
    %v6336 = vmul.f32 %v6272, %v6272
    %v6337 = vmul.f32 %v6273, %v6273
    %v6338 = vmul.f32 %v6274, %v6274
    %v6339 = vmul.f32 %v6275, %v6275
    %v6340 = vmul.f32 %v6276, %v6276
    %v6341 = vmul.f32 %v6277, %v6277
    %v6342 = vmul.f32 %v6278, %v6278
    %v6343 = vmul.f32 %v6279, %v6279
    %v6344 = vmul.f32 %v6280, %v6280
    %v6345 = vmul.f32 %v6281, %v6281
    %v6346 = vmul.f32 %v6282, %v6282
    %v6347 = vmul.f32 %v6283, %v6283
    %v6348 = vmul.f32 %v6284, %v6284
    %v6349 = vmul.f32 %v6285, %v6285
    %v6350 = vmul.f32 %v6286, %v6286
    %v6351 = vmul.f32 %v6287, %v6287
    %v6352 = vmul.f32 %v6288, %v6288
    %v6353 = vmul.f32 %v6289, %v6289
    %v6354 = vmul.f32 %v6290, %v6290
    %v6355 = vmul.f32 %v6291, %v6291
    %v6356 = vadd.f32 %v6292, %v6293
    %v6357 = vadd.f32 %v6356, %v6294
    %v6358 = vadd.f32 %v6357, %v6295
    %v6359 = vadd.f32 %v6358, %v6296
    %v6360 = vadd.f32 %v6359, %v6297
    %v6361 = vadd.f32 %v6360, %v6298
    %v6362 = vadd.f32 %v6361, %v6299
    %v6363 = vadd.f32 %v6362, %v6300
    %v6364 = vadd.f32 %v6363, %v6301
    %v6365 = vadd.f32 %v6364, %v6302
    %v6366 = vadd.f32 %v6365, %v6303
    %v6367 = vadd.f32 %v6366, %v6304
    %v6368 = vadd.f32 %v6367, %v6305
    %v6369 = vadd.f32 %v6368, %v6306
    %v6370 = vadd.f32 %v6369, %v6307
    %v6371 = vadd.f32 %v6370, %v6308
    %v6372 = vadd.f32 %v6371, %v6309
    %v6373 = vadd.f32 %v6372, %v6310
    %v6374 = vadd.f32 %v6373, %v6311
    %v6375 = vadd.f32 %v6374, %v6312
    %v6376 = vadd.f32 %v6375, %v6313
    %v6377 = vadd.f32 %v6376, %v6314
    %v6378 = vadd.f32 %v6377, %v6315
    %v6379 = vadd.f32 %v6378, %v6316
    %v6380 = vadd.f32 %v6379, %v6317
    %v6381 = vadd.f32 %v6380, %v6318
    %v6382 = vadd.f32 %v6381, %v6319
    %v6383 = vadd.f32 %v6382, %v6320
    %v6384 = vadd.f32 %v6383, %v6321
    %v6385 = vadd.f32 %v6384, %v6322
    %v6386 = vadd.f32 %v6385, %v6323
    %v6387 = vadd.f32 %v6386, %v6324
    %v6388 = vadd.f32 %v6387, %v6325
    %v6389 = vadd.f32 %v6388, %v6326
    %v6390 = vadd.f32 %v6389, %v6327
    %v6391 = vadd.f32 %v6390, %v6328
    %v6392 = vadd.f32 %v6391, %v6329
    %v6393 = vadd.f32 %v6392, %v6330
    %v6394 = vadd.f32 %v6393, %v6331
    %v6395 = vadd.f32 %v6394, %v6332
    %v6396 = vadd.f32 %v6395, %v6333
    %v6397 = vadd.f32 %v6396, %v6334
    %v6398 = vadd.f32 %v6397, %v6335
    %v6399 = vadd.f32 %v6398, %v6336
    %v6400 = vadd.f32 %v6399, %v6337
    %v6401 = vadd.f32 %v6400, %v6338
    %v6402 = vadd.f32 %v6401, %v6339
    %v6403 = vadd.f32 %v6402, %v6340
    %v6404 = vadd.f32 %v6403, %v6341
    %v6405 = vadd.f32 %v6404, %v6342
    %v6406 = vadd.f32 %v6405, %v6343
    %v6407 = vadd.f32 %v6406, %v6344
    %v6408 = vadd.f32 %v6407, %v6345
    %v6409 = vadd.f32 %v6408, %v6346
    %v6410 = vadd.f32 %v6409, %v6347
    %v6411 = vadd.f32 %v6410, %v6348
    %v6412 = vadd.f32 %v6411, %v6349
    %v6413 = vadd.f32 %v6412, %v6350
    %v6414 = vadd.f32 %v6413, %v6351
    %v6415 = vadd.f32 %v6414, %v6352
    %v6416 = vadd.f32 %v6415, %v6353
    %v6417 = vadd.f32 %v6416, %v6354
    %v6418 = vadd.f32 %v6417, %v6355
    %v6419 = vrot.slane %v6418, 4
    %v6420 = vadd.f32 %v6418, %v6419
    %v6421 = vrot.slane %v6420, 2
    %v6422 = vadd.f32 %v6420, %v6421
    %v6423 = vrot.slane %v6422, 1
    %v6424 = vadd.f32 %v6422, %v6423
    %v6425 = vmul.f32 %v6424, %v6226
    %v6426 = vld [vmem:[%s3] sm:$0x1]
    %v6427 = vadd.f32 %v6425, 1e-05
    %v6428 = vrsqrt.pop %v6427
    %v6429 = vmul.f32 %v6426, %v6428
    %v6430 = vld [vmem:[%s4] sm:$0x1]
    %v6431 = vmul.f32 %v6227, %v6429
    %v6432 = vsub.f32 %v6430, %v6431
    %v6434 = vlaneseq
    %v6435 = vshrl.u32 %v6434, 7
    %v6436 = vsub.s32 0, %v6435
    %v6437 = vrot.slane %v6429, %v6436
    %v6439 = vmul.f32 %v6093, %v6437
    %v6440 = vmul.f32 %v6094, %v6437
    %v6441 = vmul.f32 %v6095, %v6437
    %v6442 = vmul.f32 %v6096, %v6437
    %v6443 = vmul.f32 %v6097, %v6437
    %v6444 = vmul.f32 %v6098, %v6437
    %v6445 = vmul.f32 %v6099, %v6437
    %v6446 = vmul.f32 %v6100, %v6437
    %v6447 = vmul.f32 %v6101, %v6437
    %v6448 = vmul.f32 %v6102, %v6437
    %v6449 = vmul.f32 %v6103, %v6437
    %v6450 = vmul.f32 %v6104, %v6437
    %v6451 = vmul.f32 %v6105, %v6437
    %v6452 = vmul.f32 %v6106, %v6437
    %v6453 = vmul.f32 %v6107, %v6437
    %v6454 = vmul.f32 %v6108, %v6437
    %v6455 = vmul.f32 %v6109, %v6437
    %v6456 = vmul.f32 %v6110, %v6437
    %v6457 = vmul.f32 %v6111, %v6437
    %v6458 = vmul.f32 %v6112, %v6437
    %v6459 = vmul.f32 %v6113, %v6437
    %v6460 = vmul.f32 %v6114, %v6437
    %v6461 = vmul.f32 %v6115, %v6437
    %v6462 = vmul.f32 %v6116, %v6437
    %v6463 = vmul.f32 %v6117, %v6437
    %v6464 = vmul.f32 %v6118, %v6437
    %v6465 = vmul.f32 %v6119, %v6437
    %v6466 = vmul.f32 %v6120, %v6437
    %v6467 = vmul.f32 %v6121, %v6437
    %v6468 = vmul.f32 %v6122, %v6437
    %v6469 = vmul.f32 %v6123, %v6437
    %v6470 = vmul.f32 %v6124, %v6437
    %v6471 = vmul.f32 %v6125, %v6437
    %v6472 = vmul.f32 %v6126, %v6437
    %v6473 = vmul.f32 %v6127, %v6437
    %v6474 = vmul.f32 %v6128, %v6437
    %v6475 = vmul.f32 %v6129, %v6437
    %v6476 = vmul.f32 %v6130, %v6437
    %v6477 = vmul.f32 %v6131, %v6437
    %v6478 = vmul.f32 %v6132, %v6437
    %v6479 = vmul.f32 %v6133, %v6437
    %v6480 = vmul.f32 %v6134, %v6437
    %v6481 = vmul.f32 %v6135, %v6437
    %v6482 = vmul.f32 %v6136, %v6437
    %v6483 = vmul.f32 %v6137, %v6437
    %v6484 = vmul.f32 %v6138, %v6437
    %v6485 = vmul.f32 %v6139, %v6437
    %v6486 = vmul.f32 %v6140, %v6437
    %v6487 = vmul.f32 %v6141, %v6437
    %v6488 = vmul.f32 %v6142, %v6437
    %v6489 = vmul.f32 %v6143, %v6437
    %v6490 = vmul.f32 %v6144, %v6437
    %v6491 = vmul.f32 %v6145, %v6437
    %v6492 = vmul.f32 %v6146, %v6437
    %v6493 = vmul.f32 %v6147, %v6437
    %v6494 = vmul.f32 %v6148, %v6437
    %v6495 = vmul.f32 %v6149, %v6437
    %v6496 = vmul.f32 %v6150, %v6437
    %v6497 = vmul.f32 %v6151, %v6437
    %v6498 = vmul.f32 %v6152, %v6437
    %v6499 = vmul.f32 %v6153, %v6437
    %v6500 = vmul.f32 %v6154, %v6437
    %v6501 = vmul.f32 %v6155, %v6437
    %v6502 = vmul.f32 %v6156, %v6437
    %v6504 = vlaneseq
    %v6505 = vshrl.u32 %v6504, 7
    %v6506 = vsub.s32 0, %v6505
    %v6507 = vrot.slane %v6432, %v6506
    %v6509 = vadd.f32 %v6439, %v6507
    %v6510 = vadd.f32 %v6440, %v6507
    %v6511 = vadd.f32 %v6441, %v6507
    %v6512 = vadd.f32 %v6442, %v6507
    %v6513 = vadd.f32 %v6443, %v6507
    %v6514 = vadd.f32 %v6444, %v6507
    %v6515 = vadd.f32 %v6445, %v6507
    %v6516 = vadd.f32 %v6446, %v6507
    %v6517 = vadd.f32 %v6447, %v6507
    %v6518 = vadd.f32 %v6448, %v6507
    %v6519 = vadd.f32 %v6449, %v6507
    %v6520 = vadd.f32 %v6450, %v6507
    %v6521 = vadd.f32 %v6451, %v6507
    %v6522 = vadd.f32 %v6452, %v6507
    %v6523 = vadd.f32 %v6453, %v6507
    %v6524 = vadd.f32 %v6454, %v6507
    %v6525 = vadd.f32 %v6455, %v6507
    %v6526 = vadd.f32 %v6456, %v6507
    %v6527 = vadd.f32 %v6457, %v6507
    %v6528 = vadd.f32 %v6458, %v6507
    %v6529 = vadd.f32 %v6459, %v6507
    %v6530 = vadd.f32 %v6460, %v6507
    %v6531 = vadd.f32 %v6461, %v6507
    %v6532 = vadd.f32 %v6462, %v6507
    %v6533 = vadd.f32 %v6463, %v6507
    %v6534 = vadd.f32 %v6464, %v6507
    %v6535 = vadd.f32 %v6465, %v6507
    %v6536 = vadd.f32 %v6466, %v6507
    %v6537 = vadd.f32 %v6467, %v6507
    %v6538 = vadd.f32 %v6468, %v6507
    %v6539 = vadd.f32 %v6469, %v6507
    %v6540 = vadd.f32 %v6470, %v6507
    %v6541 = vadd.f32 %v6471, %v6507
    %v6542 = vadd.f32 %v6472, %v6507
    %v6543 = vadd.f32 %v6473, %v6507
    %v6544 = vadd.f32 %v6474, %v6507
    %v6545 = vadd.f32 %v6475, %v6507
    %v6546 = vadd.f32 %v6476, %v6507
    %v6547 = vadd.f32 %v6477, %v6507
    %v6548 = vadd.f32 %v6478, %v6507
    %v6549 = vadd.f32 %v6479, %v6507
    %v6550 = vadd.f32 %v6480, %v6507
    %v6551 = vadd.f32 %v6481, %v6507
    %v6552 = vadd.f32 %v6482, %v6507
    %v6553 = vadd.f32 %v6483, %v6507
    %v6554 = vadd.f32 %v6484, %v6507
    %v6555 = vadd.f32 %v6485, %v6507
    %v6556 = vadd.f32 %v6486, %v6507
    %v6557 = vadd.f32 %v6487, %v6507
    %v6558 = vadd.f32 %v6488, %v6507
    %v6559 = vadd.f32 %v6489, %v6507
    %v6560 = vadd.f32 %v6490, %v6507
    %v6561 = vadd.f32 %v6491, %v6507
    %v6562 = vadd.f32 %v6492, %v6507
    %v6563 = vadd.f32 %v6493, %v6507
    %v6564 = vadd.f32 %v6494, %v6507
    %v6565 = vadd.f32 %v6495, %v6507
    %v6566 = vadd.f32 %v6496, %v6507
    %v6567 = vadd.f32 %v6497, %v6507
    %v6568 = vadd.f32 %v6498, %v6507
    %v6569 = vadd.f32 %v6499, %v6507
    %v6570 = vadd.f32 %v6500, %v6507
    %v6571 = vadd.f32 %v6501, %v6507
    %v6572 = vadd.f32 %v6502, %v6507
    %v6573 = vmax.f32 %v6509, 0.0
    %v6574 = vmax.f32 %v6510, 0.0
    %v6575 = vmax.f32 %v6511, 0.0
    %v6576 = vmax.f32 %v6512, 0.0
    %v6577 = vmax.f32 %v6513, 0.0
    %v6578 = vmax.f32 %v6514, 0.0
    %v6579 = vmax.f32 %v6515, 0.0
    %v6580 = vmax.f32 %v6516, 0.0
    %v6581 = vmax.f32 %v6517, 0.0
    %v6582 = vmax.f32 %v6518, 0.0
    %v6583 = vmax.f32 %v6519, 0.0
    %v6584 = vmax.f32 %v6520, 0.0
    %v6585 = vmax.f32 %v6521, 0.0
    %v6586 = vmax.f32 %v6522, 0.0
    %v6587 = vmax.f32 %v6523, 0.0
    %v6588 = vmax.f32 %v6524, 0.0
    %v6589 = vmax.f32 %v6525, 0.0
    %v6590 = vmax.f32 %v6526, 0.0
    %v6591 = vmax.f32 %v6527, 0.0
    %v6592 = vmax.f32 %v6528, 0.0
    %v6593 = vmax.f32 %v6529, 0.0
    %v6594 = vmax.f32 %v6530, 0.0
    %v6595 = vmax.f32 %v6531, 0.0
    %v6596 = vmax.f32 %v6532, 0.0
    %v6597 = vmax.f32 %v6533, 0.0
    %v6598 = vmax.f32 %v6534, 0.0
    %v6599 = vmax.f32 %v6535, 0.0
    %v6600 = vmax.f32 %v6536, 0.0
    %v6601 = vmax.f32 %v6537, 0.0
    %v6602 = vmax.f32 %v6538, 0.0
    %v6603 = vmax.f32 %v6539, 0.0
    %v6604 = vmax.f32 %v6540, 0.0
    %v6605 = vmax.f32 %v6541, 0.0
    %v6606 = vmax.f32 %v6542, 0.0
    %v6607 = vmax.f32 %v6543, 0.0
    %v6608 = vmax.f32 %v6544, 0.0
    %v6609 = vmax.f32 %v6545, 0.0
    %v6610 = vmax.f32 %v6546, 0.0
    %v6611 = vmax.f32 %v6547, 0.0
    %v6612 = vmax.f32 %v6548, 0.0
    %v6613 = vmax.f32 %v6549, 0.0
    %v6614 = vmax.f32 %v6550, 0.0
    %v6615 = vmax.f32 %v6551, 0.0
    %v6616 = vmax.f32 %v6552, 0.0
    %v6617 = vmax.f32 %v6553, 0.0
    %v6618 = vmax.f32 %v6554, 0.0
    %v6619 = vmax.f32 %v6555, 0.0
    %v6620 = vmax.f32 %v6556, 0.0
    %v6621 = vmax.f32 %v6557, 0.0
    %v6622 = vmax.f32 %v6558, 0.0
    %v6623 = vmax.f32 %v6559, 0.0
    %v6624 = vmax.f32 %v6560, 0.0
    %v6625 = vmax.f32 %v6561, 0.0
    %v6626 = vmax.f32 %v6562, 0.0
    %v6627 = vmax.f32 %v6563, 0.0
    %v6628 = vmax.f32 %v6564, 0.0
    %v6629 = vmax.f32 %v6565, 0.0
    %v6630 = vmax.f32 %v6566, 0.0
    %v6631 = vmax.f32 %v6567, 0.0
    %v6632 = vmax.f32 %v6568, 0.0
    %v6633 = vmax.f32 %v6569, 0.0
    %v6634 = vmax.f32 %v6570, 0.0
    %v6635 = vmax.f32 %v6571, 0.0
    %v6636 = vmax.f32 %v6572, 0.0
    %v6637 = vpack.c.bf16 %v6574, %v6573
    %v6638 = vpack.c.bf16 %v6576, %v6575
    %v6639 = vpack.c.bf16 %v6578, %v6577
    %v6640 = vpack.c.bf16 %v6580, %v6579
    %v6641 = vpack.c.bf16 %v6582, %v6581
    %v6642 = vpack.c.bf16 %v6584, %v6583
    %v6643 = vpack.c.bf16 %v6586, %v6585
    %v6644 = vpack.c.bf16 %v6588, %v6587
    %v6645 = vpack.c.bf16 %v6590, %v6589
    %v6646 = vpack.c.bf16 %v6592, %v6591
    %v6647 = vpack.c.bf16 %v6594, %v6593
    %v6648 = vpack.c.bf16 %v6596, %v6595
    %v6649 = vpack.c.bf16 %v6598, %v6597
    %v6650 = vpack.c.bf16 %v6600, %v6599
    %v6651 = vpack.c.bf16 %v6602, %v6601
    %v6652 = vpack.c.bf16 %v6604, %v6603
    %v6653 = vpack.c.bf16 %v6606, %v6605
    %v6654 = vpack.c.bf16 %v6608, %v6607
    %v6655 = vpack.c.bf16 %v6610, %v6609
    %v6656 = vpack.c.bf16 %v6612, %v6611
    %v6657 = vpack.c.bf16 %v6614, %v6613
    %v6658 = vpack.c.bf16 %v6616, %v6615
    %v6659 = vpack.c.bf16 %v6618, %v6617
    %v6660 = vpack.c.bf16 %v6620, %v6619
    %v6661 = vpack.c.bf16 %v6622, %v6621
    %v6662 = vpack.c.bf16 %v6624, %v6623
    %v6663 = vpack.c.bf16 %v6626, %v6625
    %v6664 = vpack.c.bf16 %v6628, %v6627
    %v6665 = vpack.c.bf16 %v6630, %v6629
    %v6666 = vpack.c.bf16 %v6632, %v6631
    %v6667 = vpack.c.bf16 %v6634, %v6633
    %v6668 = vpack.c.bf16 %v6636, %v6635
    %v6701 = vunpack.c.l.b16 %v6637
    %v6702 = vunpack.c.h.b16 %v6637
    %v6703 = vunpack.c.l.b16 %v6638
    %v6704 = vunpack.c.h.b16 %v6638
    %v6705 = vunpack.c.l.b16 %v6639
    %v6706 = vunpack.c.h.b16 %v6639
    %v6707 = vunpack.c.l.b16 %v6640
    %v6708 = vunpack.c.h.b16 %v6640
    %v6709 = vunpack.c.l.b16 %v6641
    %v6710 = vunpack.c.h.b16 %v6641
    %v6711 = vunpack.c.l.b16 %v6642
    %v6712 = vunpack.c.h.b16 %v6642
    %v6713 = vunpack.c.l.b16 %v6643
    %v6714 = vunpack.c.h.b16 %v6643
    %v6715 = vunpack.c.l.b16 %v6644
    %v6716 = vunpack.c.h.b16 %v6644
    %v6717 = vunpack.c.l.b16 %v6645
    %v6718 = vunpack.c.h.b16 %v6645
    %v6719 = vunpack.c.l.b16 %v6646
    %v6720 = vunpack.c.h.b16 %v6646
    %v6721 = vunpack.c.l.b16 %v6647
    %v6722 = vunpack.c.h.b16 %v6647
    %v6723 = vunpack.c.l.b16 %v6648
    %v6724 = vunpack.c.h.b16 %v6648
    %v6725 = vunpack.c.l.b16 %v6649
    %v6726 = vunpack.c.h.b16 %v6649
    %v6727 = vunpack.c.l.b16 %v6650
    %v6728 = vunpack.c.h.b16 %v6650
    %v6729 = vunpack.c.l.b16 %v6651
    %v6730 = vunpack.c.h.b16 %v6651
    %v6731 = vunpack.c.l.b16 %v6652
    %v6732 = vunpack.c.h.b16 %v6652
    %v6733 = vunpack.c.l.b16 %v6653
    %v6734 = vunpack.c.h.b16 %v6653
    %v6735 = vunpack.c.l.b16 %v6654
    %v6736 = vunpack.c.h.b16 %v6654
    %v6737 = vunpack.c.l.b16 %v6655
    %v6738 = vunpack.c.h.b16 %v6655
    %v6739 = vunpack.c.l.b16 %v6656
    %v6740 = vunpack.c.h.b16 %v6656
    %v6741 = vunpack.c.l.b16 %v6657
    %v6742 = vunpack.c.h.b16 %v6657
    %v6743 = vunpack.c.l.b16 %v6658
    %v6744 = vunpack.c.h.b16 %v6658
    %v6745 = vunpack.c.l.b16 %v6659
    %v6746 = vunpack.c.h.b16 %v6659
    %v6747 = vunpack.c.l.b16 %v6660
    %v6748 = vunpack.c.h.b16 %v6660
    %v6749 = vunpack.c.l.b16 %v6661
    %v6750 = vunpack.c.h.b16 %v6661
    %v6751 = vunpack.c.l.b16 %v6662
    %v6752 = vunpack.c.h.b16 %v6662
    %v6753 = vunpack.c.l.b16 %v6663
    %v6754 = vunpack.c.h.b16 %v6663
    %v6755 = vunpack.c.l.b16 %v6664
    %v6756 = vunpack.c.h.b16 %v6664
    %v6757 = vunpack.c.l.b16 %v6665
    %v6758 = vunpack.c.h.b16 %v6665
    %v6759 = vunpack.c.l.b16 %v6666
    %v6760 = vunpack.c.h.b16 %v6666
    %v6761 = vunpack.c.l.b16 %v6667
    %v6762 = vunpack.c.h.b16 %v6667
    %v6763 = vunpack.c.l.b16 %v6668
    %v6764 = vunpack.c.h.b16 %v6668
    %v6765 = vpack.c.b16 %v6701, %v6701
    %v6766 = vpack.c.b16 %v6702, %v6702
    %v6767 = vpack.c.b16 %v6703, %v6703
    %v6768 = vpack.c.b16 %v6704, %v6704
    %v6769 = vpack.c.b16 %v6705, %v6705
    %v6770 = vpack.c.b16 %v6706, %v6706
    %v6771 = vpack.c.b16 %v6707, %v6707
    %v6772 = vpack.c.b16 %v6708, %v6708
    %v6773 = vpack.c.b16 %v6709, %v6709
    %v6774 = vpack.c.b16 %v6710, %v6710
    %v6775 = vpack.c.b16 %v6711, %v6711
    %v6776 = vpack.c.b16 %v6712, %v6712
    %v6777 = vpack.c.b16 %v6713, %v6713
    %v6778 = vpack.c.b16 %v6714, %v6714
    %v6779 = vpack.c.b16 %v6715, %v6715
    %v6780 = vpack.c.b16 %v6716, %v6716
    %v6781 = vpack.c.b16 %v6717, %v6717
    %v6782 = vpack.c.b16 %v6718, %v6718
    %v6783 = vpack.c.b16 %v6719, %v6719
    %v6784 = vpack.c.b16 %v6720, %v6720
    %v6785 = vpack.c.b16 %v6721, %v6721
    %v6786 = vpack.c.b16 %v6722, %v6722
    %v6787 = vpack.c.b16 %v6723, %v6723
    %v6788 = vpack.c.b16 %v6724, %v6724
    %v6789 = vpack.c.b16 %v6725, %v6725
    %v6790 = vpack.c.b16 %v6726, %v6726
    %v6791 = vpack.c.b16 %v6727, %v6727
    %v6792 = vpack.c.b16 %v6728, %v6728
    %v6793 = vpack.c.b16 %v6729, %v6729
    %v6794 = vpack.c.b16 %v6730, %v6730
    %v6795 = vpack.c.b16 %v6731, %v6731
    %v6796 = vpack.c.b16 %v6732, %v6732
    %v6797 = vpack.c.b16 %v6733, %v6733
    %v6798 = vpack.c.b16 %v6734, %v6734
    %v6799 = vpack.c.b16 %v6735, %v6735
    %v6800 = vpack.c.b16 %v6736, %v6736
    %v6801 = vpack.c.b16 %v6737, %v6737
    %v6802 = vpack.c.b16 %v6738, %v6738
    %v6803 = vpack.c.b16 %v6739, %v6739
    %v6804 = vpack.c.b16 %v6740, %v6740
    %v6805 = vpack.c.b16 %v6741, %v6741
    %v6806 = vpack.c.b16 %v6742, %v6742
    %v6807 = vpack.c.b16 %v6743, %v6743
    %v6808 = vpack.c.b16 %v6744, %v6744
    %v6809 = vpack.c.b16 %v6745, %v6745
    %v6810 = vpack.c.b16 %v6746, %v6746
    %v6811 = vpack.c.b16 %v6747, %v6747
    %v6812 = vpack.c.b16 %v6748, %v6748
    %v6813 = vpack.c.b16 %v6749, %v6749
    %v6814 = vpack.c.b16 %v6750, %v6750
    %v6815 = vpack.c.b16 %v6751, %v6751
    %v6816 = vpack.c.b16 %v6752, %v6752
    %v6817 = vpack.c.b16 %v6753, %v6753
    %v6818 = vpack.c.b16 %v6754, %v6754
    %v6819 = vpack.c.b16 %v6755, %v6755
    %v6820 = vpack.c.b16 %v6756, %v6756
    %v6821 = vpack.c.b16 %v6757, %v6757
    %v6822 = vpack.c.b16 %v6758, %v6758
    %v6823 = vpack.c.b16 %v6759, %v6759
    %v6824 = vpack.c.b16 %v6760, %v6760
    %v6825 = vpack.c.b16 %v6761, %v6761
    %v6826 = vpack.c.b16 %v6762, %v6762
    %v6827 = vpack.c.b16 %v6763, %v6763
    %v6828 = vpack.c.b16 %v6764, %v6764
    %v6830 = vshrl.u32 %v6765, 16
    %v6832 = vrot.slane %v6830, 7
    %v6833 = vshll.u32 %v6765, 16
    %v6835 = vor.u32 %v6832, %v6833
    %v6836 = vrot.slane %v6832, 4
    %v6838 = vshrl.u32 %v6766, 16
    %v6840 = vrot.slane %v6838, 7
    %v6841 = vshll.u32 %v6766, 16
    %v6843 = vor.u32 %v6840, %v6841
    %v6844 = vsel %vm542, %v6836, %v6843
    %v6846 = vshrl.u32 %v6767, 16
    %v6848 = vrot.slane %v6846, 7
    %v6849 = vshll.u32 %v6767, 16
    %v6851 = vor.u32 %v6848, %v6849
    %v6852 = vrot.slane %v6848, 4
    %v6854 = vshrl.u32 %v6768, 16
    %v6856 = vrot.slane %v6854, 7
    %v6857 = vshll.u32 %v6768, 16
    %v6859 = vor.u32 %v6856, %v6857
    %v6860 = vsel %vm542, %v6852, %v6859
    %v6862 = vshrl.u32 %v6769, 16
    %v6864 = vrot.slane %v6862, 7
    %v6865 = vshll.u32 %v6769, 16
    %v6867 = vor.u32 %v6864, %v6865
    %v6868 = vrot.slane %v6864, 4
    %v6870 = vshrl.u32 %v6770, 16
    %v6872 = vrot.slane %v6870, 7
    %v6873 = vshll.u32 %v6770, 16
    %v6875 = vor.u32 %v6872, %v6873
    %v6876 = vsel %vm542, %v6868, %v6875
    %v6878 = vshrl.u32 %v6771, 16
    %v6880 = vrot.slane %v6878, 7
    %v6881 = vshll.u32 %v6771, 16
    %v6883 = vor.u32 %v6880, %v6881
    %v6884 = vrot.slane %v6880, 4
    %v6886 = vshrl.u32 %v6772, 16
    %v6888 = vrot.slane %v6886, 7
    %v6889 = vshll.u32 %v6772, 16
    %v6891 = vor.u32 %v6888, %v6889
    %v6892 = vsel %vm542, %v6884, %v6891
    %v6894 = vshrl.u32 %v6773, 16
    %v6896 = vrot.slane %v6894, 7
    %v6897 = vshll.u32 %v6773, 16
    %v6899 = vor.u32 %v6896, %v6897
    %v6900 = vrot.slane %v6896, 4
    %v6902 = vshrl.u32 %v6774, 16
    %v6904 = vrot.slane %v6902, 7
    %v6905 = vshll.u32 %v6774, 16
    %v6907 = vor.u32 %v6904, %v6905
    %v6908 = vsel %vm542, %v6900, %v6907
    %v6910 = vshrl.u32 %v6775, 16
    %v6912 = vrot.slane %v6910, 7
    %v6913 = vshll.u32 %v6775, 16
    %v6915 = vor.u32 %v6912, %v6913
    %v6916 = vrot.slane %v6912, 4
    %v6918 = vshrl.u32 %v6776, 16
    %v6920 = vrot.slane %v6918, 7
    %v6921 = vshll.u32 %v6776, 16
    %v6923 = vor.u32 %v6920, %v6921
    %v6924 = vsel %vm542, %v6916, %v6923
    %v6926 = vshrl.u32 %v6777, 16
    %v6928 = vrot.slane %v6926, 7
    %v6929 = vshll.u32 %v6777, 16
    %v6931 = vor.u32 %v6928, %v6929
    %v6932 = vrot.slane %v6928, 4
    %v6934 = vshrl.u32 %v6778, 16
    %v6936 = vrot.slane %v6934, 7
    %v6937 = vshll.u32 %v6778, 16
    %v6939 = vor.u32 %v6936, %v6937
    %v6940 = vsel %vm542, %v6932, %v6939
    %v6942 = vshrl.u32 %v6779, 16
    %v6944 = vrot.slane %v6942, 7
    %v6945 = vshll.u32 %v6779, 16
    %v6947 = vor.u32 %v6944, %v6945
    %v6948 = vrot.slane %v6944, 4
    %v6950 = vshrl.u32 %v6780, 16
    %v6952 = vrot.slane %v6950, 7
    %v6953 = vshll.u32 %v6780, 16
    %v6955 = vor.u32 %v6952, %v6953
    %v6956 = vsel %vm542, %v6948, %v6955
    %v6958 = vshrl.u32 %v6781, 16
    %v6960 = vrot.slane %v6958, 7
    %v6961 = vshll.u32 %v6781, 16
    %v6963 = vor.u32 %v6960, %v6961
    %v6964 = vrot.slane %v6960, 4
    %v6966 = vshrl.u32 %v6782, 16
    %v6968 = vrot.slane %v6966, 7
    %v6969 = vshll.u32 %v6782, 16
    %v6971 = vor.u32 %v6968, %v6969
    %v6972 = vsel %vm542, %v6964, %v6971
    %v6974 = vshrl.u32 %v6783, 16
    %v6976 = vrot.slane %v6974, 7
    %v6977 = vshll.u32 %v6783, 16
    %v6979 = vor.u32 %v6976, %v6977
    %v6980 = vrot.slane %v6976, 4
    %v6982 = vshrl.u32 %v6784, 16
    %v6984 = vrot.slane %v6982, 7
    %v6985 = vshll.u32 %v6784, 16
    %v6987 = vor.u32 %v6984, %v6985
    %v6988 = vsel %vm542, %v6980, %v6987
    %v6990 = vshrl.u32 %v6785, 16
    %v6992 = vrot.slane %v6990, 7
    %v6993 = vshll.u32 %v6785, 16
    %v6995 = vor.u32 %v6992, %v6993
    %v6996 = vrot.slane %v6992, 4
    %v6998 = vshrl.u32 %v6786, 16
    %v7000 = vrot.slane %v6998, 7
    %v7001 = vshll.u32 %v6786, 16
    %v7003 = vor.u32 %v7000, %v7001
    %v7004 = vsel %vm542, %v6996, %v7003
    %v7006 = vshrl.u32 %v6787, 16
    %v7008 = vrot.slane %v7006, 7
    %v7009 = vshll.u32 %v6787, 16
    %v7011 = vor.u32 %v7008, %v7009
    %v7012 = vrot.slane %v7008, 4
    %v7014 = vshrl.u32 %v6788, 16
    %v7016 = vrot.slane %v7014, 7
    %v7017 = vshll.u32 %v6788, 16
    %v7019 = vor.u32 %v7016, %v7017
    %v7020 = vsel %vm542, %v7012, %v7019
    %v7022 = vshrl.u32 %v6789, 16
    %v7024 = vrot.slane %v7022, 7
    %v7025 = vshll.u32 %v6789, 16
    %v7027 = vor.u32 %v7024, %v7025
    %v7028 = vrot.slane %v7024, 4
    %v7030 = vshrl.u32 %v6790, 16
    %v7032 = vrot.slane %v7030, 7
    %v7033 = vshll.u32 %v6790, 16
    %v7035 = vor.u32 %v7032, %v7033
    %v7036 = vsel %vm542, %v7028, %v7035
    %v7038 = vshrl.u32 %v6791, 16
    %v7040 = vrot.slane %v7038, 7
    %v7041 = vshll.u32 %v6791, 16
    %v7043 = vor.u32 %v7040, %v7041
    %v7044 = vrot.slane %v7040, 4
    %v7046 = vshrl.u32 %v6792, 16
    %v7048 = vrot.slane %v7046, 7
    %v7049 = vshll.u32 %v6792, 16
    %v7051 = vor.u32 %v7048, %v7049
    %v7052 = vsel %vm542, %v7044, %v7051
    %v7054 = vshrl.u32 %v6793, 16
    %v7056 = vrot.slane %v7054, 7
    %v7057 = vshll.u32 %v6793, 16
    %v7059 = vor.u32 %v7056, %v7057
    %v7060 = vrot.slane %v7056, 4
    %v7062 = vshrl.u32 %v6794, 16
    %v7064 = vrot.slane %v7062, 7
    %v7065 = vshll.u32 %v6794, 16
    %v7067 = vor.u32 %v7064, %v7065
    %v7068 = vsel %vm542, %v7060, %v7067
    %v7070 = vshrl.u32 %v6795, 16
    %v7072 = vrot.slane %v7070, 7
    %v7073 = vshll.u32 %v6795, 16
    %v7075 = vor.u32 %v7072, %v7073
    %v7076 = vrot.slane %v7072, 4
    %v7078 = vshrl.u32 %v6796, 16
    %v7080 = vrot.slane %v7078, 7
    %v7081 = vshll.u32 %v6796, 16
    %v7083 = vor.u32 %v7080, %v7081
    %v7084 = vsel %vm542, %v7076, %v7083
    %v7086 = vshrl.u32 %v6797, 16
    %v7088 = vrot.slane %v7086, 7
    %v7089 = vshll.u32 %v6797, 16
    %v7091 = vor.u32 %v7088, %v7089
    %v7092 = vrot.slane %v7088, 4
    %v7094 = vshrl.u32 %v6798, 16
    %v7096 = vrot.slane %v7094, 7
    %v7097 = vshll.u32 %v6798, 16
    %v7099 = vor.u32 %v7096, %v7097
    %v7100 = vsel %vm542, %v7092, %v7099
    %v7102 = vshrl.u32 %v6799, 16
    %v7104 = vrot.slane %v7102, 7
    %v7105 = vshll.u32 %v6799, 16
    %v7107 = vor.u32 %v7104, %v7105
    %v7108 = vrot.slane %v7104, 4
    %v7110 = vshrl.u32 %v6800, 16
    %v7112 = vrot.slane %v7110, 7
    %v7113 = vshll.u32 %v6800, 16
    %v7115 = vor.u32 %v7112, %v7113
    %v7116 = vsel %vm542, %v7108, %v7115
    %v7118 = vshrl.u32 %v6801, 16
    %v7120 = vrot.slane %v7118, 7
    %v7121 = vshll.u32 %v6801, 16
    %v7123 = vor.u32 %v7120, %v7121
    %v7124 = vrot.slane %v7120, 4
    %v7126 = vshrl.u32 %v6802, 16
    %v7128 = vrot.slane %v7126, 7
    %v7129 = vshll.u32 %v6802, 16
    %v7131 = vor.u32 %v7128, %v7129
    %v7132 = vsel %vm542, %v7124, %v7131
    %v7134 = vshrl.u32 %v6803, 16
    %v7136 = vrot.slane %v7134, 7
    %v7137 = vshll.u32 %v6803, 16
    %v7139 = vor.u32 %v7136, %v7137
    %v7140 = vrot.slane %v7136, 4
    %v7142 = vshrl.u32 %v6804, 16
    %v7144 = vrot.slane %v7142, 7
    %v7145 = vshll.u32 %v6804, 16
    %v7147 = vor.u32 %v7144, %v7145
    %v7148 = vsel %vm542, %v7140, %v7147
    %v7150 = vshrl.u32 %v6805, 16
    %v7152 = vrot.slane %v7150, 7
    %v7153 = vshll.u32 %v6805, 16
    %v7155 = vor.u32 %v7152, %v7153
    %v7156 = vrot.slane %v7152, 4
    %v7158 = vshrl.u32 %v6806, 16
    %v7160 = vrot.slane %v7158, 7
    %v7161 = vshll.u32 %v6806, 16
    %v7163 = vor.u32 %v7160, %v7161
    %v7164 = vsel %vm542, %v7156, %v7163
    %v7166 = vshrl.u32 %v6807, 16
    %v7168 = vrot.slane %v7166, 7
    %v7169 = vshll.u32 %v6807, 16
    %v7171 = vor.u32 %v7168, %v7169
    %v7172 = vrot.slane %v7168, 4
    %v7174 = vshrl.u32 %v6808, 16
    %v7176 = vrot.slane %v7174, 7
    %v7177 = vshll.u32 %v6808, 16
    %v7179 = vor.u32 %v7176, %v7177
    %v7180 = vsel %vm542, %v7172, %v7179
    %v7182 = vshrl.u32 %v6809, 16
    %v7184 = vrot.slane %v7182, 7
    %v7185 = vshll.u32 %v6809, 16
    %v7187 = vor.u32 %v7184, %v7185
    %v7188 = vrot.slane %v7184, 4
    %v7190 = vshrl.u32 %v6810, 16
    %v7192 = vrot.slane %v7190, 7
    %v7193 = vshll.u32 %v6810, 16
    %v7195 = vor.u32 %v7192, %v7193
    %v7196 = vsel %vm542, %v7188, %v7195
    %v7198 = vshrl.u32 %v6811, 16
    %v7200 = vrot.slane %v7198, 7
    %v7201 = vshll.u32 %v6811, 16
    %v7203 = vor.u32 %v7200, %v7201
    %v7204 = vrot.slane %v7200, 4
    %v7206 = vshrl.u32 %v6812, 16
    %v7208 = vrot.slane %v7206, 7
    %v7209 = vshll.u32 %v6812, 16
    %v7211 = vor.u32 %v7208, %v7209
    %v7212 = vsel %vm542, %v7204, %v7211
    %v7214 = vshrl.u32 %v6813, 16
    %v7216 = vrot.slane %v7214, 7
    %v7217 = vshll.u32 %v6813, 16
    %v7219 = vor.u32 %v7216, %v7217
    %v7220 = vrot.slane %v7216, 4
    %v7222 = vshrl.u32 %v6814, 16
    %v7224 = vrot.slane %v7222, 7
    %v7225 = vshll.u32 %v6814, 16
    %v7227 = vor.u32 %v7224, %v7225
    %v7228 = vsel %vm542, %v7220, %v7227
    %v7230 = vshrl.u32 %v6815, 16
    %v7232 = vrot.slane %v7230, 7
    %v7233 = vshll.u32 %v6815, 16
    %v7235 = vor.u32 %v7232, %v7233
    %v7236 = vrot.slane %v7232, 4
    %v7238 = vshrl.u32 %v6816, 16
    %v7240 = vrot.slane %v7238, 7
    %v7241 = vshll.u32 %v6816, 16
    %v7243 = vor.u32 %v7240, %v7241
    %v7244 = vsel %vm542, %v7236, %v7243
    %v7246 = vshrl.u32 %v6817, 16
    %v7248 = vrot.slane %v7246, 7
    %v7249 = vshll.u32 %v6817, 16
    %v7251 = vor.u32 %v7248, %v7249
    %v7252 = vrot.slane %v7248, 4
    %v7254 = vshrl.u32 %v6818, 16
    %v7256 = vrot.slane %v7254, 7
    %v7257 = vshll.u32 %v6818, 16
    %v7259 = vor.u32 %v7256, %v7257
    %v7260 = vsel %vm542, %v7252, %v7259
    %v7262 = vshrl.u32 %v6819, 16
    %v7264 = vrot.slane %v7262, 7
    %v7265 = vshll.u32 %v6819, 16
    %v7267 = vor.u32 %v7264, %v7265
    %v7268 = vrot.slane %v7264, 4
    %v7270 = vshrl.u32 %v6820, 16
    %v7272 = vrot.slane %v7270, 7
    %v7273 = vshll.u32 %v6820, 16
    %v7275 = vor.u32 %v7272, %v7273
    %v7276 = vsel %vm542, %v7268, %v7275
    %v7278 = vshrl.u32 %v6821, 16
    %v7280 = vrot.slane %v7278, 7
    %v7281 = vshll.u32 %v6821, 16
    %v7283 = vor.u32 %v7280, %v7281
    %v7284 = vrot.slane %v7280, 4
    %v7286 = vshrl.u32 %v6822, 16
    %v7288 = vrot.slane %v7286, 7
    %v7289 = vshll.u32 %v6822, 16
    %v7291 = vor.u32 %v7288, %v7289
    %v7292 = vsel %vm542, %v7284, %v7291
    %v7294 = vshrl.u32 %v6823, 16
    %v7296 = vrot.slane %v7294, 7
    %v7297 = vshll.u32 %v6823, 16
    %v7299 = vor.u32 %v7296, %v7297
    %v7300 = vrot.slane %v7296, 4
    %v7302 = vshrl.u32 %v6824, 16
    %v7304 = vrot.slane %v7302, 7
    %v7305 = vshll.u32 %v6824, 16
    %v7307 = vor.u32 %v7304, %v7305
    %v7308 = vsel %vm542, %v7300, %v7307
    %v7310 = vshrl.u32 %v6825, 16
    %v7312 = vrot.slane %v7310, 7
    %v7313 = vshll.u32 %v6825, 16
    %v7315 = vor.u32 %v7312, %v7313
    %v7316 = vrot.slane %v7312, 4
    %v7318 = vshrl.u32 %v6826, 16
    %v7320 = vrot.slane %v7318, 7
    %v7321 = vshll.u32 %v6826, 16
    %v7323 = vor.u32 %v7320, %v7321
    %v7324 = vsel %vm542, %v7316, %v7323
    %v7326 = vshrl.u32 %v6827, 16
    %v7328 = vrot.slane %v7326, 7
    %v7329 = vshll.u32 %v6827, 16
    %v7331 = vor.u32 %v7328, %v7329
    %v7332 = vrot.slane %v7328, 4
    %v7334 = vshrl.u32 %v6828, 16
    %v7336 = vrot.slane %v7334, 7
    %v7337 = vshll.u32 %v6828, 16
    %v7339 = vor.u32 %v7336, %v7337
    %v7340 = vsel %vm542, %v7332, %v7339
    %v7405 = vld [vmem:[%s86] sm:$0xf]
    %v7406 = vsel %vm1121, %v6835, %v7405
    %7407 = vst [vmem:[%s86] sm:$0xf] %v7406
    %7408 = vst [vmem:[%s86 + $0xc] sm:$0xf] %v6844
    %v7409 = vld [vmem:[%s86 + $0x18] sm:$0xf]
    %v7410 = vsel %vm1121, %v6851, %v7409
    %7411 = vst [vmem:[%s86 + $0x18] sm:$0xf] %v7410
    %7412 = vst [vmem:[%s86 + $0x24] sm:$0xf] %v6860
    %v7413 = vld [vmem:[%s86 + $0x30] sm:$0xf]
    %v7414 = vsel %vm1121, %v6867, %v7413
    %7415 = vst [vmem:[%s86 + $0x30] sm:$0xf] %v7414
    %7416 = vst [vmem:[%s86 + $0x3c] sm:$0xf] %v6876
    %v7417 = vld [vmem:[%s86 + $0x48] sm:$0xf]
    %v7418 = vsel %vm1121, %v6883, %v7417
    %7419 = vst [vmem:[%s86 + $0x48] sm:$0xf] %v7418
    %7420 = vst [vmem:[%s86 + $0x54] sm:$0xf] %v6892
    %v7421 = vld [vmem:[%s86 + $0x60] sm:$0xf]
    %v7422 = vsel %vm1121, %v6899, %v7421
    %7423 = vst [vmem:[%s86 + $0x60] sm:$0xf] %v7422
    %7424 = vst [vmem:[%s86 + $0x6c] sm:$0xf] %v6908
    %v7425 = vld [vmem:[%s86 + $0x78] sm:$0xf]
    %v7426 = vsel %vm1121, %v6915, %v7425
    %7427 = vst [vmem:[%s86 + $0x78] sm:$0xf] %v7426
    %7428 = vst [vmem:[%s86 + $0x84] sm:$0xf] %v6924
    %v7429 = vld [vmem:[%s86 + $0x90] sm:$0xf]
    %v7430 = vsel %vm1121, %v6931, %v7429
    %7431 = vst [vmem:[%s86 + $0x90] sm:$0xf] %v7430
    %7432 = vst [vmem:[%s86 + $0x9c] sm:$0xf] %v6940
    %v7433 = vld [vmem:[%s86 + $0xa8] sm:$0xf]
    %v7434 = vsel %vm1121, %v6947, %v7433
    %7435 = vst [vmem:[%s86 + $0xa8] sm:$0xf] %v7434
    %7436 = vst [vmem:[%s86 + $0xb4] sm:$0xf] %v6956
    %v7437 = vld [vmem:[%s86 + $0xc0] sm:$0xf]
    %v7438 = vsel %vm1121, %v6963, %v7437
    %7439 = vst [vmem:[%s86 + $0xc0] sm:$0xf] %v7438
    %7440 = vst [vmem:[%s86 + $0xcc] sm:$0xf] %v6972
    %v7441 = vld [vmem:[%s86 + $0xd8] sm:$0xf]
    %v7442 = vsel %vm1121, %v6979, %v7441
    %7443 = vst [vmem:[%s86 + $0xd8] sm:$0xf] %v7442
    %7444 = vst [vmem:[%s86 + $0xe4] sm:$0xf] %v6988
    %v7445 = vld [vmem:[%s86 + $0xf0] sm:$0xf]
    %v7446 = vsel %vm1121, %v6995, %v7445
    %7447 = vst [vmem:[%s86 + $0xf0] sm:$0xf] %v7446
    %7448 = vst [vmem:[%s86 + $0xfc] sm:$0xf] %v7004
    %v7449 = vld [vmem:[%s86 + $0x108] sm:$0xf]
    %v7450 = vsel %vm1121, %v7011, %v7449
    %7451 = vst [vmem:[%s86 + $0x108] sm:$0xf] %v7450
    %7452 = vst [vmem:[%s86 + $0x114] sm:$0xf] %v7020
    %v7453 = vld [vmem:[%s86 + $0x120] sm:$0xf]
    %v7454 = vsel %vm1121, %v7027, %v7453
    %7455 = vst [vmem:[%s86 + $0x120] sm:$0xf] %v7454
    %7456 = vst [vmem:[%s86 + $0x12c] sm:$0xf] %v7036
    %v7457 = vld [vmem:[%s86 + $0x138] sm:$0xf]
    %v7458 = vsel %vm1121, %v7043, %v7457
    %7459 = vst [vmem:[%s86 + $0x138] sm:$0xf] %v7458
    %7460 = vst [vmem:[%s86 + $0x144] sm:$0xf] %v7052
    %v7461 = vld [vmem:[%s86 + $0x150] sm:$0xf]
    %v7462 = vsel %vm1121, %v7059, %v7461
    %7463 = vst [vmem:[%s86 + $0x150] sm:$0xf] %v7462
    %7464 = vst [vmem:[%s86 + $0x15c] sm:$0xf] %v7068
    %v7465 = vld [vmem:[%s86 + $0x168] sm:$0xf]
    %v7466 = vsel %vm1121, %v7075, %v7465
    %7467 = vst [vmem:[%s86 + $0x168] sm:$0xf] %v7466
    %7468 = vst [vmem:[%s86 + $0x174] sm:$0xf] %v7084
    %v7469 = vld [vmem:[%s86 + $0x1b0] sm:$0xf]
    %v7470 = vsel %vm1121, %v7091, %v7469
    %7471 = vst [vmem:[%s86 + $0x1b0] sm:$0xf] %v7470
    %7472 = vst [vmem:[%s86 + $0x1bc] sm:$0xf] %v7100
    %v7473 = vld [vmem:[%s86 + $0x1c8] sm:$0xf]
    %v7474 = vsel %vm1121, %v7107, %v7473
    %7475 = vst [vmem:[%s86 + $0x1c8] sm:$0xf] %v7474
    %7476 = vst [vmem:[%s86 + $0x1d4] sm:$0xf] %v7116
    %v7477 = vld [vmem:[%s86 + $0x1e0] sm:$0xf]
    %v7478 = vsel %vm1121, %v7123, %v7477
    %7479 = vst [vmem:[%s86 + $0x1e0] sm:$0xf] %v7478
    %7480 = vst [vmem:[%s86 + $0x1ec] sm:$0xf] %v7132
    %v7481 = vld [vmem:[%s86 + $0x1f8] sm:$0xf]
    %v7482 = vsel %vm1121, %v7139, %v7481
    %7483 = vst [vmem:[%s86 + $0x1f8] sm:$0xf] %v7482
    %7484 = vst [vmem:[%s86 + $0x204] sm:$0xf] %v7148
    %v7485 = vld [vmem:[%s86 + $0x210] sm:$0xf]
    %v7486 = vsel %vm1121, %v7155, %v7485
    %7487 = vst [vmem:[%s86 + $0x210] sm:$0xf] %v7486
    %7488 = vst [vmem:[%s86 + $0x21c] sm:$0xf] %v7164
    %v7489 = vld [vmem:[%s86 + $0x228] sm:$0xf]
    %v7490 = vsel %vm1121, %v7171, %v7489
    %7491 = vst [vmem:[%s86 + $0x228] sm:$0xf] %v7490
    %7492 = vst [vmem:[%s86 + $0x234] sm:$0xf] %v7180
    %v7493 = vld [vmem:[%s86 + $0x240] sm:$0xf]
    %v7494 = vsel %vm1121, %v7187, %v7493
    %7495 = vst [vmem:[%s86 + $0x240] sm:$0xf] %v7494
    %7496 = vst [vmem:[%s86 + $0x24c] sm:$0xf] %v7196
    %v7497 = vld [vmem:[%s86 + $0x258] sm:$0xf]
    %v7498 = vsel %vm1121, %v7203, %v7497
    %7499 = vst [vmem:[%s86 + $0x258] sm:$0xf] %v7498
    %7500 = vst [vmem:[%s86 + $0x264] sm:$0xf] %v7212
    %v7501 = vld [vmem:[%s86 + $0x270] sm:$0xf]
    %v7502 = vsel %vm1121, %v7219, %v7501
    %7503 = vst [vmem:[%s86 + $0x270] sm:$0xf] %v7502
    %7504 = vst [vmem:[%s86 + $0x27c] sm:$0xf] %v7228
    %v7505 = vld [vmem:[%s86 + $0x288] sm:$0xf]
    %v7506 = vsel %vm1121, %v7235, %v7505
    %7507 = vst [vmem:[%s86 + $0x288] sm:$0xf] %v7506
    %7508 = vst [vmem:[%s86 + $0x294] sm:$0xf] %v7244
    %v7509 = vld [vmem:[%s86 + $0x2a0] sm:$0xf]
    %v7510 = vsel %vm1121, %v7251, %v7509
    %7511 = vst [vmem:[%s86 + $0x2a0] sm:$0xf] %v7510
    %7512 = vst [vmem:[%s86 + $0x2ac] sm:$0xf] %v7260
    %v7513 = vld [vmem:[%s86 + $0x2b8] sm:$0xf]
    %v7514 = vsel %vm1121, %v7267, %v7513
    %7515 = vst [vmem:[%s86 + $0x2b8] sm:$0xf] %v7514
    %7516 = vst [vmem:[%s86 + $0x2c4] sm:$0xf] %v7276
    %v7517 = vld [vmem:[%s86 + $0x2d0] sm:$0xf]
    %v7518 = vsel %vm1121, %v7283, %v7517
    %7519 = vst [vmem:[%s86 + $0x2d0] sm:$0xf] %v7518
    %7520 = vst [vmem:[%s86 + $0x2dc] sm:$0xf] %v7292
    %v7521 = vld [vmem:[%s86 + $0x2e8] sm:$0xf]
    %v7522 = vsel %vm1121, %v7299, %v7521
    %7523 = vst [vmem:[%s86 + $0x2e8] sm:$0xf] %v7522
    %7524 = vst [vmem:[%s86 + $0x2f4] sm:$0xf] %v7308
    %v7525 = vld [vmem:[%s86 + $0x300] sm:$0xf]
    %v7526 = vsel %vm1121, %v7315, %v7525
    %7527 = vst [vmem:[%s86 + $0x300] sm:$0xf] %v7526
    %7528 = vst [vmem:[%s86 + $0x30c] sm:$0xf] %v7324
    %v7529 = vld [vmem:[%s86 + $0x318] sm:$0xf]
    %v7530 = vsel %vm1121, %v7331, %v7529
    %7531 = vst [vmem:[%s86 + $0x318] sm:$0xf] %v7530
    %7532 = vst [vmem:[%s86 + $0x324] sm:$0xf] %v7340
    %7597 = vst [vmem:[%s86 + $0x4] sm:$0xf] %v6765
    %7598 = vst [vmem:[%s86 + $0x10] sm:$0xf] %v6766
    %7599 = vst [vmem:[%s86 + $0x1c] sm:$0xf] %v6767
    %7600 = vst [vmem:[%s86 + $0x28] sm:$0xf] %v6768
    %7601 = vst [vmem:[%s86 + $0x34] sm:$0xf] %v6769
    %7602 = vst [vmem:[%s86 + $0x40] sm:$0xf] %v6770
    %7603 = vst [vmem:[%s86 + $0x4c] sm:$0xf] %v6771
    %7604 = vst [vmem:[%s86 + $0x58] sm:$0xf] %v6772
    %7605 = vst [vmem:[%s86 + $0x64] sm:$0xf] %v6773
    %7606 = vst [vmem:[%s86 + $0x70] sm:$0xf] %v6774
    %7607 = vst [vmem:[%s86 + $0x7c] sm:$0xf] %v6775
    %7608 = vst [vmem:[%s86 + $0x88] sm:$0xf] %v6776
    %7609 = vst [vmem:[%s86 + $0x94] sm:$0xf] %v6777
    %7610 = vst [vmem:[%s86 + $0xa0] sm:$0xf] %v6778
    %7611 = vst [vmem:[%s86 + $0xac] sm:$0xf] %v6779
    %7612 = vst [vmem:[%s86 + $0xb8] sm:$0xf] %v6780
    %7613 = vst [vmem:[%s86 + $0xc4] sm:$0xf] %v6781
    %7614 = vst [vmem:[%s86 + $0xd0] sm:$0xf] %v6782
    %7615 = vst [vmem:[%s86 + $0xdc] sm:$0xf] %v6783
    %7616 = vst [vmem:[%s86 + $0xe8] sm:$0xf] %v6784
    %7617 = vst [vmem:[%s86 + $0xf4] sm:$0xf] %v6785
    %7618 = vst [vmem:[%s86 + $0x100] sm:$0xf] %v6786
    %7619 = vst [vmem:[%s86 + $0x10c] sm:$0xf] %v6787
    %7620 = vst [vmem:[%s86 + $0x118] sm:$0xf] %v6788
    %7621 = vst [vmem:[%s86 + $0x124] sm:$0xf] %v6789
    %7622 = vst [vmem:[%s86 + $0x130] sm:$0xf] %v6790
    %7623 = vst [vmem:[%s86 + $0x13c] sm:$0xf] %v6791
    %7624 = vst [vmem:[%s86 + $0x148] sm:$0xf] %v6792
    %7625 = vst [vmem:[%s86 + $0x154] sm:$0xf] %v6793
    %7626 = vst [vmem:[%s86 + $0x160] sm:$0xf] %v6794
    %7627 = vst [vmem:[%s86 + $0x16c] sm:$0xf] %v6795
    %7628 = vst [vmem:[%s86 + $0x178] sm:$0xf] %v6796
    %7629 = vst [vmem:[%s86 + $0x1b4] sm:$0xf] %v6797
    %7630 = vst [vmem:[%s86 + $0x1c0] sm:$0xf] %v6798
    %7631 = vst [vmem:[%s86 + $0x1cc] sm:$0xf] %v6799
    %7632 = vst [vmem:[%s86 + $0x1d8] sm:$0xf] %v6800
    %7633 = vst [vmem:[%s86 + $0x1e4] sm:$0xf] %v6801
    %7634 = vst [vmem:[%s86 + $0x1f0] sm:$0xf] %v6802
    %7635 = vst [vmem:[%s86 + $0x1fc] sm:$0xf] %v6803
    %7636 = vst [vmem:[%s86 + $0x208] sm:$0xf] %v6804
    %7637 = vst [vmem:[%s86 + $0x214] sm:$0xf] %v6805
    %7638 = vst [vmem:[%s86 + $0x220] sm:$0xf] %v6806
    %7639 = vst [vmem:[%s86 + $0x22c] sm:$0xf] %v6807
    %7640 = vst [vmem:[%s86 + $0x238] sm:$0xf] %v6808
    %7641 = vst [vmem:[%s86 + $0x244] sm:$0xf] %v6809
    %7642 = vst [vmem:[%s86 + $0x250] sm:$0xf] %v6810
    %7643 = vst [vmem:[%s86 + $0x25c] sm:$0xf] %v6811
    %7644 = vst [vmem:[%s86 + $0x268] sm:$0xf] %v6812
    %7645 = vst [vmem:[%s86 + $0x274] sm:$0xf] %v6813
    %7646 = vst [vmem:[%s86 + $0x280] sm:$0xf] %v6814
    %7647 = vst [vmem:[%s86 + $0x28c] sm:$0xf] %v6815
    %7648 = vst [vmem:[%s86 + $0x298] sm:$0xf] %v6816
    %7649 = vst [vmem:[%s86 + $0x2a4] sm:$0xf] %v6817
    %7650 = vst [vmem:[%s86 + $0x2b0] sm:$0xf] %v6818
    %7651 = vst [vmem:[%s86 + $0x2bc] sm:$0xf] %v6819
    %7652 = vst [vmem:[%s86 + $0x2c8] sm:$0xf] %v6820
    %7653 = vst [vmem:[%s86 + $0x2d4] sm:$0xf] %v6821
    %7654 = vst [vmem:[%s86 + $0x2e0] sm:$0xf] %v6822
    %7655 = vst [vmem:[%s86 + $0x2ec] sm:$0xf] %v6823
    %7656 = vst [vmem:[%s86 + $0x2f8] sm:$0xf] %v6824
    %7657 = vst [vmem:[%s86 + $0x304] sm:$0xf] %v6825
    %7658 = vst [vmem:[%s86 + $0x310] sm:$0xf] %v6826
    %7659 = vst [vmem:[%s86 + $0x31c] sm:$0xf] %v6827
    %7660 = vst [vmem:[%s86 + $0x328] sm:$0xf] %v6828
    %v7661 = vrot.slane %v6830, 4
    %v7662 = vrot.slane %v6833, 5
    %v7663 = vor.u32 %v7661, %v7662
    %v7664 = vrot.slane %v7663, 4
    %v7665 = vrot.slane %v6841, 5
    %v7666 = vsel %vm1380, %v7664, %v7665
    %v7667 = vrot.slane %v6838, 4
    %v7668 = vor.u32 %v7667, %v7665
    %v7669 = vrot.slane %v7668, 4
    %v7670 = vrot.slane %v6846, 4
    %v7671 = vrot.slane %v6849, 5
    %v7672 = vor.u32 %v7670, %v7671
    %v7673 = vrot.slane %v7672, 4
    %v7674 = vrot.slane %v6857, 5
    %v7675 = vsel %vm1380, %v7673, %v7674
    %v7676 = vrot.slane %v6854, 4
    %v7677 = vor.u32 %v7676, %v7674
    %v7678 = vrot.slane %v7677, 4
    %v7679 = vrot.slane %v6862, 4
    %v7680 = vrot.slane %v6865, 5
    %v7681 = vor.u32 %v7679, %v7680
    %v7682 = vrot.slane %v7681, 4
    %v7683 = vrot.slane %v6873, 5
    %v7684 = vsel %vm1380, %v7682, %v7683
    %v7685 = vrot.slane %v6870, 4
    %v7686 = vor.u32 %v7685, %v7683
    %v7687 = vrot.slane %v7686, 4
    %v7688 = vrot.slane %v6878, 4
    %v7689 = vrot.slane %v6881, 5
    %v7690 = vor.u32 %v7688, %v7689
    %v7691 = vrot.slane %v7690, 4
    %v7692 = vrot.slane %v6889, 5
    %v7693 = vsel %vm1380, %v7691, %v7692
    %v7694 = vrot.slane %v6886, 4
    %v7695 = vor.u32 %v7694, %v7692
    %v7696 = vrot.slane %v7695, 4
    %v7697 = vrot.slane %v6894, 4
    %v7698 = vrot.slane %v6897, 5
    %v7699 = vor.u32 %v7697, %v7698
    %v7700 = vrot.slane %v7699, 4
    %v7701 = vrot.slane %v6905, 5
    %v7702 = vsel %vm1380, %v7700, %v7701
    %v7703 = vrot.slane %v6902, 4
    %v7704 = vor.u32 %v7703, %v7701
    %v7705 = vrot.slane %v7704, 4
    %v7706 = vrot.slane %v6910, 4
    %v7707 = vrot.slane %v6913, 5
    %v7708 = vor.u32 %v7706, %v7707
    %v7709 = vrot.slane %v7708, 4
    %v7710 = vrot.slane %v6921, 5
    %v7711 = vsel %vm1380, %v7709, %v7710
    %v7712 = vrot.slane %v6918, 4
    %v7713 = vor.u32 %v7712, %v7710
    %v7714 = vrot.slane %v7713, 4
    %v7715 = vrot.slane %v6926, 4
    %v7716 = vrot.slane %v6929, 5
    %v7717 = vor.u32 %v7715, %v7716
    %v7718 = vrot.slane %v7717, 4
    %v7719 = vrot.slane %v6937, 5
    %v7720 = vsel %vm1380, %v7718, %v7719
    %v7721 = vrot.slane %v6934, 4
    %v7722 = vor.u32 %v7721, %v7719
    %v7723 = vrot.slane %v7722, 4
    %v7724 = vrot.slane %v6942, 4
    %v7725 = vrot.slane %v6945, 5
    %v7726 = vor.u32 %v7724, %v7725
    %v7727 = vrot.slane %v7726, 4
    %v7728 = vrot.slane %v6953, 5
    %v7729 = vsel %vm1380, %v7727, %v7728
    %v7730 = vrot.slane %v6950, 4
    %v7731 = vor.u32 %v7730, %v7728
    %v7732 = vrot.slane %v7731, 4
    %v7733 = vrot.slane %v6958, 4
    %v7734 = vrot.slane %v6961, 5
    %v7735 = vor.u32 %v7733, %v7734
    %v7736 = vrot.slane %v7735, 4
    %v7737 = vrot.slane %v6969, 5
    %v7738 = vsel %vm1380, %v7736, %v7737
    %v7739 = vrot.slane %v6966, 4
    %v7740 = vor.u32 %v7739, %v7737
    %v7741 = vrot.slane %v7740, 4
    %v7742 = vrot.slane %v6974, 4
    %v7743 = vrot.slane %v6977, 5
    %v7744 = vor.u32 %v7742, %v7743
    %v7745 = vrot.slane %v7744, 4
    %v7746 = vrot.slane %v6985, 5
    %v7747 = vsel %vm1380, %v7745, %v7746
    %v7748 = vrot.slane %v6982, 4
    %v7749 = vor.u32 %v7748, %v7746
    %v7750 = vrot.slane %v7749, 4
    %v7751 = vrot.slane %v6990, 4
    %v7752 = vrot.slane %v6993, 5
    %v7753 = vor.u32 %v7751, %v7752
    %v7754 = vrot.slane %v7753, 4
    %v7755 = vrot.slane %v7001, 5
    %v7756 = vsel %vm1380, %v7754, %v7755
    %v7757 = vrot.slane %v6998, 4
    %v7758 = vor.u32 %v7757, %v7755
    %v7759 = vrot.slane %v7758, 4
    %v7760 = vrot.slane %v7006, 4
    %v7761 = vrot.slane %v7009, 5
    %v7762 = vor.u32 %v7760, %v7761
    %v7763 = vrot.slane %v7762, 4
    %v7764 = vrot.slane %v7017, 5
    %v7765 = vsel %vm1380, %v7763, %v7764
    %v7766 = vrot.slane %v7014, 4
    %v7767 = vor.u32 %v7766, %v7764
    %v7768 = vrot.slane %v7767, 4
    %v7769 = vrot.slane %v7022, 4
    %v7770 = vrot.slane %v7025, 5
    %v7771 = vor.u32 %v7769, %v7770
    %v7772 = vrot.slane %v7771, 4
    %v7773 = vrot.slane %v7033, 5
    %v7774 = vsel %vm1380, %v7772, %v7773
    %v7775 = vrot.slane %v7030, 4
    %v7776 = vor.u32 %v7775, %v7773
    %v7777 = vrot.slane %v7776, 4
    %v7778 = vrot.slane %v7038, 4
    %v7779 = vrot.slane %v7041, 5
    %v7780 = vor.u32 %v7778, %v7779
    %v7781 = vrot.slane %v7780, 4
    %v7782 = vrot.slane %v7049, 5
    %v7783 = vsel %vm1380, %v7781, %v7782
    %v7784 = vrot.slane %v7046, 4
    %v7785 = vor.u32 %v7784, %v7782
    %v7786 = vrot.slane %v7785, 4
    %v7787 = vrot.slane %v7054, 4
    %v7788 = vrot.slane %v7057, 5
    %v7789 = vor.u32 %v7787, %v7788
    %v7790 = vrot.slane %v7789, 4
    %v7791 = vrot.slane %v7065, 5
    %v7792 = vsel %vm1380, %v7790, %v7791
    %v7793 = vrot.slane %v7062, 4
    %v7794 = vor.u32 %v7793, %v7791
    %v7795 = vrot.slane %v7794, 4
    %v7796 = vrot.slane %v7070, 4
    %v7797 = vrot.slane %v7073, 5
    %v7798 = vor.u32 %v7796, %v7797
    %v7799 = vrot.slane %v7798, 4
    %v7800 = vrot.slane %v7081, 5
    %v7801 = vsel %vm1380, %v7799, %v7800
    %v7802 = vrot.slane %v7078, 4
    %v7803 = vor.u32 %v7802, %v7800
    %v7804 = vrot.slane %v7803, 4
    %v7805 = vrot.slane %v7086, 4
    %v7806 = vrot.slane %v7089, 5
    %v7807 = vor.u32 %v7805, %v7806
    %v7808 = vrot.slane %v7807, 4
    %v7809 = vrot.slane %v7097, 5
    %v7810 = vsel %vm1380, %v7808, %v7809
    %v7811 = vrot.slane %v7094, 4
    %v7812 = vor.u32 %v7811, %v7809
    %v7813 = vrot.slane %v7812, 4
    %v7814 = vrot.slane %v7102, 4
    %v7815 = vrot.slane %v7105, 5
    %v7816 = vor.u32 %v7814, %v7815
    %v7817 = vrot.slane %v7816, 4
    %v7818 = vrot.slane %v7113, 5
    %v7819 = vsel %vm1380, %v7817, %v7818
    %v7820 = vrot.slane %v7110, 4
    %v7821 = vor.u32 %v7820, %v7818
    %v7822 = vrot.slane %v7821, 4
    %v7823 = vrot.slane %v7118, 4
    %v7824 = vrot.slane %v7121, 5
    %v7825 = vor.u32 %v7823, %v7824
    %v7826 = vrot.slane %v7825, 4
    %v7827 = vrot.slane %v7129, 5
    %v7828 = vsel %vm1380, %v7826, %v7827
    %v7829 = vrot.slane %v7126, 4
    %v7830 = vor.u32 %v7829, %v7827
    %v7831 = vrot.slane %v7830, 4
    %v7832 = vrot.slane %v7134, 4
    %v7833 = vrot.slane %v7137, 5
    %v7834 = vor.u32 %v7832, %v7833
    %v7835 = vrot.slane %v7834, 4
    %v7836 = vrot.slane %v7145, 5
    %v7837 = vsel %vm1380, %v7835, %v7836
    %v7838 = vrot.slane %v7142, 4
    %v7839 = vor.u32 %v7838, %v7836
    %v7840 = vrot.slane %v7839, 4
    %v7841 = vrot.slane %v7150, 4
    %v7842 = vrot.slane %v7153, 5
    %v7843 = vor.u32 %v7841, %v7842
    %v7844 = vrot.slane %v7843, 4
    %v7845 = vrot.slane %v7161, 5
    %v7846 = vsel %vm1380, %v7844, %v7845
    %v7847 = vrot.slane %v7158, 4
    %v7848 = vor.u32 %v7847, %v7845
    %v7849 = vrot.slane %v7848, 4
    %v7850 = vrot.slane %v7166, 4
    %v7851 = vrot.slane %v7169, 5
    %v7852 = vor.u32 %v7850, %v7851
    %v7853 = vrot.slane %v7852, 4
    %v7854 = vrot.slane %v7177, 5
    %v7855 = vsel %vm1380, %v7853, %v7854
    %v7856 = vrot.slane %v7174, 4
    %v7857 = vor.u32 %v7856, %v7854
    %v7858 = vrot.slane %v7857, 4
    %v7859 = vrot.slane %v7182, 4
    %v7860 = vrot.slane %v7185, 5
    %v7861 = vor.u32 %v7859, %v7860
    %v7862 = vrot.slane %v7861, 4
    %v7863 = vrot.slane %v7193, 5
    %v7864 = vsel %vm1380, %v7862, %v7863
    %v7865 = vrot.slane %v7190, 4
    %v7866 = vor.u32 %v7865, %v7863
    %v7867 = vrot.slane %v7866, 4
    %v7868 = vrot.slane %v7198, 4
    %v7869 = vrot.slane %v7201, 5
    %v7870 = vor.u32 %v7868, %v7869
    %v7871 = vrot.slane %v7870, 4
    %v7872 = vrot.slane %v7209, 5
    %v7873 = vsel %vm1380, %v7871, %v7872
    %v7874 = vrot.slane %v7206, 4
    %v7875 = vor.u32 %v7874, %v7872
    %v7876 = vrot.slane %v7875, 4
    %v7877 = vrot.slane %v7214, 4
    %v7878 = vrot.slane %v7217, 5
    %v7879 = vor.u32 %v7877, %v7878
    %v7880 = vrot.slane %v7879, 4
    %v7881 = vrot.slane %v7225, 5
    %v7882 = vsel %vm1380, %v7880, %v7881
    %v7883 = vrot.slane %v7222, 4
    %v7884 = vor.u32 %v7883, %v7881
    %v7885 = vrot.slane %v7884, 4
    %v7886 = vrot.slane %v7230, 4
    %v7887 = vrot.slane %v7233, 5
    %v7888 = vor.u32 %v7886, %v7887
    %v7889 = vrot.slane %v7888, 4
    %v7890 = vrot.slane %v7241, 5
    %v7891 = vsel %vm1380, %v7889, %v7890
    %v7892 = vrot.slane %v7238, 4
    %v7893 = vor.u32 %v7892, %v7890
    %v7894 = vrot.slane %v7893, 4
    %v7895 = vrot.slane %v7246, 4
    %v7896 = vrot.slane %v7249, 5
    %v7897 = vor.u32 %v7895, %v7896
    %v7898 = vrot.slane %v7897, 4
    %v7899 = vrot.slane %v7257, 5
    %v7900 = vsel %vm1380, %v7898, %v7899
    %v7901 = vrot.slane %v7254, 4
    %v7902 = vor.u32 %v7901, %v7899
    %v7903 = vrot.slane %v7902, 4
    %v7904 = vrot.slane %v7262, 4
    %v7905 = vrot.slane %v7265, 5
    %v7906 = vor.u32 %v7904, %v7905
    %v7907 = vrot.slane %v7906, 4
    %v7908 = vrot.slane %v7273, 5
    %v7909 = vsel %vm1380, %v7907, %v7908
    %v7910 = vrot.slane %v7270, 4
    %v7911 = vor.u32 %v7910, %v7908
    %v7912 = vrot.slane %v7911, 4
    %v7913 = vrot.slane %v7278, 4
    %v7914 = vrot.slane %v7281, 5
    %v7915 = vor.u32 %v7913, %v7914
    %v7916 = vrot.slane %v7915, 4
    %v7917 = vrot.slane %v7289, 5
    %v7918 = vsel %vm1380, %v7916, %v7917
    %v7919 = vrot.slane %v7286, 4
    %v7920 = vor.u32 %v7919, %v7917
    %v7921 = vrot.slane %v7920, 4
    %v7922 = vrot.slane %v7294, 4
    %v7923 = vrot.slane %v7297, 5
    %v7924 = vor.u32 %v7922, %v7923
    %v7925 = vrot.slane %v7924, 4
    %v7926 = vrot.slane %v7305, 5
    %v7927 = vsel %vm1380, %v7925, %v7926
    %v7928 = vrot.slane %v7302, 4
    %v7929 = vor.u32 %v7928, %v7926
    %v7930 = vrot.slane %v7929, 4
    %v7931 = vrot.slane %v7310, 4
    %v7932 = vrot.slane %v7313, 5
    %v7933 = vor.u32 %v7931, %v7932
    %v7934 = vrot.slane %v7933, 4
    %v7935 = vrot.slane %v7321, 5
    %v7936 = vsel %vm1380, %v7934, %v7935
    %v7937 = vrot.slane %v7318, 4
    %v7938 = vor.u32 %v7937, %v7935
    %v7939 = vrot.slane %v7938, 4
    %v7940 = vrot.slane %v7326, 4
    %v7941 = vrot.slane %v7329, 5
    %v7942 = vor.u32 %v7940, %v7941
    %v7943 = vrot.slane %v7942, 4
    %v7944 = vrot.slane %v7337, 5
    %v7945 = vsel %vm1380, %v7943, %v7944
    %v7946 = vrot.slane %v7334, 4
    %v7947 = vor.u32 %v7946, %v7944
    %v7948 = vrot.slane %v7947, 4
    %8013 = vst [vmem:[%s86 + $0x8] sm:$0xf] %v7666
    %v8014 = vld [vmem:[%s86 + $0x14] sm:$0xf]
    %v8015 = vsel %vm1734, %v7669, %v8014
    %8016 = vst [vmem:[%s86 + $0x14] sm:$0xf] %v8015
    %8017 = vst [vmem:[%s86 + $0x20] sm:$0xf] %v7675
    %v8018 = vld [vmem:[%s86 + $0x2c] sm:$0xf]
    %v8019 = vsel %vm1734, %v7678, %v8018
    %8020 = vst [vmem:[%s86 + $0x2c] sm:$0xf] %v8019
    %8021 = vst [vmem:[%s86 + $0x38] sm:$0xf] %v7684
    %v8022 = vld [vmem:[%s86 + $0x44] sm:$0xf]
    %v8023 = vsel %vm1734, %v7687, %v8022
    %8024 = vst [vmem:[%s86 + $0x44] sm:$0xf] %v8023
    %8025 = vst [vmem:[%s86 + $0x50] sm:$0xf] %v7693
    %v8026 = vld [vmem:[%s86 + $0x5c] sm:$0xf]
    %v8027 = vsel %vm1734, %v7696, %v8026
    %8028 = vst [vmem:[%s86 + $0x5c] sm:$0xf] %v8027
    %8029 = vst [vmem:[%s86 + $0x68] sm:$0xf] %v7702
    %v8030 = vld [vmem:[%s86 + $0x74] sm:$0xf]
    %v8031 = vsel %vm1734, %v7705, %v8030
    %8032 = vst [vmem:[%s86 + $0x74] sm:$0xf] %v8031
    %8033 = vst [vmem:[%s86 + $0x80] sm:$0xf] %v7711
    %v8034 = vld [vmem:[%s86 + $0x8c] sm:$0xf]
    %v8035 = vsel %vm1734, %v7714, %v8034
    %8036 = vst [vmem:[%s86 + $0x8c] sm:$0xf] %v8035
    %8037 = vst [vmem:[%s86 + $0x98] sm:$0xf] %v7720
    %v8038 = vld [vmem:[%s86 + $0xa4] sm:$0xf]
    %v8039 = vsel %vm1734, %v7723, %v8038
    %8040 = vst [vmem:[%s86 + $0xa4] sm:$0xf] %v8039
    %8041 = vst [vmem:[%s86 + $0xb0] sm:$0xf] %v7729
    %v8042 = vld [vmem:[%s86 + $0xbc] sm:$0xf]
    %v8043 = vsel %vm1734, %v7732, %v8042
    %8044 = vst [vmem:[%s86 + $0xbc] sm:$0xf] %v8043
    %8045 = vst [vmem:[%s86 + $0xc8] sm:$0xf] %v7738
    %v8046 = vld [vmem:[%s86 + $0xd4] sm:$0xf]
    %v8047 = vsel %vm1734, %v7741, %v8046
    %8048 = vst [vmem:[%s86 + $0xd4] sm:$0xf] %v8047
    %8049 = vst [vmem:[%s86 + $0xe0] sm:$0xf] %v7747
    %v8050 = vld [vmem:[%s86 + $0xec] sm:$0xf]
    %v8051 = vsel %vm1734, %v7750, %v8050
    %8052 = vst [vmem:[%s86 + $0xec] sm:$0xf] %v8051
    %8053 = vst [vmem:[%s86 + $0xf8] sm:$0xf] %v7756
    %v8054 = vld [vmem:[%s86 + $0x104] sm:$0xf]
    %v8055 = vsel %vm1734, %v7759, %v8054
    %8056 = vst [vmem:[%s86 + $0x104] sm:$0xf] %v8055
    %8057 = vst [vmem:[%s86 + $0x110] sm:$0xf] %v7765
    %v8058 = vld [vmem:[%s86 + $0x11c] sm:$0xf]
    %v8059 = vsel %vm1734, %v7768, %v8058
    %8060 = vst [vmem:[%s86 + $0x11c] sm:$0xf] %v8059
    %8061 = vst [vmem:[%s86 + $0x128] sm:$0xf] %v7774
    %v8062 = vld [vmem:[%s86 + $0x134] sm:$0xf]
    %v8063 = vsel %vm1734, %v7777, %v8062
    %8064 = vst [vmem:[%s86 + $0x134] sm:$0xf] %v8063
    %8065 = vst [vmem:[%s86 + $0x140] sm:$0xf] %v7783
    %v8066 = vld [vmem:[%s86 + $0x14c] sm:$0xf]
    %v8067 = vsel %vm1734, %v7786, %v8066
    %8068 = vst [vmem:[%s86 + $0x14c] sm:$0xf] %v8067
    %8069 = vst [vmem:[%s86 + $0x158] sm:$0xf] %v7792
    %v8070 = vld [vmem:[%s86 + $0x164] sm:$0xf]
    %v8071 = vsel %vm1734, %v7795, %v8070
    %8072 = vst [vmem:[%s86 + $0x164] sm:$0xf] %v8071
    %8073 = vst [vmem:[%s86 + $0x170] sm:$0xf] %v7801
    %v8074 = vld [vmem:[%s86 + $0x17c] sm:$0xf]
    %v8075 = vsel %vm1734, %v7804, %v8074
    %8076 = vst [vmem:[%s86 + $0x17c] sm:$0xf] %v8075
    %8077 = vst [vmem:[%s86 + $0x1b8] sm:$0xf] %v7810
    %v8078 = vld [vmem:[%s86 + $0x1c4] sm:$0xf]
    %v8079 = vsel %vm1734, %v7813, %v8078
    %8080 = vst [vmem:[%s86 + $0x1c4] sm:$0xf] %v8079
    %8081 = vst [vmem:[%s86 + $0x1d0] sm:$0xf] %v7819
    %v8082 = vld [vmem:[%s86 + $0x1dc] sm:$0xf]
    %v8083 = vsel %vm1734, %v7822, %v8082
    %8084 = vst [vmem:[%s86 + $0x1dc] sm:$0xf] %v8083
    %8085 = vst [vmem:[%s86 + $0x1e8] sm:$0xf] %v7828
    %v8086 = vld [vmem:[%s86 + $0x1f4] sm:$0xf]
    %v8087 = vsel %vm1734, %v7831, %v8086
    %8088 = vst [vmem:[%s86 + $0x1f4] sm:$0xf] %v8087
    %8089 = vst [vmem:[%s86 + $0x200] sm:$0xf] %v7837
    %v8090 = vld [vmem:[%s86 + $0x20c] sm:$0xf]
    %v8091 = vsel %vm1734, %v7840, %v8090
    %8092 = vst [vmem:[%s86 + $0x20c] sm:$0xf] %v8091
    %8093 = vst [vmem:[%s86 + $0x218] sm:$0xf] %v7846
    %v8094 = vld [vmem:[%s86 + $0x224] sm:$0xf]
    %v8095 = vsel %vm1734, %v7849, %v8094
    %8096 = vst [vmem:[%s86 + $0x224] sm:$0xf] %v8095
    %8097 = vst [vmem:[%s86 + $0x230] sm:$0xf] %v7855
    %v8098 = vld [vmem:[%s86 + $0x23c] sm:$0xf]
    %v8099 = vsel %vm1734, %v7858, %v8098
    %8100 = vst [vmem:[%s86 + $0x23c] sm:$0xf] %v8099
    %8101 = vst [vmem:[%s86 + $0x248] sm:$0xf] %v7864
    %v8102 = vld [vmem:[%s86 + $0x254] sm:$0xf]
    %v8103 = vsel %vm1734, %v7867, %v8102
    %8104 = vst [vmem:[%s86 + $0x254] sm:$0xf] %v8103
    %8105 = vst [vmem:[%s86 + $0x260] sm:$0xf] %v7873
    %v8106 = vld [vmem:[%s86 + $0x26c] sm:$0xf]
    %v8107 = vsel %vm1734, %v7876, %v8106
    %8108 = vst [vmem:[%s86 + $0x26c] sm:$0xf] %v8107
    %8109 = vst [vmem:[%s86 + $0x278] sm:$0xf] %v7882
    %v8110 = vld [vmem:[%s86 + $0x284] sm:$0xf]
    %v8111 = vsel %vm1734, %v7885, %v8110
    %8112 = vst [vmem:[%s86 + $0x284] sm:$0xf] %v8111
    %8113 = vst [vmem:[%s86 + $0x290] sm:$0xf] %v7891
    %v8114 = vld [vmem:[%s86 + $0x29c] sm:$0xf]
    %v8115 = vsel %vm1734, %v7894, %v8114
    %8116 = vst [vmem:[%s86 + $0x29c] sm:$0xf] %v8115
    %8117 = vst [vmem:[%s86 + $0x2a8] sm:$0xf] %v7900
    %v8118 = vld [vmem:[%s86 + $0x2b4] sm:$0xf]
    %v8119 = vsel %vm1734, %v7903, %v8118
    %8120 = vst [vmem:[%s86 + $0x2b4] sm:$0xf] %v8119
    %8121 = vst [vmem:[%s86 + $0x2c0] sm:$0xf] %v7909
    %v8122 = vld [vmem:[%s86 + $0x2cc] sm:$0xf]
    %v8123 = vsel %vm1734, %v7912, %v8122
    %8124 = vst [vmem:[%s86 + $0x2cc] sm:$0xf] %v8123
    %8125 = vst [vmem:[%s86 + $0x2d8] sm:$0xf] %v7918
    %v8126 = vld [vmem:[%s86 + $0x2e4] sm:$0xf]
    %v8127 = vsel %vm1734, %v7921, %v8126
    %8128 = vst [vmem:[%s86 + $0x2e4] sm:$0xf] %v8127
    %8129 = vst [vmem:[%s86 + $0x2f0] sm:$0xf] %v7927
    %v8130 = vld [vmem:[%s86 + $0x2fc] sm:$0xf]
    %v8131 = vsel %vm1734, %v7930, %v8130
    %8132 = vst [vmem:[%s86 + $0x2fc] sm:$0xf] %v8131
    %8133 = vst [vmem:[%s86 + $0x308] sm:$0xf] %v7936
    %v8134 = vld [vmem:[%s86 + $0x314] sm:$0xf]
    %v8135 = vsel %vm1734, %v7939, %v8134
    %8136 = vst [vmem:[%s86 + $0x314] sm:$0xf] %v8135
    %8137 = vst [vmem:[%s86 + $0x320] sm:$0xf] %v7945
    %v8138 = vld [vmem:[%s86 + $0x32c] sm:$0xf]
    %v8139 = vsel %vm1734, %v7948, %v8138
    %8140 = vst [vmem:[%s86 + $0x32c] sm:$0xf] %v8139
    %v8141 = vld [vmem:[#allocation8] sm:$0xf]
    %v8142 = vld [vmem:[#allocation8 + $0x4] sm:$0xf]
    %v8143 = vld [vmem:[#allocation8 + $0x8] sm:$0xf]
    %v8144 = vld [vmem:[#allocation8 + $0xc] sm:$0xf]
    %v8145 = vld [vmem:[#allocation8 + $0x10] sm:$0xf]
    %v8146 = vld [vmem:[#allocation8 + $0x14] sm:$0xf]
    %v8147 = vld [vmem:[#allocation8 + $0x18] sm:$0xf]
    %v8148 = vld [vmem:[#allocation8 + $0x1c] sm:$0xf]
    %v8149 = vld [vmem:[#allocation8 + $0x20] sm:$0xf]
    %v8150 = vld [vmem:[#allocation8 + $0x24] sm:$0xf]
    %v8151 = vld [vmem:[#allocation8 + $0x28] sm:$0xf]
    %v8152 = vld [vmem:[#allocation8 + $0x2c] sm:$0xf]
    %v8153 = vld [vmem:[#allocation8 + $0x30] sm:$0xf]
    %v8154 = vld [vmem:[#allocation8 + $0x34] sm:$0xf]
    %v8155 = vld [vmem:[#allocation8 + $0x38] sm:$0xf]
    %v8156 = vld [vmem:[#allocation8 + $0x3c] sm:$0xf]
    %v8157 = vld [vmem:[#allocation8 + $0x40] sm:$0xf]
    %v8158 = vld [vmem:[#allocation8 + $0x44] sm:$0xf]
    %v8159 = vld [vmem:[#allocation8 + $0x48] sm:$0xf]
    %v8160 = vld [vmem:[#allocation8 + $0x4c] sm:$0xf]
    %v8161 = vld [vmem:[#allocation8 + $0x50] sm:$0xf]
    %v8162 = vld [vmem:[#allocation8 + $0x54] sm:$0xf]
    %v8163 = vld [vmem:[#allocation8 + $0x58] sm:$0xf]
    %v8164 = vld [vmem:[#allocation8 + $0x5c] sm:$0xf]
    %v8165 = vld [vmem:[#allocation8 + $0x60] sm:$0xf]
    %v8166 = vld [vmem:[#allocation8 + $0x64] sm:$0xf]
    %v8167 = vld [vmem:[#allocation8 + $0x68] sm:$0xf]
    %v8168 = vld [vmem:[#allocation8 + $0x6c] sm:$0xf]
    %v8169 = vld [vmem:[#allocation8 + $0x70] sm:$0xf]
    %v8170 = vld [vmem:[#allocation8 + $0x74] sm:$0xf]
    %v8171 = vld [vmem:[#allocation8 + $0x78] sm:$0xf]
    %v8172 = vld [vmem:[#allocation8 + $0x7c] sm:$0xf]
    %v8173 = vld [vmem:[#allocation8 + $0x80] sm:$0xf]
    %v8174 = vld [vmem:[#allocation8 + $0x84] sm:$0xf]
    %v8175 = vld [vmem:[#allocation8 + $0x88] sm:$0xf]
    %v8176 = vld [vmem:[#allocation8 + $0x8c] sm:$0xf]
    %v8177 = vld [vmem:[#allocation8 + $0x90] sm:$0xf]
    %v8178 = vld [vmem:[#allocation8 + $0x94] sm:$0xf]
    %v8179 = vld [vmem:[#allocation8 + $0x98] sm:$0xf]
    %v8180 = vld [vmem:[#allocation8 + $0x9c] sm:$0xf]
    %v8181 = vld [vmem:[#allocation8 + $0xa0] sm:$0xf]
    %v8182 = vld [vmem:[#allocation8 + $0xa4] sm:$0xf]
    %v8183 = vld [vmem:[#allocation8 + $0xa8] sm:$0xf]
    %v8184 = vld [vmem:[#allocation8 + $0xac] sm:$0xf]
    %v8185 = vld [vmem:[#allocation8 + $0xb0] sm:$0xf]
    %v8186 = vld [vmem:[#allocation8 + $0xb4] sm:$0xf]
    %v8187 = vld [vmem:[#allocation8 + $0xb8] sm:$0xf]
    %v8188 = vld [vmem:[#allocation8 + $0xbc] sm:$0xf]
    %v8189 = vld [vmem:[#allocation8 + $0xc0] sm:$0xf]
    %v8190 = vld [vmem:[#allocation8 + $0xc4] sm:$0xf]
    %v8191 = vld [vmem:[#allocation8 + $0xc8] sm:$0xf]
    %v8192 = vld [vmem:[#allocation8 + $0xcc] sm:$0xf]
    %v8193 = vld [vmem:[#allocation8 + $0xd0] sm:$0xf]
    %v8194 = vld [vmem:[#allocation8 + $0xd4] sm:$0xf]
    %v8195 = vld [vmem:[#allocation8 + $0xd8] sm:$0xf]
    %v8196 = vld [vmem:[#allocation8 + $0xdc] sm:$0xf]
    %v8197 = vld [vmem:[#allocation8 + $0xe0] sm:$0xf]
    %v8198 = vld [vmem:[#allocation8 + $0xe4] sm:$0xf]
    %v8199 = vld [vmem:[#allocation8 + $0xe8] sm:$0xf]
    %v8200 = vld [vmem:[#allocation8 + $0xec] sm:$0xf]
    %v8201 = vld [vmem:[#allocation8 + $0xf0] sm:$0xf]
    %v8202 = vld [vmem:[#allocation8 + $0xf4] sm:$0xf]
    %v8203 = vld [vmem:[#allocation8 + $0xf8] sm:$0xf]
    %v8204 = vld [vmem:[#allocation8 + $0xfc] sm:$0xf]
    %v8205 = vld [vmem:[#allocation8 + $0x100] sm:$0xf]
    %v8206 = vld [vmem:[#allocation8 + $0x104] sm:$0xf]
    %v8207 = vld [vmem:[#allocation8 + $0x108] sm:$0xf]
    %v8208 = vld [vmem:[#allocation8 + $0x10c] sm:$0xf]
    %v8209 = vld [vmem:[#allocation8 + $0x110] sm:$0xf]
    %v8210 = vld [vmem:[#allocation8 + $0x114] sm:$0xf]
    %v8211 = vld [vmem:[#allocation8 + $0x118] sm:$0xf]
    %v8212 = vld [vmem:[#allocation8 + $0x11c] sm:$0xf]
    %v8213 = vld [vmem:[#allocation8 + $0x120] sm:$0xf]
    %v8214 = vld [vmem:[#allocation8 + $0x124] sm:$0xf]
    %v8215 = vld [vmem:[#allocation8 + $0x128] sm:$0xf]
    %v8216 = vld [vmem:[#allocation8 + $0x12c] sm:$0xf]
    %v8217 = vld [vmem:[#allocation8 + $0x130] sm:$0xf]
    %v8218 = vld [vmem:[#allocation8 + $0x134] sm:$0xf]
    %v8219 = vld [vmem:[#allocation8 + $0x138] sm:$0xf]
    %v8220 = vld [vmem:[#allocation8 + $0x13c] sm:$0xf]
    %v8221 = vld [vmem:[#allocation8 + $0x140] sm:$0xf]
    %v8222 = vld [vmem:[#allocation8 + $0x144] sm:$0xf]
    %v8223 = vld [vmem:[#allocation8 + $0x148] sm:$0xf]
    %v8224 = vld [vmem:[#allocation8 + $0x14c] sm:$0xf]
    %v8225 = vld [vmem:[#allocation8 + $0x150] sm:$0xf]
    %v8226 = vld [vmem:[#allocation8 + $0x154] sm:$0xf]
    %v8227 = vld [vmem:[#allocation8 + $0x158] sm:$0xf]
    %v8228 = vld [vmem:[#allocation8 + $0x15c] sm:$0xf]
    %v8229 = vld [vmem:[#allocation8 + $0x160] sm:$0xf]
    %v8230 = vld [vmem:[#allocation8 + $0x164] sm:$0xf]
    %v8231 = vld [vmem:[#allocation8 + $0x168] sm:$0xf]
    %v8232 = vld [vmem:[#allocation8 + $0x16c] sm:$0xf]
    %v8233 = vld [vmem:[#allocation8 + $0x170] sm:$0xf]
    %v8234 = vld [vmem:[#allocation8 + $0x174] sm:$0xf]
    %v8235 = vld [vmem:[#allocation8 + $0x178] sm:$0xf]
    %v8236 = vld [vmem:[#allocation8 + $0x17c] sm:$0xf]
    %v8237 = vld [vmem:[#allocation8 + $0x180] sm:$0xf]
    %v8238 = vld [vmem:[#allocation8 + $0x184] sm:$0xf]
    %v8239 = vld [vmem:[#allocation8 + $0x188] sm:$0xf]
    %v8240 = vld [vmem:[#allocation8 + $0x18c] sm:$0xf]
    %v8241 = vld [vmem:[#allocation8 + $0x190] sm:$0xf]
    %v8242 = vld [vmem:[#allocation8 + $0x194] sm:$0xf]
    %v8243 = vld [vmem:[#allocation8 + $0x198] sm:$0xf]
    %v8244 = vld [vmem:[#allocation8 + $0x19c] sm:$0xf]
    %v8245 = vld [vmem:[#allocation8 + $0x1a0] sm:$0xf]
    %v8246 = vld [vmem:[#allocation8 + $0x1a4] sm:$0xf]
    %v8247 = vld [vmem:[#allocation8 + $0x1a8] sm:$0xf]
    %v8248 = vld [vmem:[#allocation8 + $0x1ac] sm:$0xf]
    %v8249 = vld [vmem:[#allocation8 + $0x1b0] sm:$0xf]
    %v8250 = vld [vmem:[#allocation8 + $0x1b4] sm:$0xf]
    %v8251 = vld [vmem:[#allocation8 + $0x1b8] sm:$0xf]
    %v8252 = vld [vmem:[#allocation8 + $0x1bc] sm:$0xf]
    %v8253 = vld [vmem:[#allocation8 + $0x1c0] sm:$0xf]
    %v8254 = vld [vmem:[#allocation8 + $0x1c4] sm:$0xf]
    %v8255 = vld [vmem:[#allocation8 + $0x1c8] sm:$0xf]
    %v8256 = vld [vmem:[#allocation8 + $0x1cc] sm:$0xf]
    %v8257 = vld [vmem:[#allocation8 + $0x1d0] sm:$0xf]
    %v8258 = vld [vmem:[#allocation8 + $0x1d4] sm:$0xf]
    %v8259 = vld [vmem:[#allocation8 + $0x1d8] sm:$0xf]
    %v8260 = vld [vmem:[#allocation8 + $0x1dc] sm:$0xf]
    %v8261 = vld [vmem:[#allocation8 + $0x1e0] sm:$0xf]
    %v8262 = vld [vmem:[#allocation8 + $0x1e4] sm:$0xf]
    %v8263 = vld [vmem:[#allocation8 + $0x1e8] sm:$0xf]
    %v8264 = vld [vmem:[#allocation8 + $0x1ec] sm:$0xf]
    %v8265 = vld [vmem:[#allocation8 + $0x1f0] sm:$0xf]
    %v8266 = vld [vmem:[#allocation8 + $0x1f4] sm:$0xf]
    %v8267 = vld [vmem:[#allocation8 + $0x1f8] sm:$0xf]
    %v8268 = vld [vmem:[#allocation8 + $0x1fc] sm:$0xf]
    %v8269 = vld [vmem:[#allocation8 + $0x200] sm:$0xf]
    %v8270 = vld [vmem:[#allocation8 + $0x204] sm:$0xf]
    %v8271 = vld [vmem:[#allocation8 + $0x208] sm:$0xf]
    %v8272 = vld [vmem:[#allocation8 + $0x20c] sm:$0xf]
    %v8273 = vld [vmem:[#allocation8 + $0x210] sm:$0xf]
    %v8274 = vld [vmem:[#allocation8 + $0x214] sm:$0xf]
    %v8275 = vld [vmem:[#allocation8 + $0x218] sm:$0xf]
    %v8276 = vld [vmem:[#allocation8 + $0x21c] sm:$0xf]
    %v8277 = vld [vmem:[#allocation8 + $0x220] sm:$0xf]
    %v8278 = vld [vmem:[#allocation8 + $0x224] sm:$0xf]
    %v8279 = vld [vmem:[#allocation8 + $0x228] sm:$0xf]
    %v8280 = vld [vmem:[#allocation8 + $0x22c] sm:$0xf]
    %v8281 = vld [vmem:[#allocation8 + $0x230] sm:$0xf]
    %v8282 = vld [vmem:[#allocation8 + $0x234] sm:$0xf]
    %v8283 = vld [vmem:[#allocation8 + $0x238] sm:$0xf]
    %v8284 = vld [vmem:[#allocation8 + $0x23c] sm:$0xf]
    %v8285 = vld [vmem:[#allocation2] sm:$0xff]
    %v8286 = vld [vmem:[#allocation2 + $0x8] sm:$0xf]
    %v8287 = vld [vmem:[#allocation2 + $0xc] sm:$0xff]
    %v8288 = vld [vmem:[#allocation2 + $0x14] sm:$0xf]
    %v8289 = vld [vmem:[#allocation2 + $0x18] sm:$0xff]
    %v8290 = vld [vmem:[#allocation2 + $0x20] sm:$0xf]
    %v8291 = vld [vmem:[#allocation2 + $0x24] sm:$0xff]
    %v8292 = vld [vmem:[#allocation2 + $0x2c] sm:$0xf]
    %v8293 = vld [vmem:[#allocation2 + $0x30] sm:$0xff]
    %v8294 = vld [vmem:[#allocation2 + $0x38] sm:$0xf]
    %v8295 = vld [vmem:[#allocation2 + $0x3c] sm:$0xff]
    %v8296 = vld [vmem:[#allocation2 + $0x44] sm:$0xf]
    %v8297 = vld [vmem:[#allocation2 + $0x48] sm:$0xff]
    %v8298 = vld [vmem:[#allocation2 + $0x50] sm:$0xf]
    %v8299 = vld [vmem:[#allocation2 + $0x54] sm:$0xff]
    %v8300 = vld [vmem:[#allocation2 + $0x5c] sm:$0xf]
    %v8301 = vld [vmem:[#allocation2 + $0x60] sm:$0xff]
    %v8302 = vld [vmem:[#allocation2 + $0x68] sm:$0xf]
    %v8303 = vld [vmem:[#allocation2 + $0x6c] sm:$0xff]
    %v8304 = vld [vmem:[#allocation2 + $0x74] sm:$0xf]
    %v8305 = vld [vmem:[#allocation2 + $0x78] sm:$0xff]
    %v8306 = vld [vmem:[#allocation2 + $0x80] sm:$0xf]
    %v8307 = vld [vmem:[#allocation2 + $0x84] sm:$0xff]
    %v8308 = vld [vmem:[#allocation2 + $0x8c] sm:$0xf]
    %v8309 = vld [vmem:[#allocation2 + $0x90] sm:$0xff]
    %v8310 = vld [vmem:[#allocation2 + $0x98] sm:$0xf]
    %v8311 = vld [vmem:[#allocation2 + $0x9c] sm:$0xff]
    %v8312 = vld [vmem:[#allocation2 + $0xa4] sm:$0xf]
    %v8313 = vld [vmem:[#allocation2 + $0xa8] sm:$0xff]
    %v8314 = vld [vmem:[#allocation2 + $0xb0] sm:$0xf]
    %v8315 = vld [vmem:[#allocation2 + $0xb4] sm:$0xff]
    %v8316 = vld [vmem:[#allocation2 + $0xbc] sm:$0xf]
    %v8317 = vld [vmem:[#allocation2 + $0xc0] sm:$0xff]
    %v8318 = vld [vmem:[#allocation2 + $0xc8] sm:$0xf]
    %v8319 = vld [vmem:[#allocation2 + $0xcc] sm:$0xff]
    %v8320 = vld [vmem:[#allocation2 + $0xd4] sm:$0xf]
    %v8321 = vld [vmem:[#allocation2 + $0xd8] sm:$0xff]
    %v8322 = vld [vmem:[#allocation2 + $0xe0] sm:$0xf]
    %v8323 = vld [vmem:[#allocation2 + $0xe4] sm:$0xff]
    %v8324 = vld [vmem:[#allocation2 + $0xec] sm:$0xf]
    %v8325 = vld [vmem:[#allocation2 + $0xf0] sm:$0xff]
    %v8326 = vld [vmem:[#allocation2 + $0xf8] sm:$0xf]
    %v8327 = vld [vmem:[#allocation2 + $0xfc] sm:$0xff]
    %v8328 = vld [vmem:[#allocation2 + $0x104] sm:$0xf]
    %v8329 = vld [vmem:[#allocation2 + $0x108] sm:$0xff]
    %v8330 = vld [vmem:[#allocation2 + $0x110] sm:$0xf]
    %v8331 = vld [vmem:[#allocation2 + $0x114] sm:$0xff]
    %v8332 = vld [vmem:[#allocation2 + $0x11c] sm:$0xf]
    %v8333 = vld [vmem:[#allocation2 + $0x120] sm:$0xff]
    %v8334 = vld [vmem:[#allocation2 + $0x128] sm:$0xf]
    %v8335 = vld [vmem:[#allocation2 + $0x12c] sm:$0xff]
    %v8336 = vld [vmem:[#allocation2 + $0x134] sm:$0xf]
    %v8337 = vld [vmem:[#allocation2 + $0x138] sm:$0xff]
    %v8338 = vld [vmem:[#allocation2 + $0x140] sm:$0xf]
    %v8339 = vld [vmem:[#allocation2 + $0x144] sm:$0xff]
    %v8340 = vld [vmem:[#allocation2 + $0x14c] sm:$0xf]
    %v8341 = vld [vmem:[#allocation2 + $0x150] sm:$0xff]
    %v8342 = vld [vmem:[#allocation2 + $0x158] sm:$0xf]
    %v8343 = vld [vmem:[#allocation2 + $0x15c] sm:$0xff]
    %v8344 = vld [vmem:[#allocation2 + $0x164] sm:$0xf]
    %v8345 = vld [vmem:[#allocation2 + $0x168] sm:$0xff]
    %v8346 = vld [vmem:[#allocation2 + $0x170] sm:$0xf]
    %v8347 = vld [vmem:[#allocation2 + $0x174] sm:$0xff]
    %v8348 = vld [vmem:[#allocation2 + $0x17c] sm:$0xf]
    %v8349 = vld [vmem:[#allocation2 + $0x1b0] sm:$0xff]
    %v8350 = vld [vmem:[#allocation2 + $0x1b8] sm:$0xf]
    %v8351 = vld [vmem:[#allocation2 + $0x1bc] sm:$0xff]
    %v8352 = vld [vmem:[#allocation2 + $0x1c4] sm:$0xf]
    %v8353 = vld [vmem:[#allocation2 + $0x1c8] sm:$0xff]
    %v8354 = vld [vmem:[#allocation2 + $0x1d0] sm:$0xf]
    %v8355 = vld [vmem:[#allocation2 + $0x1d4] sm:$0xff]
    %v8356 = vld [vmem:[#allocation2 + $0x1dc] sm:$0xf]
    %v8357 = vld [vmem:[#allocation2 + $0x1e0] sm:$0xff]
    %v8358 = vld [vmem:[#allocation2 + $0x1e8] sm:$0xf]
    %v8359 = vld [vmem:[#allocation2 + $0x1ec] sm:$0xff]
    %v8360 = vld [vmem:[#allocation2 + $0x1f4] sm:$0xf]
    %v8361 = vld [vmem:[#allocation2 + $0x1f8] sm:$0xff]
    %v8362 = vld [vmem:[#allocation2 + $0x200] sm:$0xf]
    %v8363 = vld [vmem:[#allocation2 + $0x204] sm:$0xff]
    %v8364 = vld [vmem:[#allocation2 + $0x20c] sm:$0xf]
    %v8365 = vld [vmem:[#allocation2 + $0x210] sm:$0xff]
    %v8366 = vld [vmem:[#allocation2 + $0x218] sm:$0xf]
    %v8367 = vld [vmem:[#allocation2 + $0x21c] sm:$0xff]
    %v8368 = vld [vmem:[#allocation2 + $0x224] sm:$0xf]
    %v8369 = vld [vmem:[#allocation2 + $0x228] sm:$0xff]
    %v8370 = vld [vmem:[#allocation2 + $0x230] sm:$0xf]
    %v8371 = vld [vmem:[#allocation2 + $0x234] sm:$0xff]
    %v8372 = vld [vmem:[#allocation2 + $0x23c] sm:$0xf]
    %v8373 = vld [vmem:[#allocation2 + $0x240] sm:$0xff]
    %v8374 = vld [vmem:[#allocation2 + $0x248] sm:$0xf]
    %v8375 = vld [vmem:[#allocation2 + $0x24c] sm:$0xff]
    %v8376 = vld [vmem:[#allocation2 + $0x254] sm:$0xf]
    %v8377 = vld [vmem:[#allocation2 + $0x258] sm:$0xff]
    %v8378 = vld [vmem:[#allocation2 + $0x260] sm:$0xf]
    %v8379 = vld [vmem:[#allocation2 + $0x264] sm:$0xff]
    %v8380 = vld [vmem:[#allocation2 + $0x26c] sm:$0xf]
    %v8381 = vld [vmem:[#allocation2 + $0x270] sm:$0xff]
    %v8382 = vld [vmem:[#allocation2 + $0x278] sm:$0xf]
    %v8383 = vld [vmem:[#allocation2 + $0x27c] sm:$0xff]
    %v8384 = vld [vmem:[#allocation2 + $0x284] sm:$0xf]
    %v8385 = vld [vmem:[#allocation2 + $0x288] sm:$0xff]
    %v8386 = vld [vmem:[#allocation2 + $0x290] sm:$0xf]
    %v8387 = vld [vmem:[#allocation2 + $0x294] sm:$0xff]
    %v8388 = vld [vmem:[#allocation2 + $0x29c] sm:$0xf]
    %v8389 = vld [vmem:[#allocation2 + $0x2a0] sm:$0xff]
    %v8390 = vld [vmem:[#allocation2 + $0x2a8] sm:$0xf]
    %v8391 = vld [vmem:[#allocation2 + $0x2ac] sm:$0xff]
    %v8392 = vld [vmem:[#allocation2 + $0x2b4] sm:$0xf]
    %v8393 = vld [vmem:[#allocation2 + $0x2b8] sm:$0xff]
    %v8394 = vld [vmem:[#allocation2 + $0x2c0] sm:$0xf]
    %v8395 = vld [vmem:[#allocation2 + $0x2c4] sm:$0xff]
    %v8396 = vld [vmem:[#allocation2 + $0x2cc] sm:$0xf]
    %v8397 = vld [vmem:[#allocation2 + $0x2d0] sm:$0xff]
    %v8398 = vld [vmem:[#allocation2 + $0x2d8] sm:$0xf]
    %v8399 = vld [vmem:[#allocation2 + $0x2dc] sm:$0xff]
    %v8400 = vld [vmem:[#allocation2 + $0x2e4] sm:$0xf]
    %v8401 = vld [vmem:[#allocation2 + $0x2e8] sm:$0xff]
    %v8402 = vld [vmem:[#allocation2 + $0x2f0] sm:$0xf]
    %v8403 = vld [vmem:[#allocation2 + $0x2f4] sm:$0xff]
    %v8404 = vld [vmem:[#allocation2 + $0x2fc] sm:$0xf]
    %v8405 = vld [vmem:[#allocation2 + $0x300] sm:$0xff]
    %v8406 = vld [vmem:[#allocation2 + $0x308] sm:$0xf]
    %v8407 = vld [vmem:[#allocation2 + $0x30c] sm:$0xff]
    %v8408 = vld [vmem:[#allocation2 + $0x314] sm:$0xf]
    %v8409 = vld [vmem:[#allocation2 + $0x318] sm:$0xff]
    %v8410 = vld [vmem:[#allocation2 + $0x320] sm:$0xf]
    %v8411 = vld [vmem:[#allocation2 + $0x324] sm:$0xff]
    %v8412 = vld [vmem:[#allocation2 + $0x32c] sm:$0xf]
    %v8413 = vld [vmem:[%s86] sm:$0xff]
    %v8414 = vld [vmem:[%s86 + $0x8] sm:$0xf]
    %v8415 = vld [vmem:[%s86 + $0xc] sm:$0xff]
    %v8416 = vld [vmem:[%s86 + $0x14] sm:$0xf]
    %v8417 = vld [vmem:[%s86 + $0x18] sm:$0xff]
    %v8418 = vld [vmem:[%s86 + $0x20] sm:$0xf]
    %v8419 = vld [vmem:[%s86 + $0x24] sm:$0xff]
    %v8420 = vld [vmem:[%s86 + $0x2c] sm:$0xf]
    %v8421 = vld [vmem:[%s86 + $0x30] sm:$0xff]
    %v8422 = vld [vmem:[%s86 + $0x38] sm:$0xf]
    %v8423 = vld [vmem:[%s86 + $0x3c] sm:$0xff]
    %v8424 = vld [vmem:[%s86 + $0x44] sm:$0xf]
    %v8425 = vld [vmem:[%s86 + $0x48] sm:$0xff]
    %v8426 = vld [vmem:[%s86 + $0x50] sm:$0xf]
    %v8427 = vld [vmem:[%s86 + $0x54] sm:$0xff]
    %v8428 = vld [vmem:[%s86 + $0x5c] sm:$0xf]
    %v8429 = vld [vmem:[%s86 + $0x60] sm:$0xff]
    %v8430 = vld [vmem:[%s86 + $0x68] sm:$0xf]
    %v8431 = vld [vmem:[%s86 + $0x6c] sm:$0xff]
    %v8432 = vld [vmem:[%s86 + $0x74] sm:$0xf]
    %v8433 = vld [vmem:[%s86 + $0x78] sm:$0xff]
    %v8434 = vld [vmem:[%s86 + $0x80] sm:$0xf]
    %v8435 = vld [vmem:[%s86 + $0x84] sm:$0xff]
    %v8436 = vld [vmem:[%s86 + $0x8c] sm:$0xf]
    %v8437 = vld [vmem:[%s86 + $0x90] sm:$0xff]
    %v8438 = vld [vmem:[%s86 + $0x98] sm:$0xf]
    %v8439 = vld [vmem:[%s86 + $0x9c] sm:$0xff]
    %v8440 = vld [vmem:[%s86 + $0xa4] sm:$0xf]
    %v8441 = vld [vmem:[%s86 + $0xa8] sm:$0xff]
    %v8442 = vld [vmem:[%s86 + $0xb0] sm:$0xf]
    %v8443 = vld [vmem:[%s86 + $0xb4] sm:$0xff]
    %v8444 = vld [vmem:[%s86 + $0xbc] sm:$0xf]
    %v8445 = vld [vmem:[%s86 + $0xc0] sm:$0xff]
    %v8446 = vld [vmem:[%s86 + $0xc8] sm:$0xf]
    %v8447 = vld [vmem:[%s86 + $0xcc] sm:$0xff]
    %v8448 = vld [vmem:[%s86 + $0xd4] sm:$0xf]
    %v8449 = vld [vmem:[%s86 + $0xd8] sm:$0xff]
    %v8450 = vld [vmem:[%s86 + $0xe0] sm:$0xf]
    %v8451 = vld [vmem:[%s86 + $0xe4] sm:$0xff]
    %v8452 = vld [vmem:[%s86 + $0xec] sm:$0xf]
    %v8453 = vld [vmem:[%s86 + $0xf0] sm:$0xff]
    %v8454 = vld [vmem:[%s86 + $0xf8] sm:$0xf]
    %v8455 = vld [vmem:[%s86 + $0xfc] sm:$0xff]
    %v8456 = vld [vmem:[%s86 + $0x104] sm:$0xf]
    %v8457 = vld [vmem:[%s86 + $0x108] sm:$0xff]
    %v8458 = vld [vmem:[%s86 + $0x110] sm:$0xf]
    %v8459 = vld [vmem:[%s86 + $0x114] sm:$0xff]
    %v8460 = vld [vmem:[%s86 + $0x11c] sm:$0xf]
    %v8461 = vld [vmem:[%s86 + $0x120] sm:$0xff]
    %v8462 = vld [vmem:[%s86 + $0x128] sm:$0xf]
    %v8463 = vld [vmem:[%s86 + $0x12c] sm:$0xff]
    %v8464 = vld [vmem:[%s86 + $0x134] sm:$0xf]
    %v8465 = vld [vmem:[%s86 + $0x138] sm:$0xff]
    %v8466 = vld [vmem:[%s86 + $0x140] sm:$0xf]
    %v8467 = vld [vmem:[%s86 + $0x144] sm:$0xff]
    %v8468 = vld [vmem:[%s86 + $0x14c] sm:$0xf]
    %v8469 = vld [vmem:[%s86 + $0x150] sm:$0xff]
    %v8470 = vld [vmem:[%s86 + $0x158] sm:$0xf]
    %v8471 = vld [vmem:[%s86 + $0x15c] sm:$0xff]
    %v8472 = vld [vmem:[%s86 + $0x164] sm:$0xf]
    %v8473 = vld [vmem:[%s86 + $0x168] sm:$0xff]
    %v8474 = vld [vmem:[%s86 + $0x170] sm:$0xf]
    %v8475 = vld [vmem:[%s86 + $0x174] sm:$0xff]
    %v8476 = vld [vmem:[%s86 + $0x17c] sm:$0xf]
    %v8477 = vld [vmem:[%s86 + $0x1b0] sm:$0xff]
    %v8478 = vld [vmem:[%s86 + $0x1b8] sm:$0xf]
    %v8479 = vld [vmem:[%s86 + $0x1bc] sm:$0xff]
    %v8480 = vld [vmem:[%s86 + $0x1c4] sm:$0xf]
    %v8481 = vld [vmem:[%s86 + $0x1c8] sm:$0xff]
    %v8482 = vld [vmem:[%s86 + $0x1d0] sm:$0xf]
    %v8483 = vld [vmem:[%s86 + $0x1d4] sm:$0xff]
    %v8484 = vld [vmem:[%s86 + $0x1dc] sm:$0xf]
    %v8485 = vld [vmem:[%s86 + $0x1e0] sm:$0xff]
    %v8486 = vld [vmem:[%s86 + $0x1e8] sm:$0xf]
    %v8487 = vld [vmem:[%s86 + $0x1ec] sm:$0xff]
    %v8488 = vld [vmem:[%s86 + $0x1f4] sm:$0xf]
    %v8489 = vld [vmem:[%s86 + $0x1f8] sm:$0xff]
    %v8490 = vld [vmem:[%s86 + $0x200] sm:$0xf]
    %v8491 = vld [vmem:[%s86 + $0x204] sm:$0xff]
    %v8492 = vld [vmem:[%s86 + $0x20c] sm:$0xf]
    %v8493 = vld [vmem:[%s86 + $0x210] sm:$0xff]
    %v8494 = vld [vmem:[%s86 + $0x218] sm:$0xf]
    %v8495 = vld [vmem:[%s86 + $0x21c] sm:$0xff]
    %v8496 = vld [vmem:[%s86 + $0x224] sm:$0xf]
    %v8497 = vld [vmem:[%s86 + $0x228] sm:$0xff]
    %v8498 = vld [vmem:[%s86 + $0x230] sm:$0xf]
    %v8499 = vld [vmem:[%s86 + $0x234] sm:$0xff]
    %v8500 = vld [vmem:[%s86 + $0x23c] sm:$0xf]
    %v8501 = vld [vmem:[%s86 + $0x240] sm:$0xff]
    %v8502 = vld [vmem:[%s86 + $0x248] sm:$0xf]
    %v8503 = vld [vmem:[%s86 + $0x24c] sm:$0xff]
    %v8504 = vld [vmem:[%s86 + $0x254] sm:$0xf]
    %v8505 = vld [vmem:[%s86 + $0x258] sm:$0xff]
    %v8506 = vld [vmem:[%s86 + $0x260] sm:$0xf]
    %v8507 = vld [vmem:[%s86 + $0x264] sm:$0xff]
    %v8508 = vld [vmem:[%s86 + $0x26c] sm:$0xf]
    %v8509 = vld [vmem:[%s86 + $0x270] sm:$0xff]
    %v8510 = vld [vmem:[%s86 + $0x278] sm:$0xf]
    %v8511 = vld [vmem:[%s86 + $0x27c] sm:$0xff]
    %v8512 = vld [vmem:[%s86 + $0x284] sm:$0xf]
    %v8513 = vld [vmem:[%s86 + $0x288] sm:$0xff]
    %v8514 = vld [vmem:[%s86 + $0x290] sm:$0xf]
    %v8515 = vld [vmem:[%s86 + $0x294] sm:$0xff]
    %v8516 = vld [vmem:[%s86 + $0x29c] sm:$0xf]
    %v8517 = vld [vmem:[%s86 + $0x2a0] sm:$0xff]
    %v8518 = vld [vmem:[%s86 + $0x2a8] sm:$0xf]
    %v8519 = vld [vmem:[%s86 + $0x2ac] sm:$0xff]
    %v8520 = vld [vmem:[%s86 + $0x2b4] sm:$0xf]
    %v8521 = vld [vmem:[%s86 + $0x2b8] sm:$0xff]
    %v8522 = vld [vmem:[%s86 + $0x2c0] sm:$0xf]
    %v8523 = vld [vmem:[%s86 + $0x2c4] sm:$0xff]
    %v8524 = vld [vmem:[%s86 + $0x2cc] sm:$0xf]
    %v8525 = vld [vmem:[%s86 + $0x2d0] sm:$0xff]
    %v8526 = vld [vmem:[%s86 + $0x2d8] sm:$0xf]
    %v8527 = vld [vmem:[%s86 + $0x2dc] sm:$0xff]
    %v8528 = vld [vmem:[%s86 + $0x2e4] sm:$0xf]
    %v8529 = vld [vmem:[%s86 + $0x2e8] sm:$0xff]
    %v8530 = vld [vmem:[%s86 + $0x2f0] sm:$0xf]
    %v8531 = vld [vmem:[%s86 + $0x2f4] sm:$0xff]
    %v8532 = vld [vmem:[%s86 + $0x2fc] sm:$0xf]
    %v8533 = vld [vmem:[%s86 + $0x300] sm:$0xff]
    %v8534 = vld [vmem:[%s86 + $0x308] sm:$0xf]
    %v8535 = vld [vmem:[%s86 + $0x30c] sm:$0xff]
    %v8536 = vld [vmem:[%s86 + $0x314] sm:$0xf]
    %v8537 = vld [vmem:[%s86 + $0x318] sm:$0xff]
    %v8538 = vld [vmem:[%s86 + $0x320] sm:$0xf]
    %v8539 = vld [vmem:[%s86 + $0x324] sm:$0xff]
    %v8540 = vld [vmem:[%s86 + $0x32c] sm:$0xf]
    %v8669 = vunpack.c.l.b16 %v8413
    %v8670 = vunpack.c.h.b16 %v8413
    %v8671 = vunpack.c.l.b16 %v8414
    %v8672 = vunpack.c.l.b16 %v8415
    %v8673 = vunpack.c.h.b16 %v8415
    %v8674 = vunpack.c.l.b16 %v8416
    %v8675 = vunpack.c.l.b16 %v8417
    %v8676 = vunpack.c.h.b16 %v8417
    %v8677 = vunpack.c.l.b16 %v8418
    %v8678 = vunpack.c.l.b16 %v8419
    %v8679 = vunpack.c.h.b16 %v8419
    %v8680 = vunpack.c.l.b16 %v8420
    %v8681 = vunpack.c.l.b16 %v8421
    %v8682 = vunpack.c.h.b16 %v8421
    %v8683 = vunpack.c.l.b16 %v8422
    %v8684 = vunpack.c.l.b16 %v8423
    %v8685 = vunpack.c.h.b16 %v8423
    %v8686 = vunpack.c.l.b16 %v8424
    %v8687 = vunpack.c.l.b16 %v8425
    %v8688 = vunpack.c.h.b16 %v8425
    %v8689 = vunpack.c.l.b16 %v8426
    %v8690 = vunpack.c.l.b16 %v8427
    %v8691 = vunpack.c.h.b16 %v8427
    %v8692 = vunpack.c.l.b16 %v8428
    %v8693 = vunpack.c.l.b16 %v8429
    %v8694 = vunpack.c.h.b16 %v8429
    %v8695 = vunpack.c.l.b16 %v8430
    %v8696 = vunpack.c.l.b16 %v8431
    %v8697 = vunpack.c.h.b16 %v8431
    %v8698 = vunpack.c.l.b16 %v8432
    %v8699 = vunpack.c.l.b16 %v8433
    %v8700 = vunpack.c.h.b16 %v8433
    %v8701 = vunpack.c.l.b16 %v8434
    %v8702 = vunpack.c.l.b16 %v8435
    %v8703 = vunpack.c.h.b16 %v8435
    %v8704 = vunpack.c.l.b16 %v8436
    %v8705 = vunpack.c.l.b16 %v8437
    %v8706 = vunpack.c.h.b16 %v8437
    %v8707 = vunpack.c.l.b16 %v8438
    %v8708 = vunpack.c.l.b16 %v8439
    %v8709 = vunpack.c.h.b16 %v8439
    %v8710 = vunpack.c.l.b16 %v8440
    %v8711 = vunpack.c.l.b16 %v8441
    %v8712 = vunpack.c.h.b16 %v8441
    %v8713 = vunpack.c.l.b16 %v8442
    %v8714 = vunpack.c.l.b16 %v8443
    %v8715 = vunpack.c.h.b16 %v8443
    %v8716 = vunpack.c.l.b16 %v8444
    %v8717 = vunpack.c.l.b16 %v8445
    %v8718 = vunpack.c.h.b16 %v8445
    %v8719 = vunpack.c.l.b16 %v8446
    %v8720 = vunpack.c.l.b16 %v8447
    %v8721 = vunpack.c.h.b16 %v8447
    %v8722 = vunpack.c.l.b16 %v8448
    %v8723 = vunpack.c.l.b16 %v8449
    %v8724 = vunpack.c.h.b16 %v8449
    %v8725 = vunpack.c.l.b16 %v8450
    %v8726 = vunpack.c.l.b16 %v8451
    %v8727 = vunpack.c.h.b16 %v8451
    %v8728 = vunpack.c.l.b16 %v8452
    %v8729 = vunpack.c.l.b16 %v8453
    %v8730 = vunpack.c.h.b16 %v8453
    %v8731 = vunpack.c.l.b16 %v8454
    %v8732 = vunpack.c.l.b16 %v8455
    %v8733 = vunpack.c.h.b16 %v8455
    %v8734 = vunpack.c.l.b16 %v8456
    %v8735 = vunpack.c.l.b16 %v8457
    %v8736 = vunpack.c.h.b16 %v8457
    %v8737 = vunpack.c.l.b16 %v8458
    %v8738 = vunpack.c.l.b16 %v8459
    %v8739 = vunpack.c.h.b16 %v8459
    %v8740 = vunpack.c.l.b16 %v8460
    %v8741 = vunpack.c.l.b16 %v8461
    %v8742 = vunpack.c.h.b16 %v8461
    %v8743 = vunpack.c.l.b16 %v8462
    %v8744 = vunpack.c.l.b16 %v8463
    %v8745 = vunpack.c.h.b16 %v8463
    %v8746 = vunpack.c.l.b16 %v8464
    %v8747 = vunpack.c.l.b16 %v8465
    %v8748 = vunpack.c.h.b16 %v8465
    %v8749 = vunpack.c.l.b16 %v8466
    %v8750 = vunpack.c.l.b16 %v8467
    %v8751 = vunpack.c.h.b16 %v8467
    %v8752 = vunpack.c.l.b16 %v8468
    %v8753 = vunpack.c.l.b16 %v8469
    %v8754 = vunpack.c.h.b16 %v8469
    %v8755 = vunpack.c.l.b16 %v8470
    %v8756 = vunpack.c.l.b16 %v8471
    %v8757 = vunpack.c.h.b16 %v8471
    %v8758 = vunpack.c.l.b16 %v8472
    %v8759 = vunpack.c.l.b16 %v8473
    %v8760 = vunpack.c.h.b16 %v8473
    %v8761 = vunpack.c.l.b16 %v8474
    %v8762 = vunpack.c.l.b16 %v8475
    %v8763 = vunpack.c.h.b16 %v8475
    %v8764 = vunpack.c.l.b16 %v8476
    %v8765 = vunpack.c.l.b16 %v8477
    %v8766 = vunpack.c.h.b16 %v8477
    %v8767 = vunpack.c.l.b16 %v8478
    %v8768 = vunpack.c.l.b16 %v8479
    %v8769 = vunpack.c.h.b16 %v8479
    %v8770 = vunpack.c.l.b16 %v8480
    %v8771 = vunpack.c.l.b16 %v8481
    %v8772 = vunpack.c.h.b16 %v8481
    %v8773 = vunpack.c.l.b16 %v8482
    %v8774 = vunpack.c.l.b16 %v8483
    %v8775 = vunpack.c.h.b16 %v8483
    %v8776 = vunpack.c.l.b16 %v8484
    %v8777 = vunpack.c.l.b16 %v8485
    %v8778 = vunpack.c.h.b16 %v8485
    %v8779 = vunpack.c.l.b16 %v8486
    %v8780 = vunpack.c.l.b16 %v8487
    %v8781 = vunpack.c.h.b16 %v8487
    %v8782 = vunpack.c.l.b16 %v8488
    %v8783 = vunpack.c.l.b16 %v8489
    %v8784 = vunpack.c.h.b16 %v8489
    %v8785 = vunpack.c.l.b16 %v8490
    %v8786 = vunpack.c.l.b16 %v8491
    %v8787 = vunpack.c.h.b16 %v8491
    %v8788 = vunpack.c.l.b16 %v8492
    %v8789 = vunpack.c.l.b16 %v8493
    %v8790 = vunpack.c.h.b16 %v8493
    %v8791 = vunpack.c.l.b16 %v8494
    %v8792 = vunpack.c.l.b16 %v8495
    %v8793 = vunpack.c.h.b16 %v8495
    %v8794 = vunpack.c.l.b16 %v8496
    %v8795 = vunpack.c.l.b16 %v8497
    %v8796 = vunpack.c.h.b16 %v8497
    %v8797 = vunpack.c.l.b16 %v8498
    %v8798 = vunpack.c.l.b16 %v8499
    %v8799 = vunpack.c.h.b16 %v8499
    %v8800 = vunpack.c.l.b16 %v8500
    %v8801 = vunpack.c.l.b16 %v8501
    %v8802 = vunpack.c.h.b16 %v8501
    %v8803 = vunpack.c.l.b16 %v8502
    %v8804 = vunpack.c.l.b16 %v8503
    %v8805 = vunpack.c.h.b16 %v8503
    %v8806 = vunpack.c.l.b16 %v8504
    %v8807 = vunpack.c.l.b16 %v8505
    %v8808 = vunpack.c.h.b16 %v8505
    %v8809 = vunpack.c.l.b16 %v8506
    %v8810 = vunpack.c.l.b16 %v8507
    %v8811 = vunpack.c.h.b16 %v8507
    %v8812 = vunpack.c.l.b16 %v8508
    %v8813 = vunpack.c.l.b16 %v8509
    %v8814 = vunpack.c.h.b16 %v8509
    %v8815 = vunpack.c.l.b16 %v8510
    %v8816 = vunpack.c.l.b16 %v8511
    %v8817 = vunpack.c.h.b16 %v8511
    %v8818 = vunpack.c.l.b16 %v8512
    %v8819 = vunpack.c.l.b16 %v8513
    %v8820 = vunpack.c.h.b16 %v8513
    %v8821 = vunpack.c.l.b16 %v8514
    %v8822 = vunpack.c.l.b16 %v8515
    %v8823 = vunpack.c.h.b16 %v8515
    %v8824 = vunpack.c.l.b16 %v8516
    %v8825 = vunpack.c.l.b16 %v8517
    %v8826 = vunpack.c.h.b16 %v8517
    %v8827 = vunpack.c.l.b16 %v8518
    %v8828 = vunpack.c.l.b16 %v8519
    %v8829 = vunpack.c.h.b16 %v8519
    %v8830 = vunpack.c.l.b16 %v8520
    %v8831 = vunpack.c.l.b16 %v8521
    %v8832 = vunpack.c.h.b16 %v8521
    %v8833 = vunpack.c.l.b16 %v8522
    %v8834 = vunpack.c.l.b16 %v8523
    %v8835 = vunpack.c.h.b16 %v8523
    %v8836 = vunpack.c.l.b16 %v8524
    %v8837 = vunpack.c.l.b16 %v8525
    %v8838 = vunpack.c.h.b16 %v8525
    %v8839 = vunpack.c.l.b16 %v8526
    %v8840 = vunpack.c.l.b16 %v8527
    %v8841 = vunpack.c.h.b16 %v8527
    %v8842 = vunpack.c.l.b16 %v8528
    %v8843 = vunpack.c.l.b16 %v8529
    %v8844 = vunpack.c.h.b16 %v8529
    %v8845 = vunpack.c.l.b16 %v8530
    %v8846 = vunpack.c.l.b16 %v8531
    %v8847 = vunpack.c.h.b16 %v8531
    %v8848 = vunpack.c.l.b16 %v8532
    %v8849 = vunpack.c.l.b16 %v8533
    %v8850 = vunpack.c.h.b16 %v8533
    %v8851 = vunpack.c.l.b16 %v8534
    %v8852 = vunpack.c.l.b16 %v8535
    %v8853 = vunpack.c.h.b16 %v8535
    %v8854 = vunpack.c.l.b16 %v8536
    %v8855 = vunpack.c.l.b16 %v8537
    %v8856 = vunpack.c.h.b16 %v8537
    %v8857 = vunpack.c.l.b16 %v8538
    %v8858 = vunpack.c.l.b16 %v8539
    %v8859 = vunpack.c.h.b16 %v8539
    %v8860 = vunpack.c.l.b16 %v8540
    %v8861 = vpack.c.b16 %v8672, %v8669
    %v8862 = vpack.c.b16 %v8673, %v8670
    %v8863 = vpack.c.b16 %v8674, %v8671
    %v8864 = vpack.c.b16 %v8678, %v8675
    %v8865 = vpack.c.b16 %v8679, %v8676
    %v8866 = vpack.c.b16 %v8680, %v8677
    %v8867 = vpack.c.b16 %v8684, %v8681
    %v8868 = vpack.c.b16 %v8685, %v8682
    %v8869 = vpack.c.b16 %v8686, %v8683
    %v8870 = vpack.c.b16 %v8690, %v8687
    %v8871 = vpack.c.b16 %v8691, %v8688
    %v8872 = vpack.c.b16 %v8692, %v8689
    %v8873 = vpack.c.b16 %v8696, %v8693
    %v8874 = vpack.c.b16 %v8697, %v8694
    %v8875 = vpack.c.b16 %v8698, %v8695
    %v8876 = vpack.c.b16 %v8702, %v8699
    %v8877 = vpack.c.b16 %v8703, %v8700
    %v8878 = vpack.c.b16 %v8704, %v8701
    %v8879 = vpack.c.b16 %v8708, %v8705
    %v8880 = vpack.c.b16 %v8709, %v8706
    %v8881 = vpack.c.b16 %v8710, %v8707
    %v8882 = vpack.c.b16 %v8714, %v8711
    %v8883 = vpack.c.b16 %v8715, %v8712
    %v8884 = vpack.c.b16 %v8716, %v8713
    %v8885 = vpack.c.b16 %v8720, %v8717
    %v8886 = vpack.c.b16 %v8721, %v8718
    %v8887 = vpack.c.b16 %v8722, %v8719
    %v8888 = vpack.c.b16 %v8726, %v8723
    %v8889 = vpack.c.b16 %v8727, %v8724
    %v8890 = vpack.c.b16 %v8728, %v8725
    %v8891 = vpack.c.b16 %v8732, %v8729
    %v8892 = vpack.c.b16 %v8733, %v8730
    %v8893 = vpack.c.b16 %v8734, %v8731
    %v8894 = vpack.c.b16 %v8738, %v8735
    %v8895 = vpack.c.b16 %v8739, %v8736
    %v8896 = vpack.c.b16 %v8740, %v8737
    %v8897 = vpack.c.b16 %v8744, %v8741
    %v8898 = vpack.c.b16 %v8745, %v8742
    %v8899 = vpack.c.b16 %v8746, %v8743
    %v8900 = vpack.c.b16 %v8750, %v8747
    %v8901 = vpack.c.b16 %v8751, %v8748
    %v8902 = vpack.c.b16 %v8752, %v8749
    %v8903 = vpack.c.b16 %v8756, %v8753
    %v8904 = vpack.c.b16 %v8757, %v8754
    %v8905 = vpack.c.b16 %v8758, %v8755
    %v8906 = vpack.c.b16 %v8762, %v8759
    %v8907 = vpack.c.b16 %v8763, %v8760
    %v8908 = vpack.c.b16 %v8764, %v8761
    %v8909 = vpack.c.b16 %v8768, %v8765
    %v8910 = vpack.c.b16 %v8769, %v8766
    %v8911 = vpack.c.b16 %v8770, %v8767
    %v8912 = vpack.c.b16 %v8774, %v8771
    %v8913 = vpack.c.b16 %v8775, %v8772
    %v8914 = vpack.c.b16 %v8776, %v8773
    %v8915 = vpack.c.b16 %v8780, %v8777
    %v8916 = vpack.c.b16 %v8781, %v8778
    %v8917 = vpack.c.b16 %v8782, %v8779
    %v8918 = vpack.c.b16 %v8786, %v8783
    %v8919 = vpack.c.b16 %v8787, %v8784
    %v8920 = vpack.c.b16 %v8788, %v8785
    %v8921 = vpack.c.b16 %v8792, %v8789
    %v8922 = vpack.c.b16 %v8793, %v8790
    %v8923 = vpack.c.b16 %v8794, %v8791
    %v8924 = vpack.c.b16 %v8798, %v8795
    %v8925 = vpack.c.b16 %v8799, %v8796
    %v8926 = vpack.c.b16 %v8800, %v8797
    %v8927 = vpack.c.b16 %v8804, %v8801
    %v8928 = vpack.c.b16 %v8805, %v8802
    %v8929 = vpack.c.b16 %v8806, %v8803
    %v8930 = vpack.c.b16 %v8810, %v8807
    %v8931 = vpack.c.b16 %v8811, %v8808
    %v8932 = vpack.c.b16 %v8812, %v8809
    %v8933 = vpack.c.b16 %v8816, %v8813
    %v8934 = vpack.c.b16 %v8817, %v8814
    %v8935 = vpack.c.b16 %v8818, %v8815
    %v8936 = vpack.c.b16 %v8822, %v8819
    %v8937 = vpack.c.b16 %v8823, %v8820
    %v8938 = vpack.c.b16 %v8824, %v8821
    %v8939 = vpack.c.b16 %v8828, %v8825
    %v8940 = vpack.c.b16 %v8829, %v8826
    %v8941 = vpack.c.b16 %v8830, %v8827
    %v8942 = vpack.c.b16 %v8834, %v8831
    %v8943 = vpack.c.b16 %v8835, %v8832
    %v8944 = vpack.c.b16 %v8836, %v8833
    %v8945 = vpack.c.b16 %v8840, %v8837
    %v8946 = vpack.c.b16 %v8841, %v8838
    %v8947 = vpack.c.b16 %v8842, %v8839
    %v8948 = vpack.c.b16 %v8846, %v8843
    %v8949 = vpack.c.b16 %v8847, %v8844
    %v8950 = vpack.c.b16 %v8848, %v8845
    %v8951 = vpack.c.b16 %v8852, %v8849
    %v8952 = vpack.c.b16 %v8853, %v8850
    %v8953 = vpack.c.b16 %v8854, %v8851
    %v8954 = vpack.c.b16 %v8858, %v8855
    %v8955 = vpack.c.b16 %v8859, %v8856
    %v8956 = vpack.c.b16 %v8860, %v8857
    %v9101 = vunpack.c.l.b16 %v8189
    %v9102 = vunpack.c.l.b16 %v8190
    %v9103 = vunpack.c.l.b16 %v8191
    %v9104 = vunpack.c.l.b16 %v8192
    %v9105 = vunpack.c.l.b16 %v8193
    %v9106 = vunpack.c.l.b16 %v8194
    %v9107 = vunpack.c.l.b16 %v8195
    %v9108 = vunpack.c.l.b16 %v8196
    %v9109 = vunpack.c.l.b16 %v8197
    %v9110 = vunpack.c.l.b16 %v8198
    %v9111 = vunpack.c.l.b16 %v8199
    %v9112 = vunpack.c.l.b16 %v8200
    %v9113 = vunpack.c.l.b16 %v8201
    %v9114 = vunpack.c.l.b16 %v8202
    %v9115 = vunpack.c.l.b16 %v8203
    %v9116 = vunpack.c.l.b16 %v8204
    %v9117 = vunpack.c.l.b16 %v8205
    %v9118 = vunpack.c.l.b16 %v8206
    %v9119 = vunpack.c.l.b16 %v8207
    %v9120 = vunpack.c.l.b16 %v8208
    %v9121 = vunpack.c.l.b16 %v8209
    %v9122 = vunpack.c.l.b16 %v8210
    %v9123 = vunpack.c.l.b16 %v8211
    %v9124 = vunpack.c.l.b16 %v8212
    %v9125 = vunpack.c.l.b16 %v8213
    %v9126 = vunpack.c.l.b16 %v8214
    %v9127 = vunpack.c.l.b16 %v8215
    %v9128 = vunpack.c.l.b16 %v8216
    %v9129 = vunpack.c.l.b16 %v8217
    %v9130 = vunpack.c.l.b16 %v8218
    %v9131 = vunpack.c.l.b16 %v8219
    %v9132 = vunpack.c.l.b16 %v8220
    %v9133 = vunpack.c.l.b16 %v8221
    %v9134 = vunpack.c.l.b16 %v8222
    %v9135 = vunpack.c.l.b16 %v8223
    %v9136 = vunpack.c.l.b16 %v8224
    %v9137 = vunpack.c.l.b16 %v8225
    %v9138 = vunpack.c.l.b16 %v8226
    %v9139 = vunpack.c.l.b16 %v8227
    %v9140 = vunpack.c.l.b16 %v8228
    %v9141 = vunpack.c.l.b16 %v8229
    %v9142 = vunpack.c.l.b16 %v8230
    %v9143 = vunpack.c.l.b16 %v8231
    %v9144 = vunpack.c.l.b16 %v8232
    %v9145 = vunpack.c.l.b16 %v8233
    %v9146 = vunpack.c.l.b16 %v8234
    %v9147 = vunpack.c.l.b16 %v8235
    %v9148 = vunpack.c.l.b16 %v8236
    %v9149 = vpack.c.b16 %v9102, %v9101
    %v9150 = vpack.c.b16 %v9104, %v9103
    %v9151 = vpack.c.b16 %v9106, %v9105
    %v9152 = vpack.c.b16 %v9108, %v9107
    %v9153 = vpack.c.b16 %v9110, %v9109
    %v9154 = vpack.c.b16 %v9112, %v9111
    %v9155 = vpack.c.b16 %v9114, %v9113
    %v9156 = vpack.c.b16 %v9116, %v9115
    %v9157 = vpack.c.b16 %v9118, %v9117
    %v9158 = vpack.c.b16 %v9120, %v9119
    %v9159 = vpack.c.b16 %v9122, %v9121
    %v9160 = vpack.c.b16 %v9124, %v9123
    %v9161 = vpack.c.b16 %v9126, %v9125
    %v9162 = vpack.c.b16 %v9128, %v9127
    %v9163 = vpack.c.b16 %v9130, %v9129
    %v9164 = vpack.c.b16 %v9132, %v9131
    %v9165 = vpack.c.b16 %v9134, %v9133
    %v9166 = vpack.c.b16 %v9136, %v9135
    %v9167 = vpack.c.b16 %v9138, %v9137
    %v9168 = vpack.c.b16 %v9140, %v9139
    %v9169 = vpack.c.b16 %v9142, %v9141
    %v9170 = vpack.c.b16 %v9144, %v9143
    %v9171 = vpack.c.b16 %v9146, %v9145
    %v9172 = vpack.c.b16 %v9148, %v9147
    %9197 = vmatprep.subr.bf16.mxu0 0
    %9198 = vmatpush1.bf16.msra.mxu0 %v9156
    %9199 = vmatprep.subr.bf16.mxu0 0
    %9200 = vmatpush1.bf16.msra.mxu0 %v9155
    %9201 = vmatprep.subr.bf16.mxu0 0
    %9202 = vmatpush1.bf16.msra.mxu0 %v9154
    %9203 = vmatprep.subr.bf16.mxu0 0
    %9204 = vmatpush1.bf16.msra.mxu0 %v9153
    %9205 = vmatprep.subr.bf16.mxu0 0
    %9206 = vmatpush1.bf16.msra.mxu0 %v9152
    %9207 = vmatprep.subr.bf16.mxu0 0
    %9208 = vmatpush1.bf16.msra.mxu0 %v9151
    %9209 = vmatprep.subr.bf16.mxu0 0
    %9210 = vmatpush1.bf16.msra.mxu0 %v9150
    %9211 = vmatprep.subr.bf16.mxu0 0
    %9212 = vmatpush1.bf16.msra.mxu0 %v9149
    %9213 = vmatprep.subr.bf16.mxu0 0
    %9214 = vmatpush2.bf16.msra.mxu0 %v9164
    %9215 = vmatprep.subr.bf16.mxu0 0
    %9216 = vmatpush2.bf16.msra.mxu0 %v9163
    %9217 = vmatprep.subr.bf16.mxu0 0
    %9218 = vmatpush2.bf16.msra.mxu0 %v9162
    %9219 = vmatprep.subr.bf16.mxu0 0
    %9220 = vmatpush2.bf16.msra.mxu0 %v9161
    %9221 = vmatprep.subr.bf16.mxu0 0
    %9222 = vmatpush2.bf16.msra.mxu0 %v9160
    %9223 = vmatprep.subr.bf16.mxu0 0
    %9224 = vmatpush2.bf16.msra.mxu0 %v9159
    %9225 = vmatprep.subr.bf16.mxu0 0
    %9226 = vmatpush2.bf16.msra.mxu0 %v9158
    %9227 = vmatprep.subr.bf16.mxu0 0
    %9228 = vmatpush2.bf16.msra.mxu0 %v9157
    %9229 = vmatprep.mubr.bf16.mxu0 %v8862
    %9230 = vmatmul.mubr.bf16.gmra.mxu0 %v8861
    %v9231 = vpop.f32.mrf.mxu0
    %v9232 = vadd.f32 0.0, %v9231
    %v9233 = vpop.f32.mrf.mxu0
    %v9234 = vpop.f32.mrf.mxu0
    %v9235 = vadd.f32 0.0, %v9234
    %v9236 = vpop.f32.mrf.mxu0
    %9237 = vmatprep.mubr.bf16.mxu0 %v8865
    %9238 = vmatmul.mubr.bf16.gmra.mxu0 %v8864
    %v9239 = vpop.f32.mrf.mxu0
    %v9240 = vadd.f32 0.0, %v9239
    %v9241 = vpop.f32.mrf.mxu0
    %v9242 = vpop.f32.mrf.mxu0
    %v9243 = vadd.f32 0.0, %v9242
    %v9244 = vpop.f32.mrf.mxu0
    %9245 = vmatprep.mubr.bf16.mxu0 %v8868
    %9246 = vmatmul.mubr.bf16.gmra.mxu0 %v8867
    %v9247 = vpop.f32.mrf.mxu0
    %v9248 = vadd.f32 0.0, %v9247
    %v9249 = vpop.f32.mrf.mxu0
    %v9250 = vpop.f32.mrf.mxu0
    %v9251 = vadd.f32 0.0, %v9250
    %v9252 = vpop.f32.mrf.mxu0
    %9253 = vmatprep.mubr.bf16.mxu0 %v8871
    %9254 = vmatmul.mubr.bf16.gmra.mxu0 %v8870
    %v9255 = vpop.f32.mrf.mxu0
    %v9256 = vadd.f32 0.0, %v9255
    %v9257 = vpop.f32.mrf.mxu0
    %v9258 = vpop.f32.mrf.mxu0
    %v9259 = vadd.f32 0.0, %v9258
    %v9260 = vpop.f32.mrf.mxu0
    %9261 = vmatprep.mubr.bf16.mxu0 %v8874
    %9262 = vmatmul.mubr.bf16.gmra.mxu0 %v8873
    %v9263 = vpop.f32.mrf.mxu0
    %v9264 = vadd.f32 0.0, %v9263
    %v9265 = vpop.f32.mrf.mxu0
    %v9266 = vpop.f32.mrf.mxu0
    %v9267 = vadd.f32 0.0, %v9266
    %v9268 = vpop.f32.mrf.mxu0
    %9269 = vmatprep.mubr.bf16.mxu0 %v8877
    %9270 = vmatmul.mubr.bf16.gmra.mxu0 %v8876
    %v9271 = vpop.f32.mrf.mxu0
    %v9272 = vadd.f32 0.0, %v9271
    %v9273 = vpop.f32.mrf.mxu0
    %v9274 = vpop.f32.mrf.mxu0
    %v9275 = vadd.f32 0.0, %v9274
    %v9276 = vpop.f32.mrf.mxu0
    %9277 = vmatprep.mubr.bf16.mxu0 %v8880
    %9278 = vmatmul.mubr.bf16.gmra.mxu0 %v8879
    %v9279 = vpop.f32.mrf.mxu0
    %v9280 = vadd.f32 0.0, %v9279
    %v9281 = vpop.f32.mrf.mxu0
    %v9282 = vpop.f32.mrf.mxu0
    %v9283 = vadd.f32 0.0, %v9282
    %v9284 = vpop.f32.mrf.mxu0
    %9285 = vmatprep.mubr.bf16.mxu0 %v8883
    %9286 = vmatmul.mubr.bf16.gmra.mxu0 %v8882
    %v9287 = vpop.f32.mrf.mxu0
    %v9288 = vadd.f32 0.0, %v9287
    %v9289 = vpop.f32.mrf.mxu0
    %v9290 = vpop.f32.mrf.mxu0
    %v9291 = vadd.f32 0.0, %v9290
    %v9292 = vpop.f32.mrf.mxu0
    %9293 = vmatprep.mubr.bf16.mxu0 %v8886
    %9294 = vmatmul.mubr.bf16.gmra.mxu0 %v8885
    %v9295 = vpop.f32.mrf.mxu0
    %v9296 = vadd.f32 0.0, %v9295
    %v9297 = vpop.f32.mrf.mxu0
    %v9298 = vpop.f32.mrf.mxu0
    %v9299 = vadd.f32 0.0, %v9298
    %v9300 = vpop.f32.mrf.mxu0
    %9301 = vmatprep.mubr.bf16.mxu0 %v8889
    %9302 = vmatmul.mubr.bf16.gmra.mxu0 %v8888
    %v9303 = vpop.f32.mrf.mxu0
    %v9304 = vadd.f32 0.0, %v9303
    %v9305 = vpop.f32.mrf.mxu0
    %v9306 = vpop.f32.mrf.mxu0
    %v9307 = vadd.f32 0.0, %v9306
    %v9308 = vpop.f32.mrf.mxu0
    %9309 = vmatprep.mubr.bf16.mxu0 %v8892
    %9310 = vmatmul.mubr.bf16.gmra.mxu0 %v8891
    %v9311 = vpop.f32.mrf.mxu0
    %v9312 = vadd.f32 0.0, %v9311
    %v9313 = vpop.f32.mrf.mxu0
    %v9314 = vpop.f32.mrf.mxu0
    %v9315 = vadd.f32 0.0, %v9314
    %v9316 = vpop.f32.mrf.mxu0
    %9317 = vmatprep.mubr.bf16.mxu0 %v8895
    %9318 = vmatmul.mubr.bf16.gmra.mxu0 %v8894
    %v9319 = vpop.f32.mrf.mxu0
    %v9320 = vadd.f32 0.0, %v9319
    %v9321 = vpop.f32.mrf.mxu0
    %v9322 = vpop.f32.mrf.mxu0
    %v9323 = vadd.f32 0.0, %v9322
    %v9324 = vpop.f32.mrf.mxu0
    %9325 = vmatprep.mubr.bf16.mxu0 %v8898
    %9326 = vmatmul.mubr.bf16.gmra.mxu0 %v8897
    %v9327 = vpop.f32.mrf.mxu0
    %v9328 = vadd.f32 0.0, %v9327
    %v9329 = vpop.f32.mrf.mxu0
    %v9330 = vpop.f32.mrf.mxu0
    %v9331 = vadd.f32 0.0, %v9330
    %v9332 = vpop.f32.mrf.mxu0
    %9333 = vmatprep.mubr.bf16.mxu0 %v8901
    %9334 = vmatmul.mubr.bf16.gmra.mxu0 %v8900
    %v9335 = vpop.f32.mrf.mxu0
    %v9336 = vadd.f32 0.0, %v9335
    %v9337 = vpop.f32.mrf.mxu0
    %v9338 = vpop.f32.mrf.mxu0
    %v9339 = vadd.f32 0.0, %v9338
    %v9340 = vpop.f32.mrf.mxu0
    %9341 = vmatprep.mubr.bf16.mxu0 %v8904
    %9342 = vmatmul.mubr.bf16.gmra.mxu0 %v8903
    %v9343 = vpop.f32.mrf.mxu0
    %v9344 = vadd.f32 0.0, %v9343
    %v9345 = vpop.f32.mrf.mxu0
    %v9346 = vpop.f32.mrf.mxu0
    %v9347 = vadd.f32 0.0, %v9346
    %v9348 = vpop.f32.mrf.mxu0
    %9349 = vmatprep.mubr.bf16.mxu0 %v8907
    %9350 = vmatmul.mubr.bf16.gmra.mxu0 %v8906
    %v9351 = vpop.f32.mrf.mxu0
    %v9352 = vadd.f32 0.0, %v9351
    %v9353 = vpop.f32.mrf.mxu0
    %v9354 = vpop.f32.mrf.mxu0
    %v9355 = vadd.f32 0.0, %v9354
    %v9356 = vpop.f32.mrf.mxu0
    %9357 = vmatprep.mubr.bf16.mxu0 %v8910
    %9358 = vmatmul.mubr.bf16.gmra.mxu0 %v8909
    %v9359 = vpop.f32.mrf.mxu0
    %v9360 = vadd.f32 0.0, %v9359
    %v9361 = vpop.f32.mrf.mxu0
    %v9362 = vpop.f32.mrf.mxu0
    %v9363 = vadd.f32 0.0, %v9362
    %v9364 = vpop.f32.mrf.mxu0
    %9365 = vmatprep.mubr.bf16.mxu0 %v8913
    %9366 = vmatmul.mubr.bf16.gmra.mxu0 %v8912
    %v9367 = vpop.f32.mrf.mxu0
    %v9368 = vadd.f32 0.0, %v9367
    %v9369 = vpop.f32.mrf.mxu0
    %v9370 = vpop.f32.mrf.mxu0
    %v9371 = vadd.f32 0.0, %v9370
    %v9372 = vpop.f32.mrf.mxu0
    %9373 = vmatprep.mubr.bf16.mxu0 %v8916
    %9374 = vmatmul.mubr.bf16.gmra.mxu0 %v8915
    %v9375 = vpop.f32.mrf.mxu0
    %v9376 = vadd.f32 0.0, %v9375
    %v9377 = vpop.f32.mrf.mxu0
    %v9378 = vpop.f32.mrf.mxu0
    %v9379 = vadd.f32 0.0, %v9378
    %v9380 = vpop.f32.mrf.mxu0
    %9381 = vmatprep.mubr.bf16.mxu0 %v8919
    %9382 = vmatmul.mubr.bf16.gmra.mxu0 %v8918
    %v9383 = vpop.f32.mrf.mxu0
    %v9384 = vadd.f32 0.0, %v9383
    %v9385 = vpop.f32.mrf.mxu0
    %v9386 = vpop.f32.mrf.mxu0
    %v9387 = vadd.f32 0.0, %v9386
    %v9388 = vpop.f32.mrf.mxu0
    %9389 = vmatprep.mubr.bf16.mxu0 %v8922
    %9390 = vmatmul.mubr.bf16.gmra.mxu0 %v8921
    %v9391 = vpop.f32.mrf.mxu0
    %v9392 = vadd.f32 0.0, %v9391
    %v9393 = vpop.f32.mrf.mxu0
    %v9394 = vpop.f32.mrf.mxu0
    %v9395 = vadd.f32 0.0, %v9394
    %v9396 = vpop.f32.mrf.mxu0
    %9397 = vmatprep.mubr.bf16.mxu0 %v8925
    %9398 = vmatmul.mubr.bf16.gmra.mxu0 %v8924
    %v9399 = vpop.f32.mrf.mxu0
    %v9400 = vadd.f32 0.0, %v9399
    %v9401 = vpop.f32.mrf.mxu0
    %v9402 = vpop.f32.mrf.mxu0
    %v9403 = vadd.f32 0.0, %v9402
    %v9404 = vpop.f32.mrf.mxu0
    %9405 = vmatprep.mubr.bf16.mxu0 %v8928
    %9406 = vmatmul.mubr.bf16.gmra.mxu0 %v8927
    %v9407 = vpop.f32.mrf.mxu0
    %v9408 = vadd.f32 0.0, %v9407
    %v9409 = vpop.f32.mrf.mxu0
    %v9410 = vpop.f32.mrf.mxu0
    %v9411 = vadd.f32 0.0, %v9410
    %v9412 = vpop.f32.mrf.mxu0
    %9413 = vmatprep.mubr.bf16.mxu0 %v8931
    %9414 = vmatmul.mubr.bf16.gmra.mxu0 %v8930
    %v9415 = vpop.f32.mrf.mxu0
    %v9416 = vadd.f32 0.0, %v9415
    %v9417 = vpop.f32.mrf.mxu0
    %v9418 = vpop.f32.mrf.mxu0
    %v9419 = vadd.f32 0.0, %v9418
    %v9420 = vpop.f32.mrf.mxu0
    %9421 = vmatprep.mubr.bf16.mxu0 %v8934
    %9422 = vmatmul.mubr.bf16.gmra.mxu0 %v8933
    %v9423 = vpop.f32.mrf.mxu0
    %v9424 = vadd.f32 0.0, %v9423
    %v9425 = vpop.f32.mrf.mxu0
    %v9426 = vpop.f32.mrf.mxu0
    %v9427 = vadd.f32 0.0, %v9426
    %v9428 = vpop.f32.mrf.mxu0
    %9429 = vmatprep.mubr.bf16.mxu0 %v8937
    %9430 = vmatmul.mubr.bf16.gmra.mxu0 %v8936
    %v9431 = vpop.f32.mrf.mxu0
    %v9432 = vadd.f32 0.0, %v9431
    %v9433 = vpop.f32.mrf.mxu0
    %v9434 = vpop.f32.mrf.mxu0
    %v9435 = vadd.f32 0.0, %v9434
    %v9436 = vpop.f32.mrf.mxu0
    %9437 = vmatprep.mubr.bf16.mxu0 %v8940
    %9438 = vmatmul.mubr.bf16.gmra.mxu0 %v8939
    %v9439 = vpop.f32.mrf.mxu0
    %v9440 = vadd.f32 0.0, %v9439
    %v9441 = vpop.f32.mrf.mxu0
    %v9442 = vpop.f32.mrf.mxu0
    %v9443 = vadd.f32 0.0, %v9442
    %v9444 = vpop.f32.mrf.mxu0
    %9445 = vmatprep.mubr.bf16.mxu0 %v8943
    %9446 = vmatmul.mubr.bf16.gmra.mxu0 %v8942
    %v9447 = vpop.f32.mrf.mxu0
    %v9448 = vadd.f32 0.0, %v9447
    %v9449 = vpop.f32.mrf.mxu0
    %v9450 = vpop.f32.mrf.mxu0
    %v9451 = vadd.f32 0.0, %v9450
    %v9452 = vpop.f32.mrf.mxu0
    %9453 = vmatprep.mubr.bf16.mxu0 %v8946
    %9454 = vmatmul.mubr.bf16.gmra.mxu0 %v8945
    %v9455 = vpop.f32.mrf.mxu0
    %v9456 = vadd.f32 0.0, %v9455
    %v9457 = vpop.f32.mrf.mxu0
    %v9458 = vpop.f32.mrf.mxu0
    %v9459 = vadd.f32 0.0, %v9458
    %v9460 = vpop.f32.mrf.mxu0
    %9461 = vmatprep.mubr.bf16.mxu0 %v8949
    %9462 = vmatmul.mubr.bf16.gmra.mxu0 %v8948
    %v9463 = vpop.f32.mrf.mxu0
    %v9464 = vadd.f32 0.0, %v9463
    %v9465 = vpop.f32.mrf.mxu0
    %v9466 = vpop.f32.mrf.mxu0
    %v9467 = vadd.f32 0.0, %v9466
    %v9468 = vpop.f32.mrf.mxu0
    %9469 = vmatprep.mubr.bf16.mxu0 %v8952
    %9470 = vmatmul.mubr.bf16.gmra.mxu0 %v8951
    %v9471 = vpop.f32.mrf.mxu0
    %v9472 = vadd.f32 0.0, %v9471
    %v9473 = vpop.f32.mrf.mxu0
    %v9474 = vpop.f32.mrf.mxu0
    %v9475 = vadd.f32 0.0, %v9474
    %v9476 = vpop.f32.mrf.mxu0
    %9477 = vmatprep.mubr.bf16.mxu0 %v8955
    %9478 = vmatmul.mubr.bf16.gmra.mxu0 %v8954
    %v9479 = vpop.f32.mrf.mxu0
    %v9480 = vadd.f32 0.0, %v9479
    %v9481 = vpop.f32.mrf.mxu0
    %v9482 = vpop.f32.mrf.mxu0
    %v9483 = vadd.f32 0.0, %v9482
    %v9484 = vpop.f32.mrf.mxu0
    %9485 = vdwg.mxu0
    %9486 = vmatprep.subr.bf16.mxu0 0
    %9487 = vmatpush1.bf16.msra.mxu0 %v9172
    %9488 = vmatprep.subr.bf16.mxu0 0
    %9489 = vmatpush1.bf16.msra.mxu0 %v9171
    %9490 = vmatprep.subr.bf16.mxu0 0
    %9491 = vmatpush1.bf16.msra.mxu0 %v9170
    %9492 = vmatprep.subr.bf16.mxu0 0
    %9493 = vmatpush1.bf16.msra.mxu0 %v9169
    %9494 = vmatprep.subr.bf16.mxu0 0
    %9495 = vmatpush1.bf16.msra.mxu0 %v9168
    %9496 = vmatprep.subr.bf16.mxu0 0
    %9497 = vmatpush1.bf16.msra.mxu0 %v9167
    %9498 = vmatprep.subr.bf16.mxu0 0
    %9499 = vmatpush1.bf16.msra.mxu0 %v9166
    %9500 = vmatprep.subr.bf16.mxu0 0
    %9501 = vmatpush1.bf16.msra.mxu0 %v9165
    %9502 = vmatprep.subr.bf16.mxu0 0
    %9503 = vmatpush2.bf16.msra.mxu0 0
    %9504 = vmatprep.subr.bf16.mxu0 0
    %9505 = vmatpush2.bf16.msra.mxu0 0
    %9506 = vmatprep.subr.bf16.mxu0 0
    %9507 = vmatpush2.bf16.msra.mxu0 0
    %9508 = vmatprep.subr.bf16.mxu0 0
    %9509 = vmatpush2.bf16.msra.mxu0 0
    %9510 = vmatprep.subr.bf16.mxu0 0
    %9511 = vmatpush2.bf16.msra.mxu0 0
    %9512 = vmatprep.subr.bf16.mxu0 0
    %9513 = vmatpush2.bf16.msra.mxu0 0
    %9514 = vmatprep.subr.bf16.mxu0 0
    %9515 = vmatpush2.bf16.msra.mxu0 0
    %9516 = vmatprep.subr.bf16.mxu0 0
    %9517 = vmatpush2.bf16.msra.mxu0 0
    %9518 = vmatprep.mubr.bf16.mxu0 0
    %9519 = vmatmul.mubr.bf16.gmra.mxu0 %v8863
    %v9520 = vpop.f32.mrf.mxu0
    %v9521 = vadd.f32 %v9232, %v9520
    %v9522 = vpop.f32.mrf.mxu0
    %v9523 = vpop.f32.mrf.mxu0
    %v9524 = vadd.f32 %v9235, %v9523
    %v9525 = vpop.f32.mrf.mxu0
    %9526 = vmatprep.mubr.bf16.mxu0 0
    %9527 = vmatmul.mubr.bf16.gmra.mxu0 %v8866
    %v9528 = vpop.f32.mrf.mxu0
    %v9529 = vadd.f32 %v9240, %v9528
    %v9530 = vpop.f32.mrf.mxu0
    %v9531 = vpop.f32.mrf.mxu0
    %v9532 = vadd.f32 %v9243, %v9531
    %v9533 = vpop.f32.mrf.mxu0
    %9534 = vmatprep.mubr.bf16.mxu0 0
    %9535 = vmatmul.mubr.bf16.gmra.mxu0 %v8869
    %v9536 = vpop.f32.mrf.mxu0
    %v9537 = vadd.f32 %v9248, %v9536
    %v9538 = vpop.f32.mrf.mxu0
    %v9539 = vpop.f32.mrf.mxu0
    %v9540 = vadd.f32 %v9251, %v9539
    %v9541 = vpop.f32.mrf.mxu0
    %9542 = vmatprep.mubr.bf16.mxu0 0
    %9543 = vmatmul.mubr.bf16.gmra.mxu0 %v8872
    %v9544 = vpop.f32.mrf.mxu0
    %v9545 = vadd.f32 %v9256, %v9544
    %v9546 = vpop.f32.mrf.mxu0
    %v9547 = vpop.f32.mrf.mxu0
    %v9548 = vadd.f32 %v9259, %v9547
    %v9549 = vpop.f32.mrf.mxu0
    %9550 = vmatprep.mubr.bf16.mxu0 0
    %9551 = vmatmul.mubr.bf16.gmra.mxu0 %v8875
    %v9552 = vpop.f32.mrf.mxu0
    %v9553 = vadd.f32 %v9264, %v9552
    %v9554 = vpop.f32.mrf.mxu0
    %v9555 = vpop.f32.mrf.mxu0
    %v9556 = vadd.f32 %v9267, %v9555
    %v9557 = vpop.f32.mrf.mxu0
    %9558 = vmatprep.mubr.bf16.mxu0 0
    %9559 = vmatmul.mubr.bf16.gmra.mxu0 %v8878
    %v9560 = vpop.f32.mrf.mxu0
    %v9561 = vadd.f32 %v9272, %v9560
    %v9562 = vpop.f32.mrf.mxu0
    %v9563 = vpop.f32.mrf.mxu0
    %v9564 = vadd.f32 %v9275, %v9563
    %v9565 = vpop.f32.mrf.mxu0
    %9566 = vmatprep.mubr.bf16.mxu0 0
    %9567 = vmatmul.mubr.bf16.gmra.mxu0 %v8881
    %v9568 = vpop.f32.mrf.mxu0
    %v9569 = vadd.f32 %v9280, %v9568
    %v9570 = vpop.f32.mrf.mxu0
    %v9571 = vpop.f32.mrf.mxu0
    %v9572 = vadd.f32 %v9283, %v9571
    %v9573 = vpop.f32.mrf.mxu0
    %9574 = vmatprep.mubr.bf16.mxu0 0
    %9575 = vmatmul.mubr.bf16.gmra.mxu0 %v8884
    %v9576 = vpop.f32.mrf.mxu0
    %v9577 = vadd.f32 %v9288, %v9576
    %v9578 = vpop.f32.mrf.mxu0
    %v9579 = vpop.f32.mrf.mxu0
    %v9580 = vadd.f32 %v9291, %v9579
    %v9581 = vpop.f32.mrf.mxu0
    %9582 = vmatprep.mubr.bf16.mxu0 0
    %9583 = vmatmul.mubr.bf16.gmra.mxu0 %v8887
    %v9584 = vpop.f32.mrf.mxu0
    %v9585 = vadd.f32 %v9296, %v9584
    %v9586 = vpop.f32.mrf.mxu0
    %v9587 = vpop.f32.mrf.mxu0
    %v9588 = vadd.f32 %v9299, %v9587
    %v9589 = vpop.f32.mrf.mxu0
    %9590 = vmatprep.mubr.bf16.mxu0 0
    %9591 = vmatmul.mubr.bf16.gmra.mxu0 %v8890
    %v9592 = vpop.f32.mrf.mxu0
    %v9593 = vadd.f32 %v9304, %v9592
    %v9594 = vpop.f32.mrf.mxu0
    %v9595 = vpop.f32.mrf.mxu0
    %v9596 = vadd.f32 %v9307, %v9595
    %v9597 = vpop.f32.mrf.mxu0
    %9598 = vmatprep.mubr.bf16.mxu0 0
    %9599 = vmatmul.mubr.bf16.gmra.mxu0 %v8893
    %v9600 = vpop.f32.mrf.mxu0
    %v9601 = vadd.f32 %v9312, %v9600
    %v9602 = vpop.f32.mrf.mxu0
    %v9603 = vpop.f32.mrf.mxu0
    %v9604 = vadd.f32 %v9315, %v9603
    %v9605 = vpop.f32.mrf.mxu0
    %9606 = vmatprep.mubr.bf16.mxu0 0
    %9607 = vmatmul.mubr.bf16.gmra.mxu0 %v8896
    %v9608 = vpop.f32.mrf.mxu0
    %v9609 = vadd.f32 %v9320, %v9608
    %v9610 = vpop.f32.mrf.mxu0
    %v9611 = vpop.f32.mrf.mxu0
    %v9612 = vadd.f32 %v9323, %v9611
    %v9613 = vpop.f32.mrf.mxu0
    %9614 = vmatprep.mubr.bf16.mxu0 0
    %9615 = vmatmul.mubr.bf16.gmra.mxu0 %v8899
    %v9616 = vpop.f32.mrf.mxu0
    %v9617 = vadd.f32 %v9328, %v9616
    %v9618 = vpop.f32.mrf.mxu0
    %v9619 = vpop.f32.mrf.mxu0
    %v9620 = vadd.f32 %v9331, %v9619
    %v9621 = vpop.f32.mrf.mxu0
    %9622 = vmatprep.mubr.bf16.mxu0 0
    %9623 = vmatmul.mubr.bf16.gmra.mxu0 %v8902
    %v9624 = vpop.f32.mrf.mxu0
    %v9625 = vadd.f32 %v9336, %v9624
    %v9626 = vpop.f32.mrf.mxu0
    %v9627 = vpop.f32.mrf.mxu0
    %v9628 = vadd.f32 %v9339, %v9627
    %v9629 = vpop.f32.mrf.mxu0
    %9630 = vmatprep.mubr.bf16.mxu0 0
    %9631 = vmatmul.mubr.bf16.gmra.mxu0 %v8905
    %v9632 = vpop.f32.mrf.mxu0
    %v9633 = vadd.f32 %v9344, %v9632
    %v9634 = vpop.f32.mrf.mxu0
    %v9635 = vpop.f32.mrf.mxu0
    %v9636 = vadd.f32 %v9347, %v9635
    %v9637 = vpop.f32.mrf.mxu0
    %9638 = vmatprep.mubr.bf16.mxu0 0
    %9639 = vmatmul.mubr.bf16.gmra.mxu0 %v8908
    %v9640 = vpop.f32.mrf.mxu0
    %v9641 = vadd.f32 %v9352, %v9640
    %v9642 = vpop.f32.mrf.mxu0
    %v9643 = vpop.f32.mrf.mxu0
    %v9644 = vadd.f32 %v9355, %v9643
    %v9645 = vpop.f32.mrf.mxu0
    %9646 = vmatprep.mubr.bf16.mxu0 0
    %9647 = vmatmul.mubr.bf16.gmra.mxu0 %v8911
    %v9648 = vpop.f32.mrf.mxu0
    %v9649 = vadd.f32 %v9360, %v9648
    %v9650 = vpop.f32.mrf.mxu0
    %v9651 = vpop.f32.mrf.mxu0
    %v9652 = vadd.f32 %v9363, %v9651
    %v9653 = vpop.f32.mrf.mxu0
    %9654 = vmatprep.mubr.bf16.mxu0 0
    %9655 = vmatmul.mubr.bf16.gmra.mxu0 %v8914
    %v9656 = vpop.f32.mrf.mxu0
    %v9657 = vadd.f32 %v9368, %v9656
    %v9658 = vpop.f32.mrf.mxu0
    %v9659 = vpop.f32.mrf.mxu0
    %v9660 = vadd.f32 %v9371, %v9659
    %v9661 = vpop.f32.mrf.mxu0
    %9662 = vmatprep.mubr.bf16.mxu0 0
    %9663 = vmatmul.mubr.bf16.gmra.mxu0 %v8917
    %v9664 = vpop.f32.mrf.mxu0
    %v9665 = vadd.f32 %v9376, %v9664
    %v9666 = vpop.f32.mrf.mxu0
    %v9667 = vpop.f32.mrf.mxu0
    %v9668 = vadd.f32 %v9379, %v9667
    %v9669 = vpop.f32.mrf.mxu0
    %9670 = vmatprep.mubr.bf16.mxu0 0
    %9671 = vmatmul.mubr.bf16.gmra.mxu0 %v8920
    %v9672 = vpop.f32.mrf.mxu0
    %v9673 = vadd.f32 %v9384, %v9672
    %v9674 = vpop.f32.mrf.mxu0
    %v9675 = vpop.f32.mrf.mxu0
    %v9676 = vadd.f32 %v9387, %v9675
    %v9677 = vpop.f32.mrf.mxu0
    %9678 = vmatprep.mubr.bf16.mxu0 0
    %9679 = vmatmul.mubr.bf16.gmra.mxu0 %v8923
    %v9680 = vpop.f32.mrf.mxu0
    %v9681 = vadd.f32 %v9392, %v9680
    %v9682 = vpop.f32.mrf.mxu0
    %v9683 = vpop.f32.mrf.mxu0
    %v9684 = vadd.f32 %v9395, %v9683
    %v9685 = vpop.f32.mrf.mxu0
    %9686 = vmatprep.mubr.bf16.mxu0 0
    %9687 = vmatmul.mubr.bf16.gmra.mxu0 %v8926
    %v9688 = vpop.f32.mrf.mxu0
    %v9689 = vadd.f32 %v9400, %v9688
    %v9690 = vpop.f32.mrf.mxu0
    %v9691 = vpop.f32.mrf.mxu0
    %v9692 = vadd.f32 %v9403, %v9691
    %v9693 = vpop.f32.mrf.mxu0
    %9694 = vmatprep.mubr.bf16.mxu0 0
    %9695 = vmatmul.mubr.bf16.gmra.mxu0 %v8929
    %v9696 = vpop.f32.mrf.mxu0
    %v9697 = vadd.f32 %v9408, %v9696
    %v9698 = vpop.f32.mrf.mxu0
    %v9699 = vpop.f32.mrf.mxu0
    %v9700 = vadd.f32 %v9411, %v9699
    %v9701 = vpop.f32.mrf.mxu0
    %9702 = vmatprep.mubr.bf16.mxu0 0
    %9703 = vmatmul.mubr.bf16.gmra.mxu0 %v8932
    %v9704 = vpop.f32.mrf.mxu0
    %v9705 = vadd.f32 %v9416, %v9704
    %v9706 = vpop.f32.mrf.mxu0
    %v9707 = vpop.f32.mrf.mxu0
    %v9708 = vadd.f32 %v9419, %v9707
    %v9709 = vpop.f32.mrf.mxu0
    %9710 = vmatprep.mubr.bf16.mxu0 0
    %9711 = vmatmul.mubr.bf16.gmra.mxu0 %v8935
    %v9712 = vpop.f32.mrf.mxu0
    %v9713 = vadd.f32 %v9424, %v9712
    %v9714 = vpop.f32.mrf.mxu0
    %v9715 = vpop.f32.mrf.mxu0
    %v9716 = vadd.f32 %v9427, %v9715
    %v9717 = vpop.f32.mrf.mxu0
    %9718 = vmatprep.mubr.bf16.mxu0 0
    %9719 = vmatmul.mubr.bf16.gmra.mxu0 %v8938
    %v9720 = vpop.f32.mrf.mxu0
    %v9721 = vadd.f32 %v9432, %v9720
    %v9722 = vpop.f32.mrf.mxu0
    %v9723 = vpop.f32.mrf.mxu0
    %v9724 = vadd.f32 %v9435, %v9723
    %v9725 = vpop.f32.mrf.mxu0
    %9726 = vmatprep.mubr.bf16.mxu0 0
    %9727 = vmatmul.mubr.bf16.gmra.mxu0 %v8941
    %v9728 = vpop.f32.mrf.mxu0
    %v9729 = vadd.f32 %v9440, %v9728
    %v9730 = vpop.f32.mrf.mxu0
    %v9731 = vpop.f32.mrf.mxu0
    %v9732 = vadd.f32 %v9443, %v9731
    %v9733 = vpop.f32.mrf.mxu0
    %9734 = vmatprep.mubr.bf16.mxu0 0
    %9735 = vmatmul.mubr.bf16.gmra.mxu0 %v8944
    %v9736 = vpop.f32.mrf.mxu0
    %v9737 = vadd.f32 %v9448, %v9736
    %v9738 = vpop.f32.mrf.mxu0
    %v9739 = vpop.f32.mrf.mxu0
    %v9740 = vadd.f32 %v9451, %v9739
    %v9741 = vpop.f32.mrf.mxu0
    %9742 = vmatprep.mubr.bf16.mxu0 0
    %9743 = vmatmul.mubr.bf16.gmra.mxu0 %v8947
    %v9744 = vpop.f32.mrf.mxu0
    %v9745 = vadd.f32 %v9456, %v9744
    %v9746 = vpop.f32.mrf.mxu0
    %v9747 = vpop.f32.mrf.mxu0
    %v9748 = vadd.f32 %v9459, %v9747
    %v9749 = vpop.f32.mrf.mxu0
    %9750 = vmatprep.mubr.bf16.mxu0 0
    %9751 = vmatmul.mubr.bf16.gmra.mxu0 %v8950
    %v9752 = vpop.f32.mrf.mxu0
    %v9753 = vadd.f32 %v9464, %v9752
    %v9754 = vpop.f32.mrf.mxu0
    %v9755 = vpop.f32.mrf.mxu0
    %v9756 = vadd.f32 %v9467, %v9755
    %v9757 = vpop.f32.mrf.mxu0
    %9758 = vmatprep.mubr.bf16.mxu0 0
    %9759 = vmatmul.mubr.bf16.gmra.mxu0 %v8953
    %v9760 = vpop.f32.mrf.mxu0
    %v9761 = vadd.f32 %v9472, %v9760
    %v9762 = vpop.f32.mrf.mxu0
    %v9763 = vpop.f32.mrf.mxu0
    %v9764 = vadd.f32 %v9475, %v9763
    %v9765 = vpop.f32.mrf.mxu0
    %9766 = vmatprep.mubr.bf16.mxu0 0
    %9767 = vmatmul.mubr.bf16.gmra.mxu0 %v8956
    %v9768 = vpop.f32.mrf.mxu0
    %v9769 = vadd.f32 %v9480, %v9768
    %v9770 = vpop.f32.mrf.mxu0
    %v9771 = vpop.f32.mrf.mxu0
    %v9772 = vadd.f32 %v9483, %v9771
    %v9773 = vpop.f32.mrf.mxu0
    %9774 = vdwg.mxu0
    %v9903 = vunpack.c.l.b16 %v8285
    %v9904 = vunpack.c.h.b16 %v8285
    %v9905 = vunpack.c.l.b16 %v8286
    %v9906 = vunpack.c.l.b16 %v8287
    %v9907 = vunpack.c.h.b16 %v8287
    %v9908 = vunpack.c.l.b16 %v8288
    %v9909 = vunpack.c.l.b16 %v8289
    %v9910 = vunpack.c.h.b16 %v8289
    %v9911 = vunpack.c.l.b16 %v8290
    %v9912 = vunpack.c.l.b16 %v8291
    %v9913 = vunpack.c.h.b16 %v8291
    %v9914 = vunpack.c.l.b16 %v8292
    %v9915 = vunpack.c.l.b16 %v8293
    %v9916 = vunpack.c.h.b16 %v8293
    %v9917 = vunpack.c.l.b16 %v8294
    %v9918 = vunpack.c.l.b16 %v8295
    %v9919 = vunpack.c.h.b16 %v8295
    %v9920 = vunpack.c.l.b16 %v8296
    %v9921 = vunpack.c.l.b16 %v8297
    %v9922 = vunpack.c.h.b16 %v8297
    %v9923 = vunpack.c.l.b16 %v8298
    %v9924 = vunpack.c.l.b16 %v8299
    %v9925 = vunpack.c.h.b16 %v8299
    %v9926 = vunpack.c.l.b16 %v8300
    %v9927 = vunpack.c.l.b16 %v8301
    %v9928 = vunpack.c.h.b16 %v8301
    %v9929 = vunpack.c.l.b16 %v8302
    %v9930 = vunpack.c.l.b16 %v8303
    %v9931 = vunpack.c.h.b16 %v8303
    %v9932 = vunpack.c.l.b16 %v8304
    %v9933 = vunpack.c.l.b16 %v8305
    %v9934 = vunpack.c.h.b16 %v8305
    %v9935 = vunpack.c.l.b16 %v8306
    %v9936 = vunpack.c.l.b16 %v8307
    %v9937 = vunpack.c.h.b16 %v8307
    %v9938 = vunpack.c.l.b16 %v8308
    %v9939 = vunpack.c.l.b16 %v8309
    %v9940 = vunpack.c.h.b16 %v8309
    %v9941 = vunpack.c.l.b16 %v8310
    %v9942 = vunpack.c.l.b16 %v8311
    %v9943 = vunpack.c.h.b16 %v8311
    %v9944 = vunpack.c.l.b16 %v8312
    %v9945 = vunpack.c.l.b16 %v8313
    %v9946 = vunpack.c.h.b16 %v8313
    %v9947 = vunpack.c.l.b16 %v8314
    %v9948 = vunpack.c.l.b16 %v8315
    %v9949 = vunpack.c.h.b16 %v8315
    %v9950 = vunpack.c.l.b16 %v8316
    %v9951 = vunpack.c.l.b16 %v8317
    %v9952 = vunpack.c.h.b16 %v8317
    %v9953 = vunpack.c.l.b16 %v8318
    %v9954 = vunpack.c.l.b16 %v8319
    %v9955 = vunpack.c.h.b16 %v8319
    %v9956 = vunpack.c.l.b16 %v8320
    %v9957 = vunpack.c.l.b16 %v8321
    %v9958 = vunpack.c.h.b16 %v8321
    %v9959 = vunpack.c.l.b16 %v8322
    %v9960 = vunpack.c.l.b16 %v8323
    %v9961 = vunpack.c.h.b16 %v8323
    %v9962 = vunpack.c.l.b16 %v8324
    %v9963 = vunpack.c.l.b16 %v8325
    %v9964 = vunpack.c.h.b16 %v8325
    %v9965 = vunpack.c.l.b16 %v8326
    %v9966 = vunpack.c.l.b16 %v8327
    %v9967 = vunpack.c.h.b16 %v8327
    %v9968 = vunpack.c.l.b16 %v8328
    %v9969 = vunpack.c.l.b16 %v8329
    %v9970 = vunpack.c.h.b16 %v8329
    %v9971 = vunpack.c.l.b16 %v8330
    %v9972 = vunpack.c.l.b16 %v8331
    %v9973 = vunpack.c.h.b16 %v8331
    %v9974 = vunpack.c.l.b16 %v8332
    %v9975 = vunpack.c.l.b16 %v8333
    %v9976 = vunpack.c.h.b16 %v8333
    %v9977 = vunpack.c.l.b16 %v8334
    %v9978 = vunpack.c.l.b16 %v8335
    %v9979 = vunpack.c.h.b16 %v8335
    %v9980 = vunpack.c.l.b16 %v8336
    %v9981 = vunpack.c.l.b16 %v8337
    %v9982 = vunpack.c.h.b16 %v8337
    %v9983 = vunpack.c.l.b16 %v8338
    %v9984 = vunpack.c.l.b16 %v8339
    %v9985 = vunpack.c.h.b16 %v8339
    %v9986 = vunpack.c.l.b16 %v8340
    %v9987 = vunpack.c.l.b16 %v8341
    %v9988 = vunpack.c.h.b16 %v8341
    %v9989 = vunpack.c.l.b16 %v8342
    %v9990 = vunpack.c.l.b16 %v8343
    %v9991 = vunpack.c.h.b16 %v8343
    %v9992 = vunpack.c.l.b16 %v8344
    %v9993 = vunpack.c.l.b16 %v8345
    %v9994 = vunpack.c.h.b16 %v8345
    %v9995 = vunpack.c.l.b16 %v8346
    %v9996 = vunpack.c.l.b16 %v8347
    %v9997 = vunpack.c.h.b16 %v8347
    %v9998 = vunpack.c.l.b16 %v8348
    %v9999 = vunpack.c.l.b16 %v8349
    %v10000 = vunpack.c.h.b16 %v8349
    %v10001 = vunpack.c.l.b16 %v8350
    %v10002 = vunpack.c.l.b16 %v8351
    %v10003 = vunpack.c.h.b16 %v8351
    %v10004 = vunpack.c.l.b16 %v8352
    %v10005 = vunpack.c.l.b16 %v8353
    %v10006 = vunpack.c.h.b16 %v8353
    %v10007 = vunpack.c.l.b16 %v8354
    %v10008 = vunpack.c.l.b16 %v8355
    %v10009 = vunpack.c.h.b16 %v8355
    %v10010 = vunpack.c.l.b16 %v8356
    %v10011 = vunpack.c.l.b16 %v8357
    %v10012 = vunpack.c.h.b16 %v8357
    %v10013 = vunpack.c.l.b16 %v8358
    %v10014 = vunpack.c.l.b16 %v8359
    %v10015 = vunpack.c.h.b16 %v8359
    %v10016 = vunpack.c.l.b16 %v8360
    %v10017 = vunpack.c.l.b16 %v8361
    %v10018 = vunpack.c.h.b16 %v8361
    %v10019 = vunpack.c.l.b16 %v8362
    %v10020 = vunpack.c.l.b16 %v8363
    %v10021 = vunpack.c.h.b16 %v8363
    %v10022 = vunpack.c.l.b16 %v8364
    %v10023 = vunpack.c.l.b16 %v8365
    %v10024 = vunpack.c.h.b16 %v8365
    %v10025 = vunpack.c.l.b16 %v8366
    %v10026 = vunpack.c.l.b16 %v8367
    %v10027 = vunpack.c.h.b16 %v8367
    %v10028 = vunpack.c.l.b16 %v8368
    %v10029 = vunpack.c.l.b16 %v8369
    %v10030 = vunpack.c.h.b16 %v8369
    %v10031 = vunpack.c.l.b16 %v8370
    %v10032 = vunpack.c.l.b16 %v8371
    %v10033 = vunpack.c.h.b16 %v8371
    %v10034 = vunpack.c.l.b16 %v8372
    %v10035 = vunpack.c.l.b16 %v8373
    %v10036 = vunpack.c.h.b16 %v8373
    %v10037 = vunpack.c.l.b16 %v8374
    %v10038 = vunpack.c.l.b16 %v8375
    %v10039 = vunpack.c.h.b16 %v8375
    %v10040 = vunpack.c.l.b16 %v8376
    %v10041 = vunpack.c.l.b16 %v8377
    %v10042 = vunpack.c.h.b16 %v8377
    %v10043 = vunpack.c.l.b16 %v8378
    %v10044 = vunpack.c.l.b16 %v8379
    %v10045 = vunpack.c.h.b16 %v8379
    %v10046 = vunpack.c.l.b16 %v8380
    %v10047 = vunpack.c.l.b16 %v8381
    %v10048 = vunpack.c.h.b16 %v8381
    %v10049 = vunpack.c.l.b16 %v8382
    %v10050 = vunpack.c.l.b16 %v8383
    %v10051 = vunpack.c.h.b16 %v8383
    %v10052 = vunpack.c.l.b16 %v8384
    %v10053 = vunpack.c.l.b16 %v8385
    %v10054 = vunpack.c.h.b16 %v8385
    %v10055 = vunpack.c.l.b16 %v8386
    %v10056 = vunpack.c.l.b16 %v8387
    %v10057 = vunpack.c.h.b16 %v8387
    %v10058 = vunpack.c.l.b16 %v8388
    %v10059 = vunpack.c.l.b16 %v8389
    %v10060 = vunpack.c.h.b16 %v8389
    %v10061 = vunpack.c.l.b16 %v8390
    %v10062 = vunpack.c.l.b16 %v8391
    %v10063 = vunpack.c.h.b16 %v8391
    %v10064 = vunpack.c.l.b16 %v8392
    %v10065 = vunpack.c.l.b16 %v8393
    %v10066 = vunpack.c.h.b16 %v8393
    %v10067 = vunpack.c.l.b16 %v8394
    %v10068 = vunpack.c.l.b16 %v8395
    %v10069 = vunpack.c.h.b16 %v8395
    %v10070 = vunpack.c.l.b16 %v8396
    %v10071 = vunpack.c.l.b16 %v8397
    %v10072 = vunpack.c.h.b16 %v8397
    %v10073 = vunpack.c.l.b16 %v8398
    %v10074 = vunpack.c.l.b16 %v8399
    %v10075 = vunpack.c.h.b16 %v8399
    %v10076 = vunpack.c.l.b16 %v8400
    %v10077 = vunpack.c.l.b16 %v8401
    %v10078 = vunpack.c.h.b16 %v8401
    %v10079 = vunpack.c.l.b16 %v8402
    %v10080 = vunpack.c.l.b16 %v8403
    %v10081 = vunpack.c.h.b16 %v8403
    %v10082 = vunpack.c.l.b16 %v8404
    %v10083 = vunpack.c.l.b16 %v8405
    %v10084 = vunpack.c.h.b16 %v8405
    %v10085 = vunpack.c.l.b16 %v8406
    %v10086 = vunpack.c.l.b16 %v8407
    %v10087 = vunpack.c.h.b16 %v8407
    %v10088 = vunpack.c.l.b16 %v8408
    %v10089 = vunpack.c.l.b16 %v8409
    %v10090 = vunpack.c.h.b16 %v8409
    %v10091 = vunpack.c.l.b16 %v8410
    %v10092 = vunpack.c.l.b16 %v8411
    %v10093 = vunpack.c.h.b16 %v8411
    %v10094 = vunpack.c.l.b16 %v8412
    %v10095 = vpack.c.b16 %v9906, %v9903
    %v10096 = vpack.c.b16 %v9907, %v9904
    %v10097 = vpack.c.b16 %v9908, %v9905
    %v10098 = vpack.c.b16 %v9912, %v9909
    %v10099 = vpack.c.b16 %v9913, %v9910
    %v10100 = vpack.c.b16 %v9914, %v9911
    %v10101 = vpack.c.b16 %v9918, %v9915
    %v10102 = vpack.c.b16 %v9919, %v9916
    %v10103 = vpack.c.b16 %v9920, %v9917
    %v10104 = vpack.c.b16 %v9924, %v9921
    %v10105 = vpack.c.b16 %v9925, %v9922
    %v10106 = vpack.c.b16 %v9926, %v9923
    %v10107 = vpack.c.b16 %v9930, %v9927
    %v10108 = vpack.c.b16 %v9931, %v9928
    %v10109 = vpack.c.b16 %v9932, %v9929
    %v10110 = vpack.c.b16 %v9936, %v9933
    %v10111 = vpack.c.b16 %v9937, %v9934
    %v10112 = vpack.c.b16 %v9938, %v9935
    %v10113 = vpack.c.b16 %v9942, %v9939
    %v10114 = vpack.c.b16 %v9943, %v9940
    %v10115 = vpack.c.b16 %v9944, %v9941
    %v10116 = vpack.c.b16 %v9948, %v9945
    %v10117 = vpack.c.b16 %v9949, %v9946
    %v10118 = vpack.c.b16 %v9950, %v9947
    %v10119 = vpack.c.b16 %v9954, %v9951
    %v10120 = vpack.c.b16 %v9955, %v9952
    %v10121 = vpack.c.b16 %v9956, %v9953
    %v10122 = vpack.c.b16 %v9960, %v9957
    %v10123 = vpack.c.b16 %v9961, %v9958
    %v10124 = vpack.c.b16 %v9962, %v9959
    %v10125 = vpack.c.b16 %v9966, %v9963
    %v10126 = vpack.c.b16 %v9967, %v9964
    %v10127 = vpack.c.b16 %v9968, %v9965
    %v10128 = vpack.c.b16 %v9972, %v9969
    %v10129 = vpack.c.b16 %v9973, %v9970
    %v10130 = vpack.c.b16 %v9974, %v9971
    %v10131 = vpack.c.b16 %v9978, %v9975
    %v10132 = vpack.c.b16 %v9979, %v9976
    %v10133 = vpack.c.b16 %v9980, %v9977
    %v10134 = vpack.c.b16 %v9984, %v9981
    %v10135 = vpack.c.b16 %v9985, %v9982
    %v10136 = vpack.c.b16 %v9986, %v9983
    %v10137 = vpack.c.b16 %v9990, %v9987
    %v10138 = vpack.c.b16 %v9991, %v9988
    %v10139 = vpack.c.b16 %v9992, %v9989
    %v10140 = vpack.c.b16 %v9996, %v9993
    %v10141 = vpack.c.b16 %v9997, %v9994
    %v10142 = vpack.c.b16 %v9998, %v9995
    %v10143 = vpack.c.b16 %v10002, %v9999
    %v10144 = vpack.c.b16 %v10003, %v10000
    %v10145 = vpack.c.b16 %v10004, %v10001
    %v10146 = vpack.c.b16 %v10008, %v10005
    %v10147 = vpack.c.b16 %v10009, %v10006
    %v10148 = vpack.c.b16 %v10010, %v10007
    %v10149 = vpack.c.b16 %v10014, %v10011
    %v10150 = vpack.c.b16 %v10015, %v10012
    %v10151 = vpack.c.b16 %v10016, %v10013
    %v10152 = vpack.c.b16 %v10020, %v10017
    %v10153 = vpack.c.b16 %v10021, %v10018
    %v10154 = vpack.c.b16 %v10022, %v10019
    %v10155 = vpack.c.b16 %v10026, %v10023
    %v10156 = vpack.c.b16 %v10027, %v10024
    %v10157 = vpack.c.b16 %v10028, %v10025
    %v10158 = vpack.c.b16 %v10032, %v10029
    %v10159 = vpack.c.b16 %v10033, %v10030
    %v10160 = vpack.c.b16 %v10034, %v10031
    %v10161 = vpack.c.b16 %v10038, %v10035
    %v10162 = vpack.c.b16 %v10039, %v10036
    %v10163 = vpack.c.b16 %v10040, %v10037
    %v10164 = vpack.c.b16 %v10044, %v10041
    %v10165 = vpack.c.b16 %v10045, %v10042
    %v10166 = vpack.c.b16 %v10046, %v10043
    %v10167 = vpack.c.b16 %v10050, %v10047
    %v10168 = vpack.c.b16 %v10051, %v10048
    %v10169 = vpack.c.b16 %v10052, %v10049
    %v10170 = vpack.c.b16 %v10056, %v10053
    %v10171 = vpack.c.b16 %v10057, %v10054
    %v10172 = vpack.c.b16 %v10058, %v10055
    %v10173 = vpack.c.b16 %v10062, %v10059
    %v10174 = vpack.c.b16 %v10063, %v10060
    %v10175 = vpack.c.b16 %v10064, %v10061
    %v10176 = vpack.c.b16 %v10068, %v10065
    %v10177 = vpack.c.b16 %v10069, %v10066
    %v10178 = vpack.c.b16 %v10070, %v10067
    %v10179 = vpack.c.b16 %v10074, %v10071
    %v10180 = vpack.c.b16 %v10075, %v10072
    %v10181 = vpack.c.b16 %v10076, %v10073
    %v10182 = vpack.c.b16 %v10080, %v10077
    %v10183 = vpack.c.b16 %v10081, %v10078
    %v10184 = vpack.c.b16 %v10082, %v10079
    %v10185 = vpack.c.b16 %v10086, %v10083
    %v10186 = vpack.c.b16 %v10087, %v10084
    %v10187 = vpack.c.b16 %v10088, %v10085
    %v10188 = vpack.c.b16 %v10092, %v10089
    %v10189 = vpack.c.b16 %v10093, %v10090
    %v10190 = vpack.c.b16 %v10094, %v10091
    %v10335 = vunpack.c.l.b16 %v8141
    %v10336 = vunpack.c.l.b16 %v8142
    %v10337 = vunpack.c.l.b16 %v8143
    %v10338 = vunpack.c.l.b16 %v8144
    %v10339 = vunpack.c.l.b16 %v8145
    %v10340 = vunpack.c.l.b16 %v8146
    %v10341 = vunpack.c.l.b16 %v8147
    %v10342 = vunpack.c.l.b16 %v8148
    %v10343 = vunpack.c.l.b16 %v8149
    %v10344 = vunpack.c.l.b16 %v8150
    %v10345 = vunpack.c.l.b16 %v8151
    %v10346 = vunpack.c.l.b16 %v8152
    %v10347 = vunpack.c.l.b16 %v8153
    %v10348 = vunpack.c.l.b16 %v8154
    %v10349 = vunpack.c.l.b16 %v8155
    %v10350 = vunpack.c.l.b16 %v8156
    %v10351 = vunpack.c.l.b16 %v8157
    %v10352 = vunpack.c.l.b16 %v8158
    %v10353 = vunpack.c.l.b16 %v8159
    %v10354 = vunpack.c.l.b16 %v8160
    %v10355 = vunpack.c.l.b16 %v8161
    %v10356 = vunpack.c.l.b16 %v8162
    %v10357 = vunpack.c.l.b16 %v8163
    %v10358 = vunpack.c.l.b16 %v8164
    %v10359 = vunpack.c.l.b16 %v8165
    %v10360 = vunpack.c.l.b16 %v8166
    %v10361 = vunpack.c.l.b16 %v8167
    %v10362 = vunpack.c.l.b16 %v8168
    %v10363 = vunpack.c.l.b16 %v8169
    %v10364 = vunpack.c.l.b16 %v8170
    %v10365 = vunpack.c.l.b16 %v8171
    %v10366 = vunpack.c.l.b16 %v8172
    %v10367 = vunpack.c.l.b16 %v8173
    %v10368 = vunpack.c.l.b16 %v8174
    %v10369 = vunpack.c.l.b16 %v8175
    %v10370 = vunpack.c.l.b16 %v8176
    %v10371 = vunpack.c.l.b16 %v8177
    %v10372 = vunpack.c.l.b16 %v8178
    %v10373 = vunpack.c.l.b16 %v8179
    %v10374 = vunpack.c.l.b16 %v8180
    %v10375 = vunpack.c.l.b16 %v8181
    %v10376 = vunpack.c.l.b16 %v8182
    %v10377 = vunpack.c.l.b16 %v8183
    %v10378 = vunpack.c.l.b16 %v8184
    %v10379 = vunpack.c.l.b16 %v8185
    %v10380 = vunpack.c.l.b16 %v8186
    %v10381 = vunpack.c.l.b16 %v8187
    %v10382 = vunpack.c.l.b16 %v8188
    %v10383 = vpack.c.b16 %v10336, %v10335
    %v10384 = vpack.c.b16 %v10338, %v10337
    %v10385 = vpack.c.b16 %v10340, %v10339
    %v10386 = vpack.c.b16 %v10342, %v10341
    %v10387 = vpack.c.b16 %v10344, %v10343
    %v10388 = vpack.c.b16 %v10346, %v10345
    %v10389 = vpack.c.b16 %v10348, %v10347
    %v10390 = vpack.c.b16 %v10350, %v10349
    %v10391 = vpack.c.b16 %v10352, %v10351
    %v10392 = vpack.c.b16 %v10354, %v10353
    %v10393 = vpack.c.b16 %v10356, %v10355
    %v10394 = vpack.c.b16 %v10358, %v10357
    %v10395 = vpack.c.b16 %v10360, %v10359
    %v10396 = vpack.c.b16 %v10362, %v10361
    %v10397 = vpack.c.b16 %v10364, %v10363
    %v10398 = vpack.c.b16 %v10366, %v10365
    %v10399 = vpack.c.b16 %v10368, %v10367
    %v10400 = vpack.c.b16 %v10370, %v10369
    %v10401 = vpack.c.b16 %v10372, %v10371
    %v10402 = vpack.c.b16 %v10374, %v10373
    %v10403 = vpack.c.b16 %v10376, %v10375
    %v10404 = vpack.c.b16 %v10378, %v10377
    %v10405 = vpack.c.b16 %v10380, %v10379
    %v10406 = vpack.c.b16 %v10382, %v10381
    %10431 = vmatprep.subr.bf16.mxu0 0
    %10432 = vmatpush1.bf16.msra.mxu0 %v10390
    %10433 = vmatprep.subr.bf16.mxu0 0
    %10434 = vmatpush1.bf16.msra.mxu0 %v10389
    %10435 = vmatprep.subr.bf16.mxu0 0
    %10436 = vmatpush1.bf16.msra.mxu0 %v10388
    %10437 = vmatprep.subr.bf16.mxu0 0
    %10438 = vmatpush1.bf16.msra.mxu0 %v10387
    %10439 = vmatprep.subr.bf16.mxu0 0
    %10440 = vmatpush1.bf16.msra.mxu0 %v10386
    %10441 = vmatprep.subr.bf16.mxu0 0
    %10442 = vmatpush1.bf16.msra.mxu0 %v10385
    %10443 = vmatprep.subr.bf16.mxu0 0
    %10444 = vmatpush1.bf16.msra.mxu0 %v10384
    %10445 = vmatprep.subr.bf16.mxu0 0
    %10446 = vmatpush1.bf16.msra.mxu0 %v10383
    %10447 = vmatprep.subr.bf16.mxu0 0
    %10448 = vmatpush2.bf16.msra.mxu0 %v10398
    %10449 = vmatprep.subr.bf16.mxu0 0
    %10450 = vmatpush2.bf16.msra.mxu0 %v10397
    %10451 = vmatprep.subr.bf16.mxu0 0
    %10452 = vmatpush2.bf16.msra.mxu0 %v10396
    %10453 = vmatprep.subr.bf16.mxu0 0
    %10454 = vmatpush2.bf16.msra.mxu0 %v10395
    %10455 = vmatprep.subr.bf16.mxu0 0
    %10456 = vmatpush2.bf16.msra.mxu0 %v10394
    %10457 = vmatprep.subr.bf16.mxu0 0
    %10458 = vmatpush2.bf16.msra.mxu0 %v10393
    %10459 = vmatprep.subr.bf16.mxu0 0
    %10460 = vmatpush2.bf16.msra.mxu0 %v10392
    %10461 = vmatprep.subr.bf16.mxu0 0
    %10462 = vmatpush2.bf16.msra.mxu0 %v10391
    %10463 = vmatprep.mubr.bf16.mxu0 %v10096
    %10464 = vmatmul.mubr.bf16.gmra.mxu0 %v10095
    %v10465 = vpop.f32.mrf.mxu0
    %v10466 = vadd.f32 %v9521, %v10465
    %v10467 = vpop.f32.mrf.mxu0
    %v10468 = vpop.f32.mrf.mxu0
    %v10469 = vadd.f32 %v9524, %v10468
    %v10470 = vpop.f32.mrf.mxu0
    %10471 = vmatprep.mubr.bf16.mxu0 %v10099
    %10472 = vmatmul.mubr.bf16.gmra.mxu0 %v10098
    %v10473 = vpop.f32.mrf.mxu0
    %v10474 = vadd.f32 %v9529, %v10473
    %v10475 = vpop.f32.mrf.mxu0
    %v10476 = vpop.f32.mrf.mxu0
    %v10477 = vadd.f32 %v9532, %v10476
    %v10478 = vpop.f32.mrf.mxu0
    %10479 = vmatprep.mubr.bf16.mxu0 %v10102
    %10480 = vmatmul.mubr.bf16.gmra.mxu0 %v10101
    %v10481 = vpop.f32.mrf.mxu0
    %v10482 = vadd.f32 %v9537, %v10481
    %v10483 = vpop.f32.mrf.mxu0
    %v10484 = vpop.f32.mrf.mxu0
    %v10485 = vadd.f32 %v9540, %v10484
    %v10486 = vpop.f32.mrf.mxu0
    %10487 = vmatprep.mubr.bf16.mxu0 %v10105
    %10488 = vmatmul.mubr.bf16.gmra.mxu0 %v10104
    %v10489 = vpop.f32.mrf.mxu0
    %v10490 = vadd.f32 %v9545, %v10489
    %v10491 = vpop.f32.mrf.mxu0
    %v10492 = vpop.f32.mrf.mxu0
    %v10493 = vadd.f32 %v9548, %v10492
    %v10494 = vpop.f32.mrf.mxu0
    %10495 = vmatprep.mubr.bf16.mxu0 %v10108
    %10496 = vmatmul.mubr.bf16.gmra.mxu0 %v10107
    %v10497 = vpop.f32.mrf.mxu0
    %v10498 = vadd.f32 %v9553, %v10497
    %v10499 = vpop.f32.mrf.mxu0
    %v10500 = vpop.f32.mrf.mxu0
    %v10501 = vadd.f32 %v9556, %v10500
    %v10502 = vpop.f32.mrf.mxu0
    %10503 = vmatprep.mubr.bf16.mxu0 %v10111
    %10504 = vmatmul.mubr.bf16.gmra.mxu0 %v10110
    %v10505 = vpop.f32.mrf.mxu0
    %v10506 = vadd.f32 %v9561, %v10505
    %v10507 = vpop.f32.mrf.mxu0
    %v10508 = vpop.f32.mrf.mxu0
    %v10509 = vadd.f32 %v9564, %v10508
    %v10510 = vpop.f32.mrf.mxu0
    %10511 = vmatprep.mubr.bf16.mxu0 %v10114
    %10512 = vmatmul.mubr.bf16.gmra.mxu0 %v10113
    %v10513 = vpop.f32.mrf.mxu0
    %v10514 = vadd.f32 %v9569, %v10513
    %v10515 = vpop.f32.mrf.mxu0
    %v10516 = vpop.f32.mrf.mxu0
    %v10517 = vadd.f32 %v9572, %v10516
    %v10518 = vpop.f32.mrf.mxu0
    %10519 = vmatprep.mubr.bf16.mxu0 %v10117
    %10520 = vmatmul.mubr.bf16.gmra.mxu0 %v10116
    %v10521 = vpop.f32.mrf.mxu0
    %v10522 = vadd.f32 %v9577, %v10521
    %v10523 = vpop.f32.mrf.mxu0
    %v10524 = vpop.f32.mrf.mxu0
    %v10525 = vadd.f32 %v9580, %v10524
    %v10526 = vpop.f32.mrf.mxu0
    %10527 = vmatprep.mubr.bf16.mxu0 %v10120
    %10528 = vmatmul.mubr.bf16.gmra.mxu0 %v10119
    %v10529 = vpop.f32.mrf.mxu0
    %v10530 = vadd.f32 %v9585, %v10529
    %v10531 = vpop.f32.mrf.mxu0
    %v10532 = vpop.f32.mrf.mxu0
    %v10533 = vadd.f32 %v9588, %v10532
    %v10534 = vpop.f32.mrf.mxu0
    %10535 = vmatprep.mubr.bf16.mxu0 %v10123
    %10536 = vmatmul.mubr.bf16.gmra.mxu0 %v10122
    %v10537 = vpop.f32.mrf.mxu0
    %v10538 = vadd.f32 %v9593, %v10537
    %v10539 = vpop.f32.mrf.mxu0
    %v10540 = vpop.f32.mrf.mxu0
    %v10541 = vadd.f32 %v9596, %v10540
    %v10542 = vpop.f32.mrf.mxu0
    %10543 = vmatprep.mubr.bf16.mxu0 %v10126
    %10544 = vmatmul.mubr.bf16.gmra.mxu0 %v10125
    %v10545 = vpop.f32.mrf.mxu0
    %v10546 = vadd.f32 %v9601, %v10545
    %v10547 = vpop.f32.mrf.mxu0
    %v10548 = vpop.f32.mrf.mxu0
    %v10549 = vadd.f32 %v9604, %v10548
    %v10550 = vpop.f32.mrf.mxu0
    %10551 = vmatprep.mubr.bf16.mxu0 %v10129
    %10552 = vmatmul.mubr.bf16.gmra.mxu0 %v10128
    %v10553 = vpop.f32.mrf.mxu0
    %v10554 = vadd.f32 %v9609, %v10553
    %v10555 = vpop.f32.mrf.mxu0
    %v10556 = vpop.f32.mrf.mxu0
    %v10557 = vadd.f32 %v9612, %v10556
    %v10558 = vpop.f32.mrf.mxu0
    %10559 = vmatprep.mubr.bf16.mxu0 %v10132
    %10560 = vmatmul.mubr.bf16.gmra.mxu0 %v10131
    %v10561 = vpop.f32.mrf.mxu0
    %v10562 = vadd.f32 %v9617, %v10561
    %v10563 = vpop.f32.mrf.mxu0
    %v10564 = vpop.f32.mrf.mxu0
    %v10565 = vadd.f32 %v9620, %v10564
    %v10566 = vpop.f32.mrf.mxu0
    %10567 = vmatprep.mubr.bf16.mxu0 %v10135
    %10568 = vmatmul.mubr.bf16.gmra.mxu0 %v10134
    %v10569 = vpop.f32.mrf.mxu0
    %v10570 = vadd.f32 %v9625, %v10569
    %v10571 = vpop.f32.mrf.mxu0
    %v10572 = vpop.f32.mrf.mxu0
    %v10573 = vadd.f32 %v9628, %v10572
    %v10574 = vpop.f32.mrf.mxu0
    %10575 = vmatprep.mubr.bf16.mxu0 %v10138
    %10576 = vmatmul.mubr.bf16.gmra.mxu0 %v10137
    %v10577 = vpop.f32.mrf.mxu0
    %v10578 = vadd.f32 %v9633, %v10577
    %v10579 = vpop.f32.mrf.mxu0
    %v10580 = vpop.f32.mrf.mxu0
    %v10581 = vadd.f32 %v9636, %v10580
    %v10582 = vpop.f32.mrf.mxu0
    %10583 = vmatprep.mubr.bf16.mxu0 %v10141
    %10584 = vmatmul.mubr.bf16.gmra.mxu0 %v10140
    %v10585 = vpop.f32.mrf.mxu0
    %v10586 = vadd.f32 %v9641, %v10585
    %v10587 = vpop.f32.mrf.mxu0
    %v10588 = vpop.f32.mrf.mxu0
    %v10589 = vadd.f32 %v9644, %v10588
    %v10590 = vpop.f32.mrf.mxu0
    %10591 = vmatprep.mubr.bf16.mxu0 %v10144
    %10592 = vmatmul.mubr.bf16.gmra.mxu0 %v10143
    %v10593 = vpop.f32.mrf.mxu0
    %v10594 = vadd.f32 %v9649, %v10593
    %v10595 = vpop.f32.mrf.mxu0
    %v10596 = vpop.f32.mrf.mxu0
    %v10597 = vadd.f32 %v9652, %v10596
    %v10598 = vpop.f32.mrf.mxu0
    %10599 = vmatprep.mubr.bf16.mxu0 %v10147
    %10600 = vmatmul.mubr.bf16.gmra.mxu0 %v10146
    %v10601 = vpop.f32.mrf.mxu0
    %v10602 = vadd.f32 %v9657, %v10601
    %v10603 = vpop.f32.mrf.mxu0
    %v10604 = vpop.f32.mrf.mxu0
    %v10605 = vadd.f32 %v9660, %v10604
    %v10606 = vpop.f32.mrf.mxu0
    %10607 = vmatprep.mubr.bf16.mxu0 %v10150
    %10608 = vmatmul.mubr.bf16.gmra.mxu0 %v10149
    %v10609 = vpop.f32.mrf.mxu0
    %v10610 = vadd.f32 %v9665, %v10609
    %v10611 = vpop.f32.mrf.mxu0
    %v10612 = vpop.f32.mrf.mxu0
    %v10613 = vadd.f32 %v9668, %v10612
    %v10614 = vpop.f32.mrf.mxu0
    %10615 = vmatprep.mubr.bf16.mxu0 %v10153
    %10616 = vmatmul.mubr.bf16.gmra.mxu0 %v10152
    %v10617 = vpop.f32.mrf.mxu0
    %v10618 = vadd.f32 %v9673, %v10617
    %v10619 = vpop.f32.mrf.mxu0
    %v10620 = vpop.f32.mrf.mxu0
    %v10621 = vadd.f32 %v9676, %v10620
    %v10622 = vpop.f32.mrf.mxu0
    %10623 = vmatprep.mubr.bf16.mxu0 %v10156
    %10624 = vmatmul.mubr.bf16.gmra.mxu0 %v10155
    %v10625 = vpop.f32.mrf.mxu0
    %v10626 = vadd.f32 %v9681, %v10625
    %v10627 = vpop.f32.mrf.mxu0
    %v10628 = vpop.f32.mrf.mxu0
    %v10629 = vadd.f32 %v9684, %v10628
    %v10630 = vpop.f32.mrf.mxu0
    %10631 = vmatprep.mubr.bf16.mxu0 %v10159
    %10632 = vmatmul.mubr.bf16.gmra.mxu0 %v10158
    %v10633 = vpop.f32.mrf.mxu0
    %v10634 = vadd.f32 %v9689, %v10633
    %v10635 = vpop.f32.mrf.mxu0
    %v10636 = vpop.f32.mrf.mxu0
    %v10637 = vadd.f32 %v9692, %v10636
    %v10638 = vpop.f32.mrf.mxu0
    %10639 = vmatprep.mubr.bf16.mxu0 %v10162
    %10640 = vmatmul.mubr.bf16.gmra.mxu0 %v10161
    %v10641 = vpop.f32.mrf.mxu0
    %v10642 = vadd.f32 %v9697, %v10641
    %v10643 = vpop.f32.mrf.mxu0
    %v10644 = vpop.f32.mrf.mxu0
    %v10645 = vadd.f32 %v9700, %v10644
    %v10646 = vpop.f32.mrf.mxu0
    %10647 = vmatprep.mubr.bf16.mxu0 %v10165
    %10648 = vmatmul.mubr.bf16.gmra.mxu0 %v10164
    %v10649 = vpop.f32.mrf.mxu0
    %v10650 = vadd.f32 %v9705, %v10649
    %v10651 = vpop.f32.mrf.mxu0
    %v10652 = vpop.f32.mrf.mxu0
    %v10653 = vadd.f32 %v9708, %v10652
    %v10654 = vpop.f32.mrf.mxu0
    %10655 = vmatprep.mubr.bf16.mxu0 %v10168
    %10656 = vmatmul.mubr.bf16.gmra.mxu0 %v10167
    %v10657 = vpop.f32.mrf.mxu0
    %v10658 = vadd.f32 %v9713, %v10657
    %v10659 = vpop.f32.mrf.mxu0
    %v10660 = vpop.f32.mrf.mxu0
    %v10661 = vadd.f32 %v9716, %v10660
    %v10662 = vpop.f32.mrf.mxu0
    %10663 = vmatprep.mubr.bf16.mxu0 %v10171
    %10664 = vmatmul.mubr.bf16.gmra.mxu0 %v10170
    %v10665 = vpop.f32.mrf.mxu0
    %v10666 = vadd.f32 %v9721, %v10665
    %v10667 = vpop.f32.mrf.mxu0
    %v10668 = vpop.f32.mrf.mxu0
    %v10669 = vadd.f32 %v9724, %v10668
    %v10670 = vpop.f32.mrf.mxu0
    %10671 = vmatprep.mubr.bf16.mxu0 %v10174
    %10672 = vmatmul.mubr.bf16.gmra.mxu0 %v10173
    %v10673 = vpop.f32.mrf.mxu0
    %v10674 = vadd.f32 %v9729, %v10673
    %v10675 = vpop.f32.mrf.mxu0
    %v10676 = vpop.f32.mrf.mxu0
    %v10677 = vadd.f32 %v9732, %v10676
    %v10678 = vpop.f32.mrf.mxu0
    %10679 = vmatprep.mubr.bf16.mxu0 %v10177
    %10680 = vmatmul.mubr.bf16.gmra.mxu0 %v10176
    %v10681 = vpop.f32.mrf.mxu0
    %v10682 = vadd.f32 %v9737, %v10681
    %v10683 = vpop.f32.mrf.mxu0
    %v10684 = vpop.f32.mrf.mxu0
    %v10685 = vadd.f32 %v9740, %v10684
    %v10686 = vpop.f32.mrf.mxu0
    %10687 = vmatprep.mubr.bf16.mxu0 %v10180
    %10688 = vmatmul.mubr.bf16.gmra.mxu0 %v10179
    %v10689 = vpop.f32.mrf.mxu0
    %v10690 = vadd.f32 %v9745, %v10689
    %v10691 = vpop.f32.mrf.mxu0
    %v10692 = vpop.f32.mrf.mxu0
    %v10693 = vadd.f32 %v9748, %v10692
    %v10694 = vpop.f32.mrf.mxu0
    %10695 = vmatprep.mubr.bf16.mxu0 %v10183
    %10696 = vmatmul.mubr.bf16.gmra.mxu0 %v10182
    %v10697 = vpop.f32.mrf.mxu0
    %v10698 = vadd.f32 %v9753, %v10697
    %v10699 = vpop.f32.mrf.mxu0
    %v10700 = vpop.f32.mrf.mxu0
    %v10701 = vadd.f32 %v9756, %v10700
    %v10702 = vpop.f32.mrf.mxu0
    %10703 = vmatprep.mubr.bf16.mxu0 %v10186
    %10704 = vmatmul.mubr.bf16.gmra.mxu0 %v10185
    %v10705 = vpop.f32.mrf.mxu0
    %v10706 = vadd.f32 %v9761, %v10705
    %v10707 = vpop.f32.mrf.mxu0
    %v10708 = vpop.f32.mrf.mxu0
    %v10709 = vadd.f32 %v9764, %v10708
    %v10710 = vpop.f32.mrf.mxu0
    %10711 = vmatprep.mubr.bf16.mxu0 %v10189
    %10712 = vmatmul.mubr.bf16.gmra.mxu0 %v10188
    %v10713 = vpop.f32.mrf.mxu0
    %v10714 = vadd.f32 %v9769, %v10713
    %v10715 = vpop.f32.mrf.mxu0
    %v10716 = vpop.f32.mrf.mxu0
    %v10717 = vadd.f32 %v9772, %v10716
    %v10718 = vpop.f32.mrf.mxu0
    %10719 = vdwg.mxu0
    %10720 = vmatprep.subr.bf16.mxu0 0
    %10721 = vmatpush1.bf16.msra.mxu0 %v10406
    %10722 = vmatprep.subr.bf16.mxu0 0
    %10723 = vmatpush1.bf16.msra.mxu0 %v10405
    %10724 = vmatprep.subr.bf16.mxu0 0
    %10725 = vmatpush1.bf16.msra.mxu0 %v10404
    %10726 = vmatprep.subr.bf16.mxu0 0
    %10727 = vmatpush1.bf16.msra.mxu0 %v10403
    %10728 = vmatprep.subr.bf16.mxu0 0
    %10729 = vmatpush1.bf16.msra.mxu0 %v10402
    %10730 = vmatprep.subr.bf16.mxu0 0
    %10731 = vmatpush1.bf16.msra.mxu0 %v10401
    %10732 = vmatprep.subr.bf16.mxu0 0
    %10733 = vmatpush1.bf16.msra.mxu0 %v10400
    %10734 = vmatprep.subr.bf16.mxu0 0
    %10735 = vmatpush1.bf16.msra.mxu0 %v10399
    %10736 = vmatprep.subr.bf16.mxu0 0
    %10737 = vmatpush2.bf16.msra.mxu0 0
    %10738 = vmatprep.subr.bf16.mxu0 0
    %10739 = vmatpush2.bf16.msra.mxu0 0
    %10740 = vmatprep.subr.bf16.mxu0 0
    %10741 = vmatpush2.bf16.msra.mxu0 0
    %10742 = vmatprep.subr.bf16.mxu0 0
    %10743 = vmatpush2.bf16.msra.mxu0 0
    %10744 = vmatprep.subr.bf16.mxu0 0
    %10745 = vmatpush2.bf16.msra.mxu0 0
    %10746 = vmatprep.subr.bf16.mxu0 0
    %10747 = vmatpush2.bf16.msra.mxu0 0
    %10748 = vmatprep.subr.bf16.mxu0 0
    %10749 = vmatpush2.bf16.msra.mxu0 0
    %10750 = vmatprep.subr.bf16.mxu0 0
    %10751 = vmatpush2.bf16.msra.mxu0 0
    %10752 = vmatprep.mubr.bf16.mxu0 0
    %10753 = vmatmul.mubr.bf16.gmra.mxu0 %v10097
    %v10754 = vpop.f32.mrf.mxu0
    %v10755 = vadd.f32 %v10466, %v10754
    %v10756 = vpop.f32.mrf.mxu0
    %v10757 = vpop.f32.mrf.mxu0
    %v10758 = vadd.f32 %v10469, %v10757
    %v10759 = vpop.f32.mrf.mxu0
    %10760 = vmatprep.mubr.bf16.mxu0 0
    %10761 = vmatmul.mubr.bf16.gmra.mxu0 %v10100
    %v10762 = vpop.f32.mrf.mxu0
    %v10763 = vadd.f32 %v10474, %v10762
    %v10764 = vpop.f32.mrf.mxu0
    %v10765 = vpop.f32.mrf.mxu0
    %v10766 = vadd.f32 %v10477, %v10765
    %v10767 = vpop.f32.mrf.mxu0
    %10768 = vmatprep.mubr.bf16.mxu0 0
    %10769 = vmatmul.mubr.bf16.gmra.mxu0 %v10103
    %v10770 = vpop.f32.mrf.mxu0
    %v10771 = vadd.f32 %v10482, %v10770
    %v10772 = vpop.f32.mrf.mxu0
    %v10773 = vpop.f32.mrf.mxu0
    %v10774 = vadd.f32 %v10485, %v10773
    %v10775 = vpop.f32.mrf.mxu0
    %10776 = vmatprep.mubr.bf16.mxu0 0
    %10777 = vmatmul.mubr.bf16.gmra.mxu0 %v10106
    %v10778 = vpop.f32.mrf.mxu0
    %v10779 = vadd.f32 %v10490, %v10778
    %v10780 = vpop.f32.mrf.mxu0
    %v10781 = vpop.f32.mrf.mxu0
    %v10782 = vadd.f32 %v10493, %v10781
    %v10783 = vpop.f32.mrf.mxu0
    %10784 = vmatprep.mubr.bf16.mxu0 0
    %10785 = vmatmul.mubr.bf16.gmra.mxu0 %v10109
    %v10786 = vpop.f32.mrf.mxu0
    %v10787 = vadd.f32 %v10498, %v10786
    %v10788 = vpop.f32.mrf.mxu0
    %v10789 = vpop.f32.mrf.mxu0
    %v10790 = vadd.f32 %v10501, %v10789
    %v10791 = vpop.f32.mrf.mxu0
    %10792 = vmatprep.mubr.bf16.mxu0 0
    %10793 = vmatmul.mubr.bf16.gmra.mxu0 %v10112
    %v10794 = vpop.f32.mrf.mxu0
    %v10795 = vadd.f32 %v10506, %v10794
    %v10796 = vpop.f32.mrf.mxu0
    %v10797 = vpop.f32.mrf.mxu0
    %v10798 = vadd.f32 %v10509, %v10797
    %v10799 = vpop.f32.mrf.mxu0
    %10800 = vmatprep.mubr.bf16.mxu0 0
    %10801 = vmatmul.mubr.bf16.gmra.mxu0 %v10115
    %v10802 = vpop.f32.mrf.mxu0
    %v10803 = vadd.f32 %v10514, %v10802
    %v10804 = vpop.f32.mrf.mxu0
    %v10805 = vpop.f32.mrf.mxu0
    %v10806 = vadd.f32 %v10517, %v10805
    %v10807 = vpop.f32.mrf.mxu0
    %10808 = vmatprep.mubr.bf16.mxu0 0
    %10809 = vmatmul.mubr.bf16.gmra.mxu0 %v10118
    %v10810 = vpop.f32.mrf.mxu0
    %v10811 = vadd.f32 %v10522, %v10810
    %v10812 = vpop.f32.mrf.mxu0
    %v10813 = vpop.f32.mrf.mxu0
    %v10814 = vadd.f32 %v10525, %v10813
    %v10815 = vpop.f32.mrf.mxu0
    %10816 = vmatprep.mubr.bf16.mxu0 0
    %10817 = vmatmul.mubr.bf16.gmra.mxu0 %v10121
    %v10818 = vpop.f32.mrf.mxu0
    %v10819 = vadd.f32 %v10530, %v10818
    %v10820 = vpop.f32.mrf.mxu0
    %v10821 = vpop.f32.mrf.mxu0
    %v10822 = vadd.f32 %v10533, %v10821
    %v10823 = vpop.f32.mrf.mxu0
    %10824 = vmatprep.mubr.bf16.mxu0 0
    %10825 = vmatmul.mubr.bf16.gmra.mxu0 %v10124
    %v10826 = vpop.f32.mrf.mxu0
    %v10827 = vadd.f32 %v10538, %v10826
    %v10828 = vpop.f32.mrf.mxu0
    %v10829 = vpop.f32.mrf.mxu0
    %v10830 = vadd.f32 %v10541, %v10829
    %v10831 = vpop.f32.mrf.mxu0
    %10832 = vmatprep.mubr.bf16.mxu0 0
    %10833 = vmatmul.mubr.bf16.gmra.mxu0 %v10127
    %v10834 = vpop.f32.mrf.mxu0
    %v10835 = vadd.f32 %v10546, %v10834
    %v10836 = vpop.f32.mrf.mxu0
    %v10837 = vpop.f32.mrf.mxu0
    %v10838 = vadd.f32 %v10549, %v10837
    %v10839 = vpop.f32.mrf.mxu0
    %10840 = vmatprep.mubr.bf16.mxu0 0
    %10841 = vmatmul.mubr.bf16.gmra.mxu0 %v10130
    %v10842 = vpop.f32.mrf.mxu0
    %v10843 = vadd.f32 %v10554, %v10842
    %v10844 = vpop.f32.mrf.mxu0
    %v10845 = vpop.f32.mrf.mxu0
    %v10846 = vadd.f32 %v10557, %v10845
    %v10847 = vpop.f32.mrf.mxu0
    %10848 = vmatprep.mubr.bf16.mxu0 0
    %10849 = vmatmul.mubr.bf16.gmra.mxu0 %v10133
    %v10850 = vpop.f32.mrf.mxu0
    %v10851 = vadd.f32 %v10562, %v10850
    %v10852 = vpop.f32.mrf.mxu0
    %v10853 = vpop.f32.mrf.mxu0
    %v10854 = vadd.f32 %v10565, %v10853
    %v10855 = vpop.f32.mrf.mxu0
    %10856 = vmatprep.mubr.bf16.mxu0 0
    %10857 = vmatmul.mubr.bf16.gmra.mxu0 %v10136
    %v10858 = vpop.f32.mrf.mxu0
    %v10859 = vadd.f32 %v10570, %v10858
    %v10860 = vpop.f32.mrf.mxu0
    %v10861 = vpop.f32.mrf.mxu0
    %v10862 = vadd.f32 %v10573, %v10861
    %v10863 = vpop.f32.mrf.mxu0
    %10864 = vmatprep.mubr.bf16.mxu0 0
    %10865 = vmatmul.mubr.bf16.gmra.mxu0 %v10139
    %v10866 = vpop.f32.mrf.mxu0
    %v10867 = vadd.f32 %v10578, %v10866
    %v10868 = vpop.f32.mrf.mxu0
    %v10869 = vpop.f32.mrf.mxu0
    %v10870 = vadd.f32 %v10581, %v10869
    %v10871 = vpop.f32.mrf.mxu0
    %10872 = vmatprep.mubr.bf16.mxu0 0
    %10873 = vmatmul.mubr.bf16.gmra.mxu0 %v10142
    %v10874 = vpop.f32.mrf.mxu0
    %v10875 = vadd.f32 %v10586, %v10874
    %v10876 = vpop.f32.mrf.mxu0
    %v10877 = vpop.f32.mrf.mxu0
    %v10878 = vadd.f32 %v10589, %v10877
    %v10879 = vpop.f32.mrf.mxu0
    %10880 = vmatprep.mubr.bf16.mxu0 0
    %10881 = vmatmul.mubr.bf16.gmra.mxu0 %v10145
    %v10882 = vpop.f32.mrf.mxu0
    %v10883 = vadd.f32 %v10594, %v10882
    %v10884 = vpop.f32.mrf.mxu0
    %v10885 = vpop.f32.mrf.mxu0
    %v10886 = vadd.f32 %v10597, %v10885
    %v10887 = vpop.f32.mrf.mxu0
    %10888 = vmatprep.mubr.bf16.mxu0 0
    %10889 = vmatmul.mubr.bf16.gmra.mxu0 %v10148
    %v10890 = vpop.f32.mrf.mxu0
    %v10891 = vadd.f32 %v10602, %v10890
    %v10892 = vpop.f32.mrf.mxu0
    %v10893 = vpop.f32.mrf.mxu0
    %v10894 = vadd.f32 %v10605, %v10893
    %v10895 = vpop.f32.mrf.mxu0
    %10896 = vmatprep.mubr.bf16.mxu0 0
    %10897 = vmatmul.mubr.bf16.gmra.mxu0 %v10151
    %v10898 = vpop.f32.mrf.mxu0
    %v10899 = vadd.f32 %v10610, %v10898
    %v10900 = vpop.f32.mrf.mxu0
    %v10901 = vpop.f32.mrf.mxu0
    %v10902 = vadd.f32 %v10613, %v10901
    %v10903 = vpop.f32.mrf.mxu0
    %10904 = vmatprep.mubr.bf16.mxu0 0
    %10905 = vmatmul.mubr.bf16.gmra.mxu0 %v10154
    %v10906 = vpop.f32.mrf.mxu0
    %v10907 = vadd.f32 %v10618, %v10906
    %v10908 = vpop.f32.mrf.mxu0
    %v10909 = vpop.f32.mrf.mxu0
    %v10910 = vadd.f32 %v10621, %v10909
    %v10911 = vpop.f32.mrf.mxu0
    %10912 = vmatprep.mubr.bf16.mxu0 0
    %10913 = vmatmul.mubr.bf16.gmra.mxu0 %v10157
    %v10914 = vpop.f32.mrf.mxu0
    %v10915 = vadd.f32 %v10626, %v10914
    %v10916 = vpop.f32.mrf.mxu0
    %v10917 = vpop.f32.mrf.mxu0
    %v10918 = vadd.f32 %v10629, %v10917
    %v10919 = vpop.f32.mrf.mxu0
    %10920 = vmatprep.mubr.bf16.mxu0 0
    %10921 = vmatmul.mubr.bf16.gmra.mxu0 %v10160
    %v10922 = vpop.f32.mrf.mxu0
    %v10923 = vadd.f32 %v10634, %v10922
    %v10924 = vpop.f32.mrf.mxu0
    %v10925 = vpop.f32.mrf.mxu0
    %v10926 = vadd.f32 %v10637, %v10925
    %v10927 = vpop.f32.mrf.mxu0
    %10928 = vmatprep.mubr.bf16.mxu0 0
    %10929 = vmatmul.mubr.bf16.gmra.mxu0 %v10163
    %v10930 = vpop.f32.mrf.mxu0
    %v10931 = vadd.f32 %v10642, %v10930
    %v10932 = vpop.f32.mrf.mxu0
    %v10933 = vpop.f32.mrf.mxu0
    %v10934 = vadd.f32 %v10645, %v10933
    %v10935 = vpop.f32.mrf.mxu0
    %10936 = vmatprep.mubr.bf16.mxu0 0
    %10937 = vmatmul.mubr.bf16.gmra.mxu0 %v10166
    %v10938 = vpop.f32.mrf.mxu0
    %v10939 = vadd.f32 %v10650, %v10938
    %v10940 = vpop.f32.mrf.mxu0
    %v10941 = vpop.f32.mrf.mxu0
    %v10942 = vadd.f32 %v10653, %v10941
    %v10943 = vpop.f32.mrf.mxu0
    %10944 = vmatprep.mubr.bf16.mxu0 0
    %10945 = vmatmul.mubr.bf16.gmra.mxu0 %v10169
    %v10946 = vpop.f32.mrf.mxu0
    %v10947 = vadd.f32 %v10658, %v10946
    %v10948 = vpop.f32.mrf.mxu0
    %v10949 = vpop.f32.mrf.mxu0
    %v10950 = vadd.f32 %v10661, %v10949
    %v10951 = vpop.f32.mrf.mxu0
    %10952 = vmatprep.mubr.bf16.mxu0 0
    %10953 = vmatmul.mubr.bf16.gmra.mxu0 %v10172
    %v10954 = vpop.f32.mrf.mxu0
    %v10955 = vadd.f32 %v10666, %v10954
    %v10956 = vpop.f32.mrf.mxu0
    %v10957 = vpop.f32.mrf.mxu0
    %v10958 = vadd.f32 %v10669, %v10957
    %v10959 = vpop.f32.mrf.mxu0
    %10960 = vmatprep.mubr.bf16.mxu0 0
    %10961 = vmatmul.mubr.bf16.gmra.mxu0 %v10175
    %v10962 = vpop.f32.mrf.mxu0
    %v10963 = vadd.f32 %v10674, %v10962
    %v10964 = vpop.f32.mrf.mxu0
    %v10965 = vpop.f32.mrf.mxu0
    %v10966 = vadd.f32 %v10677, %v10965
    %v10967 = vpop.f32.mrf.mxu0
    %10968 = vmatprep.mubr.bf16.mxu0 0
    %10969 = vmatmul.mubr.bf16.gmra.mxu0 %v10178
    %v10970 = vpop.f32.mrf.mxu0
    %v10971 = vadd.f32 %v10682, %v10970
    %v10972 = vpop.f32.mrf.mxu0
    %v10973 = vpop.f32.mrf.mxu0
    %v10974 = vadd.f32 %v10685, %v10973
    %v10975 = vpop.f32.mrf.mxu0
    %10976 = vmatprep.mubr.bf16.mxu0 0
    %10977 = vmatmul.mubr.bf16.gmra.mxu0 %v10181
    %v10978 = vpop.f32.mrf.mxu0
    %v10979 = vadd.f32 %v10690, %v10978
    %v10980 = vpop.f32.mrf.mxu0
    %v10981 = vpop.f32.mrf.mxu0
    %v10982 = vadd.f32 %v10693, %v10981
    %v10983 = vpop.f32.mrf.mxu0
    %10984 = vmatprep.mubr.bf16.mxu0 0
    %10985 = vmatmul.mubr.bf16.gmra.mxu0 %v10184
    %v10986 = vpop.f32.mrf.mxu0
    %v10987 = vadd.f32 %v10698, %v10986
    %v10988 = vpop.f32.mrf.mxu0
    %v10989 = vpop.f32.mrf.mxu0
    %v10990 = vadd.f32 %v10701, %v10989
    %v10991 = vpop.f32.mrf.mxu0
    %10992 = vmatprep.mubr.bf16.mxu0 0
    %10993 = vmatmul.mubr.bf16.gmra.mxu0 %v10187
    %v10994 = vpop.f32.mrf.mxu0
    %v10995 = vadd.f32 %v10706, %v10994
    %v10996 = vpop.f32.mrf.mxu0
    %v10997 = vpop.f32.mrf.mxu0
    %v10998 = vadd.f32 %v10709, %v10997
    %v10999 = vpop.f32.mrf.mxu0
    %11000 = vmatprep.mubr.bf16.mxu0 0
    %11001 = vmatmul.mubr.bf16.gmra.mxu0 %v10190
    %v11002 = vpop.f32.mrf.mxu0
    %v11003 = vadd.f32 %v10714, %v11002
    %v11004 = vpop.f32.mrf.mxu0
    %v11005 = vpop.f32.mrf.mxu0
    %v11006 = vadd.f32 %v10717, %v11005
    %v11007 = vpop.f32.mrf.mxu0
    %11008 = vdwg.mxu0
    %v11009 = vld [vmem:[%s4730] sm:$0xff]
    %v11010 = vld [vmem:[%s4730 + $0x8] sm:$0xf]
    %v11011 = vld [vmem:[%s4730 + $0xc] sm:$0xff]
    %v11012 = vld [vmem:[%s4730 + $0x14] sm:$0xf]
    %v11013 = vld [vmem:[%s4730 + $0x18] sm:$0xff]
    %v11014 = vld [vmem:[%s4730 + $0x20] sm:$0xf]
    %v11015 = vld [vmem:[%s4730 + $0x24] sm:$0xff]
    %v11016 = vld [vmem:[%s4730 + $0x2c] sm:$0xf]
    %v11017 = vld [vmem:[%s4730 + $0x30] sm:$0xff]
    %v11018 = vld [vmem:[%s4730 + $0x38] sm:$0xf]
    %v11019 = vld [vmem:[%s4730 + $0x3c] sm:$0xff]
    %v11020 = vld [vmem:[%s4730 + $0x44] sm:$0xf]
    %v11021 = vld [vmem:[%s4730 + $0x48] sm:$0xff]
    %v11022 = vld [vmem:[%s4730 + $0x50] sm:$0xf]
    %v11023 = vld [vmem:[%s4730 + $0x54] sm:$0xff]
    %v11024 = vld [vmem:[%s4730 + $0x5c] sm:$0xf]
    %v11025 = vld [vmem:[%s4730 + $0x60] sm:$0xff]
    %v11026 = vld [vmem:[%s4730 + $0x68] sm:$0xf]
    %v11027 = vld [vmem:[%s4730 + $0x6c] sm:$0xff]
    %v11028 = vld [vmem:[%s4730 + $0x74] sm:$0xf]
    %v11029 = vld [vmem:[%s4730 + $0x78] sm:$0xff]
    %v11030 = vld [vmem:[%s4730 + $0x80] sm:$0xf]
    %v11031 = vld [vmem:[%s4730 + $0x84] sm:$0xff]
    %v11032 = vld [vmem:[%s4730 + $0x8c] sm:$0xf]
    %v11033 = vld [vmem:[%s4730 + $0x90] sm:$0xff]
    %v11034 = vld [vmem:[%s4730 + $0x98] sm:$0xf]
    %v11035 = vld [vmem:[%s4730 + $0x9c] sm:$0xff]
    %v11036 = vld [vmem:[%s4730 + $0xa4] sm:$0xf]
    %v11037 = vld [vmem:[%s4730 + $0xa8] sm:$0xff]
    %v11038 = vld [vmem:[%s4730 + $0xb0] sm:$0xf]
    %v11039 = vld [vmem:[%s4730 + $0xb4] sm:$0xff]
    %v11040 = vld [vmem:[%s4730 + $0xbc] sm:$0xf]
    %v11041 = vld [vmem:[%s4730 + $0xc0] sm:$0xff]
    %v11042 = vld [vmem:[%s4730 + $0xc8] sm:$0xf]
    %v11043 = vld [vmem:[%s4730 + $0xcc] sm:$0xff]
    %v11044 = vld [vmem:[%s4730 + $0xd4] sm:$0xf]
    %v11045 = vld [vmem:[%s4730 + $0xd8] sm:$0xff]
    %v11046 = vld [vmem:[%s4730 + $0xe0] sm:$0xf]
    %v11047 = vld [vmem:[%s4730 + $0xe4] sm:$0xff]
    %v11048 = vld [vmem:[%s4730 + $0xec] sm:$0xf]
    %v11049 = vld [vmem:[%s4730 + $0xf0] sm:$0xff]
    %v11050 = vld [vmem:[%s4730 + $0xf8] sm:$0xf]
    %v11051 = vld [vmem:[%s4730 + $0xfc] sm:$0xff]
    %v11052 = vld [vmem:[%s4730 + $0x104] sm:$0xf]
    %v11053 = vld [vmem:[%s4730 + $0x108] sm:$0xff]
    %v11054 = vld [vmem:[%s4730 + $0x110] sm:$0xf]
    %v11055 = vld [vmem:[%s4730 + $0x114] sm:$0xff]
    %v11056 = vld [vmem:[%s4730 + $0x11c] sm:$0xf]
    %v11057 = vld [vmem:[%s4730 + $0x120] sm:$0xff]
    %v11058 = vld [vmem:[%s4730 + $0x128] sm:$0xf]
    %v11059 = vld [vmem:[%s4730 + $0x12c] sm:$0xff]
    %v11060 = vld [vmem:[%s4730 + $0x134] sm:$0xf]
    %v11061 = vld [vmem:[%s4730 + $0x138] sm:$0xff]
    %v11062 = vld [vmem:[%s4730 + $0x140] sm:$0xf]
    %v11063 = vld [vmem:[%s4730 + $0x144] sm:$0xff]
    %v11064 = vld [vmem:[%s4730 + $0x14c] sm:$0xf]
    %v11065 = vld [vmem:[%s4730 + $0x150] sm:$0xff]
    %v11066 = vld [vmem:[%s4730 + $0x158] sm:$0xf]
    %v11067 = vld [vmem:[%s4730 + $0x15c] sm:$0xff]
    %v11068 = vld [vmem:[%s4730 + $0x164] sm:$0xf]
    %v11069 = vld [vmem:[%s4730 + $0x168] sm:$0xff]
    %v11070 = vld [vmem:[%s4730 + $0x170] sm:$0xf]
    %v11071 = vld [vmem:[%s4730 + $0x174] sm:$0xff]
    %v11072 = vld [vmem:[%s4730 + $0x17c] sm:$0xf]
    %v11073 = vld [vmem:[%s4730 + $0x1b0] sm:$0xff]
    %v11074 = vld [vmem:[%s4730 + $0x1b8] sm:$0xf]
    %v11075 = vld [vmem:[%s4730 + $0x1bc] sm:$0xff]
    %v11076 = vld [vmem:[%s4730 + $0x1c4] sm:$0xf]
    %v11077 = vld [vmem:[%s4730 + $0x1c8] sm:$0xff]
    %v11078 = vld [vmem:[%s4730 + $0x1d0] sm:$0xf]
    %v11079 = vld [vmem:[%s4730 + $0x1d4] sm:$0xff]
    %v11080 = vld [vmem:[%s4730 + $0x1dc] sm:$0xf]
    %v11081 = vld [vmem:[%s4730 + $0x1e0] sm:$0xff]
    %v11082 = vld [vmem:[%s4730 + $0x1e8] sm:$0xf]
    %v11083 = vld [vmem:[%s4730 + $0x1ec] sm:$0xff]
    %v11084 = vld [vmem:[%s4730 + $0x1f4] sm:$0xf]
    %v11085 = vld [vmem:[%s4730 + $0x1f8] sm:$0xff]
    %v11086 = vld [vmem:[%s4730 + $0x200] sm:$0xf]
    %v11087 = vld [vmem:[%s4730 + $0x204] sm:$0xff]
    %v11088 = vld [vmem:[%s4730 + $0x20c] sm:$0xf]
    %v11089 = vld [vmem:[%s4730 + $0x210] sm:$0xff]
    %v11090 = vld [vmem:[%s4730 + $0x218] sm:$0xf]
    %v11091 = vld [vmem:[%s4730 + $0x21c] sm:$0xff]
    %v11092 = vld [vmem:[%s4730 + $0x224] sm:$0xf]
    %v11093 = vld [vmem:[%s4730 + $0x228] sm:$0xff]
    %v11094 = vld [vmem:[%s4730 + $0x230] sm:$0xf]
    %v11095 = vld [vmem:[%s4730 + $0x234] sm:$0xff]
    %v11096 = vld [vmem:[%s4730 + $0x23c] sm:$0xf]
    %v11097 = vld [vmem:[%s4730 + $0x240] sm:$0xff]
    %v11098 = vld [vmem:[%s4730 + $0x248] sm:$0xf]
    %v11099 = vld [vmem:[%s4730 + $0x24c] sm:$0xff]
    %v11100 = vld [vmem:[%s4730 + $0x254] sm:$0xf]
    %v11101 = vld [vmem:[%s4730 + $0x258] sm:$0xff]
    %v11102 = vld [vmem:[%s4730 + $0x260] sm:$0xf]
    %v11103 = vld [vmem:[%s4730 + $0x264] sm:$0xff]
    %v11104 = vld [vmem:[%s4730 + $0x26c] sm:$0xf]
    %v11105 = vld [vmem:[%s4730 + $0x270] sm:$0xff]
    %v11106 = vld [vmem:[%s4730 + $0x278] sm:$0xf]
    %v11107 = vld [vmem:[%s4730 + $0x27c] sm:$0xff]
    %v11108 = vld [vmem:[%s4730 + $0x284] sm:$0xf]
    %v11109 = vld [vmem:[%s4730 + $0x288] sm:$0xff]
    %v11110 = vld [vmem:[%s4730 + $0x290] sm:$0xf]
    %v11111 = vld [vmem:[%s4730 + $0x294] sm:$0xff]
    %v11112 = vld [vmem:[%s4730 + $0x29c] sm:$0xf]
    %v11113 = vld [vmem:[%s4730 + $0x2a0] sm:$0xff]
    %v11114 = vld [vmem:[%s4730 + $0x2a8] sm:$0xf]
    %v11115 = vld [vmem:[%s4730 + $0x2ac] sm:$0xff]
    %v11116 = vld [vmem:[%s4730 + $0x2b4] sm:$0xf]
    %v11117 = vld [vmem:[%s4730 + $0x2b8] sm:$0xff]
    %v11118 = vld [vmem:[%s4730 + $0x2c0] sm:$0xf]
    %v11119 = vld [vmem:[%s4730 + $0x2c4] sm:$0xff]
    %v11120 = vld [vmem:[%s4730 + $0x2cc] sm:$0xf]
    %v11121 = vld [vmem:[%s4730 + $0x2d0] sm:$0xff]
    %v11122 = vld [vmem:[%s4730 + $0x2d8] sm:$0xf]
    %v11123 = vld [vmem:[%s4730 + $0x2dc] sm:$0xff]
    %v11124 = vld [vmem:[%s4730 + $0x2e4] sm:$0xf]
    %v11125 = vld [vmem:[%s4730 + $0x2e8] sm:$0xff]
    %v11126 = vld [vmem:[%s4730 + $0x2f0] sm:$0xf]
    %v11127 = vld [vmem:[%s4730 + $0x2f4] sm:$0xff]
    %v11128 = vld [vmem:[%s4730 + $0x2fc] sm:$0xf]
    %v11129 = vld [vmem:[%s4730 + $0x300] sm:$0xff]
    %v11130 = vld [vmem:[%s4730 + $0x308] sm:$0xf]
    %v11131 = vld [vmem:[%s4730 + $0x30c] sm:$0xff]
    %v11132 = vld [vmem:[%s4730 + $0x314] sm:$0xf]
    %v11133 = vld [vmem:[%s4730 + $0x318] sm:$0xff]
    %v11134 = vld [vmem:[%s4730 + $0x320] sm:$0xf]
    %v11135 = vld [vmem:[%s4730 + $0x324] sm:$0xff]
    %v11136 = vld [vmem:[%s4730 + $0x32c] sm:$0xf]
    %v11265 = vunpack.c.l.b16 %v11009
    %v11266 = vunpack.c.h.b16 %v11009
    %v11267 = vunpack.c.l.b16 %v11010
    %v11268 = vunpack.c.l.b16 %v11011
    %v11269 = vunpack.c.h.b16 %v11011
    %v11270 = vunpack.c.l.b16 %v11012
    %v11271 = vunpack.c.l.b16 %v11013
    %v11272 = vunpack.c.h.b16 %v11013
    %v11273 = vunpack.c.l.b16 %v11014
    %v11274 = vunpack.c.l.b16 %v11015
    %v11275 = vunpack.c.h.b16 %v11015
    %v11276 = vunpack.c.l.b16 %v11016
    %v11277 = vunpack.c.l.b16 %v11017
    %v11278 = vunpack.c.h.b16 %v11017
    %v11279 = vunpack.c.l.b16 %v11018
    %v11280 = vunpack.c.l.b16 %v11019
    %v11281 = vunpack.c.h.b16 %v11019
    %v11282 = vunpack.c.l.b16 %v11020
    %v11283 = vunpack.c.l.b16 %v11021
    %v11284 = vunpack.c.h.b16 %v11021
    %v11285 = vunpack.c.l.b16 %v11022
    %v11286 = vunpack.c.l.b16 %v11023
    %v11287 = vunpack.c.h.b16 %v11023
    %v11288 = vunpack.c.l.b16 %v11024
    %v11289 = vunpack.c.l.b16 %v11025
    %v11290 = vunpack.c.h.b16 %v11025
    %v11291 = vunpack.c.l.b16 %v11026
    %v11292 = vunpack.c.l.b16 %v11027
    %v11293 = vunpack.c.h.b16 %v11027
    %v11294 = vunpack.c.l.b16 %v11028
    %v11295 = vunpack.c.l.b16 %v11029
    %v11296 = vunpack.c.h.b16 %v11029
    %v11297 = vunpack.c.l.b16 %v11030
    %v11298 = vunpack.c.l.b16 %v11031
    %v11299 = vunpack.c.h.b16 %v11031
    %v11300 = vunpack.c.l.b16 %v11032
    %v11301 = vunpack.c.l.b16 %v11033
    %v11302 = vunpack.c.h.b16 %v11033
    %v11303 = vunpack.c.l.b16 %v11034
    %v11304 = vunpack.c.l.b16 %v11035
    %v11305 = vunpack.c.h.b16 %v11035
    %v11306 = vunpack.c.l.b16 %v11036
    %v11307 = vunpack.c.l.b16 %v11037
    %v11308 = vunpack.c.h.b16 %v11037
    %v11309 = vunpack.c.l.b16 %v11038
    %v11310 = vunpack.c.l.b16 %v11039
    %v11311 = vunpack.c.h.b16 %v11039
    %v11312 = vunpack.c.l.b16 %v11040
    %v11313 = vunpack.c.l.b16 %v11041
    %v11314 = vunpack.c.h.b16 %v11041
    %v11315 = vunpack.c.l.b16 %v11042
    %v11316 = vunpack.c.l.b16 %v11043
    %v11317 = vunpack.c.h.b16 %v11043
    %v11318 = vunpack.c.l.b16 %v11044
    %v11319 = vunpack.c.l.b16 %v11045
    %v11320 = vunpack.c.h.b16 %v11045
    %v11321 = vunpack.c.l.b16 %v11046
    %v11322 = vunpack.c.l.b16 %v11047
    %v11323 = vunpack.c.h.b16 %v11047
    %v11324 = vunpack.c.l.b16 %v11048
    %v11325 = vunpack.c.l.b16 %v11049
    %v11326 = vunpack.c.h.b16 %v11049
    %v11327 = vunpack.c.l.b16 %v11050
    %v11328 = vunpack.c.l.b16 %v11051
    %v11329 = vunpack.c.h.b16 %v11051
    %v11330 = vunpack.c.l.b16 %v11052
    %v11331 = vunpack.c.l.b16 %v11053
    %v11332 = vunpack.c.h.b16 %v11053
    %v11333 = vunpack.c.l.b16 %v11054
    %v11334 = vunpack.c.l.b16 %v11055
    %v11335 = vunpack.c.h.b16 %v11055
    %v11336 = vunpack.c.l.b16 %v11056
    %v11337 = vunpack.c.l.b16 %v11057
    %v11338 = vunpack.c.h.b16 %v11057
    %v11339 = vunpack.c.l.b16 %v11058
    %v11340 = vunpack.c.l.b16 %v11059
    %v11341 = vunpack.c.h.b16 %v11059
    %v11342 = vunpack.c.l.b16 %v11060
    %v11343 = vunpack.c.l.b16 %v11061
    %v11344 = vunpack.c.h.b16 %v11061
    %v11345 = vunpack.c.l.b16 %v11062
    %v11346 = vunpack.c.l.b16 %v11063
    %v11347 = vunpack.c.h.b16 %v11063
    %v11348 = vunpack.c.l.b16 %v11064
    %v11349 = vunpack.c.l.b16 %v11065
    %v11350 = vunpack.c.h.b16 %v11065
    %v11351 = vunpack.c.l.b16 %v11066
    %v11352 = vunpack.c.l.b16 %v11067
    %v11353 = vunpack.c.h.b16 %v11067
    %v11354 = vunpack.c.l.b16 %v11068
    %v11355 = vunpack.c.l.b16 %v11069
    %v11356 = vunpack.c.h.b16 %v11069
    %v11357 = vunpack.c.l.b16 %v11070
    %v11358 = vunpack.c.l.b16 %v11071
    %v11359 = vunpack.c.h.b16 %v11071
    %v11360 = vunpack.c.l.b16 %v11072
    %v11361 = vunpack.c.l.b16 %v11073
    %v11362 = vunpack.c.h.b16 %v11073
    %v11363 = vunpack.c.l.b16 %v11074
    %v11364 = vunpack.c.l.b16 %v11075
    %v11365 = vunpack.c.h.b16 %v11075
    %v11366 = vunpack.c.l.b16 %v11076
    %v11367 = vunpack.c.l.b16 %v11077
    %v11368 = vunpack.c.h.b16 %v11077
    %v11369 = vunpack.c.l.b16 %v11078
    %v11370 = vunpack.c.l.b16 %v11079
    %v11371 = vunpack.c.h.b16 %v11079
    %v11372 = vunpack.c.l.b16 %v11080
    %v11373 = vunpack.c.l.b16 %v11081
    %v11374 = vunpack.c.h.b16 %v11081
    %v11375 = vunpack.c.l.b16 %v11082
    %v11376 = vunpack.c.l.b16 %v11083
    %v11377 = vunpack.c.h.b16 %v11083
    %v11378 = vunpack.c.l.b16 %v11084
    %v11379 = vunpack.c.l.b16 %v11085
    %v11380 = vunpack.c.h.b16 %v11085
    %v11381 = vunpack.c.l.b16 %v11086
    %v11382 = vunpack.c.l.b16 %v11087
    %v11383 = vunpack.c.h.b16 %v11087
    %v11384 = vunpack.c.l.b16 %v11088
    %v11385 = vunpack.c.l.b16 %v11089
    %v11386 = vunpack.c.h.b16 %v11089
    %v11387 = vunpack.c.l.b16 %v11090
    %v11388 = vunpack.c.l.b16 %v11091
    %v11389 = vunpack.c.h.b16 %v11091
    %v11390 = vunpack.c.l.b16 %v11092
    %v11391 = vunpack.c.l.b16 %v11093
    %v11392 = vunpack.c.h.b16 %v11093
    %v11393 = vunpack.c.l.b16 %v11094
    %v11394 = vunpack.c.l.b16 %v11095
    %v11395 = vunpack.c.h.b16 %v11095
    %v11396 = vunpack.c.l.b16 %v11096
    %v11397 = vunpack.c.l.b16 %v11097
    %v11398 = vunpack.c.h.b16 %v11097
    %v11399 = vunpack.c.l.b16 %v11098
    %v11400 = vunpack.c.l.b16 %v11099
    %v11401 = vunpack.c.h.b16 %v11099
    %v11402 = vunpack.c.l.b16 %v11100
    %v11403 = vunpack.c.l.b16 %v11101
    %v11404 = vunpack.c.h.b16 %v11101
    %v11405 = vunpack.c.l.b16 %v11102
    %v11406 = vunpack.c.l.b16 %v11103
    %v11407 = vunpack.c.h.b16 %v11103
    %v11408 = vunpack.c.l.b16 %v11104
    %v11409 = vunpack.c.l.b16 %v11105
    %v11410 = vunpack.c.h.b16 %v11105
    %v11411 = vunpack.c.l.b16 %v11106
    %v11412 = vunpack.c.l.b16 %v11107
    %v11413 = vunpack.c.h.b16 %v11107
    %v11414 = vunpack.c.l.b16 %v11108
    %v11415 = vunpack.c.l.b16 %v11109
    %v11416 = vunpack.c.h.b16 %v11109
    %v11417 = vunpack.c.l.b16 %v11110
    %v11418 = vunpack.c.l.b16 %v11111
    %v11419 = vunpack.c.h.b16 %v11111
    %v11420 = vunpack.c.l.b16 %v11112
    %v11421 = vunpack.c.l.b16 %v11113
    %v11422 = vunpack.c.h.b16 %v11113
    %v11423 = vunpack.c.l.b16 %v11114
    %v11424 = vunpack.c.l.b16 %v11115
    %v11425 = vunpack.c.h.b16 %v11115
    %v11426 = vunpack.c.l.b16 %v11116
    %v11427 = vunpack.c.l.b16 %v11117
    %v11428 = vunpack.c.h.b16 %v11117
    %v11429 = vunpack.c.l.b16 %v11118
    %v11430 = vunpack.c.l.b16 %v11119
    %v11431 = vunpack.c.h.b16 %v11119
    %v11432 = vunpack.c.l.b16 %v11120
    %v11433 = vunpack.c.l.b16 %v11121
    %v11434 = vunpack.c.h.b16 %v11121
    %v11435 = vunpack.c.l.b16 %v11122
    %v11436 = vunpack.c.l.b16 %v11123
    %v11437 = vunpack.c.h.b16 %v11123
    %v11438 = vunpack.c.l.b16 %v11124
    %v11439 = vunpack.c.l.b16 %v11125
    %v11440 = vunpack.c.h.b16 %v11125
    %v11441 = vunpack.c.l.b16 %v11126
    %v11442 = vunpack.c.l.b16 %v11127
    %v11443 = vunpack.c.h.b16 %v11127
    %v11444 = vunpack.c.l.b16 %v11128
    %v11445 = vunpack.c.l.b16 %v11129
    %v11446 = vunpack.c.h.b16 %v11129
    %v11447 = vunpack.c.l.b16 %v11130
    %v11448 = vunpack.c.l.b16 %v11131
    %v11449 = vunpack.c.h.b16 %v11131
    %v11450 = vunpack.c.l.b16 %v11132
    %v11451 = vunpack.c.l.b16 %v11133
    %v11452 = vunpack.c.h.b16 %v11133
    %v11453 = vunpack.c.l.b16 %v11134
    %v11454 = vunpack.c.l.b16 %v11135
    %v11455 = vunpack.c.h.b16 %v11135
    %v11456 = vunpack.c.l.b16 %v11136
    %v11457 = vpack.c.b16 %v11268, %v11265
    %v11458 = vpack.c.b16 %v11269, %v11266
    %v11459 = vpack.c.b16 %v11270, %v11267
    %v11460 = vpack.c.b16 %v11274, %v11271
    %v11461 = vpack.c.b16 %v11275, %v11272
    %v11462 = vpack.c.b16 %v11276, %v11273
    %v11463 = vpack.c.b16 %v11280, %v11277
    %v11464 = vpack.c.b16 %v11281, %v11278
    %v11465 = vpack.c.b16 %v11282, %v11279
    %v11466 = vpack.c.b16 %v11286, %v11283
    %v11467 = vpack.c.b16 %v11287, %v11284
    %v11468 = vpack.c.b16 %v11288, %v11285
    %v11469 = vpack.c.b16 %v11292, %v11289
    %v11470 = vpack.c.b16 %v11293, %v11290
    %v11471 = vpack.c.b16 %v11294, %v11291
    %v11472 = vpack.c.b16 %v11298, %v11295
    %v11473 = vpack.c.b16 %v11299, %v11296
    %v11474 = vpack.c.b16 %v11300, %v11297
    %v11475 = vpack.c.b16 %v11304, %v11301
    %v11476 = vpack.c.b16 %v11305, %v11302
    %v11477 = vpack.c.b16 %v11306, %v11303
    %v11478 = vpack.c.b16 %v11310, %v11307
    %v11479 = vpack.c.b16 %v11311, %v11308
    %v11480 = vpack.c.b16 %v11312, %v11309
    %v11481 = vpack.c.b16 %v11316, %v11313
    %v11482 = vpack.c.b16 %v11317, %v11314
    %v11483 = vpack.c.b16 %v11318, %v11315
    %v11484 = vpack.c.b16 %v11322, %v11319
    %v11485 = vpack.c.b16 %v11323, %v11320
    %v11486 = vpack.c.b16 %v11324, %v11321
    %v11487 = vpack.c.b16 %v11328, %v11325
    %v11488 = vpack.c.b16 %v11329, %v11326
    %v11489 = vpack.c.b16 %v11330, %v11327
    %v11490 = vpack.c.b16 %v11334, %v11331
    %v11491 = vpack.c.b16 %v11335, %v11332
    %v11492 = vpack.c.b16 %v11336, %v11333
    %v11493 = vpack.c.b16 %v11340, %v11337
    %v11494 = vpack.c.b16 %v11341, %v11338
    %v11495 = vpack.c.b16 %v11342, %v11339
    %v11496 = vpack.c.b16 %v11346, %v11343
    %v11497 = vpack.c.b16 %v11347, %v11344
    %v11498 = vpack.c.b16 %v11348, %v11345
    %v11499 = vpack.c.b16 %v11352, %v11349
    %v11500 = vpack.c.b16 %v11353, %v11350
    %v11501 = vpack.c.b16 %v11354, %v11351
    %v11502 = vpack.c.b16 %v11358, %v11355
    %v11503 = vpack.c.b16 %v11359, %v11356
    %v11504 = vpack.c.b16 %v11360, %v11357
    %v11505 = vpack.c.b16 %v11364, %v11361
    %v11506 = vpack.c.b16 %v11365, %v11362
    %v11507 = vpack.c.b16 %v11366, %v11363
    %v11508 = vpack.c.b16 %v11370, %v11367
    %v11509 = vpack.c.b16 %v11371, %v11368
    %v11510 = vpack.c.b16 %v11372, %v11369
    %v11511 = vpack.c.b16 %v11376, %v11373
    %v11512 = vpack.c.b16 %v11377, %v11374
    %v11513 = vpack.c.b16 %v11378, %v11375
    %v11514 = vpack.c.b16 %v11382, %v11379
    %v11515 = vpack.c.b16 %v11383, %v11380
    %v11516 = vpack.c.b16 %v11384, %v11381
    %v11517 = vpack.c.b16 %v11388, %v11385
    %v11518 = vpack.c.b16 %v11389, %v11386
    %v11519 = vpack.c.b16 %v11390, %v11387
    %v11520 = vpack.c.b16 %v11394, %v11391
    %v11521 = vpack.c.b16 %v11395, %v11392
    %v11522 = vpack.c.b16 %v11396, %v11393
    %v11523 = vpack.c.b16 %v11400, %v11397
    %v11524 = vpack.c.b16 %v11401, %v11398
    %v11525 = vpack.c.b16 %v11402, %v11399
    %v11526 = vpack.c.b16 %v11406, %v11403
    %v11527 = vpack.c.b16 %v11407, %v11404
    %v11528 = vpack.c.b16 %v11408, %v11405
    %v11529 = vpack.c.b16 %v11412, %v11409
    %v11530 = vpack.c.b16 %v11413, %v11410
    %v11531 = vpack.c.b16 %v11414, %v11411
    %v11532 = vpack.c.b16 %v11418, %v11415
    %v11533 = vpack.c.b16 %v11419, %v11416
    %v11534 = vpack.c.b16 %v11420, %v11417
    %v11535 = vpack.c.b16 %v11424, %v11421
    %v11536 = vpack.c.b16 %v11425, %v11422
    %v11537 = vpack.c.b16 %v11426, %v11423
    %v11538 = vpack.c.b16 %v11430, %v11427
    %v11539 = vpack.c.b16 %v11431, %v11428
    %v11540 = vpack.c.b16 %v11432, %v11429
    %v11541 = vpack.c.b16 %v11436, %v11433
    %v11542 = vpack.c.b16 %v11437, %v11434
    %v11543 = vpack.c.b16 %v11438, %v11435
    %v11544 = vpack.c.b16 %v11442, %v11439
    %v11545 = vpack.c.b16 %v11443, %v11440
    %v11546 = vpack.c.b16 %v11444, %v11441
    %v11547 = vpack.c.b16 %v11448, %v11445
    %v11548 = vpack.c.b16 %v11449, %v11446
    %v11549 = vpack.c.b16 %v11450, %v11447
    %v11550 = vpack.c.b16 %v11454, %v11451
    %v11551 = vpack.c.b16 %v11455, %v11452
    %v11552 = vpack.c.b16 %v11456, %v11453
    %v11697 = vunpack.c.l.b16 %v8237
    %v11698 = vunpack.c.l.b16 %v8238
    %v11699 = vunpack.c.l.b16 %v8239
    %v11700 = vunpack.c.l.b16 %v8240
    %v11701 = vunpack.c.l.b16 %v8241
    %v11702 = vunpack.c.l.b16 %v8242
    %v11703 = vunpack.c.l.b16 %v8243
    %v11704 = vunpack.c.l.b16 %v8244
    %v11705 = vunpack.c.l.b16 %v8245
    %v11706 = vunpack.c.l.b16 %v8246
    %v11707 = vunpack.c.l.b16 %v8247
    %v11708 = vunpack.c.l.b16 %v8248
    %v11709 = vunpack.c.l.b16 %v8249
    %v11710 = vunpack.c.l.b16 %v8250
    %v11711 = vunpack.c.l.b16 %v8251
    %v11712 = vunpack.c.l.b16 %v8252
    %v11713 = vunpack.c.l.b16 %v8253
    %v11714 = vunpack.c.l.b16 %v8254
    %v11715 = vunpack.c.l.b16 %v8255
    %v11716 = vunpack.c.l.b16 %v8256
    %v11717 = vunpack.c.l.b16 %v8257
    %v11718 = vunpack.c.l.b16 %v8258
    %v11719 = vunpack.c.l.b16 %v8259
    %v11720 = vunpack.c.l.b16 %v8260
    %v11721 = vunpack.c.l.b16 %v8261
    %v11722 = vunpack.c.l.b16 %v8262
    %v11723 = vunpack.c.l.b16 %v8263
    %v11724 = vunpack.c.l.b16 %v8264
    %v11725 = vunpack.c.l.b16 %v8265
    %v11726 = vunpack.c.l.b16 %v8266
    %v11727 = vunpack.c.l.b16 %v8267
    %v11728 = vunpack.c.l.b16 %v8268
    %v11729 = vunpack.c.l.b16 %v8269
    %v11730 = vunpack.c.l.b16 %v8270
    %v11731 = vunpack.c.l.b16 %v8271
    %v11732 = vunpack.c.l.b16 %v8272
    %v11733 = vunpack.c.l.b16 %v8273
    %v11734 = vunpack.c.l.b16 %v8274
    %v11735 = vunpack.c.l.b16 %v8275
    %v11736 = vunpack.c.l.b16 %v8276
    %v11737 = vunpack.c.l.b16 %v8277
    %v11738 = vunpack.c.l.b16 %v8278
    %v11739 = vunpack.c.l.b16 %v8279
    %v11740 = vunpack.c.l.b16 %v8280
    %v11741 = vunpack.c.l.b16 %v8281
    %v11742 = vunpack.c.l.b16 %v8282
    %v11743 = vunpack.c.l.b16 %v8283
    %v11744 = vunpack.c.l.b16 %v8284
    %v11745 = vpack.c.b16 %v11698, %v11697
    %v11746 = vpack.c.b16 %v11700, %v11699
    %v11747 = vpack.c.b16 %v11702, %v11701
    %v11748 = vpack.c.b16 %v11704, %v11703
    %v11749 = vpack.c.b16 %v11706, %v11705
    %v11750 = vpack.c.b16 %v11708, %v11707
    %v11751 = vpack.c.b16 %v11710, %v11709
    %v11752 = vpack.c.b16 %v11712, %v11711
    %v11753 = vpack.c.b16 %v11714, %v11713
    %v11754 = vpack.c.b16 %v11716, %v11715
    %v11755 = vpack.c.b16 %v11718, %v11717
    %v11756 = vpack.c.b16 %v11720, %v11719
    %v11757 = vpack.c.b16 %v11722, %v11721
    %v11758 = vpack.c.b16 %v11724, %v11723
    %v11759 = vpack.c.b16 %v11726, %v11725
    %v11760 = vpack.c.b16 %v11728, %v11727
    %v11761 = vpack.c.b16 %v11730, %v11729
    %v11762 = vpack.c.b16 %v11732, %v11731
    %v11763 = vpack.c.b16 %v11734, %v11733
    %v11764 = vpack.c.b16 %v11736, %v11735
    %v11765 = vpack.c.b16 %v11738, %v11737
    %v11766 = vpack.c.b16 %v11740, %v11739
    %v11767 = vpack.c.b16 %v11742, %v11741
    %v11768 = vpack.c.b16 %v11744, %v11743
    %11793 = vmatprep.subr.bf16.mxu0 0
    %11794 = vmatpush1.bf16.msra.mxu0 %v11752
    %11795 = vmatprep.subr.bf16.mxu0 0
    %11796 = vmatpush1.bf16.msra.mxu0 %v11751
    %11797 = vmatprep.subr.bf16.mxu0 0
    %11798 = vmatpush1.bf16.msra.mxu0 %v11750
    %11799 = vmatprep.subr.bf16.mxu0 0
    %11800 = vmatpush1.bf16.msra.mxu0 %v11749
    %11801 = vmatprep.subr.bf16.mxu0 0
    %11802 = vmatpush1.bf16.msra.mxu0 %v11748
    %11803 = vmatprep.subr.bf16.mxu0 0
    %11804 = vmatpush1.bf16.msra.mxu0 %v11747
    %11805 = vmatprep.subr.bf16.mxu0 0
    %11806 = vmatpush1.bf16.msra.mxu0 %v11746
    %11807 = vmatprep.subr.bf16.mxu0 0
    %11808 = vmatpush1.bf16.msra.mxu0 %v11745
    %11809 = vmatprep.subr.bf16.mxu0 0
    %11810 = vmatpush2.bf16.msra.mxu0 %v11760
    %11811 = vmatprep.subr.bf16.mxu0 0
    %11812 = vmatpush2.bf16.msra.mxu0 %v11759
    %11813 = vmatprep.subr.bf16.mxu0 0
    %11814 = vmatpush2.bf16.msra.mxu0 %v11758
    %11815 = vmatprep.subr.bf16.mxu0 0
    %11816 = vmatpush2.bf16.msra.mxu0 %v11757
    %11817 = vmatprep.subr.bf16.mxu0 0
    %11818 = vmatpush2.bf16.msra.mxu0 %v11756
    %11819 = vmatprep.subr.bf16.mxu0 0
    %11820 = vmatpush2.bf16.msra.mxu0 %v11755
    %11821 = vmatprep.subr.bf16.mxu0 0
    %11822 = vmatpush2.bf16.msra.mxu0 %v11754
    %11823 = vmatprep.subr.bf16.mxu0 0
    %11824 = vmatpush2.bf16.msra.mxu0 %v11753
    %11825 = vmatprep.mubr.bf16.mxu0 %v11458
    %11826 = vmatmul.mubr.bf16.gmra.mxu0 %v11457
    %v11827 = vpop.f32.mrf.mxu0
    %v11828 = vadd.f32 0.0, %v11827
    %v11829 = vpop.f32.mrf.mxu0
    %v11830 = vpop.f32.mrf.mxu0
    %v11831 = vadd.f32 0.0, %v11830
    %v11832 = vpop.f32.mrf.mxu0
    %11833 = vmatprep.mubr.bf16.mxu0 %v11461
    %11834 = vmatmul.mubr.bf16.gmra.mxu0 %v11460
    %v11835 = vpop.f32.mrf.mxu0
    %v11836 = vadd.f32 0.0, %v11835
    %v11837 = vpop.f32.mrf.mxu0
    %v11838 = vpop.f32.mrf.mxu0
    %v11839 = vadd.f32 0.0, %v11838
    %v11840 = vpop.f32.mrf.mxu0
    %11841 = vmatprep.mubr.bf16.mxu0 %v11464
    %11842 = vmatmul.mubr.bf16.gmra.mxu0 %v11463
    %v11843 = vpop.f32.mrf.mxu0
    %v11844 = vadd.f32 0.0, %v11843
    %v11845 = vpop.f32.mrf.mxu0
    %v11846 = vpop.f32.mrf.mxu0
    %v11847 = vadd.f32 0.0, %v11846
    %v11848 = vpop.f32.mrf.mxu0
    %11849 = vmatprep.mubr.bf16.mxu0 %v11467
    %11850 = vmatmul.mubr.bf16.gmra.mxu0 %v11466
    %v11851 = vpop.f32.mrf.mxu0
    %v11852 = vadd.f32 0.0, %v11851
    %v11853 = vpop.f32.mrf.mxu0
    %v11854 = vpop.f32.mrf.mxu0
    %v11855 = vadd.f32 0.0, %v11854
    %v11856 = vpop.f32.mrf.mxu0
    %11857 = vmatprep.mubr.bf16.mxu0 %v11470
    %11858 = vmatmul.mubr.bf16.gmra.mxu0 %v11469
    %v11859 = vpop.f32.mrf.mxu0
    %v11860 = vadd.f32 0.0, %v11859
    %v11861 = vpop.f32.mrf.mxu0
    %v11862 = vpop.f32.mrf.mxu0
    %v11863 = vadd.f32 0.0, %v11862
    %v11864 = vpop.f32.mrf.mxu0
    %11865 = vmatprep.mubr.bf16.mxu0 %v11473
    %11866 = vmatmul.mubr.bf16.gmra.mxu0 %v11472
    %v11867 = vpop.f32.mrf.mxu0
    %v11868 = vadd.f32 0.0, %v11867
    %v11869 = vpop.f32.mrf.mxu0
    %v11870 = vpop.f32.mrf.mxu0
    %v11871 = vadd.f32 0.0, %v11870
    %v11872 = vpop.f32.mrf.mxu0
    %11873 = vmatprep.mubr.bf16.mxu0 %v11476
    %11874 = vmatmul.mubr.bf16.gmra.mxu0 %v11475
    %v11875 = vpop.f32.mrf.mxu0
    %v11876 = vadd.f32 0.0, %v11875
    %v11877 = vpop.f32.mrf.mxu0
    %v11878 = vpop.f32.mrf.mxu0
    %v11879 = vadd.f32 0.0, %v11878
    %v11880 = vpop.f32.mrf.mxu0
    %11881 = vmatprep.mubr.bf16.mxu0 %v11479
    %11882 = vmatmul.mubr.bf16.gmra.mxu0 %v11478
    %v11883 = vpop.f32.mrf.mxu0
    %v11884 = vadd.f32 0.0, %v11883
    %v11885 = vpop.f32.mrf.mxu0
    %v11886 = vpop.f32.mrf.mxu0
    %v11887 = vadd.f32 0.0, %v11886
    %v11888 = vpop.f32.mrf.mxu0
    %11889 = vmatprep.mubr.bf16.mxu0 %v11482
    %11890 = vmatmul.mubr.bf16.gmra.mxu0 %v11481
    %v11891 = vpop.f32.mrf.mxu0
    %v11892 = vadd.f32 0.0, %v11891
    %v11893 = vpop.f32.mrf.mxu0
    %v11894 = vpop.f32.mrf.mxu0
    %v11895 = vadd.f32 0.0, %v11894
    %v11896 = vpop.f32.mrf.mxu0
    %11897 = vmatprep.mubr.bf16.mxu0 %v11485
    %11898 = vmatmul.mubr.bf16.gmra.mxu0 %v11484
    %v11899 = vpop.f32.mrf.mxu0
    %v11900 = vadd.f32 0.0, %v11899
    %v11901 = vpop.f32.mrf.mxu0
    %v11902 = vpop.f32.mrf.mxu0
    %v11903 = vadd.f32 0.0, %v11902
    %v11904 = vpop.f32.mrf.mxu0
    %11905 = vmatprep.mubr.bf16.mxu0 %v11488
    %11906 = vmatmul.mubr.bf16.gmra.mxu0 %v11487
    %v11907 = vpop.f32.mrf.mxu0
    %v11908 = vadd.f32 0.0, %v11907
    %v11909 = vpop.f32.mrf.mxu0
    %v11910 = vpop.f32.mrf.mxu0
    %v11911 = vadd.f32 0.0, %v11910
    %v11912 = vpop.f32.mrf.mxu0
    %11913 = vmatprep.mubr.bf16.mxu0 %v11491
    %11914 = vmatmul.mubr.bf16.gmra.mxu0 %v11490
    %v11915 = vpop.f32.mrf.mxu0
    %v11916 = vadd.f32 0.0, %v11915
    %v11917 = vpop.f32.mrf.mxu0
    %v11918 = vpop.f32.mrf.mxu0
    %v11919 = vadd.f32 0.0, %v11918
    %v11920 = vpop.f32.mrf.mxu0
    %11921 = vmatprep.mubr.bf16.mxu0 %v11494
    %11922 = vmatmul.mubr.bf16.gmra.mxu0 %v11493
    %v11923 = vpop.f32.mrf.mxu0
    %v11924 = vadd.f32 0.0, %v11923
    %v11925 = vpop.f32.mrf.mxu0
    %v11926 = vpop.f32.mrf.mxu0
    %v11927 = vadd.f32 0.0, %v11926
    %v11928 = vpop.f32.mrf.mxu0
    %11929 = vmatprep.mubr.bf16.mxu0 %v11497
    %11930 = vmatmul.mubr.bf16.gmra.mxu0 %v11496
    %v11931 = vpop.f32.mrf.mxu0
    %v11932 = vadd.f32 0.0, %v11931
    %v11933 = vpop.f32.mrf.mxu0
    %v11934 = vpop.f32.mrf.mxu0
    %v11935 = vadd.f32 0.0, %v11934
    %v11936 = vpop.f32.mrf.mxu0
    %11937 = vmatprep.mubr.bf16.mxu0 %v11500
    %11938 = vmatmul.mubr.bf16.gmra.mxu0 %v11499
    %v11939 = vpop.f32.mrf.mxu0
    %v11940 = vadd.f32 0.0, %v11939
    %v11941 = vpop.f32.mrf.mxu0
    %v11942 = vpop.f32.mrf.mxu0
    %v11943 = vadd.f32 0.0, %v11942
    %v11944 = vpop.f32.mrf.mxu0
    %11945 = vmatprep.mubr.bf16.mxu0 %v11503
    %11946 = vmatmul.mubr.bf16.gmra.mxu0 %v11502
    %v11947 = vpop.f32.mrf.mxu0
    %v11948 = vadd.f32 0.0, %v11947
    %v11949 = vpop.f32.mrf.mxu0
    %v11950 = vpop.f32.mrf.mxu0
    %v11951 = vadd.f32 0.0, %v11950
    %v11952 = vpop.f32.mrf.mxu0
    %11953 = vmatprep.mubr.bf16.mxu0 %v11506
    %11954 = vmatmul.mubr.bf16.gmra.mxu0 %v11505
    %v11955 = vpop.f32.mrf.mxu0
    %v11956 = vadd.f32 0.0, %v11955
    %v11957 = vpop.f32.mrf.mxu0
    %v11958 = vpop.f32.mrf.mxu0
    %v11959 = vadd.f32 0.0, %v11958
    %v11960 = vpop.f32.mrf.mxu0
    %11961 = vmatprep.mubr.bf16.mxu0 %v11509
    %11962 = vmatmul.mubr.bf16.gmra.mxu0 %v11508
    %v11963 = vpop.f32.mrf.mxu0
    %v11964 = vadd.f32 0.0, %v11963
    %v11965 = vpop.f32.mrf.mxu0
    %v11966 = vpop.f32.mrf.mxu0
    %v11967 = vadd.f32 0.0, %v11966
    %v11968 = vpop.f32.mrf.mxu0
    %11969 = vmatprep.mubr.bf16.mxu0 %v11512
    %11970 = vmatmul.mubr.bf16.gmra.mxu0 %v11511
    %v11971 = vpop.f32.mrf.mxu0
    %v11972 = vadd.f32 0.0, %v11971
    %v11973 = vpop.f32.mrf.mxu0
    %v11974 = vpop.f32.mrf.mxu0
    %v11975 = vadd.f32 0.0, %v11974
    %v11976 = vpop.f32.mrf.mxu0
    %11977 = vmatprep.mubr.bf16.mxu0 %v11515
    %11978 = vmatmul.mubr.bf16.gmra.mxu0 %v11514
    %v11979 = vpop.f32.mrf.mxu0
    %v11980 = vadd.f32 0.0, %v11979
    %v11981 = vpop.f32.mrf.mxu0
    %v11982 = vpop.f32.mrf.mxu0
    %v11983 = vadd.f32 0.0, %v11982
    %v11984 = vpop.f32.mrf.mxu0
    %11985 = vmatprep.mubr.bf16.mxu0 %v11518
    %11986 = vmatmul.mubr.bf16.gmra.mxu0 %v11517
    %v11987 = vpop.f32.mrf.mxu0
    %v11988 = vadd.f32 0.0, %v11987
    %v11989 = vpop.f32.mrf.mxu0
    %v11990 = vpop.f32.mrf.mxu0
    %v11991 = vadd.f32 0.0, %v11990
    %v11992 = vpop.f32.mrf.mxu0
    %11993 = vmatprep.mubr.bf16.mxu0 %v11521
    %11994 = vmatmul.mubr.bf16.gmra.mxu0 %v11520
    %v11995 = vpop.f32.mrf.mxu0
    %v11996 = vadd.f32 0.0, %v11995
    %v11997 = vpop.f32.mrf.mxu0
    %v11998 = vpop.f32.mrf.mxu0
    %v11999 = vadd.f32 0.0, %v11998
    %v12000 = vpop.f32.mrf.mxu0
    %12001 = vmatprep.mubr.bf16.mxu0 %v11524
    %12002 = vmatmul.mubr.bf16.gmra.mxu0 %v11523
    %v12003 = vpop.f32.mrf.mxu0
    %v12004 = vadd.f32 0.0, %v12003
    %v12005 = vpop.f32.mrf.mxu0
    %v12006 = vpop.f32.mrf.mxu0
    %v12007 = vadd.f32 0.0, %v12006
    %v12008 = vpop.f32.mrf.mxu0
    %12009 = vmatprep.mubr.bf16.mxu0 %v11527
    %12010 = vmatmul.mubr.bf16.gmra.mxu0 %v11526
    %v12011 = vpop.f32.mrf.mxu0
    %v12012 = vadd.f32 0.0, %v12011
    %v12013 = vpop.f32.mrf.mxu0
    %v12014 = vpop.f32.mrf.mxu0
    %v12015 = vadd.f32 0.0, %v12014
    %v12016 = vpop.f32.mrf.mxu0
    %12017 = vmatprep.mubr.bf16.mxu0 %v11530
    %12018 = vmatmul.mubr.bf16.gmra.mxu0 %v11529
    %v12019 = vpop.f32.mrf.mxu0
    %v12020 = vadd.f32 0.0, %v12019
    %v12021 = vpop.f32.mrf.mxu0
    %v12022 = vpop.f32.mrf.mxu0
    %v12023 = vadd.f32 0.0, %v12022
    %v12024 = vpop.f32.mrf.mxu0
    %12025 = vmatprep.mubr.bf16.mxu0 %v11533
    %12026 = vmatmul.mubr.bf16.gmra.mxu0 %v11532
    %v12027 = vpop.f32.mrf.mxu0
    %v12028 = vadd.f32 0.0, %v12027
    %v12029 = vpop.f32.mrf.mxu0
    %v12030 = vpop.f32.mrf.mxu0
    %v12031 = vadd.f32 0.0, %v12030
    %v12032 = vpop.f32.mrf.mxu0
    %12033 = vmatprep.mubr.bf16.mxu0 %v11536
    %12034 = vmatmul.mubr.bf16.gmra.mxu0 %v11535
    %v12035 = vpop.f32.mrf.mxu0
    %v12036 = vadd.f32 0.0, %v12035
    %v12037 = vpop.f32.mrf.mxu0
    %v12038 = vpop.f32.mrf.mxu0
    %v12039 = vadd.f32 0.0, %v12038
    %v12040 = vpop.f32.mrf.mxu0
    %12041 = vmatprep.mubr.bf16.mxu0 %v11539
    %12042 = vmatmul.mubr.bf16.gmra.mxu0 %v11538
    %v12043 = vpop.f32.mrf.mxu0
    %v12044 = vadd.f32 0.0, %v12043
    %v12045 = vpop.f32.mrf.mxu0
    %v12046 = vpop.f32.mrf.mxu0
    %v12047 = vadd.f32 0.0, %v12046
    %v12048 = vpop.f32.mrf.mxu0
    %12049 = vmatprep.mubr.bf16.mxu0 %v11542
    %12050 = vmatmul.mubr.bf16.gmra.mxu0 %v11541
    %v12051 = vpop.f32.mrf.mxu0
    %v12052 = vadd.f32 0.0, %v12051
    %v12053 = vpop.f32.mrf.mxu0
    %v12054 = vpop.f32.mrf.mxu0
    %v12055 = vadd.f32 0.0, %v12054
    %v12056 = vpop.f32.mrf.mxu0
    %12057 = vmatprep.mubr.bf16.mxu0 %v11545
    %12058 = vmatmul.mubr.bf16.gmra.mxu0 %v11544
    %v12059 = vpop.f32.mrf.mxu0
    %v12060 = vadd.f32 0.0, %v12059
    %v12061 = vpop.f32.mrf.mxu0
    %v12062 = vpop.f32.mrf.mxu0
    %v12063 = vadd.f32 0.0, %v12062
    %v12064 = vpop.f32.mrf.mxu0
    %12065 = vmatprep.mubr.bf16.mxu0 %v11548
    %12066 = vmatmul.mubr.bf16.gmra.mxu0 %v11547
    %v12067 = vpop.f32.mrf.mxu0
    %v12068 = vadd.f32 0.0, %v12067
    %v12069 = vpop.f32.mrf.mxu0
    %v12070 = vpop.f32.mrf.mxu0
    %v12071 = vadd.f32 0.0, %v12070
    %v12072 = vpop.f32.mrf.mxu0
    %12073 = vmatprep.mubr.bf16.mxu0 %v11551
    %12074 = vmatmul.mubr.bf16.gmra.mxu0 %v11550
    %v12075 = vpop.f32.mrf.mxu0
    %v12076 = vadd.f32 0.0, %v12075
    %v12077 = vpop.f32.mrf.mxu0
    %v12078 = vpop.f32.mrf.mxu0
    %v12079 = vadd.f32 0.0, %v12078
    %v12080 = vpop.f32.mrf.mxu0
    %12081 = vdwg.mxu0
    %12082 = vmatprep.subr.bf16.mxu0 0
    %12083 = vmatpush1.bf16.msra.mxu0 %v11768
    %12084 = vmatprep.subr.bf16.mxu0 0
    %12085 = vmatpush1.bf16.msra.mxu0 %v11767
    %12086 = vmatprep.subr.bf16.mxu0 0
    %12087 = vmatpush1.bf16.msra.mxu0 %v11766
    %12088 = vmatprep.subr.bf16.mxu0 0
    %12089 = vmatpush1.bf16.msra.mxu0 %v11765
    %12090 = vmatprep.subr.bf16.mxu0 0
    %12091 = vmatpush1.bf16.msra.mxu0 %v11764
    %12092 = vmatprep.subr.bf16.mxu0 0
    %12093 = vmatpush1.bf16.msra.mxu0 %v11763
    %12094 = vmatprep.subr.bf16.mxu0 0
    %12095 = vmatpush1.bf16.msra.mxu0 %v11762
    %12096 = vmatprep.subr.bf16.mxu0 0
    %12097 = vmatpush1.bf16.msra.mxu0 %v11761
    %12098 = vmatprep.subr.bf16.mxu0 0
    %12099 = vmatpush2.bf16.msra.mxu0 0
    %12100 = vmatprep.subr.bf16.mxu0 0
    %12101 = vmatpush2.bf16.msra.mxu0 0
    %12102 = vmatprep.subr.bf16.mxu0 0
    %12103 = vmatpush2.bf16.msra.mxu0 0
    %12104 = vmatprep.subr.bf16.mxu0 0
    %12105 = vmatpush2.bf16.msra.mxu0 0
    %12106 = vmatprep.subr.bf16.mxu0 0
    %12107 = vmatpush2.bf16.msra.mxu0 0
    %12108 = vmatprep.subr.bf16.mxu0 0
    %12109 = vmatpush2.bf16.msra.mxu0 0
    %12110 = vmatprep.subr.bf16.mxu0 0
    %12111 = vmatpush2.bf16.msra.mxu0 0
    %12112 = vmatprep.subr.bf16.mxu0 0
    %12113 = vmatpush2.bf16.msra.mxu0 0
    %12114 = vmatprep.mubr.bf16.mxu0 0
    %12115 = vmatmul.mubr.bf16.gmra.mxu0 %v11459
    %v12116 = vpop.f32.mrf.mxu0
    %v12117 = vadd.f32 %v11828, %v12116
    %v12118 = vpop.f32.mrf.mxu0
    %v12119 = vpop.f32.mrf.mxu0
    %v12120 = vadd.f32 %v11831, %v12119
    %v12121 = vpop.f32.mrf.mxu0
    %12122 = vmatprep.mubr.bf16.mxu0 0
    %12123 = vmatmul.mubr.bf16.gmra.mxu0 %v11462
    %v12124 = vpop.f32.mrf.mxu0
    %v12125 = vadd.f32 %v11836, %v12124
    %v12126 = vpop.f32.mrf.mxu0
    %v12127 = vpop.f32.mrf.mxu0
    %v12128 = vadd.f32 %v11839, %v12127
    %v12129 = vpop.f32.mrf.mxu0
    %12130 = vmatprep.mubr.bf16.mxu0 0
    %12131 = vmatmul.mubr.bf16.gmra.mxu0 %v11465
    %v12132 = vpop.f32.mrf.mxu0
    %v12133 = vadd.f32 %v11844, %v12132
    %v12134 = vpop.f32.mrf.mxu0
    %v12135 = vpop.f32.mrf.mxu0
    %v12136 = vadd.f32 %v11847, %v12135
    %v12137 = vpop.f32.mrf.mxu0
    %12138 = vmatprep.mubr.bf16.mxu0 0
    %12139 = vmatmul.mubr.bf16.gmra.mxu0 %v11468
    %v12140 = vpop.f32.mrf.mxu0
    %v12141 = vadd.f32 %v11852, %v12140
    %v12142 = vpop.f32.mrf.mxu0
    %v12143 = vpop.f32.mrf.mxu0
    %v12144 = vadd.f32 %v11855, %v12143
    %v12145 = vpop.f32.mrf.mxu0
    %12146 = vmatprep.mubr.bf16.mxu0 0
    %12147 = vmatmul.mubr.bf16.gmra.mxu0 %v11471
    %v12148 = vpop.f32.mrf.mxu0
    %v12149 = vadd.f32 %v11860, %v12148
    %v12150 = vpop.f32.mrf.mxu0
    %v12151 = vpop.f32.mrf.mxu0
    %v12152 = vadd.f32 %v11863, %v12151
    %v12153 = vpop.f32.mrf.mxu0
    %12154 = vmatprep.mubr.bf16.mxu0 0
    %12155 = vmatmul.mubr.bf16.gmra.mxu0 %v11474
    %v12156 = vpop.f32.mrf.mxu0
    %v12157 = vadd.f32 %v11868, %v12156
    %v12158 = vpop.f32.mrf.mxu0
    %v12159 = vpop.f32.mrf.mxu0
    %v12160 = vadd.f32 %v11871, %v12159
    %v12161 = vpop.f32.mrf.mxu0
    %12162 = vmatprep.mubr.bf16.mxu0 0
    %12163 = vmatmul.mubr.bf16.gmra.mxu0 %v11477
    %v12164 = vpop.f32.mrf.mxu0
    %v12165 = vadd.f32 %v11876, %v12164
    %v12166 = vpop.f32.mrf.mxu0
    %v12167 = vpop.f32.mrf.mxu0
    %v12168 = vadd.f32 %v11879, %v12167
    %v12169 = vpop.f32.mrf.mxu0
    %12170 = vmatprep.mubr.bf16.mxu0 0
    %12171 = vmatmul.mubr.bf16.gmra.mxu0 %v11480
    %v12172 = vpop.f32.mrf.mxu0
    %v12173 = vadd.f32 %v11884, %v12172
    %v12174 = vpop.f32.mrf.mxu0
    %v12175 = vpop.f32.mrf.mxu0
    %v12176 = vadd.f32 %v11887, %v12175
    %v12177 = vpop.f32.mrf.mxu0
    %12178 = vmatprep.mubr.bf16.mxu0 0
    %12179 = vmatmul.mubr.bf16.gmra.mxu0 %v11483
    %v12180 = vpop.f32.mrf.mxu0
    %v12181 = vadd.f32 %v11892, %v12180
    %v12182 = vpop.f32.mrf.mxu0
    %v12183 = vpop.f32.mrf.mxu0
    %v12184 = vadd.f32 %v11895, %v12183
    %v12185 = vpop.f32.mrf.mxu0
    %12186 = vmatprep.mubr.bf16.mxu0 0
    %12187 = vmatmul.mubr.bf16.gmra.mxu0 %v11486
    %v12188 = vpop.f32.mrf.mxu0
    %v12189 = vadd.f32 %v11900, %v12188
    %v12190 = vpop.f32.mrf.mxu0
    %v12191 = vpop.f32.mrf.mxu0
    %v12192 = vadd.f32 %v11903, %v12191
    %v12193 = vpop.f32.mrf.mxu0
    %12194 = vmatprep.mubr.bf16.mxu0 0
    %12195 = vmatmul.mubr.bf16.gmra.mxu0 %v11489
    %v12196 = vpop.f32.mrf.mxu0
    %v12197 = vadd.f32 %v11908, %v12196
    %v12198 = vpop.f32.mrf.mxu0
    %v12199 = vpop.f32.mrf.mxu0
    %v12200 = vadd.f32 %v11911, %v12199
    %v12201 = vpop.f32.mrf.mxu0
    %12202 = vmatprep.mubr.bf16.mxu0 0
    %12203 = vmatmul.mubr.bf16.gmra.mxu0 %v11492
    %v12204 = vpop.f32.mrf.mxu0
    %v12205 = vadd.f32 %v11916, %v12204
    %v12206 = vpop.f32.mrf.mxu0
    %v12207 = vpop.f32.mrf.mxu0
    %v12208 = vadd.f32 %v11919, %v12207
    %v12209 = vpop.f32.mrf.mxu0
    %12210 = vmatprep.mubr.bf16.mxu0 0
    %12211 = vmatmul.mubr.bf16.gmra.mxu0 %v11495
    %v12212 = vpop.f32.mrf.mxu0
    %v12213 = vadd.f32 %v11924, %v12212
    %v12214 = vpop.f32.mrf.mxu0
    %v12215 = vpop.f32.mrf.mxu0
    %v12216 = vadd.f32 %v11927, %v12215
    %v12217 = vpop.f32.mrf.mxu0
    %12218 = vmatprep.mubr.bf16.mxu0 0
    %12219 = vmatmul.mubr.bf16.gmra.mxu0 %v11498
    %v12220 = vpop.f32.mrf.mxu0
    %v12221 = vadd.f32 %v11932, %v12220
    %v12222 = vpop.f32.mrf.mxu0
    %v12223 = vpop.f32.mrf.mxu0
    %v12224 = vadd.f32 %v11935, %v12223
    %v12225 = vpop.f32.mrf.mxu0
    %12226 = vmatprep.mubr.bf16.mxu0 0
    %12227 = vmatmul.mubr.bf16.gmra.mxu0 %v11501
    %v12228 = vpop.f32.mrf.mxu0
    %v12229 = vadd.f32 %v11940, %v12228
    %v12230 = vpop.f32.mrf.mxu0
    %v12231 = vpop.f32.mrf.mxu0
    %v12232 = vadd.f32 %v11943, %v12231
    %v12233 = vpop.f32.mrf.mxu0
    %12234 = vmatprep.mubr.bf16.mxu0 0
    %12235 = vmatmul.mubr.bf16.gmra.mxu0 %v11504
    %v12236 = vpop.f32.mrf.mxu0
    %v12237 = vadd.f32 %v11948, %v12236
    %v12238 = vpop.f32.mrf.mxu0
    %v12239 = vpop.f32.mrf.mxu0
    %v12240 = vadd.f32 %v11951, %v12239
    %v12241 = vpop.f32.mrf.mxu0
    %12242 = vmatprep.mubr.bf16.mxu0 0
    %12243 = vmatmul.mubr.bf16.gmra.mxu0 %v11507
    %v12244 = vpop.f32.mrf.mxu0
    %v12245 = vadd.f32 %v11956, %v12244
    %v12246 = vpop.f32.mrf.mxu0
    %v12247 = vpop.f32.mrf.mxu0
    %v12248 = vadd.f32 %v11959, %v12247
    %v12249 = vpop.f32.mrf.mxu0
    %12250 = vmatprep.mubr.bf16.mxu0 0
    %12251 = vmatmul.mubr.bf16.gmra.mxu0 %v11510
    %v12252 = vpop.f32.mrf.mxu0
    %v12253 = vadd.f32 %v11964, %v12252
    %v12254 = vpop.f32.mrf.mxu0
    %v12255 = vpop.f32.mrf.mxu0
    %v12256 = vadd.f32 %v11967, %v12255
    %v12257 = vpop.f32.mrf.mxu0
    %12258 = vmatprep.mubr.bf16.mxu0 0
    %12259 = vmatmul.mubr.bf16.gmra.mxu0 %v11513
    %v12260 = vpop.f32.mrf.mxu0
    %v12261 = vadd.f32 %v11972, %v12260
    %v12262 = vpop.f32.mrf.mxu0
    %v12263 = vpop.f32.mrf.mxu0
    %v12264 = vadd.f32 %v11975, %v12263
    %v12265 = vpop.f32.mrf.mxu0
    %12266 = vmatprep.mubr.bf16.mxu0 0
    %12267 = vmatmul.mubr.bf16.gmra.mxu0 %v11516
    %v12268 = vpop.f32.mrf.mxu0
    %v12269 = vadd.f32 %v11980, %v12268
    %v12270 = vpop.f32.mrf.mxu0
    %v12271 = vpop.f32.mrf.mxu0
    %v12272 = vadd.f32 %v11983, %v12271
    %v12273 = vpop.f32.mrf.mxu0
    %12274 = vmatprep.mubr.bf16.mxu0 0
    %12275 = vmatmul.mubr.bf16.gmra.mxu0 %v11519
    %v12276 = vpop.f32.mrf.mxu0
    %v12277 = vadd.f32 %v11988, %v12276
    %v12278 = vpop.f32.mrf.mxu0
    %v12279 = vpop.f32.mrf.mxu0
    %v12280 = vadd.f32 %v11991, %v12279
    %v12281 = vpop.f32.mrf.mxu0
    %12282 = vmatprep.mubr.bf16.mxu0 0
    %12283 = vmatmul.mubr.bf16.gmra.mxu0 %v11522
    %v12284 = vpop.f32.mrf.mxu0
    %v12285 = vadd.f32 %v11996, %v12284
    %v12286 = vpop.f32.mrf.mxu0
    %v12287 = vpop.f32.mrf.mxu0
    %v12288 = vadd.f32 %v11999, %v12287
    %v12289 = vpop.f32.mrf.mxu0
    %12290 = vmatprep.mubr.bf16.mxu0 0
    %12291 = vmatmul.mubr.bf16.gmra.mxu0 %v11525
    %v12292 = vpop.f32.mrf.mxu0
    %v12293 = vadd.f32 %v12004, %v12292
    %v12294 = vpop.f32.mrf.mxu0
    %v12295 = vpop.f32.mrf.mxu0
    %v12296 = vadd.f32 %v12007, %v12295
    %v12297 = vpop.f32.mrf.mxu0
    %12298 = vmatprep.mubr.bf16.mxu0 0
    %12299 = vmatmul.mubr.bf16.gmra.mxu0 %v11528
    %v12300 = vpop.f32.mrf.mxu0
    %v12301 = vadd.f32 %v12012, %v12300
    %v12302 = vpop.f32.mrf.mxu0
    %v12303 = vpop.f32.mrf.mxu0
    %v12304 = vadd.f32 %v12015, %v12303
    %v12305 = vpop.f32.mrf.mxu0
    %12306 = vmatprep.mubr.bf16.mxu0 0
    %12307 = vmatmul.mubr.bf16.gmra.mxu0 %v11531
    %v12308 = vpop.f32.mrf.mxu0
    %v12309 = vadd.f32 %v12020, %v12308
    %v12310 = vpop.f32.mrf.mxu0
    %v12311 = vpop.f32.mrf.mxu0
    %v12312 = vadd.f32 %v12023, %v12311
    %v12313 = vpop.f32.mrf.mxu0
    %12314 = vmatprep.mubr.bf16.mxu0 0
    %12315 = vmatmul.mubr.bf16.gmra.mxu0 %v11534
    %v12316 = vpop.f32.mrf.mxu0
    %v12317 = vadd.f32 %v12028, %v12316
    %v12318 = vpop.f32.mrf.mxu0
    %v12319 = vpop.f32.mrf.mxu0
    %v12320 = vadd.f32 %v12031, %v12319
    %v12321 = vpop.f32.mrf.mxu0
    %12322 = vmatprep.mubr.bf16.mxu0 0
    %12323 = vmatmul.mubr.bf16.gmra.mxu0 %v11537
    %v12324 = vpop.f32.mrf.mxu0
    %v12325 = vadd.f32 %v12036, %v12324
    %v12326 = vpop.f32.mrf.mxu0
    %v12327 = vpop.f32.mrf.mxu0
    %v12328 = vadd.f32 %v12039, %v12327
    %v12329 = vpop.f32.mrf.mxu0
    %12330 = vmatprep.mubr.bf16.mxu0 0
    %12331 = vmatmul.mubr.bf16.gmra.mxu0 %v11540
    %v12332 = vpop.f32.mrf.mxu0
    %v12333 = vadd.f32 %v12044, %v12332
    %v12334 = vpop.f32.mrf.mxu0
    %v12335 = vpop.f32.mrf.mxu0
    %v12336 = vadd.f32 %v12047, %v12335
    %v12337 = vpop.f32.mrf.mxu0
    %12338 = vmatprep.mubr.bf16.mxu0 0
    %12339 = vmatmul.mubr.bf16.gmra.mxu0 %v11543
    %v12340 = vpop.f32.mrf.mxu0
    %v12341 = vadd.f32 %v12052, %v12340
    %v12342 = vpop.f32.mrf.mxu0
    %v12343 = vpop.f32.mrf.mxu0
    %v12344 = vadd.f32 %v12055, %v12343
    %v12345 = vpop.f32.mrf.mxu0
    %12346 = vmatprep.mubr.bf16.mxu0 0
    %12347 = vmatmul.mubr.bf16.gmra.mxu0 %v11546
    %v12348 = vpop.f32.mrf.mxu0
    %v12349 = vadd.f32 %v12060, %v12348
    %v12350 = vpop.f32.mrf.mxu0
    %v12351 = vpop.f32.mrf.mxu0
    %v12352 = vadd.f32 %v12063, %v12351
    %v12353 = vpop.f32.mrf.mxu0
    %12354 = vmatprep.mubr.bf16.mxu0 0
    %12355 = vmatmul.mubr.bf16.gmra.mxu0 %v11549
    %v12356 = vpop.f32.mrf.mxu0
    %v12357 = vadd.f32 %v12068, %v12356
    %v12358 = vpop.f32.mrf.mxu0
    %v12359 = vpop.f32.mrf.mxu0
    %v12360 = vadd.f32 %v12071, %v12359
    %v12361 = vpop.f32.mrf.mxu0
    %12362 = vmatprep.mubr.bf16.mxu0 0
    %12363 = vmatmul.mubr.bf16.gmra.mxu0 %v11552
    %v12364 = vpop.f32.mrf.mxu0
    %v12365 = vadd.f32 %v12076, %v12364
    %v12366 = vpop.f32.mrf.mxu0
    %v12367 = vpop.f32.mrf.mxu0
    %v12368 = vadd.f32 %v12079, %v12367
    %v12369 = vpop.f32.mrf.mxu0
    %12370 = vdwg.mxu0
    %v12371 = vadd.f32 %v10755, %v12117
    %v12372 = vadd.f32 %v10758, %v12120
    %v12373 = vadd.f32 %v10763, %v12125
    %v12374 = vadd.f32 %v10766, %v12128
    %v12375 = vadd.f32 %v10771, %v12133
    %v12376 = vadd.f32 %v10774, %v12136
    %v12377 = vadd.f32 %v10779, %v12141
    %v12378 = vadd.f32 %v10782, %v12144
    %v12379 = vadd.f32 %v10787, %v12149
    %v12380 = vadd.f32 %v10790, %v12152
    %v12381 = vadd.f32 %v10795, %v12157
    %v12382 = vadd.f32 %v10798, %v12160
    %v12383 = vadd.f32 %v10803, %v12165
    %v12384 = vadd.f32 %v10806, %v12168
    %v12385 = vadd.f32 %v10811, %v12173
    %v12386 = vadd.f32 %v10814, %v12176
    %v12387 = vadd.f32 %v10819, %v12181
    %v12388 = vadd.f32 %v10822, %v12184
    %v12389 = vadd.f32 %v10827, %v12189
    %v12390 = vadd.f32 %v10830, %v12192
    %v12391 = vadd.f32 %v10835, %v12197
    %v12392 = vadd.f32 %v10838, %v12200
    %v12393 = vadd.f32 %v10843, %v12205
    %v12394 = vadd.f32 %v10846, %v12208
    %v12395 = vadd.f32 %v10851, %v12213
    %v12396 = vadd.f32 %v10854, %v12216
    %v12397 = vadd.f32 %v10859, %v12221
    %v12398 = vadd.f32 %v10862, %v12224
    %v12399 = vadd.f32 %v10867, %v12229
    %v12400 = vadd.f32 %v10870, %v12232
    %v12401 = vadd.f32 %v10875, %v12237
    %v12402 = vadd.f32 %v10878, %v12240
    %v12403 = vadd.f32 %v10883, %v12245
    %v12404 = vadd.f32 %v10886, %v12248
    %v12405 = vadd.f32 %v10891, %v12253
    %v12406 = vadd.f32 %v10894, %v12256
    %v12407 = vadd.f32 %v10899, %v12261
    %v12408 = vadd.f32 %v10902, %v12264
    %v12409 = vadd.f32 %v10907, %v12269
    %v12410 = vadd.f32 %v10910, %v12272
    %v12411 = vadd.f32 %v10915, %v12277
    %v12412 = vadd.f32 %v10918, %v12280
    %v12413 = vadd.f32 %v10923, %v12285
    %v12414 = vadd.f32 %v10926, %v12288
    %v12415 = vadd.f32 %v10931, %v12293
    %v12416 = vadd.f32 %v10934, %v12296
    %v12417 = vadd.f32 %v10939, %v12301
    %v12418 = vadd.f32 %v10942, %v12304
    %v12419 = vadd.f32 %v10947, %v12309
    %v12420 = vadd.f32 %v10950, %v12312
    %v12421 = vadd.f32 %v10955, %v12317
    %v12422 = vadd.f32 %v10958, %v12320
    %v12423 = vadd.f32 %v10963, %v12325
    %v12424 = vadd.f32 %v10966, %v12328
    %v12425 = vadd.f32 %v10971, %v12333
    %v12426 = vadd.f32 %v10974, %v12336
    %v12427 = vadd.f32 %v10979, %v12341
    %v12428 = vadd.f32 %v10982, %v12344
    %v12429 = vadd.f32 %v10987, %v12349
    %v12430 = vadd.f32 %v10990, %v12352
    %v12431 = vadd.f32 %v10995, %v12357
    %v12432 = vadd.f32 %v10998, %v12360
    %v12433 = vadd.f32 %v11003, %v12365
    %v12434 = vadd.f32 %v11006, %v12368
    %v12435 = vadd.f32 %v12371, %v12372
    %v12436 = vadd.f32 %v12435, %v12373
    %v12437 = vadd.f32 %v12436, %v12374
    %v12438 = vadd.f32 %v12437, %v12375
    %v12439 = vadd.f32 %v12438, %v12376
    %v12440 = vadd.f32 %v12439, %v12377
    %v12441 = vadd.f32 %v12440, %v12378
    %v12442 = vadd.f32 %v12441, %v12379
    %v12443 = vadd.f32 %v12442, %v12380
    %v12444 = vadd.f32 %v12443, %v12381
    %v12445 = vadd.f32 %v12444, %v12382
    %v12446 = vadd.f32 %v12445, %v12383
    %v12447 = vadd.f32 %v12446, %v12384
    %v12448 = vadd.f32 %v12447, %v12385
    %v12449 = vadd.f32 %v12448, %v12386
    %v12450 = vadd.f32 %v12449, %v12387
    %v12451 = vadd.f32 %v12450, %v12388
    %v12452 = vadd.f32 %v12451, %v12389
    %v12453 = vadd.f32 %v12452, %v12390
    %v12454 = vadd.f32 %v12453, %v12391
    %v12455 = vadd.f32 %v12454, %v12392
    %v12456 = vadd.f32 %v12455, %v12393
    %v12457 = vadd.f32 %v12456, %v12394
    %v12458 = vadd.f32 %v12457, %v12395
    %v12459 = vadd.f32 %v12458, %v12396
    %v12460 = vadd.f32 %v12459, %v12397
    %v12461 = vadd.f32 %v12460, %v12398
    %v12462 = vadd.f32 %v12461, %v12399
    %v12463 = vadd.f32 %v12462, %v12400
    %v12464 = vadd.f32 %v12463, %v12401
    %v12465 = vadd.f32 %v12464, %v12402
    %v12466 = vadd.f32 %v12465, %v12403
    %v12467 = vadd.f32 %v12466, %v12404
    %v12468 = vadd.f32 %v12467, %v12405
    %v12469 = vadd.f32 %v12468, %v12406
    %v12470 = vadd.f32 %v12469, %v12407
    %v12471 = vadd.f32 %v12470, %v12408
    %v12472 = vadd.f32 %v12471, %v12409
    %v12473 = vadd.f32 %v12472, %v12410
    %v12474 = vadd.f32 %v12473, %v12411
    %v12475 = vadd.f32 %v12474, %v12412
    %v12476 = vadd.f32 %v12475, %v12413
    %v12477 = vadd.f32 %v12476, %v12414
    %v12478 = vadd.f32 %v12477, %v12415
    %v12479 = vadd.f32 %v12478, %v12416
    %v12480 = vadd.f32 %v12479, %v12417
    %v12481 = vadd.f32 %v12480, %v12418
    %v12482 = vadd.f32 %v12481, %v12419
    %v12483 = vadd.f32 %v12482, %v12420
    %v12484 = vadd.f32 %v12483, %v12421
    %v12485 = vadd.f32 %v12484, %v12422
    %v12486 = vadd.f32 %v12485, %v12423
    %v12487 = vadd.f32 %v12486, %v12424
    %v12488 = vadd.f32 %v12487, %v12425
    %v12489 = vadd.f32 %v12488, %v12426
    %v12490 = vadd.f32 %v12489, %v12427
    %v12491 = vadd.f32 %v12490, %v12428
    %v12492 = vadd.f32 %v12491, %v12429
    %v12493 = vadd.f32 %v12492, %v12430
    %v12494 = vadd.f32 %v12493, %v12431
    %v12495 = vadd.f32 %v12494, %v12432
    %v12496 = vadd.f32 %v12495, %v12433
    %v12497 = vadd.f32 %v12496, %v12434
    %v12498 = vrot.slane %v12497, 4
    %v12499 = vadd.f32 %v12497, %v12498
    %v12500 = vrot.slane %v12499, 2
    %v12501 = vadd.f32 %v12499, %v12500
    %v12502 = vrot.slane %v12501, 1
    %v12503 = vadd.f32 %v12501, %v12502
    %v12504 = vmul.f32 %v12503, %v6226
    %v12505 = vsub.f32 %v12371, %v12504
    %v12506 = vsub.f32 %v12372, %v12504
    %v12507 = vsub.f32 %v12373, %v12504
    %v12508 = vsub.f32 %v12374, %v12504
    %v12509 = vsub.f32 %v12375, %v12504
    %v12510 = vsub.f32 %v12376, %v12504
    %v12511 = vsub.f32 %v12377, %v12504
    %v12512 = vsub.f32 %v12378, %v12504
    %v12513 = vsub.f32 %v12379, %v12504
    %v12514 = vsub.f32 %v12380, %v12504
    %v12515 = vsub.f32 %v12381, %v12504
    %v12516 = vsub.f32 %v12382, %v12504
    %v12517 = vsub.f32 %v12383, %v12504
    %v12518 = vsub.f32 %v12384, %v12504
    %v12519 = vsub.f32 %v12385, %v12504
    %v12520 = vsub.f32 %v12386, %v12504
    %v12521 = vsub.f32 %v12387, %v12504
    %v12522 = vsub.f32 %v12388, %v12504
    %v12523 = vsub.f32 %v12389, %v12504
    %v12524 = vsub.f32 %v12390, %v12504
    %v12525 = vsub.f32 %v12391, %v12504
    %v12526 = vsub.f32 %v12392, %v12504
    %v12527 = vsub.f32 %v12393, %v12504
    %v12528 = vsub.f32 %v12394, %v12504
    %v12529 = vsub.f32 %v12395, %v12504
    %v12530 = vsub.f32 %v12396, %v12504
    %v12531 = vsub.f32 %v12397, %v12504
    %v12532 = vsub.f32 %v12398, %v12504
    %v12533 = vsub.f32 %v12399, %v12504
    %v12534 = vsub.f32 %v12400, %v12504
    %v12535 = vsub.f32 %v12401, %v12504
    %v12536 = vsub.f32 %v12402, %v12504
    %v12537 = vsub.f32 %v12403, %v12504
    %v12538 = vsub.f32 %v12404, %v12504
    %v12539 = vsub.f32 %v12405, %v12504
    %v12540 = vsub.f32 %v12406, %v12504
    %v12541 = vsub.f32 %v12407, %v12504
    %v12542 = vsub.f32 %v12408, %v12504
    %v12543 = vsub.f32 %v12409, %v12504
    %v12544 = vsub.f32 %v12410, %v12504
    %v12545 = vsub.f32 %v12411, %v12504
    %v12546 = vsub.f32 %v12412, %v12504
    %v12547 = vsub.f32 %v12413, %v12504
    %v12548 = vsub.f32 %v12414, %v12504
    %v12549 = vsub.f32 %v12415, %v12504
    %v12550 = vsub.f32 %v12416, %v12504
    %v12551 = vsub.f32 %v12417, %v12504
    %v12552 = vsub.f32 %v12418, %v12504
    %v12553 = vsub.f32 %v12419, %v12504
    %v12554 = vsub.f32 %v12420, %v12504
    %v12555 = vsub.f32 %v12421, %v12504
    %v12556 = vsub.f32 %v12422, %v12504
    %v12557 = vsub.f32 %v12423, %v12504
    %v12558 = vsub.f32 %v12424, %v12504
    %v12559 = vsub.f32 %v12425, %v12504
    %v12560 = vsub.f32 %v12426, %v12504
    %v12561 = vsub.f32 %v12427, %v12504
    %v12562 = vsub.f32 %v12428, %v12504
    %v12563 = vsub.f32 %v12429, %v12504
    %v12564 = vsub.f32 %v12430, %v12504
    %v12565 = vsub.f32 %v12431, %v12504
    %v12566 = vsub.f32 %v12432, %v12504
    %v12567 = vsub.f32 %v12433, %v12504
    %v12568 = vsub.f32 %v12434, %v12504
    %v12569 = vmul.f32 %v12505, %v12505
    %v12570 = vmul.f32 %v12506, %v12506
    %v12571 = vmul.f32 %v12507, %v12507
    %v12572 = vmul.f32 %v12508, %v12508
    %v12573 = vmul.f32 %v12509, %v12509
    %v12574 = vmul.f32 %v12510, %v12510
    %v12575 = vmul.f32 %v12511, %v12511
    %v12576 = vmul.f32 %v12512, %v12512
    %v12577 = vmul.f32 %v12513, %v12513
    %v12578 = vmul.f32 %v12514, %v12514
    %v12579 = vmul.f32 %v12515, %v12515
    %v12580 = vmul.f32 %v12516, %v12516
    %v12581 = vmul.f32 %v12517, %v12517
    %v12582 = vmul.f32 %v12518, %v12518
    %v12583 = vmul.f32 %v12519, %v12519
    %v12584 = vmul.f32 %v12520, %v12520
    %v12585 = vmul.f32 %v12521, %v12521
    %v12586 = vmul.f32 %v12522, %v12522
    %v12587 = vmul.f32 %v12523, %v12523
    %v12588 = vmul.f32 %v12524, %v12524
    %v12589 = vmul.f32 %v12525, %v12525
    %v12590 = vmul.f32 %v12526, %v12526
    %v12591 = vmul.f32 %v12527, %v12527
    %v12592 = vmul.f32 %v12528, %v12528
    %v12593 = vmul.f32 %v12529, %v12529
    %v12594 = vmul.f32 %v12530, %v12530
    %v12595 = vmul.f32 %v12531, %v12531
    %v12596 = vmul.f32 %v12532, %v12532
    %v12597 = vmul.f32 %v12533, %v12533
    %v12598 = vmul.f32 %v12534, %v12534
    %v12599 = vmul.f32 %v12535, %v12535
    %v12600 = vmul.f32 %v12536, %v12536
    %v12601 = vmul.f32 %v12537, %v12537
    %v12602 = vmul.f32 %v12538, %v12538
    %v12603 = vmul.f32 %v12539, %v12539
    %v12604 = vmul.f32 %v12540, %v12540
    %v12605 = vmul.f32 %v12541, %v12541
    %v12606 = vmul.f32 %v12542, %v12542
    %v12607 = vmul.f32 %v12543, %v12543
    %v12608 = vmul.f32 %v12544, %v12544
    %v12609 = vmul.f32 %v12545, %v12545
    %v12610 = vmul.f32 %v12546, %v12546
    %v12611 = vmul.f32 %v12547, %v12547
    %v12612 = vmul.f32 %v12548, %v12548
    %v12613 = vmul.f32 %v12549, %v12549
    %v12614 = vmul.f32 %v12550, %v12550
    %v12615 = vmul.f32 %v12551, %v12551
    %v12616 = vmul.f32 %v12552, %v12552
    %v12617 = vmul.f32 %v12553, %v12553
    %v12618 = vmul.f32 %v12554, %v12554
    %v12619 = vmul.f32 %v12555, %v12555
    %v12620 = vmul.f32 %v12556, %v12556
    %v12621 = vmul.f32 %v12557, %v12557
    %v12622 = vmul.f32 %v12558, %v12558
    %v12623 = vmul.f32 %v12559, %v12559
    %v12624 = vmul.f32 %v12560, %v12560
    %v12625 = vmul.f32 %v12561, %v12561
    %v12626 = vmul.f32 %v12562, %v12562
    %v12627 = vmul.f32 %v12563, %v12563
    %v12628 = vmul.f32 %v12564, %v12564
    %v12629 = vmul.f32 %v12565, %v12565
    %v12630 = vmul.f32 %v12566, %v12566
    %v12631 = vmul.f32 %v12567, %v12567
    %v12632 = vmul.f32 %v12568, %v12568
    %v12633 = vadd.f32 %v12569, %v12570
    %v12634 = vadd.f32 %v12633, %v12571
    %v12635 = vadd.f32 %v12634, %v12572
    %v12636 = vadd.f32 %v12635, %v12573
    %v12637 = vadd.f32 %v12636, %v12574
    %v12638 = vadd.f32 %v12637, %v12575
    %v12639 = vadd.f32 %v12638, %v12576
    %v12640 = vadd.f32 %v12639, %v12577
    %v12641 = vadd.f32 %v12640, %v12578
    %v12642 = vadd.f32 %v12641, %v12579
    %v12643 = vadd.f32 %v12642, %v12580
    %v12644 = vadd.f32 %v12643, %v12581
    %v12645 = vadd.f32 %v12644, %v12582
    %v12646 = vadd.f32 %v12645, %v12583
    %v12647 = vadd.f32 %v12646, %v12584
    %v12648 = vadd.f32 %v12647, %v12585
    %v12649 = vadd.f32 %v12648, %v12586
    %v12650 = vadd.f32 %v12649, %v12587
    %v12651 = vadd.f32 %v12650, %v12588
    %v12652 = vadd.f32 %v12651, %v12589
    %v12653 = vadd.f32 %v12652, %v12590
    %v12654 = vadd.f32 %v12653, %v12591
    %v12655 = vadd.f32 %v12654, %v12592
    %v12656 = vadd.f32 %v12655, %v12593
    %v12657 = vadd.f32 %v12656, %v12594
    %v12658 = vadd.f32 %v12657, %v12595
    %v12659 = vadd.f32 %v12658, %v12596
    %v12660 = vadd.f32 %v12659, %v12597
    %v12661 = vadd.f32 %v12660, %v12598
    %v12662 = vadd.f32 %v12661, %v12599
    %v12663 = vadd.f32 %v12662, %v12600
    %v12664 = vadd.f32 %v12663, %v12601
    %v12665 = vadd.f32 %v12664, %v12602
    %v12666 = vadd.f32 %v12665, %v12603
    %v12667 = vadd.f32 %v12666, %v12604
    %v12668 = vadd.f32 %v12667, %v12605
    %v12669 = vadd.f32 %v12668, %v12606
    %v12670 = vadd.f32 %v12669, %v12607
    %v12671 = vadd.f32 %v12670, %v12608
    %v12672 = vadd.f32 %v12671, %v12609
    %v12673 = vadd.f32 %v12672, %v12610
    %v12674 = vadd.f32 %v12673, %v12611
    %v12675 = vadd.f32 %v12674, %v12612
    %v12676 = vadd.f32 %v12675, %v12613
    %v12677 = vadd.f32 %v12676, %v12614
    %v12678 = vadd.f32 %v12677, %v12615
    %v12679 = vadd.f32 %v12678, %v12616
    %v12680 = vadd.f32 %v12679, %v12617
    %v12681 = vadd.f32 %v12680, %v12618
    %v12682 = vadd.f32 %v12681, %v12619
    %v12683 = vadd.f32 %v12682, %v12620
    %v12684 = vadd.f32 %v12683, %v12621
    %v12685 = vadd.f32 %v12684, %v12622
    %v12686 = vadd.f32 %v12685, %v12623
    %v12687 = vadd.f32 %v12686, %v12624
    %v12688 = vadd.f32 %v12687, %v12625
    %v12689 = vadd.f32 %v12688, %v12626
    %v12690 = vadd.f32 %v12689, %v12627
    %v12691 = vadd.f32 %v12690, %v12628
    %v12692 = vadd.f32 %v12691, %v12629
    %v12693 = vadd.f32 %v12692, %v12630
    %v12694 = vadd.f32 %v12693, %v12631
    %v12695 = vadd.f32 %v12694, %v12632
    %v12696 = vrot.slane %v12695, 4
    %v12697 = vadd.f32 %v12695, %v12696
    %v12698 = vrot.slane %v12697, 2
    %v12699 = vadd.f32 %v12697, %v12698
    %v12700 = vrot.slane %v12699, 1
    %v12701 = vadd.f32 %v12699, %v12700
    %v12702 = vmul.f32 %v12701, %v6226
    %v12703 = vld [vmem:[%s5] sm:$0x1]
    %v12704 = vadd.f32 %v12702, 1e-05
    %v12705 = vrsqrt.pop %v12704
    %v12706 = vmul.f32 %v12703, %v12705
    %v12707 = vld [vmem:[%s6] sm:$0x1]
    %v12708 = vmul.f32 %v12504, %v12706
    %v12709 = vsub.f32 %v12707, %v12708
    %v12711 = vlaneseq
    %v12712 = vshrl.u32 %v12711, 7
    %v12713 = vsub.s32 0, %v12712
    %v12714 = vrot.slane %v12706, %v12713
    %v12716 = vmul.f32 %v12371, %v12714
    %v12717 = vmul.f32 %v12372, %v12714
    %v12718 = vmul.f32 %v12373, %v12714
    %v12719 = vmul.f32 %v12374, %v12714
    %v12720 = vmul.f32 %v12375, %v12714
    %v12721 = vmul.f32 %v12376, %v12714
    %v12722 = vmul.f32 %v12377, %v12714
    %v12723 = vmul.f32 %v12378, %v12714
    %v12724 = vmul.f32 %v12379, %v12714
    %v12725 = vmul.f32 %v12380, %v12714
    %v12726 = vmul.f32 %v12381, %v12714
    %v12727 = vmul.f32 %v12382, %v12714
    %v12728 = vmul.f32 %v12383, %v12714
    %v12729 = vmul.f32 %v12384, %v12714
    %v12730 = vmul.f32 %v12385, %v12714
    %v12731 = vmul.f32 %v12386, %v12714
    %v12732 = vmul.f32 %v12387, %v12714
    %v12733 = vmul.f32 %v12388, %v12714
    %v12734 = vmul.f32 %v12389, %v12714
    %v12735 = vmul.f32 %v12390, %v12714
    %v12736 = vmul.f32 %v12391, %v12714
    %v12737 = vmul.f32 %v12392, %v12714
    %v12738 = vmul.f32 %v12393, %v12714
    %v12739 = vmul.f32 %v12394, %v12714
    %v12740 = vmul.f32 %v12395, %v12714
    %v12741 = vmul.f32 %v12396, %v12714
    %v12742 = vmul.f32 %v12397, %v12714
    %v12743 = vmul.f32 %v12398, %v12714
    %v12744 = vmul.f32 %v12399, %v12714
    %v12745 = vmul.f32 %v12400, %v12714
    %v12746 = vmul.f32 %v12401, %v12714
    %v12747 = vmul.f32 %v12402, %v12714
    %v12748 = vmul.f32 %v12403, %v12714
    %v12749 = vmul.f32 %v12404, %v12714
    %v12750 = vmul.f32 %v12405, %v12714
    %v12751 = vmul.f32 %v12406, %v12714
    %v12752 = vmul.f32 %v12407, %v12714
    %v12753 = vmul.f32 %v12408, %v12714
    %v12754 = vmul.f32 %v12409, %v12714
    %v12755 = vmul.f32 %v12410, %v12714
    %v12756 = vmul.f32 %v12411, %v12714
    %v12757 = vmul.f32 %v12412, %v12714
    %v12758 = vmul.f32 %v12413, %v12714
    %v12759 = vmul.f32 %v12414, %v12714
    %v12760 = vmul.f32 %v12415, %v12714
    %v12761 = vmul.f32 %v12416, %v12714
    %v12762 = vmul.f32 %v12417, %v12714
    %v12763 = vmul.f32 %v12418, %v12714
    %v12764 = vmul.f32 %v12419, %v12714
    %v12765 = vmul.f32 %v12420, %v12714
    %v12766 = vmul.f32 %v12421, %v12714
    %v12767 = vmul.f32 %v12422, %v12714
    %v12768 = vmul.f32 %v12423, %v12714
    %v12769 = vmul.f32 %v12424, %v12714
    %v12770 = vmul.f32 %v12425, %v12714
    %v12771 = vmul.f32 %v12426, %v12714
    %v12772 = vmul.f32 %v12427, %v12714
    %v12773 = vmul.f32 %v12428, %v12714
    %v12774 = vmul.f32 %v12429, %v12714
    %v12775 = vmul.f32 %v12430, %v12714
    %v12776 = vmul.f32 %v12431, %v12714
    %v12777 = vmul.f32 %v12432, %v12714
    %v12778 = vmul.f32 %v12433, %v12714
    %v12779 = vmul.f32 %v12434, %v12714
    %v12781 = vlaneseq
    %v12782 = vshrl.u32 %v12781, 7
    %v12783 = vsub.s32 0, %v12782
    %v12784 = vrot.slane %v12709, %v12783
    %v12786 = vadd.f32 %v12716, %v12784
    %v12787 = vadd.f32 %v12717, %v12784
    %v12788 = vadd.f32 %v12718, %v12784
    %v12789 = vadd.f32 %v12719, %v12784
    %v12790 = vadd.f32 %v12720, %v12784
    %v12791 = vadd.f32 %v12721, %v12784
    %v12792 = vadd.f32 %v12722, %v12784
    %v12793 = vadd.f32 %v12723, %v12784
    %v12794 = vadd.f32 %v12724, %v12784
    %v12795 = vadd.f32 %v12725, %v12784
    %v12796 = vadd.f32 %v12726, %v12784
    %v12797 = vadd.f32 %v12727, %v12784
    %v12798 = vadd.f32 %v12728, %v12784
    %v12799 = vadd.f32 %v12729, %v12784
    %v12800 = vadd.f32 %v12730, %v12784
    %v12801 = vadd.f32 %v12731, %v12784
    %v12802 = vadd.f32 %v12732, %v12784
    %v12803 = vadd.f32 %v12733, %v12784
    %v12804 = vadd.f32 %v12734, %v12784
    %v12805 = vadd.f32 %v12735, %v12784
    %v12806 = vadd.f32 %v12736, %v12784
    %v12807 = vadd.f32 %v12737, %v12784
    %v12808 = vadd.f32 %v12738, %v12784
    %v12809 = vadd.f32 %v12739, %v12784
    %v12810 = vadd.f32 %v12740, %v12784
    %v12811 = vadd.f32 %v12741, %v12784
    %v12812 = vadd.f32 %v12742, %v12784
    %v12813 = vadd.f32 %v12743, %v12784
    %v12814 = vadd.f32 %v12744, %v12784
    %v12815 = vadd.f32 %v12745, %v12784
    %v12816 = vadd.f32 %v12746, %v12784
    %v12817 = vadd.f32 %v12747, %v12784
    %v12818 = vadd.f32 %v12748, %v12784
    %v12819 = vadd.f32 %v12749, %v12784
    %v12820 = vadd.f32 %v12750, %v12784
    %v12821 = vadd.f32 %v12751, %v12784
    %v12822 = vadd.f32 %v12752, %v12784
    %v12823 = vadd.f32 %v12753, %v12784
    %v12824 = vadd.f32 %v12754, %v12784
    %v12825 = vadd.f32 %v12755, %v12784
    %v12826 = vadd.f32 %v12756, %v12784
    %v12827 = vadd.f32 %v12757, %v12784
    %v12828 = vadd.f32 %v12758, %v12784
    %v12829 = vadd.f32 %v12759, %v12784
    %v12830 = vadd.f32 %v12760, %v12784
    %v12831 = vadd.f32 %v12761, %v12784
    %v12832 = vadd.f32 %v12762, %v12784
    %v12833 = vadd.f32 %v12763, %v12784
    %v12834 = vadd.f32 %v12764, %v12784
    %v12835 = vadd.f32 %v12765, %v12784
    %v12836 = vadd.f32 %v12766, %v12784
    %v12837 = vadd.f32 %v12767, %v12784
    %v12838 = vadd.f32 %v12768, %v12784
    %v12839 = vadd.f32 %v12769, %v12784
    %v12840 = vadd.f32 %v12770, %v12784
    %v12841 = vadd.f32 %v12771, %v12784
    %v12842 = vadd.f32 %v12772, %v12784
    %v12843 = vadd.f32 %v12773, %v12784
    %v12844 = vadd.f32 %v12774, %v12784
    %v12845 = vadd.f32 %v12775, %v12784
    %v12846 = vadd.f32 %v12776, %v12784
    %v12847 = vadd.f32 %v12777, %v12784
    %v12848 = vadd.f32 %v12778, %v12784
    %v12849 = vadd.f32 %v12779, %v12784
    %v12850 = vld [vmem:[#allocation3] sm:$0xff]
    %v12851 = vld [vmem:[#allocation3 + $0x8] sm:$0xff]
    %v12852 = vld [vmem:[#allocation3 + $0x10] sm:$0xff]
    %v12853 = vld [vmem:[#allocation3 + $0x18] sm:$0xff]
    %v12854 = vld [vmem:[#allocation3 + $0x20] sm:$0xff]
    %v12855 = vld [vmem:[#allocation3 + $0x28] sm:$0xff]
    %v12856 = vld [vmem:[#allocation3 + $0x30] sm:$0xff]
    %v12857 = vld [vmem:[#allocation3 + $0x38] sm:$0xff]
    %v12858 = vld [vmem:[#allocation3 + $0x40] sm:$0xff]
    %v12859 = vld [vmem:[#allocation3 + $0x48] sm:$0xff]
    %v12860 = vld [vmem:[#allocation3 + $0x50] sm:$0xff]
    %v12861 = vld [vmem:[#allocation3 + $0x58] sm:$0xff]
    %v12862 = vld [vmem:[#allocation3 + $0x60] sm:$0xff]
    %v12863 = vld [vmem:[#allocation3 + $0x68] sm:$0xff]
    %v12864 = vld [vmem:[#allocation3 + $0x70] sm:$0xff]
    %v12865 = vld [vmem:[#allocation3 + $0x78] sm:$0xff]
    %v12866 = vld [vmem:[#allocation3 + $0x80] sm:$0xff]
    %v12867 = vld [vmem:[#allocation3 + $0x88] sm:$0xff]
    %v12868 = vld [vmem:[#allocation3 + $0x90] sm:$0xff]
    %v12869 = vld [vmem:[#allocation3 + $0x98] sm:$0xff]
    %v12870 = vld [vmem:[#allocation3 + $0xa0] sm:$0xff]
    %v12871 = vld [vmem:[#allocation3 + $0xa8] sm:$0xff]
    %v12872 = vld [vmem:[#allocation3 + $0xb0] sm:$0xff]
    %v12873 = vld [vmem:[#allocation3 + $0xb8] sm:$0xff]
    %v12874 = vld [vmem:[#allocation3 + $0xc0] sm:$0xff]
    %v12875 = vld [vmem:[#allocation3 + $0xc8] sm:$0xff]
    %v12876 = vld [vmem:[#allocation3 + $0xd0] sm:$0xff]
    %v12877 = vld [vmem:[#allocation3 + $0xd8] sm:$0xff]
    %v12878 = vld [vmem:[#allocation3 + $0xe0] sm:$0xff]
    %v12879 = vld [vmem:[#allocation3 + $0xe8] sm:$0xff]
    %v12880 = vld [vmem:[#allocation3 + $0xf0] sm:$0xff]
    %v12881 = vld [vmem:[#allocation3 + $0xf8] sm:$0xff]
    %v12882 = vld [vmem:[#allocation3 + $0x100] sm:$0xff]
    %v12883 = vld [vmem:[#allocation3 + $0x108] sm:$0xff]
    %v12884 = vld [vmem:[#allocation3 + $0x110] sm:$0xff]
    %v12885 = vld [vmem:[#allocation3 + $0x118] sm:$0xff]
    %v12886 = vld [vmem:[#allocation3 + $0x120] sm:$0xff]
    %v12887 = vld [vmem:[#allocation3 + $0x128] sm:$0xff]
    %v12888 = vld [vmem:[#allocation3 + $0x130] sm:$0xff]
    %v12889 = vld [vmem:[#allocation3 + $0x138] sm:$0xff]
    %v12890 = vld [vmem:[#allocation3 + $0x140] sm:$0xff]
    %v12891 = vld [vmem:[#allocation3 + $0x148] sm:$0xff]
    %v12892 = vld [vmem:[#allocation3 + $0x150] sm:$0xff]
    %v12893 = vld [vmem:[#allocation3 + $0x158] sm:$0xff]
    %v12894 = vld [vmem:[#allocation3 + $0x160] sm:$0xff]
    %v12895 = vld [vmem:[#allocation3 + $0x168] sm:$0xff]
    %v12896 = vld [vmem:[#allocation3 + $0x170] sm:$0xff]
    %v12897 = vld [vmem:[#allocation3 + $0x178] sm:$0xff]
    %v12898 = vld [vmem:[#allocation3 + $0x180] sm:$0xff]
    %v12899 = vld [vmem:[#allocation3 + $0x188] sm:$0xff]
    %v12900 = vld [vmem:[#allocation3 + $0x190] sm:$0xff]
    %v12901 = vld [vmem:[#allocation3 + $0x198] sm:$0xff]
    %v12902 = vld [vmem:[#allocation3 + $0x1a0] sm:$0xff]
    %v12903 = vld [vmem:[#allocation3 + $0x1a8] sm:$0xff]
    %v12904 = vld [vmem:[#allocation3 + $0x1b0] sm:$0xff]
    %v12905 = vld [vmem:[#allocation3 + $0x1b8] sm:$0xff]
    %v12906 = vld [vmem:[#allocation3 + $0x1c0] sm:$0xff]
    %v12907 = vld [vmem:[#allocation3 + $0x1c8] sm:$0xff]
    %v12908 = vld [vmem:[#allocation3 + $0x1d0] sm:$0xff]
    %v12909 = vld [vmem:[#allocation3 + $0x1d8] sm:$0xff]
    %v12910 = vld [vmem:[#allocation3 + $0x1e0] sm:$0xff]
    %v12911 = vld [vmem:[#allocation3 + $0x1e8] sm:$0xff]
    %v12912 = vld [vmem:[#allocation3 + $0x1f0] sm:$0xff]
    %v12913 = vld [vmem:[#allocation3 + $0x1f8] sm:$0xff]
    %v12914 = vadd.f32 %v12786, %v12850
    %v12915 = vadd.f32 %v12787, %v12851
    %v12916 = vadd.f32 %v12788, %v12852
    %v12917 = vadd.f32 %v12789, %v12853
    %v12918 = vadd.f32 %v12790, %v12854
    %v12919 = vadd.f32 %v12791, %v12855
    %v12920 = vadd.f32 %v12792, %v12856
    %v12921 = vadd.f32 %v12793, %v12857
    %v12922 = vadd.f32 %v12794, %v12858
    %v12923 = vadd.f32 %v12795, %v12859
    %v12924 = vadd.f32 %v12796, %v12860
    %v12925 = vadd.f32 %v12797, %v12861
    %v12926 = vadd.f32 %v12798, %v12862
    %v12927 = vadd.f32 %v12799, %v12863
    %v12928 = vadd.f32 %v12800, %v12864
    %v12929 = vadd.f32 %v12801, %v12865
    %v12930 = vadd.f32 %v12802, %v12866
    %v12931 = vadd.f32 %v12803, %v12867
    %v12932 = vadd.f32 %v12804, %v12868
    %v12933 = vadd.f32 %v12805, %v12869
    %v12934 = vadd.f32 %v12806, %v12870
    %v12935 = vadd.f32 %v12807, %v12871
    %v12936 = vadd.f32 %v12808, %v12872
    %v12937 = vadd.f32 %v12809, %v12873
    %v12938 = vadd.f32 %v12810, %v12874
    %v12939 = vadd.f32 %v12811, %v12875
    %v12940 = vadd.f32 %v12812, %v12876
    %v12941 = vadd.f32 %v12813, %v12877
    %v12942 = vadd.f32 %v12814, %v12878
    %v12943 = vadd.f32 %v12815, %v12879
    %v12944 = vadd.f32 %v12816, %v12880
    %v12945 = vadd.f32 %v12817, %v12881
    %v12946 = vadd.f32 %v12818, %v12882
    %v12947 = vadd.f32 %v12819, %v12883
    %v12948 = vadd.f32 %v12820, %v12884
    %v12949 = vadd.f32 %v12821, %v12885
    %v12950 = vadd.f32 %v12822, %v12886
    %v12951 = vadd.f32 %v12823, %v12887
    %v12952 = vadd.f32 %v12824, %v12888
    %v12953 = vadd.f32 %v12825, %v12889
    %v12954 = vadd.f32 %v12826, %v12890
    %v12955 = vadd.f32 %v12827, %v12891
    %v12956 = vadd.f32 %v12828, %v12892
    %v12957 = vadd.f32 %v12829, %v12893
    %v12958 = vadd.f32 %v12830, %v12894
    %v12959 = vadd.f32 %v12831, %v12895
    %v12960 = vadd.f32 %v12832, %v12896
    %v12961 = vadd.f32 %v12833, %v12897
    %v12962 = vadd.f32 %v12834, %v12898
    %v12963 = vadd.f32 %v12835, %v12899
    %v12964 = vadd.f32 %v12836, %v12900
    %v12965 = vadd.f32 %v12837, %v12901
    %v12966 = vadd.f32 %v12838, %v12902
    %v12967 = vadd.f32 %v12839, %v12903
    %v12968 = vadd.f32 %v12840, %v12904
    %v12969 = vadd.f32 %v12841, %v12905
    %v12970 = vadd.f32 %v12842, %v12906
    %v12971 = vadd.f32 %v12843, %v12907
    %v12972 = vadd.f32 %v12844, %v12908
    %v12973 = vadd.f32 %v12845, %v12909
    %v12974 = vadd.f32 %v12846, %v12910
    %v12975 = vadd.f32 %v12847, %v12911
    %v12976 = vadd.f32 %v12848, %v12912
    %v12977 = vadd.f32 %v12849, %v12913
    %v12978 = vmax.f32 %v12914, 0.0
    %v12979 = vmax.f32 %v12915, 0.0
    %v12980 = vmax.f32 %v12916, 0.0
    %v12981 = vmax.f32 %v12917, 0.0
    %v12982 = vmax.f32 %v12918, 0.0
    %v12983 = vmax.f32 %v12919, 0.0
    %v12984 = vmax.f32 %v12920, 0.0
    %v12985 = vmax.f32 %v12921, 0.0
    %v12986 = vmax.f32 %v12922, 0.0
    %v12987 = vmax.f32 %v12923, 0.0
    %v12988 = vmax.f32 %v12924, 0.0
    %v12989 = vmax.f32 %v12925, 0.0
    %v12990 = vmax.f32 %v12926, 0.0
    %v12991 = vmax.f32 %v12927, 0.0
    %v12992 = vmax.f32 %v12928, 0.0
    %v12993 = vmax.f32 %v12929, 0.0
    %v12994 = vmax.f32 %v12930, 0.0
    %v12995 = vmax.f32 %v12931, 0.0
    %v12996 = vmax.f32 %v12932, 0.0
    %v12997 = vmax.f32 %v12933, 0.0
    %v12998 = vmax.f32 %v12934, 0.0
    %v12999 = vmax.f32 %v12935, 0.0
    %v13000 = vmax.f32 %v12936, 0.0
    %v13001 = vmax.f32 %v12937, 0.0
    %v13002 = vmax.f32 %v12938, 0.0
    %v13003 = vmax.f32 %v12939, 0.0
    %v13004 = vmax.f32 %v12940, 0.0
    %v13005 = vmax.f32 %v12941, 0.0
    %v13006 = vmax.f32 %v12942, 0.0
    %v13007 = vmax.f32 %v12943, 0.0
    %v13008 = vmax.f32 %v12944, 0.0
    %v13009 = vmax.f32 %v12945, 0.0
    %v13010 = vmax.f32 %v12946, 0.0
    %v13011 = vmax.f32 %v12947, 0.0
    %v13012 = vmax.f32 %v12948, 0.0
    %v13013 = vmax.f32 %v12949, 0.0
    %v13014 = vmax.f32 %v12950, 0.0
    %v13015 = vmax.f32 %v12951, 0.0
    %v13016 = vmax.f32 %v12952, 0.0
    %v13017 = vmax.f32 %v12953, 0.0
    %v13018 = vmax.f32 %v12954, 0.0
    %v13019 = vmax.f32 %v12955, 0.0
    %v13020 = vmax.f32 %v12956, 0.0
    %v13021 = vmax.f32 %v12957, 0.0
    %v13022 = vmax.f32 %v12958, 0.0
    %v13023 = vmax.f32 %v12959, 0.0
    %v13024 = vmax.f32 %v12960, 0.0
    %v13025 = vmax.f32 %v12961, 0.0
    %v13026 = vmax.f32 %v12962, 0.0
    %v13027 = vmax.f32 %v12963, 0.0
    %v13028 = vmax.f32 %v12964, 0.0
    %v13029 = vmax.f32 %v12965, 0.0
    %v13030 = vmax.f32 %v12966, 0.0
    %v13031 = vmax.f32 %v12967, 0.0
    %v13032 = vmax.f32 %v12968, 0.0
    %v13033 = vmax.f32 %v12969, 0.0
    %v13034 = vmax.f32 %v12970, 0.0
    %v13035 = vmax.f32 %v12971, 0.0
    %v13036 = vmax.f32 %v12972, 0.0
    %v13037 = vmax.f32 %v12973, 0.0
    %v13038 = vmax.f32 %v12974, 0.0
    %v13039 = vmax.f32 %v12975, 0.0
    %v13040 = vmax.f32 %v12976, 0.0
    %v13041 = vmax.f32 %v12977, 0.0
    %13042 = vst [vmem:[#allocation9] sm:$0xff] %v12978
    %13043 = vst [vmem:[#allocation9 + $0x8] sm:$0xff] %v12979
    %13044 = vst [vmem:[#allocation9 + $0x10] sm:$0xff] %v12980
    %13045 = vst [vmem:[#allocation9 + $0x18] sm:$0xff] %v12981
    %13046 = vst [vmem:[#allocation9 + $0x20] sm:$0xff] %v12982
    %13047 = vst [vmem:[#allocation9 + $0x28] sm:$0xff] %v12983
    %13048 = vst [vmem:[#allocation9 + $0x30] sm:$0xff] %v12984
    %13049 = vst [vmem:[#allocation9 + $0x38] sm:$0xff] %v12985
    %13050 = vst [vmem:[#allocation9 + $0x40] sm:$0xff] %v12986
    %13051 = vst [vmem:[#allocation9 + $0x48] sm:$0xff] %v12987
    %13052 = vst [vmem:[#allocation9 + $0x50] sm:$0xff] %v12988
    %13053 = vst [vmem:[#allocation9 + $0x58] sm:$0xff] %v12989
    %13054 = vst [vmem:[#allocation9 + $0x60] sm:$0xff] %v12990
    %13055 = vst [vmem:[#allocation9 + $0x68] sm:$0xff] %v12991
    %13056 = vst [vmem:[#allocation9 + $0x70] sm:$0xff] %v12992
    %13057 = vst [vmem:[#allocation9 + $0x78] sm:$0xff] %v12993
    %13058 = vst [vmem:[#allocation9 + $0x80] sm:$0xff] %v12994
    %13059 = vst [vmem:[#allocation9 + $0x88] sm:$0xff] %v12995
    %13060 = vst [vmem:[#allocation9 + $0x90] sm:$0xff] %v12996
    %13061 = vst [vmem:[#allocation9 + $0x98] sm:$0xff] %v12997
    %13062 = vst [vmem:[#allocation9 + $0xa0] sm:$0xff] %v12998
    %13063 = vst [vmem:[#allocation9 + $0xa8] sm:$0xff] %v12999
    %13064 = vst [vmem:[#allocation9 + $0xb0] sm:$0xff] %v13000
    %13065 = vst [vmem:[#allocation9 + $0xb8] sm:$0xff] %v13001
    %13066 = vst [vmem:[#allocation9 + $0xc0] sm:$0xff] %v13002
    %13067 = vst [vmem:[#allocation9 + $0xc8] sm:$0xff] %v13003
    %13068 = vst [vmem:[#allocation9 + $0xd0] sm:$0xff] %v13004
    %13069 = vst [vmem:[#allocation9 + $0xd8] sm:$0xff] %v13005
    %13070 = vst [vmem:[#allocation9 + $0xe0] sm:$0xff] %v13006
    %13071 = vst [vmem:[#allocation9 + $0xe8] sm:$0xff] %v13007
    %13072 = vst [vmem:[#allocation9 + $0xf0] sm:$0xff] %v13008
    %13073 = vst [vmem:[#allocation9 + $0xf8] sm:$0xff] %v13009
    %13074 = vst [vmem:[#allocation9 + $0x100] sm:$0xff] %v13010
    %13075 = vst [vmem:[#allocation9 + $0x108] sm:$0xff] %v13011
    %13076 = vst [vmem:[#allocation9 + $0x110] sm:$0xff] %v13012
    %13077 = vst [vmem:[#allocation9 + $0x118] sm:$0xff] %v13013
    %13078 = vst [vmem:[#allocation9 + $0x120] sm:$0xff] %v13014
    %13079 = vst [vmem:[#allocation9 + $0x128] sm:$0xff] %v13015
    %13080 = vst [vmem:[#allocation9 + $0x130] sm:$0xff] %v13016
    %13081 = vst [vmem:[#allocation9 + $0x138] sm:$0xff] %v13017
    %13082 = vst [vmem:[#allocation9 + $0x140] sm:$0xff] %v13018
    %13083 = vst [vmem:[#allocation9 + $0x148] sm:$0xff] %v13019
    %13084 = vst [vmem:[#allocation9 + $0x150] sm:$0xff] %v13020
    %13085 = vst [vmem:[#allocation9 + $0x158] sm:$0xff] %v13021
    %13086 = vst [vmem:[#allocation9 + $0x160] sm:$0xff] %v13022
    %13087 = vst [vmem:[#allocation9 + $0x168] sm:$0xff] %v13023
    %13088 = vst [vmem:[#allocation9 + $0x170] sm:$0xff] %v13024
    %13089 = vst [vmem:[#allocation9 + $0x178] sm:$0xff] %v13025
    %13090 = vst [vmem:[#allocation9 + $0x180] sm:$0xff] %v13026
    %13091 = vst [vmem:[#allocation9 + $0x188] sm:$0xff] %v13027
    %13092 = vst [vmem:[#allocation9 + $0x190] sm:$0xff] %v13028
    %13093 = vst [vmem:[#allocation9 + $0x198] sm:$0xff] %v13029
    %13094 = vst [vmem:[#allocation9 + $0x1a0] sm:$0xff] %v13030
    %13095 = vst [vmem:[#allocation9 + $0x1a8] sm:$0xff] %v13031
    %13096 = vst [vmem:[#allocation9 + $0x1b0] sm:$0xff] %v13032
    %13097 = vst [vmem:[#allocation9 + $0x1b8] sm:$0xff] %v13033
    %13098 = vst [vmem:[#allocation9 + $0x1c0] sm:$0xff] %v13034
    %13099 = vst [vmem:[#allocation9 + $0x1c8] sm:$0xff] %v13035
    %13100 = vst [vmem:[#allocation9 + $0x1d0] sm:$0xff] %v13036
    %13101 = vst [vmem:[#allocation9 + $0x1d8] sm:$0xff] %v13037
    %13102 = vst [vmem:[#allocation9 + $0x1e0] sm:$0xff] %v13038
    %13103 = vst [vmem:[#allocation9 + $0x1e8] sm:$0xff] %v13039
    %13104 = vst [vmem:[#allocation9 + $0x1f0] sm:$0xff] %v13040
    %13105 = vst [vmem:[#allocation9 + $0x1f8] sm:$0xff] %v13041
    // Predicated region
    $region42: #{basic_block_forward_nhwc.1} parent=1 // pred_check
      _
    $region43: #{basic_block_forward_nhwc.1} parent=1 // pred_check_branch
      %13107 = sbr.rel (0) target = $region45
    $region44: #{basic_block_forward_nhwc.1} parent=1 // pred_region
      %s13109 = ssub.s32 8192, 8192
      %13110 = vsyncadd [#allocation5], %s13109
      %s13111 = sshll.u32 [#allocation9], 4
      %s13112 = int_to_ptr.vmem [resolvable:$true] %s13111
      %13117 = dma.vmem_to_hbm [thread:$0]  %s13112, 8192, %s7, [#allocation5], 128, 128, 8
    $region45: #{basic_block_forward_nhwc.1} parent=1 // pred_fallthru
      _
    // Predicated region
    $region46: #{basic_block_forward_nhwc.1} parent=1 // pred_check
      _
    $region47: #{basic_block_forward_nhwc.1} parent=1 // pred_check_branch
      %13119 = sbr.rel (0) target = $region49
    $region48: #{basic_block_forward_nhwc.1} parent=1 // pred_region
      %13120 = dma.done [#allocation5], 8192
    $region49: #{basic_block_forward_nhwc.1} parent=1 // pred_fallthru
      _
    %13121 = vsyncpa [#allocation4], 1
    %13122 = vsyncpa [#allocation7], 1
    %13123 = vsyncpa [#allocation5], 1

</llo_original>
